<compile_context>
chip_gen: v7x
topology: tpu7x:2x2x1
jax: 0.10.0
libtpu: 0.0.40
codegen_flags: <defaults>
</compile_context>

<pallas_src>
import math

import jax
import jax.numpy as jnp
from jax import lax
from jax.experimental import pallas as pl
from jax.experimental.pallas import tpu as pltpu

D_K = D_V = 64
D_MODEL = 30
N_HEADS = 8
D_FF = 1024
LN_EPS = 1e-5          # nn.LayerNorm default (fresh LN each forward -> gamma=1, beta=0)
DM_PAD = 128           # d_model padded to a full 128-lane vreg width
LK_PAD = 128           # attention-prob / mask last dim padded to 128 lanes
HD = N_HEADS * D_K     # 512


# ---------------------------------------------------------------------------
# In-kernel helpers
# ---------------------------------------------------------------------------
def _masked_layer_norm(x, feat_mask):
    """LayerNorm over the first D_MODEL features of a (rows, DM_PAD) slab whose
    padded lanes are zero; returns a slab whose padded lanes are zero again."""
    mean = jnp.sum(x, axis=-1, keepdims=True) * (1.0 / D_MODEL)
    diff = (x - mean) * feat_mask                       # re-zero the pad lanes
    var = jnp.sum(diff * diff, axis=-1, keepdims=True) * (1.0 / D_MODEL)
    return diff * lax.rsqrt(var + LN_EPS)


def _split_heads(x2d, b, l, dh):
    """(b*l, H*dh) -> (b*H, l, dh) via static lane slices + leading-dim stack."""
    pieces = []
    for bi in range(b):
        rows = x2d[bi * l:(bi + 1) * l, :]
        for h in range(N_HEADS):
            pieces.append(rows[:, h * dh:(h + 1) * dh])
    return jnp.stack(pieces, axis=0)


def _attention(q2d, k2d, v2d, mask, w_fc, attn_ref, residual, ctx_scratch,
               b, lq, lk, feat_mask):
    """Scores/softmax/context are head-batched; every projection stays 2-D.

    q2d: (b*lq, 512)   k2d/v2d: (b*lk, 512)   mask: (b, lq, LK_PAD) 0/1
    w_fc: (512, DM_PAD)   residual: (b*lq, DM_PAD)   ctx_scratch: (b*lq, 512)
    """
    q_h = _split_heads(q2d, b, lq, D_K)                       # (b*H, lq, d_k)
    k_h = _split_heads(k2d, b, lk, D_K)
    v_h = _split_heads(v2d, b, lk, D_V)

    scores = jnp.einsum('gqd,gkd->gqk', q_h, k_h,
                        preferred_element_type=jnp.float32)   # (b*H, lq, lk)
    scores = scores.reshape(b, N_HEADS, lq, lk)
    # exact masked_fill(-10000.) semantics (mask is 0/1)
    scores = jnp.where(mask[:, None, :, :lk] > 0.5, -10000.0, scores)
    m = jnp.max(scores, axis=-1, keepdims=True)
    e = jnp.exp(scores - m)
    attn = e / jnp.sum(e, axis=-1, keepdims=True)             # (b, H, lq, lk)

    # lane-dense writeback: zero the 128-lane-padded block, fill first lk lanes
    attn_ref[...] = jnp.zeros_like(attn_ref)
    attn_ref[:, :, :, :lk] = attn

    ctx = jnp.einsum('gqk,gkv->gqv', attn.reshape(b * N_HEADS, lq, lk), v_h,
                     preferred_element_type=jnp.float32)      # (b*H, lq, d_v)

    # merge heads back to (b*lq, H*d_v) through VMEM scratch (static slice stores)
    for bi in range(b):
        for h in range(N_HEADS):
            ctx_scratch[bi * lq:(bi + 1) * lq, h * D_V:(h + 1) * D_V] = (
                ctx[bi * N_HEADS + h])
    ctx2d = ctx_scratch[...]                                  # (b*lq, 512)

    # single (b*lq, 512) @ (512, DM_PAD) output projection
    proj = jnp.dot(ctx2d, w_fc, preferred_element_type=jnp.float32)
    return _masked_layer_norm(proj + residual, feat_mask)


# ---------------------------------------------------------------------------
# Fused decoder-layer kernel (whole batch, single invocation, no grid)
# ---------------------------------------------------------------------------
def decoder_layer_kernel(dec_ref, enc_ref, smask_ref, emask_ref,
                         w_qkv_s_ref, w_fc_s_ref,
                         w_q_c_ref, w_kv_c_ref, w_fc_c_ref,
                         ff_w1_ref, ff_w2_ref,
                         out_ref, sattn_ref, eattn_ref,
                         ctx_scratch):
    b, lq, _ = dec_ref.shape
    ls = enc_ref.shape[1]
    feat_mask = (lax.broadcasted_iota(jnp.int32, (1, DM_PAD), 1)
                 < D_MODEL).astype(jnp.float32)

    x = dec_ref[...].reshape(b * lq, DM_PAD)                  # fold batch into rows
    enc = enc_ref[...].reshape(b * ls, DM_PAD)

    # ---- self attention: fused QKV, one (b*lq,128)@(128,1536) matmul --------
    qkv = jnp.dot(x, w_qkv_s_ref[...], preferred_element_type=jnp.float32)
    out1 = _attention(qkv[:, :HD], qkv[:, HD:2 * HD], qkv[:, 2 * HD:],
                      smask_ref[...], w_fc_s_ref[...], sattn_ref, x, ctx_scratch,
                      b, lq, lq, feat_mask)

    # ---- cross attention: Q from out1, fused KV from encoder output ---------
    q_c = jnp.dot(out1, w_q_c_ref[...], preferred_element_type=jnp.float32)
    kv_c = jnp.dot(enc, w_kv_c_ref[...], preferred_element_type=jnp.float32)
    out2 = _attention(q_c, kv_c[:, :HD], kv_c[:, HD:],
                      emask_ref[...], w_fc_c_ref[...], eattn_ref, out1, ctx_scratch,
                      b, lq, ls, feat_mask)

    # ---- position-wise FFN ---------------------------------------------------
    h1 = jnp.maximum(
        jnp.dot(out2, ff_w1_ref[...], preferred_element_type=jnp.float32), 0.0)
    h2 = jnp.dot(h1, ff_w2_ref[...], preferred_element_type=jnp.float32)
    out3 = _masked_layer_norm(h2 + out2, feat_mask)

    out_ref[...] = out3.reshape(b, lq, DM_PAD)


# ---------------------------------------------------------------------------
# Host-side packing + wrapper
# ---------------------------------------------------------------------------
def _pad_axis(x, axis, target):
    pad = target - x.shape[axis]
    if pad == 0:
        return x
    cfg = [(0, 0)] * x.ndim
    cfg[axis] = (0, pad)
    return jnp.pad(x, cfg)


@jax.jit
def decoder_layer(dec_inputs, enc_outputs, dec_self_mask, dec_enc_mask, params):
    B, LQ, _ = dec_inputs.shape
    LS = enc_outputs.shape[1]
    scale = 1.0 / math.sqrt(D_K)

    dec_p = _pad_axis(dec_inputs.astype(jnp.float32), 2, DM_PAD)
    enc_p = _pad_axis(enc_outputs.astype(jnp.float32), 2, DM_PAD)
    smask_p = _pad_axis(dec_self_mask.astype(jnp.float32), 2, LK_PAD)
    emask_p = _pad_axis(dec_enc_mask.astype(jnp.float32), 2, LK_PAD)

    # fused, lane-dense weights; 1/sqrt(d_k) folded into W_Q
    w_qkv_s = _pad_axis(jnp.concatenate(
        [params["sa_wq"] * scale, params["sa_wk"], params["sa_wv"]], axis=1),
        0, DM_PAD)                                            # (128, 1536)
    w_fc_s = _pad_axis(params["sa_fc"], 1, DM_PAD)            # (512, 128)
    w_q_c = _pad_axis(params["ca_wq"] * scale, 0, DM_PAD)     # (128, 512)
    w_kv_c = _pad_axis(jnp.concatenate(
        [params["ca_wk"], params["ca_wv"]], axis=1), 0, DM_PAD)  # (128, 1024)
    w_fc_c = _pad_axis(params["ca_fc"], 1, DM_PAD)            # (512, 128)
    ff_w1 = _pad_axis(params["ff_w1"], 0, DM_PAD)             # (128, 1024)
    ff_w2 = _pad_axis(params["ff_w2"], 1, DM_PAD)             # (1024, 128)

    out_p, sattn_p, eattn_p = pl.pallas_call(
        decoder_layer_kernel,
        out_shape=(
            jax.ShapeDtypeStruct((B, LQ, DM_PAD), jnp.float32),
            jax.ShapeDtypeStruct((B, N_HEADS, LQ, LK_PAD), jnp.float32),
            jax.ShapeDtypeStruct((B, N_HEADS, LQ, LK_PAD), jnp.float32),
        ),
        scratch_shapes=[pltpu.VMEM((B * LQ, N_HEADS * D_V), jnp.float32)],
    )(dec_p, enc_p, smask_p, emask_p,
      w_qkv_s, w_fc_s, w_q_c, w_kv_c, w_fc_c, ff_w1, ff_w2)

    return (out_p[..., :D_MODEL],
            sattn_p[..., :LQ],
            eattn_p[..., :LS])


# ---------------------------------------------------------------------------
# Pure-JAX reference (matches the PyTorch module, incl. masked_fill semantics)
# ---------------------------------------------------------------------------
def _ref_layer_norm(x):
    mean = jnp.mean(x, axis=-1, keepdims=True)
    var = jnp.mean((x - mean) ** 2, axis=-1, keepdims=True)
    return (x - mean) * lax.rsqrt(var + LN_EPS)


def _ref_mha(x_q, x_kv, mask, wq, wk, wv, wfc):
    B, Lq, _ = x_q.shape
    Lk = x_kv.shape[1]
    Q = (x_q @ wq).reshape(B, Lq, N_HEADS, D_K).transpose(0, 2, 1, 3)
    K = (x_kv @ wk).reshape(B, Lk, N_HEADS, D_K).transpose(0, 2, 1, 3)
    V = (x_kv @ wv).reshape(B, Lk, N_HEADS, D_V).transpose(0, 2, 1, 3)
    scores = jnp.einsum("bhqd,bhkd->bhqk", Q, K) / math.sqrt(D_K)
    scores = jnp.where(mask[:, None] > 0.5, -10000.0, scores)
    attn = jax.nn.softmax(scores, axis=-1)
    ctx = jnp.einsum("bhqk,bhkd->bhqd", attn, V).transpose(0, 2, 1, 3)
    ctx = ctx.reshape(B, Lq, N_HEADS * D_V)
    return _ref_layer_norm(ctx @ wfc + x_q), attn


def _ref_decoder(dec_inputs, enc_outputs, m_self, m_enc, p):
    o1, a1 = _ref_mha(dec_inputs, dec_inputs, m_self,
                      p["sa_wq"], p["sa_wk"], p["sa_wv"], p["sa_fc"])
    o2, a2 = _ref_mha(o1, enc_outputs, m_enc,
                      p["ca_wq"], p["ca_wk"], p["ca_wv"], p["ca_fc"])
    o3 = _ref_layer_norm(jnp.maximum(o2 @ p["ff_w1"], 0.0) @ p["ff_w2"] + o2)
    return o3, a1, a2


if __name__ == "__main__":
    key = jax.random.PRNGKey(0)
    ks = jax.random.split(key, 16)

    B, TGT, SRC = 2, 8, 8

    def w(k, shape, scale=0.05):
        return (scale * jax.random.normal(k, shape)).astype(jnp.float32)

    params = {
        "sa_wq": w(ks[0], (D_MODEL, N_HEADS * D_K)),
        "sa_wk": w(ks[1], (D_MODEL, N_HEADS * D_K)),
        "sa_wv": w(ks[2], (D_MODEL, N_HEADS * D_V)),
        "sa_fc": w(ks[3], (N_HEADS * D_V, D_MODEL)),
        "ca_wq": w(ks[4], (D_MODEL, N_HEADS * D_K)),
        "ca_wk": w(ks[5], (D_MODEL, N_HEADS * D_K)),
        "ca_wv": w(ks[6], (D_MODEL, N_HEADS * D_V)),
        "ca_fc": w(ks[7], (N_HEADS * D_V, D_MODEL)),
        "ff_w1": w(ks[8], (D_MODEL, D_FF)),
        "ff_w2": w(ks[9], (D_FF, D_MODEL)),
    }

    dec_inputs = jax.random.normal(ks[10], (B, TGT, D_MODEL), dtype=jnp.float32)
    enc_outputs = jax.random.normal(ks[11], (B, SRC, D_MODEL), dtype=jnp.float32)

    # causal self-attention mask (1.0 == masked), zero cross-attention mask
    causal = jnp.triu(jnp.ones((TGT, TGT), dtype=jnp.float32), k=1)
    dec_self_mask = jnp.broadcast_to(causal, (B, TGT, TGT)).astype(jnp.float32)
    dec_enc_mask = jnp.zeros((B, TGT, SRC), dtype=jnp.float32)

    out, self_attn, enc_attn = decoder_layer(
        dec_inputs, enc_outputs, dec_self_mask, dec_enc_mask, params)
    out = jax.block_until_ready(out)
    self_attn = jax.block_until_ready(self_attn)
    enc_attn = jax.block_until_ready(enc_attn)

    # sanity check against pure-JAX reference
    r_out, r_sa, r_ea = _ref_decoder(dec_inputs, enc_outputs,
                                     dec_self_mask, dec_enc_mask, params)
    assert jnp.allclose(out, r_out, atol=1e-4, rtol=1e-4)
    assert jnp.allclose(self_attn, r_sa, atol=1e-5, rtol=1e-4)
    assert jnp.allclose(enc_attn, r_ea, atol=1e-5, rtol=1e-4)

    print("KERNEL_OK")
</pallas_src>

<mosaic_0001>
module attributes {stable_mosaic.version = 11 : i64} {
  func.func @decoder_layer_kernel(%arg0: memref<2x8x128xf32, #tpu.memory_space<vmem>>, %arg1: memref<2x8x128xf32, #tpu.memory_space<vmem>>, %arg2: memref<2x8x128xf32, #tpu.memory_space<vmem>>, %arg3: memref<2x8x128xf32, #tpu.memory_space<vmem>>, %arg4: memref<128x1536xf32, #tpu.memory_space<vmem>>, %arg5: memref<512x128xf32, #tpu.memory_space<vmem>>, %arg6: memref<128x512xf32, #tpu.memory_space<vmem>>, %arg7: memref<128x1024xf32, #tpu.memory_space<vmem>>, %arg8: memref<512x128xf32, #tpu.memory_space<vmem>>, %arg9: memref<128x1024xf32, #tpu.memory_space<vmem>>, %arg10: memref<1024x128xf32, #tpu.memory_space<vmem>>, %arg11: memref<2x8x128xf32, #tpu.memory_space<vmem>>, %arg12: memref<2x8x8x128xf32, #tpu.memory_space<vmem>>, %arg13: memref<2x8x8x128xf32, #tpu.memory_space<vmem>>, %arg14: memref<16x512xf32, #tpu.memory_space<vmem>>) attributes {dimension_semantics = [], scalar_prefetch = 0 : i64, scratch_operands = 1 : i64, tpu.core_type = #tpu.core_type<tc>} {
    %0 = tpu.iota {dimensions = array<i32: 1>} : vector<1x128xi32>
    %c30_i32 = arith.constant 30 : i32
    %1 = vector.broadcast %c30_i32 : i32 to vector<1x128xi32>
    %2 = arith.cmpi slt, %0, %1 : vector<1x128xi32>
    %3 = arith.extui %2 : vector<1x128xi1> to vector<1x128xi32>
    %4 = arith.sitofp %3 : vector<1x128xi32> to vector<1x128xf32>
    %c0 = arith.constant 0 : index
    %c0_0 = arith.constant 0 : index
    %c0_1 = arith.constant 0 : index
    %5 = vector.load %arg0[%c0, %c0_0, %c0_1] : memref<2x8x128xf32, #tpu.memory_space<vmem>>, vector<2x8x128xf32>
    %6 = vector.shape_cast %5 : vector<2x8x128xf32> to vector<16x128xf32>
    %c0_2 = arith.constant 0 : index
    %c0_3 = arith.constant 0 : index
    %c0_4 = arith.constant 0 : index
    %7 = vector.load %arg1[%c0_2, %c0_3, %c0_4] : memref<2x8x128xf32, #tpu.memory_space<vmem>>, vector<2x8x128xf32>
    %8 = vector.shape_cast %7 : vector<2x8x128xf32> to vector<16x128xf32>
    %c0_5 = arith.constant 0 : index
    %c0_6 = arith.constant 0 : index
    %9 = vector.load %arg4[%c0_5, %c0_6] : memref<128x1536xf32, #tpu.memory_space<vmem>>, vector<128x1536xf32>
    %cst = arith.constant dense<0.000000e+00> : vector<16x1536xf32>
    %10 = tpu.matmul %6, %9, %cst {dimension_numbers = #tpu.dot_dimension_numbers<[1], [0], [0], [1], [0, 0, 1, 1], [], []>} : vector<16x128xf32>, vector<128x1536xf32>, vector<16x1536xf32> -> vector<16x1536xf32>
    %11 = vector.extract_strided_slice %10 {offsets = [0, 0], sizes = [16, 512], strides = [1, 1]} : vector<16x1536xf32> to vector<16x512xf32>
    %12 = vector.extract_strided_slice %10 {offsets = [0, 512], sizes = [16, 512], strides = [1, 1]} : vector<16x1536xf32> to vector<16x512xf32>
    %13 = vector.extract_strided_slice %10 {offsets = [0, 1024], sizes = [16, 512], strides = [1, 1]} : vector<16x1536xf32> to vector<16x512xf32>
    %c0_7 = arith.constant 0 : index
    %c0_8 = arith.constant 0 : index
    %c0_9 = arith.constant 0 : index
    %14 = vector.load %arg2[%c0_7, %c0_8, %c0_9] : memref<2x8x128xf32, #tpu.memory_space<vmem>>, vector<2x8x128xf32>
    %c0_10 = arith.constant 0 : index
    %c0_11 = arith.constant 0 : index
    %15 = vector.load %arg5[%c0_10, %c0_11] : memref<512x128xf32, #tpu.memory_space<vmem>>, vector<512x128xf32>
    %16 = vector.extract_strided_slice %11 {offsets = [0, 0], sizes = [8, 512], strides = [1, 1]} : vector<16x512xf32> to vector<8x512xf32>
    %17 = vector.extract_strided_slice %16 {offsets = [0, 0], sizes = [8, 64], strides = [1, 1]} : vector<8x512xf32> to vector<8x64xf32>
    %18 = vector.extract_strided_slice %16 {offsets = [0, 64], sizes = [8, 64], strides = [1, 1]} : vector<8x512xf32> to vector<8x64xf32>
    %19 = vector.extract_strided_slice %16 {offsets = [0, 128], sizes = [8, 64], strides = [1, 1]} : vector<8x512xf32> to vector<8x64xf32>
    %20 = vector.extract_strided_slice %16 {offsets = [0, 192], sizes = [8, 64], strides = [1, 1]} : vector<8x512xf32> to vector<8x64xf32>
    %21 = vector.extract_strided_slice %16 {offsets = [0, 256], sizes = [8, 64], strides = [1, 1]} : vector<8x512xf32> to vector<8x64xf32>
    %22 = vector.extract_strided_slice %16 {offsets = [0, 320], sizes = [8, 64], strides = [1, 1]} : vector<8x512xf32> to vector<8x64xf32>
    %23 = vector.extract_strided_slice %16 {offsets = [0, 384], sizes = [8, 64], strides = [1, 1]} : vector<8x512xf32> to vector<8x64xf32>
    %24 = vector.extract_strided_slice %16 {offsets = [0, 448], sizes = [8, 64], strides = [1, 1]} : vector<8x512xf32> to vector<8x64xf32>
    %25 = vector.extract_strided_slice %11 {offsets = [8, 0], sizes = [8, 512], strides = [1, 1]} : vector<16x512xf32> to vector<8x512xf32>
    %26 = vector.extract_strided_slice %25 {offsets = [0, 0], sizes = [8, 64], strides = [1, 1]} : vector<8x512xf32> to vector<8x64xf32>
    %27 = vector.extract_strided_slice %25 {offsets = [0, 64], sizes = [8, 64], strides = [1, 1]} : vector<8x512xf32> to vector<8x64xf32>
    %28 = vector.extract_strided_slice %25 {offsets = [0, 128], sizes = [8, 64], strides = [1, 1]} : vector<8x512xf32> to vector<8x64xf32>
    %29 = vector.extract_strided_slice %25 {offsets = [0, 192], sizes = [8, 64], strides = [1, 1]} : vector<8x512xf32> to vector<8x64xf32>
    %30 = vector.extract_strided_slice %25 {offsets = [0, 256], sizes = [8, 64], strides = [1, 1]} : vector<8x512xf32> to vector<8x64xf32>
    %31 = vector.extract_strided_slice %25 {offsets = [0, 320], sizes = [8, 64], strides = [1, 1]} : vector<8x512xf32> to vector<8x64xf32>
    %32 = vector.extract_strided_slice %25 {offsets = [0, 384], sizes = [8, 64], strides = [1, 1]} : vector<8x512xf32> to vector<8x64xf32>
    %33 = vector.extract_strided_slice %25 {offsets = [0, 448], sizes = [8, 64], strides = [1, 1]} : vector<8x512xf32> to vector<8x64xf32>
    %34 = vector.shape_cast %17 : vector<8x64xf32> to vector<1x8x64xf32>
    %35 = vector.shape_cast %18 : vector<8x64xf32> to vector<1x8x64xf32>
    %36 = vector.shape_cast %19 : vector<8x64xf32> to vector<1x8x64xf32>
    %37 = vector.shape_cast %20 : vector<8x64xf32> to vector<1x8x64xf32>
    %38 = vector.shape_cast %21 : vector<8x64xf32> to vector<1x8x64xf32>
    %39 = vector.shape_cast %22 : vector<8x64xf32> to vector<1x8x64xf32>
    %40 = vector.shape_cast %23 : vector<8x64xf32> to vector<1x8x64xf32>
    %41 = vector.shape_cast %24 : vector<8x64xf32> to vector<1x8x64xf32>
    %42 = vector.shape_cast %26 : vector<8x64xf32> to vector<1x8x64xf32>
    %43 = vector.shape_cast %27 : vector<8x64xf32> to vector<1x8x64xf32>
    %44 = vector.shape_cast %28 : vector<8x64xf32> to vector<1x8x64xf32>
    %45 = vector.shape_cast %29 : vector<8x64xf32> to vector<1x8x64xf32>
    %46 = vector.shape_cast %30 : vector<8x64xf32> to vector<1x8x64xf32>
    %47 = vector.shape_cast %31 : vector<8x64xf32> to vector<1x8x64xf32>
    %48 = vector.shape_cast %32 : vector<8x64xf32> to vector<1x8x64xf32>
    %49 = vector.shape_cast %33 : vector<8x64xf32> to vector<1x8x64xf32>
    %50 = tpu.concatenate %34, %35, %36, %37, %38, %39, %40, %41, %42, %43, %44, %45, %46, %47, %48, %49 in 0 : vector<1x8x64xf32>, vector<1x8x64xf32>, vector<1x8x64xf32>, vector<1x8x64xf32>, vector<1x8x64xf32>, vector<1x8x64xf32>, vector<1x8x64xf32>, vector<1x8x64xf32>, vector<1x8x64xf32>, vector<1x8x64xf32>, vector<1x8x64xf32>, vector<1x8x64xf32>, vector<1x8x64xf32>, vector<1x8x64xf32>, vector<1x8x64xf32>, vector<1x8x64xf32> -> vector<16x8x64xf32>
    %51 = vector.extract_strided_slice %12 {offsets = [0, 0], sizes = [8, 512], strides = [1, 1]} : vector<16x512xf32> to vector<8x512xf32>
    %52 = vector.extract_strided_slice %51 {offsets = [0, 0], sizes = [8, 64], strides = [1, 1]} : vector<8x512xf32> to vector<8x64xf32>
    %53 = vector.extract_strided_slice %51 {offsets = [0, 64], sizes = [8, 64], strides = [1, 1]} : vector<8x512xf32> to vector<8x64xf32>
    %54 = vector.extract_strided_slice %51 {offsets = [0, 128], sizes = [8, 64], strides = [1, 1]} : vector<8x512xf32> to vector<8x64xf32>
    %55 = vector.extract_strided_slice %51 {offsets = [0, 192], sizes = [8, 64], strides = [1, 1]} : vector<8x512xf32> to vector<8x64xf32>
    %56 = vector.extract_strided_slice %51 {offsets = [0, 256], sizes = [8, 64], strides = [1, 1]} : vector<8x512xf32> to vector<8x64xf32>
    %57 = vector.extract_strided_slice %51 {offsets = [0, 320], sizes = [8, 64], strides = [1, 1]} : vector<8x512xf32> to vector<8x64xf32>
    %58 = vector.extract_strided_slice %51 {offsets = [0, 384], sizes = [8, 64], strides = [1, 1]} : vector<8x512xf32> to vector<8x64xf32>
    %59 = vector.extract_strided_slice %51 {offsets = [0, 448], sizes = [8, 64], strides = [1, 1]} : vector<8x512xf32> to vector<8x64xf32>
    %60 = vector.extract_strided_slice %12 {offsets = [8, 0], sizes = [8, 512], strides = [1, 1]} : vector<16x512xf32> to vector<8x512xf32>
    %61 = vector.extract_strided_slice %60 {offsets = [0, 0], sizes = [8, 64], strides = [1, 1]} : vector<8x512xf32> to vector<8x64xf32>
    %62 = vector.extract_strided_slice %60 {offsets = [0, 64], sizes = [8, 64], strides = [1, 1]} : vector<8x512xf32> to vector<8x64xf32>
    %63 = vector.extract_strided_slice %60 {offsets = [0, 128], sizes = [8, 64], strides = [1, 1]} : vector<8x512xf32> to vector<8x64xf32>
    %64 = vector.extract_strided_slice %60 {offsets = [0, 192], sizes = [8, 64], strides = [1, 1]} : vector<8x512xf32> to vector<8x64xf32>
    %65 = vector.extract_strided_slice %60 {offsets = [0, 256], sizes = [8, 64], strides = [1, 1]} : vector<8x512xf32> to vector<8x64xf32>
    %66 = vector.extract_strided_slice %60 {offsets = [0, 320], sizes = [8, 64], strides = [1, 1]} : vector<8x512xf32> to vector<8x64xf32>
    %67 = vector.extract_strided_slice %60 {offsets = [0, 384], sizes = [8, 64], strides = [1, 1]} : vector<8x512xf32> to vector<8x64xf32>
    %68 = vector.extract_strided_slice %60 {offsets = [0, 448], sizes = [8, 64], strides = [1, 1]} : vector<8x512xf32> to vector<8x64xf32>
    %69 = vector.shape_cast %52 : vector<8x64xf32> to vector<1x8x64xf32>
    %70 = vector.shape_cast %53 : vector<8x64xf32> to vector<1x8x64xf32>
    %71 = vector.shape_cast %54 : vector<8x64xf32> to vector<1x8x64xf32>
    %72 = vector.shape_cast %55 : vector<8x64xf32> to vector<1x8x64xf32>
    %73 = vector.shape_cast %56 : vector<8x64xf32> to vector<1x8x64xf32>
    %74 = vector.shape_cast %57 : vector<8x64xf32> to vector<1x8x64xf32>
    %75 = vector.shape_cast %58 : vector<8x64xf32> to vector<1x8x64xf32>
    %76 = vector.shape_cast %59 : vector<8x64xf32> to vector<1x8x64xf32>
    %77 = vector.shape_cast %61 : vector<8x64xf32> to vector<1x8x64xf32>
    %78 = vector.shape_cast %62 : vector<8x64xf32> to vector<1x8x64xf32>
    %79 = vector.shape_cast %63 : vector<8x64xf32> to vector<1x8x64xf32>
    %80 = vector.shape_cast %64 : vector<8x64xf32> to vector<1x8x64xf32>
    %81 = vector.shape_cast %65 : vector<8x64xf32> to vector<1x8x64xf32>
    %82 = vector.shape_cast %66 : vector<8x64xf32> to vector<1x8x64xf32>
    %83 = vector.shape_cast %67 : vector<8x64xf32> to vector<1x8x64xf32>
    %84 = vector.shape_cast %68 : vector<8x64xf32> to vector<1x8x64xf32>
    %85 = tpu.concatenate %69, %70, %71, %72, %73, %74, %75, %76, %77, %78, %79, %80, %81, %82, %83, %84 in 0 : vector<1x8x64xf32>, vector<1x8x64xf32>, vector<1x8x64xf32>, vector<1x8x64xf32>, vector<1x8x64xf32>, vector<1x8x64xf32>, vector<1x8x64xf32>, vector<1x8x64xf32>, vector<1x8x64xf32>, vector<1x8x64xf32>, vector<1x8x64xf32>, vector<1x8x64xf32>, vector<1x8x64xf32>, vector<1x8x64xf32>, vector<1x8x64xf32>, vector<1x8x64xf32> -> vector<16x8x64xf32>
    %86 = vector.extract_strided_slice %13 {offsets = [0, 0], sizes = [8, 512], strides = [1, 1]} : vector<16x512xf32> to vector<8x512xf32>
    %87 = vector.extract_strided_slice %86 {offsets = [0, 0], sizes = [8, 64], strides = [1, 1]} : vector<8x512xf32> to vector<8x64xf32>
    %88 = vector.extract_strided_slice %86 {offsets = [0, 64], sizes = [8, 64], strides = [1, 1]} : vector<8x512xf32> to vector<8x64xf32>
    %89 = vector.extract_strided_slice %86 {offsets = [0, 128], sizes = [8, 64], strides = [1, 1]} : vector<8x512xf32> to vector<8x64xf32>
    %90 = vector.extract_strided_slice %86 {offsets = [0, 192], sizes = [8, 64], strides = [1, 1]} : vector<8x512xf32> to vector<8x64xf32>
    %91 = vector.extract_strided_slice %86 {offsets = [0, 256], sizes = [8, 64], strides = [1, 1]} : vector<8x512xf32> to vector<8x64xf32>
    %92 = vector.extract_strided_slice %86 {offsets = [0, 320], sizes = [8, 64], strides = [1, 1]} : vector<8x512xf32> to vector<8x64xf32>
    %93 = vector.extract_strided_slice %86 {offsets = [0, 384], sizes = [8, 64], strides = [1, 1]} : vector<8x512xf32> to vector<8x64xf32>
    %94 = vector.extract_strided_slice %86 {offsets = [0, 448], sizes = [8, 64], strides = [1, 1]} : vector<8x512xf32> to vector<8x64xf32>
    %95 = vector.extract_strided_slice %13 {offsets = [8, 0], sizes = [8, 512], strides = [1, 1]} : vector<16x512xf32> to vector<8x512xf32>
    %96 = vector.extract_strided_slice %95 {offsets = [0, 0], sizes = [8, 64], strides = [1, 1]} : vector<8x512xf32> to vector<8x64xf32>
    %97 = vector.extract_strided_slice %95 {offsets = [0, 64], sizes = [8, 64], strides = [1, 1]} : vector<8x512xf32> to vector<8x64xf32>
    %98 = vector.extract_strided_slice %95 {offsets = [0, 128], sizes = [8, 64], strides = [1, 1]} : vector<8x512xf32> to vector<8x64xf32>
    %99 = vector.extract_strided_slice %95 {offsets = [0, 192], sizes = [8, 64], strides = [1, 1]} : vector<8x512xf32> to vector<8x64xf32>
    %100 = vector.extract_strided_slice %95 {offsets = [0, 256], sizes = [8, 64], strides = [1, 1]} : vector<8x512xf32> to vector<8x64xf32>
    %101 = vector.extract_strided_slice %95 {offsets = [0, 320], sizes = [8, 64], strides = [1, 1]} : vector<8x512xf32> to vector<8x64xf32>
    %102 = vector.extract_strided_slice %95 {offsets = [0, 384], sizes = [8, 64], strides = [1, 1]} : vector<8x512xf32> to vector<8x64xf32>
    %103 = vector.extract_strided_slice %95 {offsets = [0, 448], sizes = [8, 64], strides = [1, 1]} : vector<8x512xf32> to vector<8x64xf32>
    %104 = vector.shape_cast %87 : vector<8x64xf32> to vector<1x8x64xf32>
    %105 = vector.shape_cast %88 : vector<8x64xf32> to vector<1x8x64xf32>
    %106 = vector.shape_cast %89 : vector<8x64xf32> to vector<1x8x64xf32>
    %107 = vector.shape_cast %90 : vector<8x64xf32> to vector<1x8x64xf32>
    %108 = vector.shape_cast %91 : vector<8x64xf32> to vector<1x8x64xf32>
    %109 = vector.shape_cast %92 : vector<8x64xf32> to vector<1x8x64xf32>
    %110 = vector.shape_cast %93 : vector<8x64xf32> to vector<1x8x64xf32>
    %111 = vector.shape_cast %94 : vector<8x64xf32> to vector<1x8x64xf32>
    %112 = vector.shape_cast %96 : vector<8x64xf32> to vector<1x8x64xf32>
    %113 = vector.shape_cast %97 : vector<8x64xf32> to vector<1x8x64xf32>
    %114 = vector.shape_cast %98 : vector<8x64xf32> to vector<1x8x64xf32>
    %115 = vector.shape_cast %99 : vector<8x64xf32> to vector<1x8x64xf32>
    %116 = vector.shape_cast %100 : vector<8x64xf32> to vector<1x8x64xf32>
    %117 = vector.shape_cast %101 : vector<8x64xf32> to vector<1x8x64xf32>
    %118 = vector.shape_cast %102 : vector<8x64xf32> to vector<1x8x64xf32>
    %119 = vector.shape_cast %103 : vector<8x64xf32> to vector<1x8x64xf32>
    %120 = tpu.concatenate %104, %105, %106, %107, %108, %109, %110, %111, %112, %113, %114, %115, %116, %117, %118, %119 in 0 : vector<1x8x64xf32>, vector<1x8x64xf32>, vector<1x8x64xf32>, vector<1x8x64xf32>, vector<1x8x64xf32>, vector<1x8x64xf32>, vector<1x8x64xf32>, vector<1x8x64xf32>, vector<1x8x64xf32>, vector<1x8x64xf32>, vector<1x8x64xf32>, vector<1x8x64xf32>, vector<1x8x64xf32>, vector<1x8x64xf32>, vector<1x8x64xf32>, vector<1x8x64xf32> -> vector<16x8x64xf32>
    "tpu.trace_start"() <{level = 10 : i32, message = "gqd,gkd->gqk"}> : () -> ()
    %cst_12 = arith.constant dense<0.000000e+00> : vector<16x8x8xf32>
    %121 = tpu.matmul %50, %85, %cst_12 {dimension_numbers = #tpu.dot_dimension_numbers<[2], [2], [1], [1], [0, 0, 0, 1, 1, 1], [0], [0]>} : vector<16x8x64xf32>, vector<16x8x64xf32>, vector<16x8x8xf32> -> vector<16x8x8xf32>
    "tpu.trace_stop"() : () -> ()
    %122 = vector.shape_cast %121 : vector<16x8x8xf32> to vector<2x8x8x8xf32>
    %123 = vector.extract_strided_slice %14 {offsets = [0, 0, 0], sizes = [2, 8, 8], strides = [1, 1, 1]} : vector<2x8x128xf32> to vector<2x8x8xf32>
    %124 = vector.shape_cast %123 : vector<2x8x8xf32> to vector<2x1x8x8xf32>
    %cst_13 = arith.constant 5.000000e-01 : f32
    %125 = vector.broadcast %cst_13 : f32 to vector<2x1x8x8xf32>
    %126 = arith.cmpf ogt, %124, %125 : vector<2x1x8x8xf32>
    %cst_14 = arith.constant -1.000000e+04 : f32
    %127 = vector.shape_cast %126 : vector<2x1x8x8xi1> to vector<2x1x8x8xi1>
    %128 = vector.broadcast %127 : vector<2x1x8x8xi1> to vector<2x8x8x8xi1>
    %129 = vector.broadcast %cst_14 : f32 to vector<2x8x8x8xf32>
    %130 = arith.select %128, %129, %122 : vector<2x8x8x8xi1>, vector<2x8x8x8xf32>
    %cst_15 = arith.constant dense<0xFF800000> : vector<2x8x8xf32>
    %131 = vector.multi_reduction <maximumf>, %130, %cst_15 [3] : vector<2x8x8x8xf32> to vector<2x8x8xf32>
    %132 = vector.shape_cast %131 : vector<2x8x8xf32> to vector<2x8x8x1xf32>
    %133 = vector.broadcast %132 : vector<2x8x8x1xf32> to vector<2x8x8x8xf32>
    %134 = arith.subf %130, %133 : vector<2x8x8x8xf32>
    %135 = math.exp %134 : vector<2x8x8x8xf32>
    %cst_16 = arith.constant dense<0.000000e+00> : vector<2x8x8xf32>
    %136 = vector.multi_reduction <add>, %135, %cst_16 [3] : vector<2x8x8x8xf32> to vector<2x8x8xf32>
    %137 = vector.shape_cast %136 : vector<2x8x8xf32> to vector<2x8x8x1xf32>
    %138 = vector.broadcast %137 : vector<2x8x8x1xf32> to vector<2x8x8x8xf32>
    %139 = arith.divf %135, %138 : vector<2x8x8x8xf32>
    %cst_17 = arith.constant 0.000000e+00 : f32
    %140 = vector.broadcast %cst_17 : f32 to vector<2x8x8x128xf32>
    %c0_18 = arith.constant 0 : index
    %c0_19 = arith.constant 0 : index
    %c0_20 = arith.constant 0 : index
    %c0_21 = arith.constant 0 : index
    %141 = vector.load %arg12[%c0_18, %c0_19, %c0_20, %c0_21] : memref<2x8x8x128xf32, #tpu.memory_space<vmem>>, vector<2x8x8x128xf32>
    tpu.vector_store %arg12[%c0_18, %c0_19, %c0_20, %c0_21], %140 {strides = array<i32>} : memref<2x8x8x128xf32, #tpu.memory_space<vmem>>, vector<2x8x8x128xf32>,
    %c0_22 = arith.constant 0 : index
    %c0_23 = arith.constant 0 : index
    %c0_24 = arith.constant 0 : index
    %c0_25 = arith.constant 0 : index
    %142 = vector.load %arg12[%c0_22, %c0_23, %c0_24, %c0_25] : memref<2x8x8x128xf32, #tpu.memory_space<vmem>>, vector<2x8x8x8xf32>
    tpu.vector_store %arg12[%c0_22, %c0_23, %c0_24, %c0_25], %139 {strides = array<i32>} : memref<2x8x8x128xf32, #tpu.memory_space<vmem>>, vector<2x8x8x8xf32>,
    %143 = vector.shape_cast %139 : vector<2x8x8x8xf32> to vector<16x8x8xf32>
    "tpu.trace_start"() <{level = 10 : i32, message = "gqk,gkv->gqv"}> : () -> ()
    %cst_26 = arith.constant dense<0.000000e+00> : vector<16x8x64xf32>
    %144 = tpu.matmul %143, %120, %cst_26 {dimension_numbers = #tpu.dot_dimension_numbers<[2], [1], [1], [2], [0, 0, 0, 1, 1, 2], [0], [0]>} : vector<16x8x8xf32>, vector<16x8x64xf32>, vector<16x8x64xf32> -> vector<16x8x64xf32>
    "tpu.trace_stop"() : () -> ()
    %145 = vector.extract_strided_slice %144 {offsets = [0, 0, 0], sizes = [1, 8, 64], strides = [1, 1, 1]} : vector<16x8x64xf32> to vector<1x8x64xf32>
    %146 = vector.shape_cast %145 : vector<1x8x64xf32> to vector<8x64xf32>
    %c0_27 = arith.constant 0 : index
    %c0_28 = arith.constant 0 : index
    %147 = vector.load %arg14[%c0_27, %c0_28] : memref<16x512xf32, #tpu.memory_space<vmem>>, vector<8x64xf32>
    tpu.vector_store %arg14[%c0_27, %c0_28], %146 {strides = array<i32>} : memref<16x512xf32, #tpu.memory_space<vmem>>, vector<8x64xf32>,
    %148 = vector.extract_strided_slice %144 {offsets = [1, 0, 0], sizes = [1, 8, 64], strides = [1, 1, 1]} : vector<16x8x64xf32> to vector<1x8x64xf32>
    %149 = vector.shape_cast %148 : vector<1x8x64xf32> to vector<8x64xf32>
    %c0_29 = arith.constant 0 : index
    %c64 = arith.constant 64 : index
    %150 = vector.load %arg14[%c0_29, %c64] : memref<16x512xf32, #tpu.memory_space<vmem>>, vector<8x64xf32>
    tpu.vector_store %arg14[%c0_29, %c64], %149 {strides = array<i32>} : memref<16x512xf32, #tpu.memory_space<vmem>>, vector<8x64xf32>,
    %151 = vector.extract_strided_slice %144 {offsets = [2, 0, 0], sizes = [1, 8, 64], strides = [1, 1, 1]} : vector<16x8x64xf32> to vector<1x8x64xf32>
    %152 = vector.shape_cast %151 : vector<1x8x64xf32> to vector<8x64xf32>
    %c0_30 = arith.constant 0 : index
    %c128 = arith.constant 128 : index
    %153 = vector.load %arg14[%c0_30, %c128] : memref<16x512xf32, #tpu.memory_space<vmem>>, vector<8x64xf32>
    tpu.vector_store %arg14[%c0_30, %c128], %152 {strides = array<i32>} : memref<16x512xf32, #tpu.memory_space<vmem>>, vector<8x64xf32>,
    %154 = vector.extract_strided_slice %144 {offsets = [3, 0, 0], sizes = [1, 8, 64], strides = [1, 1, 1]} : vector<16x8x64xf32> to vector<1x8x64xf32>
    %155 = vector.shape_cast %154 : vector<1x8x64xf32> to vector<8x64xf32>
    %c0_31 = arith.constant 0 : index
    %c192 = arith.constant 192 : index
    %156 = vector.load %arg14[%c0_31, %c192] : memref<16x512xf32, #tpu.memory_space<vmem>>, vector<8x64xf32>
    tpu.vector_store %arg14[%c0_31, %c192], %155 {strides = array<i32>} : memref<16x512xf32, #tpu.memory_space<vmem>>, vector<8x64xf32>,
    %157 = vector.extract_strided_slice %144 {offsets = [4, 0, 0], sizes = [1, 8, 64], strides = [1, 1, 1]} : vector<16x8x64xf32> to vector<1x8x64xf32>
    %158 = vector.shape_cast %157 : vector<1x8x64xf32> to vector<8x64xf32>
    %c0_32 = arith.constant 0 : index
    %c256 = arith.constant 256 : index
    %159 = vector.load %arg14[%c0_32, %c256] : memref<16x512xf32, #tpu.memory_space<vmem>>, vector<8x64xf32>
    tpu.vector_store %arg14[%c0_32, %c256], %158 {strides = array<i32>} : memref<16x512xf32, #tpu.memory_space<vmem>>, vector<8x64xf32>,
    %160 = vector.extract_strided_slice %144 {offsets = [5, 0, 0], sizes = [1, 8, 64], strides = [1, 1, 1]} : vector<16x8x64xf32> to vector<1x8x64xf32>
    %161 = vector.shape_cast %160 : vector<1x8x64xf32> to vector<8x64xf32>
    %c0_33 = arith.constant 0 : index
    %c320 = arith.constant 320 : index
    %162 = vector.load %arg14[%c0_33, %c320] : memref<16x512xf32, #tpu.memory_space<vmem>>, vector<8x64xf32>
    tpu.vector_store %arg14[%c0_33, %c320], %161 {strides = array<i32>} : memref<16x512xf32, #tpu.memory_space<vmem>>, vector<8x64xf32>,
    %163 = vector.extract_strided_slice %144 {offsets = [6, 0, 0], sizes = [1, 8, 64], strides = [1, 1, 1]} : vector<16x8x64xf32> to vector<1x8x64xf32>
    %164 = vector.shape_cast %163 : vector<1x8x64xf32> to vector<8x64xf32>
    %c0_34 = arith.constant 0 : index
    %c384 = arith.constant 384 : index
    %165 = vector.load %arg14[%c0_34, %c384] : memref<16x512xf32, #tpu.memory_space<vmem>>, vector<8x64xf32>
    tpu.vector_store %arg14[%c0_34, %c384], %164 {strides = array<i32>} : memref<16x512xf32, #tpu.memory_space<vmem>>, vector<8x64xf32>,
    %166 = vector.extract_strided_slice %144 {offsets = [7, 0, 0], sizes = [1, 8, 64], strides = [1, 1, 1]} : vector<16x8x64xf32> to vector<1x8x64xf32>
    %167 = vector.shape_cast %166 : vector<1x8x64xf32> to vector<8x64xf32>
    %c0_35 = arith.constant 0 : index
    %c448 = arith.constant 448 : index
    %168 = vector.load %arg14[%c0_35, %c448] : memref<16x512xf32, #tpu.memory_space<vmem>>, vector<8x64xf32>
    tpu.vector_store %arg14[%c0_35, %c448], %167 {strides = array<i32>} : memref<16x512xf32, #tpu.memory_space<vmem>>, vector<8x64xf32>,
    %169 = vector.extract_strided_slice %144 {offsets = [8, 0, 0], sizes = [1, 8, 64], strides = [1, 1, 1]} : vector<16x8x64xf32> to vector<1x8x64xf32>
    %170 = vector.shape_cast %169 : vector<1x8x64xf32> to vector<8x64xf32>
    %c8 = arith.constant 8 : index
    %c0_36 = arith.constant 0 : index
    %171 = vector.load %arg14[%c8, %c0_36] : memref<16x512xf32, #tpu.memory_space<vmem>>, vector<8x64xf32>
    tpu.vector_store %arg14[%c8, %c0_36], %170 {strides = array<i32>} : memref<16x512xf32, #tpu.memory_space<vmem>>, vector<8x64xf32>,
    %172 = vector.extract_strided_slice %144 {offsets = [9, 0, 0], sizes = [1, 8, 64], strides = [1, 1, 1]} : vector<16x8x64xf32> to vector<1x8x64xf32>
    %173 = vector.shape_cast %172 : vector<1x8x64xf32> to vector<8x64xf32>
    %c8_37 = arith.constant 8 : index
    %c64_38 = arith.constant 64 : index
    %174 = vector.load %arg14[%c8_37, %c64_38] : memref<16x512xf32, #tpu.memory_space<vmem>>, vector<8x64xf32>
    tpu.vector_store %arg14[%c8_37, %c64_38], %173 {strides = array<i32>} : memref<16x512xf32, #tpu.memory_space<vmem>>, vector<8x64xf32>,
    %175 = vector.extract_strided_slice %144 {offsets = [10, 0, 0], sizes = [1, 8, 64], strides = [1, 1, 1]} : vector<16x8x64xf32> to vector<1x8x64xf32>
    %176 = vector.shape_cast %175 : vector<1x8x64xf32> to vector<8x64xf32>
    %c8_39 = arith.constant 8 : index
    %c128_40 = arith.constant 128 : index
    %177 = vector.load %arg14[%c8_39, %c128_40] : memref<16x512xf32, #tpu.memory_space<vmem>>, vector<8x64xf32>
    tpu.vector_store %arg14[%c8_39, %c128_40], %176 {strides = array<i32>} : memref<16x512xf32, #tpu.memory_space<vmem>>, vector<8x64xf32>,
    %178 = vector.extract_strided_slice %144 {offsets = [11, 0, 0], sizes = [1, 8, 64], strides = [1, 1, 1]} : vector<16x8x64xf32> to vector<1x8x64xf32>
    %179 = vector.shape_cast %178 : vector<1x8x64xf32> to vector<8x64xf32>
    %c8_41 = arith.constant 8 : index
    %c192_42 = arith.constant 192 : index
    %180 = vector.load %arg14[%c8_41, %c192_42] : memref<16x512xf32, #tpu.memory_space<vmem>>, vector<8x64xf32>
    tpu.vector_store %arg14[%c8_41, %c192_42], %179 {strides = array<i32>} : memref<16x512xf32, #tpu.memory_space<vmem>>, vector<8x64xf32>,
    %181 = vector.extract_strided_slice %144 {offsets = [12, 0, 0], sizes = [1, 8, 64], strides = [1, 1, 1]} : vector<16x8x64xf32> to vector<1x8x64xf32>
    %182 = vector.shape_cast %181 : vector<1x8x64xf32> to vector<8x64xf32>
    %c8_43 = arith.constant 8 : index
    %c256_44 = arith.constant 256 : index
    %183 = vector.load %arg14[%c8_43, %c256_44] : memref<16x512xf32, #tpu.memory_space<vmem>>, vector<8x64xf32>
    tpu.vector_store %arg14[%c8_43, %c256_44], %182 {strides = array<i32>} : memref<16x512xf32, #tpu.memory_space<vmem>>, vector<8x64xf32>,
    %184 = vector.extract_strided_slice %144 {offsets = [13, 0, 0], sizes = [1, 8, 64], strides = [1, 1, 1]} : vector<16x8x64xf32> to vector<1x8x64xf32>
    %185 = vector.shape_cast %184 : vector<1x8x64xf32> to vector<8x64xf32>
    %c8_45 = arith.constant 8 : index
    %c320_46 = arith.constant 320 : index
    %186 = vector.load %arg14[%c8_45, %c320_46] : memref<16x512xf32, #tpu.memory_space<vmem>>, vector<8x64xf32>
    tpu.vector_store %arg14[%c8_45, %c320_46], %185 {strides = array<i32>} : memref<16x512xf32, #tpu.memory_space<vmem>>, vector<8x64xf32>,
    %187 = vector.extract_strided_slice %144 {offsets = [14, 0, 0], sizes = [1, 8, 64], strides = [1, 1, 1]} : vector<16x8x64xf32> to vector<1x8x64xf32>
    %188 = vector.shape_cast %187 : vector<1x8x64xf32> to vector<8x64xf32>
    %c8_47 = arith.constant 8 : index
    %c384_48 = arith.constant 384 : index
    %189 = vector.load %arg14[%c8_47, %c384_48] : memref<16x512xf32, #tpu.memory_space<vmem>>, vector<8x64xf32>
    tpu.vector_store %arg14[%c8_47, %c384_48], %188 {strides = array<i32>} : memref<16x512xf32, #tpu.memory_space<vmem>>, vector<8x64xf32>,
    %190 = vector.extract_strided_slice %144 {offsets = [15, 0, 0], sizes = [1, 8, 64], strides = [1, 1, 1]} : vector<16x8x64xf32> to vector<1x8x64xf32>
    %191 = vector.shape_cast %190 : vector<1x8x64xf32> to vector<8x64xf32>
    %c8_49 = arith.constant 8 : index
    %c448_50 = arith.constant 448 : index
    %192 = vector.load %arg14[%c8_49, %c448_50] : memref<16x512xf32, #tpu.memory_space<vmem>>, vector<8x64xf32>
    tpu.vector_store %arg14[%c8_49, %c448_50], %191 {strides = array<i32>} : memref<16x512xf32, #tpu.memory_space<vmem>>, vector<8x64xf32>,
    %c0_51 = arith.constant 0 : index
    %c0_52 = arith.constant 0 : index
    %193 = vector.load %arg14[%c0_51, %c0_52] : memref<16x512xf32, #tpu.memory_space<vmem>>, vector<16x512xf32>
    %cst_53 = arith.constant dense<0.000000e+00> : vector<16x128xf32>
    %194 = tpu.matmul %193, %15, %cst_53 {dimension_numbers = #tpu.dot_dimension_numbers<[1], [0], [0], [1], [0, 0, 1, 1], [], []>} : vector<16x512xf32>, vector<512x128xf32>, vector<16x128xf32> -> vector<16x128xf32>
    %195 = arith.addf %194, %6 : vector<16x128xf32>
    %cst_54 = arith.constant dense<0.000000e+00> : vector<16xf32>
    %196 = vector.multi_reduction <add>, %195, %cst_54 [1] : vector<16x128xf32> to vector<16xf32>
    %197 = vector.shape_cast %196 : vector<16xf32> to vector<16x1xf32>
    %cst_55 = arith.constant 0.0333333351 : f32
    %198 = vector.broadcast %cst_55 : f32 to vector<16x1xf32>
    %199 = arith.mulf %197, %198 : vector<16x1xf32>
    %200 = vector.broadcast %199 : vector<16x1xf32> to vector<16x128xf32>
    %201 = arith.subf %195, %200 : vector<16x128xf32>
    %202 = vector.broadcast %4 : vector<1x128xf32> to vector<16x128xf32>
    %203 = arith.mulf %201, %202 : vector<16x128xf32>
    %204 = arith.mulf %203, %203 : vector<16x128xf32>
    %cst_56 = arith.constant dense<0.000000e+00> : vector<16xf32>
    %205 = vector.multi_reduction <add>, %204, %cst_56 [1] : vector<16x128xf32> to vector<16xf32>
    %206 = vector.shape_cast %205 : vector<16xf32> to vector<16x1xf32>
    %cst_57 = arith.constant 0.0333333351 : f32
    %207 = vector.broadcast %cst_57 : f32 to vector<16x1xf32>
    %208 = arith.mulf %206, %207 : vector<16x1xf32>
    %cst_58 = arith.constant 9.99999974E-6 : f32
    %209 = vector.broadcast %cst_58 : f32 to vector<16x1xf32>
    %210 = arith.addf %208, %209 : vector<16x1xf32>
    %211 = math.rsqrt %210 : vector<16x1xf32>
    %212 = vector.broadcast %211 : vector<16x1xf32> to vector<16x128xf32>
    %213 = arith.mulf %203, %212 : vector<16x128xf32>
    %c0_59 = arith.constant 0 : index
    %c0_60 = arith.constant 0 : index
    %214 = vector.load %arg6[%c0_59, %c0_60] : memref<128x512xf32, #tpu.memory_space<vmem>>, vector<128x512xf32>
    %cst_61 = arith.constant dense<0.000000e+00> : vector<16x512xf32>
    %215 = tpu.matmul %213, %214, %cst_61 {dimension_numbers = #tpu.dot_dimension_numbers<[1], [0], [0], [1], [0, 0, 1, 1], [], []>} : vector<16x128xf32>, vector<128x512xf32>, vector<16x512xf32> -> vector<16x512xf32>
    %c0_62 = arith.constant 0 : index
    %c0_63 = arith.constant 0 : index
    %216 = vector.load %arg7[%c0_62, %c0_63] : memref<128x1024xf32, #tpu.memory_space<vmem>>, vector<128x1024xf32>
    %cst_64 = arith.constant dense<0.000000e+00> : vector<16x1024xf32>
    %217 = tpu.matmul %8, %216, %cst_64 {dimension_numbers = #tpu.dot_dimension_numbers<[1], [0], [0], [1], [0, 0, 1, 1], [], []>} : vector<16x128xf32>, vector<128x1024xf32>, vector<16x1024xf32> -> vector<16x1024xf32>
    %218 = vector.extract_strided_slice %217 {offsets = [0, 0], sizes = [16, 512], strides = [1, 1]} : vector<16x1024xf32> to vector<16x512xf32>
    %219 = vector.extract_strided_slice %217 {offsets = [0, 512], sizes = [16, 512], strides = [1, 1]} : vector<16x1024xf32> to vector<16x512xf32>
    %c0_65 = arith.constant 0 : index
    %c0_66 = arith.constant 0 : index
    %c0_67 = arith.constant 0 : index
    %220 = vector.load %arg3[%c0_65, %c0_66, %c0_67] : memref<2x8x128xf32, #tpu.memory_space<vmem>>, vector<2x8x128xf32>
    %c0_68 = arith.constant 0 : index
    %c0_69 = arith.constant 0 : index
    %221 = vector.load %arg8[%c0_68, %c0_69] : memref<512x128xf32, #tpu.memory_space<vmem>>, vector<512x128xf32>
    %222 = vector.extract_strided_slice %215 {offsets = [0, 0], sizes = [8, 512], strides = [1, 1]} : vector<16x512xf32> to vector<8x512xf32>
    %223 = vector.extract_strided_slice %222 {offsets = [0, 0], sizes = [8, 64], strides = [1, 1]} : vector<8x512xf32> to vector<8x64xf32>
    %224 = vector.extract_strided_slice %222 {offsets = [0, 64], sizes = [8, 64], strides = [1, 1]} : vector<8x512xf32> to vector<8x64xf32>
    %225 = vector.extract_strided_slice %222 {offsets = [0, 128], sizes = [8, 64], strides = [1, 1]} : vector<8x512xf32> to vector<8x64xf32>
    %226 = vector.extract_strided_slice %222 {offsets = [0, 192], sizes = [8, 64], strides = [1, 1]} : vector<8x512xf32> to vector<8x64xf32>
    %227 = vector.extract_strided_slice %222 {offsets = [0, 256], sizes = [8, 64], strides = [1, 1]} : vector<8x512xf32> to vector<8x64xf32>
    %228 = vector.extract_strided_slice %222 {offsets = [0, 320], sizes = [8, 64], strides = [1, 1]} : vector<8x512xf32> to vector<8x64xf32>
    %229 = vector.extract_strided_slice %222 {offsets = [0, 384], sizes = [8, 64], strides = [1, 1]} : vector<8x512xf32> to vector<8x64xf32>
    %230 = vector.extract_strided_slice %222 {offsets = [0, 448], sizes = [8, 64], strides = [1, 1]} : vector<8x512xf32> to vector<8x64xf32>
    %231 = vector.extract_strided_slice %215 {offsets = [8, 0], sizes = [8, 512], strides = [1, 1]} : vector<16x512xf32> to vector<8x512xf32>
    %232 = vector.extract_strided_slice %231 {offsets = [0, 0], sizes = [8, 64], strides = [1, 1]} : vector<8x512xf32> to vector<8x64xf32>
    %233 = vector.extract_strided_slice %231 {offsets = [0, 64], sizes = [8, 64], strides = [1, 1]} : vector<8x512xf32> to vector<8x64xf32>
    %234 = vector.extract_strided_slice %231 {offsets = [0, 128], sizes = [8, 64], strides = [1, 1]} : vector<8x512xf32> to vector<8x64xf32>
    %235 = vector.extract_strided_slice %231 {offsets = [0, 192], sizes = [8, 64], strides = [1, 1]} : vector<8x512xf32> to vector<8x64xf32>
    %236 = vector.extract_strided_slice %231 {offsets = [0, 256], sizes = [8, 64], strides = [1, 1]} : vector<8x512xf32> to vector<8x64xf32>
    %237 = vector.extract_strided_slice %231 {offsets = [0, 320], sizes = [8, 64], strides = [1, 1]} : vector<8x512xf32> to vector<8x64xf32>
    %238 = vector.extract_strided_slice %231 {offsets = [0, 384], sizes = [8, 64], strides = [1, 1]} : vector<8x512xf32> to vector<8x64xf32>
    %239 = vector.extract_strided_slice %231 {offsets = [0, 448], sizes = [8, 64], strides = [1, 1]} : vector<8x512xf32> to vector<8x64xf32>
    %240 = vector.shape_cast %223 : vector<8x64xf32> to vector<1x8x64xf32>
    %241 = vector.shape_cast %224 : vector<8x64xf32> to vector<1x8x64xf32>
    %242 = vector.shape_cast %225 : vector<8x64xf32> to vector<1x8x64xf32>
    %243 = vector.shape_cast %226 : vector<8x64xf32> to vector<1x8x64xf32>
    %244 = vector.shape_cast %227 : vector<8x64xf32> to vector<1x8x64xf32>
    %245 = vector.shape_cast %228 : vector<8x64xf32> to vector<1x8x64xf32>
    %246 = vector.shape_cast %229 : vector<8x64xf32> to vector<1x8x64xf32>
    %247 = vector.shape_cast %230 : vector<8x64xf32> to vector<1x8x64xf32>
    %248 = vector.shape_cast %232 : vector<8x64xf32> to vector<1x8x64xf32>
    %249 = vector.shape_cast %233 : vector<8x64xf32> to vector<1x8x64xf32>
    %250 = vector.shape_cast %234 : vector<8x64xf32> to vector<1x8x64xf32>
    %251 = vector.shape_cast %235 : vector<8x64xf32> to vector<1x8x64xf32>
    %252 = vector.shape_cast %236 : vector<8x64xf32> to vector<1x8x64xf32>
    %253 = vector.shape_cast %237 : vector<8x64xf32> to vector<1x8x64xf32>
    %254 = vector.shape_cast %238 : vector<8x64xf32> to vector<1x8x64xf32>
    %255 = vector.shape_cast %239 : vector<8x64xf32> to vector<1x8x64xf32>
    %256 = tpu.concatenate %240, %241, %242, %243, %244, %245, %246, %247, %248, %249, %250, %251, %252, %253, %254, %255 in 0 : vector<1x8x64xf32>, vector<1x8x64xf32>, vector<1x8x64xf32>, vector<1x8x64xf32>, vector<1x8x64xf32>, vector<1x8x64xf32>, vector<1x8x64xf32>, vector<1x8x64xf32>, vector<1x8x64xf32>, vector<1x8x64xf32>, vector<1x8x64xf32>, vector<1x8x64xf32>, vector<1x8x64xf32>, vector<1x8x64xf32>, vector<1x8x64xf32>, vector<1x8x64xf32> -> vector<16x8x64xf32>
    %257 = vector.extract_strided_slice %218 {offsets = [0, 0], sizes = [8, 512], strides = [1, 1]} : vector<16x512xf32> to vector<8x512xf32>
    %258 = vector.extract_strided_slice %257 {offsets = [0, 0], sizes = [8, 64], strides = [1, 1]} : vector<8x512xf32> to vector<8x64xf32>
    %259 = vector.extract_strided_slice %257 {offsets = [0, 64], sizes = [8, 64], strides = [1, 1]} : vector<8x512xf32> to vector<8x64xf32>
    %260 = vector.extract_strided_slice %257 {offsets = [0, 128], sizes = [8, 64], strides = [1, 1]} : vector<8x512xf32> to vector<8x64xf32>
    %261 = vector.extract_strided_slice %257 {offsets = [0, 192], sizes = [8, 64], strides = [1, 1]} : vector<8x512xf32> to vector<8x64xf32>
    %262 = vector.extract_strided_slice %257 {offsets = [0, 256], sizes = [8, 64], strides = [1, 1]} : vector<8x512xf32> to vector<8x64xf32>
    %263 = vector.extract_strided_slice %257 {offsets = [0, 320], sizes = [8, 64], strides = [1, 1]} : vector<8x512xf32> to vector<8x64xf32>
    %264 = vector.extract_strided_slice %257 {offsets = [0, 384], sizes = [8, 64], strides = [1, 1]} : vector<8x512xf32> to vector<8x64xf32>
    %265 = vector.extract_strided_slice %257 {offsets = [0, 448], sizes = [8, 64], strides = [1, 1]} : vector<8x512xf32> to vector<8x64xf32>
    %266 = vector.extract_strided_slice %218 {offsets = [8, 0], sizes = [8, 512], strides = [1, 1]} : vector<16x512xf32> to vector<8x512xf32>
    %267 = vector.extract_strided_slice %266 {offsets = [0, 0], sizes = [8, 64], strides = [1, 1]} : vector<8x512xf32> to vector<8x64xf32>
    %268 = vector.extract_strided_slice %266 {offsets = [0, 64], sizes = [8, 64], strides = [1, 1]} : vector<8x512xf32> to vector<8x64xf32>
    %269 = vector.extract_strided_slice %266 {offsets = [0, 128], sizes = [8, 64], strides = [1, 1]} : vector<8x512xf32> to vector<8x64xf32>
    %270 = vector.extract_strided_slice %266 {offsets = [0, 192], sizes = [8, 64], strides = [1, 1]} : vector<8x512xf32> to vector<8x64xf32>
    %271 = vector.extract_strided_slice %266 {offsets = [0, 256], sizes = [8, 64], strides = [1, 1]} : vector<8x512xf32> to vector<8x64xf32>
    %272 = vector.extract_strided_slice %266 {offsets = [0, 320], sizes = [8, 64], strides = [1, 1]} : vector<8x512xf32> to vector<8x64xf32>
    %273 = vector.extract_strided_slice %266 {offsets = [0, 384], sizes = [8, 64], strides = [1, 1]} : vector<8x512xf32> to vector<8x64xf32>
    %274 = vector.extract_strided_slice %266 {offsets = [0, 448], sizes = [8, 64], strides = [1, 1]} : vector<8x512xf32> to vector<8x64xf32>
    %275 = vector.shape_cast %258 : vector<8x64xf32> to vector<1x8x64xf32>
    %276 = vector.shape_cast %259 : vector<8x64xf32> to vector<1x8x64xf32>
    %277 = vector.shape_cast %260 : vector<8x64xf32> to vector<1x8x64xf32>
    %278 = vector.shape_cast %261 : vector<8x64xf32> to vector<1x8x64xf32>
    %279 = vector.shape_cast %262 : vector<8x64xf32> to vector<1x8x64xf32>
    %280 = vector.shape_cast %263 : vector<8x64xf32> to vector<1x8x64xf32>
    %281 = vector.shape_cast %264 : vector<8x64xf32> to vector<1x8x64xf32>
    %282 = vector.shape_cast %265 : vector<8x64xf32> to vector<1x8x64xf32>
    %283 = vector.shape_cast %267 : vector<8x64xf32> to vector<1x8x64xf32>
    %284 = vector.shape_cast %268 : vector<8x64xf32> to vector<1x8x64xf32>
    %285 = vector.shape_cast %269 : vector<8x64xf32> to vector<1x8x64xf32>
    %286 = vector.shape_cast %270 : vector<8x64xf32> to vector<1x8x64xf32>
    %287 = vector.shape_cast %271 : vector<8x64xf32> to vector<1x8x64xf32>
    %288 = vector.shape_cast %272 : vector<8x64xf32> to vector<1x8x64xf32>
    %289 = vector.shape_cast %273 : vector<8x64xf32> to vector<1x8x64xf32>
    %290 = vector.shape_cast %274 : vector<8x64xf32> to vector<1x8x64xf32>
    %291 = tpu.concatenate %275, %276, %277, %278, %279, %280, %281, %282, %283, %284, %285, %286, %287, %288, %289, %290 in 0 : vector<1x8x64xf32>, vector<1x8x64xf32>, vector<1x8x64xf32>, vector<1x8x64xf32>, vector<1x8x64xf32>, vector<1x8x64xf32>, vector<1x8x64xf32>, vector<1x8x64xf32>, vector<1x8x64xf32>, vector<1x8x64xf32>, vector<1x8x64xf32>, vector<1x8x64xf32>, vector<1x8x64xf32>, vector<1x8x64xf32>, vector<1x8x64xf32>, vector<1x8x64xf32> -> vector<16x8x64xf32>
    %292 = vector.extract_strided_slice %219 {offsets = [0, 0], sizes = [8, 512], strides = [1, 1]} : vector<16x512xf32> to vector<8x512xf32>
    %293 = vector.extract_strided_slice %292 {offsets = [0, 0], sizes = [8, 64], strides = [1, 1]} : vector<8x512xf32> to vector<8x64xf32>
    %294 = vector.extract_strided_slice %292 {offsets = [0, 64], sizes = [8, 64], strides = [1, 1]} : vector<8x512xf32> to vector<8x64xf32>
    %295 = vector.extract_strided_slice %292 {offsets = [0, 128], sizes = [8, 64], strides = [1, 1]} : vector<8x512xf32> to vector<8x64xf32>
    %296 = vector.extract_strided_slice %292 {offsets = [0, 192], sizes = [8, 64], strides = [1, 1]} : vector<8x512xf32> to vector<8x64xf32>
    %297 = vector.extract_strided_slice %292 {offsets = [0, 256], sizes = [8, 64], strides = [1, 1]} : vector<8x512xf32> to vector<8x64xf32>
    %298 = vector.extract_strided_slice %292 {offsets = [0, 320], sizes = [8, 64], strides = [1, 1]} : vector<8x512xf32> to vector<8x64xf32>
    %299 = vector.extract_strided_slice %292 {offsets = [0, 384], sizes = [8, 64], strides = [1, 1]} : vector<8x512xf32> to vector<8x64xf32>
    %300 = vector.extract_strided_slice %292 {offsets = [0, 448], sizes = [8, 64], strides = [1, 1]} : vector<8x512xf32> to vector<8x64xf32>
    %301 = vector.extract_strided_slice %219 {offsets = [8, 0], sizes = [8, 512], strides = [1, 1]} : vector<16x512xf32> to vector<8x512xf32>
    %302 = vector.extract_strided_slice %301 {offsets = [0, 0], sizes = [8, 64], strides = [1, 1]} : vector<8x512xf32> to vector<8x64xf32>
    %303 = vector.extract_strided_slice %301 {offsets = [0, 64], sizes = [8, 64], strides = [1, 1]} : vector<8x512xf32> to vector<8x64xf32>
    %304 = vector.extract_strided_slice %301 {offsets = [0, 128], sizes = [8, 64], strides = [1, 1]} : vector<8x512xf32> to vector<8x64xf32>
    %305 = vector.extract_strided_slice %301 {offsets = [0, 192], sizes = [8, 64], strides = [1, 1]} : vector<8x512xf32> to vector<8x64xf32>
    %306 = vector.extract_strided_slice %301 {offsets = [0, 256], sizes = [8, 64], strides = [1, 1]} : vector<8x512xf32> to vector<8x64xf32>
    %307 = vector.extract_strided_slice %301 {offsets = [0, 320], sizes = [8, 64], strides = [1, 1]} : vector<8x512xf32> to vector<8x64xf32>
    %308 = vector.extract_strided_slice %301 {offsets = [0, 384], sizes = [8, 64], strides = [1, 1]} : vector<8x512xf32> to vector<8x64xf32>
    %309 = vector.extract_strided_slice %301 {offsets = [0, 448], sizes = [8, 64], strides = [1, 1]} : vector<8x512xf32> to vector<8x64xf32>
    %310 = vector.shape_cast %293 : vector<8x64xf32> to vector<1x8x64xf32>
    %311 = vector.shape_cast %294 : vector<8x64xf32> to vector<1x8x64xf32>
    %312 = vector.shape_cast %295 : vector<8x64xf32> to vector<1x8x64xf32>
    %313 = vector.shape_cast %296 : vector<8x64xf32> to vector<1x8x64xf32>
    %314 = vector.shape_cast %297 : vector<8x64xf32> to vector<1x8x64xf32>
    %315 = vector.shape_cast %298 : vector<8x64xf32> to vector<1x8x64xf32>
    %316 = vector.shape_cast %299 : vector<8x64xf32> to vector<1x8x64xf32>
    %317 = vector.shape_cast %300 : vector<8x64xf32> to vector<1x8x64xf32>
    %318 = vector.shape_cast %302 : vector<8x64xf32> to vector<1x8x64xf32>
    %319 = vector.shape_cast %303 : vector<8x64xf32> to vector<1x8x64xf32>
    %320 = vector.shape_cast %304 : vector<8x64xf32> to vector<1x8x64xf32>
    %321 = vector.shape_cast %305 : vector<8x64xf32> to vector<1x8x64xf32>
    %322 = vector.shape_cast %306 : vector<8x64xf32> to vector<1x8x64xf32>
    %323 = vector.shape_cast %307 : vector<8x64xf32> to vector<1x8x64xf32>
    %324 = vector.shape_cast %308 : vector<8x64xf32> to vector<1x8x64xf32>
    %325 = vector.shape_cast %309 : vector<8x64xf32> to vector<1x8x64xf32>
    %326 = tpu.concatenate %310, %311, %312, %313, %314, %315, %316, %317, %318, %319, %320, %321, %322, %323, %324, %325 in 0 : vector<1x8x64xf32>, vector<1x8x64xf32>, vector<1x8x64xf32>, vector<1x8x64xf32>, vector<1x8x64xf32>, vector<1x8x64xf32>, vector<1x8x64xf32>, vector<1x8x64xf32>, vector<1x8x64xf32>, vector<1x8x64xf32>, vector<1x8x64xf32>, vector<1x8x64xf32>, vector<1x8x64xf32>, vector<1x8x64xf32>, vector<1x8x64xf32>, vector<1x8x64xf32> -> vector<16x8x64xf32>
    "tpu.trace_start"() <{level = 10 : i32, message = "gqd,gkd->gqk"}> : () -> ()
    %cst_70 = arith.constant dense<0.000000e+00> : vector<16x8x8xf32>
    %327 = tpu.matmul %256, %291, %cst_70 {dimension_numbers = #tpu.dot_dimension_numbers<[2], [2], [1], [1], [0, 0, 0, 1, 1, 1], [0], [0]>} : vector<16x8x64xf32>, vector<16x8x64xf32>, vector<16x8x8xf32> -> vector<16x8x8xf32>
    "tpu.trace_stop"() : () -> ()
    %328 = vector.shape_cast %327 : vector<16x8x8xf32> to vector<2x8x8x8xf32>
    %329 = vector.extract_strided_slice %220 {offsets = [0, 0, 0], sizes = [2, 8, 8], strides = [1, 1, 1]} : vector<2x8x128xf32> to vector<2x8x8xf32>
    %330 = vector.shape_cast %329 : vector<2x8x8xf32> to vector<2x1x8x8xf32>
    %cst_71 = arith.constant 5.000000e-01 : f32
    %331 = vector.broadcast %cst_71 : f32 to vector<2x1x8x8xf32>
    %332 = arith.cmpf ogt, %330, %331 : vector<2x1x8x8xf32>
    %cst_72 = arith.constant -1.000000e+04 : f32
    %333 = vector.shape_cast %332 : vector<2x1x8x8xi1> to vector<2x1x8x8xi1>
    %334 = vector.broadcast %333 : vector<2x1x8x8xi1> to vector<2x8x8x8xi1>
    %335 = vector.broadcast %cst_72 : f32 to vector<2x8x8x8xf32>
    %336 = arith.select %334, %335, %328 : vector<2x8x8x8xi1>, vector<2x8x8x8xf32>
    %cst_73 = arith.constant dense<0xFF800000> : vector<2x8x8xf32>
    %337 = vector.multi_reduction <maximumf>, %336, %cst_73 [3] : vector<2x8x8x8xf32> to vector<2x8x8xf32>
    %338 = vector.shape_cast %337 : vector<2x8x8xf32> to vector<2x8x8x1xf32>
    %339 = vector.broadcast %338 : vector<2x8x8x1xf32> to vector<2x8x8x8xf32>
    %340 = arith.subf %336, %339 : vector<2x8x8x8xf32>
    %341 = math.exp %340 : vector<2x8x8x8xf32>
    %cst_74 = arith.constant dense<0.000000e+00> : vector<2x8x8xf32>
    %342 = vector.multi_reduction <add>, %341, %cst_74 [3] : vector<2x8x8x8xf32> to vector<2x8x8xf32>
    %343 = vector.shape_cast %342 : vector<2x8x8xf32> to vector<2x8x8x1xf32>
    %344 = vector.broadcast %343 : vector<2x8x8x1xf32> to vector<2x8x8x8xf32>
    %345 = arith.divf %341, %344 : vector<2x8x8x8xf32>
    %cst_75 = arith.constant 0.000000e+00 : f32
    %346 = vector.broadcast %cst_75 : f32 to vector<2x8x8x128xf32>
    %c0_76 = arith.constant 0 : index
    %c0_77 = arith.constant 0 : index
    %c0_78 = arith.constant 0 : index
    %c0_79 = arith.constant 0 : index
    %347 = vector.load %arg13[%c0_76, %c0_77, %c0_78, %c0_79] : memref<2x8x8x128xf32, #tpu.memory_space<vmem>>, vector<2x8x8x128xf32>
    tpu.vector_store %arg13[%c0_76, %c0_77, %c0_78, %c0_79], %346 {strides = array<i32>} : memref<2x8x8x128xf32, #tpu.memory_space<vmem>>, vector<2x8x8x128xf32>,
    %c0_80 = arith.constant 0 : index
    %c0_81 = arith.constant 0 : index
    %c0_82 = arith.constant 0 : index
    %c0_83 = arith.constant 0 : index
    %348 = vector.load %arg13[%c0_80, %c0_81, %c0_82, %c0_83] : memref<2x8x8x128xf32, #tpu.memory_space<vmem>>, vector<2x8x8x8xf32>
    tpu.vector_store %arg13[%c0_80, %c0_81, %c0_82, %c0_83], %345 {strides = array<i32>} : memref<2x8x8x128xf32, #tpu.memory_space<vmem>>, vector<2x8x8x8xf32>,
    %349 = vector.shape_cast %345 : vector<2x8x8x8xf32> to vector<16x8x8xf32>
    "tpu.trace_start"() <{level = 10 : i32, message = "gqk,gkv->gqv"}> : () -> ()
    %cst_84 = arith.constant dense<0.000000e+00> : vector<16x8x64xf32>
    %350 = tpu.matmul %349, %326, %cst_84 {dimension_numbers = #tpu.dot_dimension_numbers<[2], [1], [1], [2], [0, 0, 0, 1, 1, 2], [0], [0]>} : vector<16x8x8xf32>, vector<16x8x64xf32>, vector<16x8x64xf32> -> vector<16x8x64xf32>
    "tpu.trace_stop"() : () -> ()
    %351 = vector.extract_strided_slice %350 {offsets = [0, 0, 0], sizes = [1, 8, 64], strides = [1, 1, 1]} : vector<16x8x64xf32> to vector<1x8x64xf32>
    %352 = vector.shape_cast %351 : vector<1x8x64xf32> to vector<8x64xf32>
    %c0_85 = arith.constant 0 : index
    %c0_86 = arith.constant 0 : index
    %353 = vector.load %arg14[%c0_85, %c0_86] : memref<16x512xf32, #tpu.memory_space<vmem>>, vector<8x64xf32>
    tpu.vector_store %arg14[%c0_85, %c0_86], %352 {strides = array<i32>} : memref<16x512xf32, #tpu.memory_space<vmem>>, vector<8x64xf32>,
    %354 = vector.extract_strided_slice %350 {offsets = [1, 0, 0], sizes = [1, 8, 64], strides = [1, 1, 1]} : vector<16x8x64xf32> to vector<1x8x64xf32>
    %355 = vector.shape_cast %354 : vector<1x8x64xf32> to vector<8x64xf32>
    %c0_87 = arith.constant 0 : index
    %c64_88 = arith.constant 64 : index
    %356 = vector.load %arg14[%c0_87, %c64_88] : memref<16x512xf32, #tpu.memory_space<vmem>>, vector<8x64xf32>
    tpu.vector_store %arg14[%c0_87, %c64_88], %355 {strides = array<i32>} : memref<16x512xf32, #tpu.memory_space<vmem>>, vector<8x64xf32>,
    %357 = vector.extract_strided_slice %350 {offsets = [2, 0, 0], sizes = [1, 8, 64], strides = [1, 1, 1]} : vector<16x8x64xf32> to vector<1x8x64xf32>
    %358 = vector.shape_cast %357 : vector<1x8x64xf32> to vector<8x64xf32>
    %c0_89 = arith.constant 0 : index
    %c128_90 = arith.constant 128 : index
    %359 = vector.load %arg14[%c0_89, %c128_90] : memref<16x512xf32, #tpu.memory_space<vmem>>, vector<8x64xf32>
    tpu.vector_store %arg14[%c0_89, %c128_90], %358 {strides = array<i32>} : memref<16x512xf32, #tpu.memory_space<vmem>>, vector<8x64xf32>,
    %360 = vector.extract_strided_slice %350 {offsets = [3, 0, 0], sizes = [1, 8, 64], strides = [1, 1, 1]} : vector<16x8x64xf32> to vector<1x8x64xf32>
    %361 = vector.shape_cast %360 : vector<1x8x64xf32> to vector<8x64xf32>
    %c0_91 = arith.constant 0 : index
    %c192_92 = arith.constant 192 : index
    %362 = vector.load %arg14[%c0_91, %c192_92] : memref<16x512xf32, #tpu.memory_space<vmem>>, vector<8x64xf32>
    tpu.vector_store %arg14[%c0_91, %c192_92], %361 {strides = array<i32>} : memref<16x512xf32, #tpu.memory_space<vmem>>, vector<8x64xf32>,
    %363 = vector.extract_strided_slice %350 {offsets = [4, 0, 0], sizes = [1, 8, 64], strides = [1, 1, 1]} : vector<16x8x64xf32> to vector<1x8x64xf32>
    %364 = vector.shape_cast %363 : vector<1x8x64xf32> to vector<8x64xf32>
    %c0_93 = arith.constant 0 : index
    %c256_94 = arith.constant 256 : index
    %365 = vector.load %arg14[%c0_93, %c256_94] : memref<16x512xf32, #tpu.memory_space<vmem>>, vector<8x64xf32>
    tpu.vector_store %arg14[%c0_93, %c256_94], %364 {strides = array<i32>} : memref<16x512xf32, #tpu.memory_space<vmem>>, vector<8x64xf32>,
    %366 = vector.extract_strided_slice %350 {offsets = [5, 0, 0], sizes = [1, 8, 64], strides = [1, 1, 1]} : vector<16x8x64xf32> to vector<1x8x64xf32>
    %367 = vector.shape_cast %366 : vector<1x8x64xf32> to vector<8x64xf32>
    %c0_95 = arith.constant 0 : index
    %c320_96 = arith.constant 320 : index
    %368 = vector.load %arg14[%c0_95, %c320_96] : memref<16x512xf32, #tpu.memory_space<vmem>>, vector<8x64xf32>
    tpu.vector_store %arg14[%c0_95, %c320_96], %367 {strides = array<i32>} : memref<16x512xf32, #tpu.memory_space<vmem>>, vector<8x64xf32>,
    %369 = vector.extract_strided_slice %350 {offsets = [6, 0, 0], sizes = [1, 8, 64], strides = [1, 1, 1]} : vector<16x8x64xf32> to vector<1x8x64xf32>
    %370 = vector.shape_cast %369 : vector<1x8x64xf32> to vector<8x64xf32>
    %c0_97 = arith.constant 0 : index
    %c384_98 = arith.constant 384 : index
    %371 = vector.load %arg14[%c0_97, %c384_98] : memref<16x512xf32, #tpu.memory_space<vmem>>, vector<8x64xf32>
    tpu.vector_store %arg14[%c0_97, %c384_98], %370 {strides = array<i32>} : memref<16x512xf32, #tpu.memory_space<vmem>>, vector<8x64xf32>,
    %372 = vector.extract_strided_slice %350 {offsets = [7, 0, 0], sizes = [1, 8, 64], strides = [1, 1, 1]} : vector<16x8x64xf32> to vector<1x8x64xf32>
    %373 = vector.shape_cast %372 : vector<1x8x64xf32> to vector<8x64xf32>
    %c0_99 = arith.constant 0 : index
    %c448_100 = arith.constant 448 : index
    %374 = vector.load %arg14[%c0_99, %c448_100] : memref<16x512xf32, #tpu.memory_space<vmem>>, vector<8x64xf32>
    tpu.vector_store %arg14[%c0_99, %c448_100], %373 {strides = array<i32>} : memref<16x512xf32, #tpu.memory_space<vmem>>, vector<8x64xf32>,
    %375 = vector.extract_strided_slice %350 {offsets = [8, 0, 0], sizes = [1, 8, 64], strides = [1, 1, 1]} : vector<16x8x64xf32> to vector<1x8x64xf32>
    %376 = vector.shape_cast %375 : vector<1x8x64xf32> to vector<8x64xf32>
    %c8_101 = arith.constant 8 : index
    %c0_102 = arith.constant 0 : index
    %377 = vector.load %arg14[%c8_101, %c0_102] : memref<16x512xf32, #tpu.memory_space<vmem>>, vector<8x64xf32>
    tpu.vector_store %arg14[%c8_101, %c0_102], %376 {strides = array<i32>} : memref<16x512xf32, #tpu.memory_space<vmem>>, vector<8x64xf32>,
    %378 = vector.extract_strided_slice %350 {offsets = [9, 0, 0], sizes = [1, 8, 64], strides = [1, 1, 1]} : vector<16x8x64xf32> to vector<1x8x64xf32>
    %379 = vector.shape_cast %378 : vector<1x8x64xf32> to vector<8x64xf32>
    %c8_103 = arith.constant 8 : index
    %c64_104 = arith.constant 64 : index
    %380 = vector.load %arg14[%c8_103, %c64_104] : memref<16x512xf32, #tpu.memory_space<vmem>>, vector<8x64xf32>
    tpu.vector_store %arg14[%c8_103, %c64_104], %379 {strides = array<i32>} : memref<16x512xf32, #tpu.memory_space<vmem>>, vector<8x64xf32>,
    %381 = vector.extract_strided_slice %350 {offsets = [10, 0, 0], sizes = [1, 8, 64], strides = [1, 1, 1]} : vector<16x8x64xf32> to vector<1x8x64xf32>
    %382 = vector.shape_cast %381 : vector<1x8x64xf32> to vector<8x64xf32>
    %c8_105 = arith.constant 8 : index
    %c128_106 = arith.constant 128 : index
    %383 = vector.load %arg14[%c8_105, %c128_106] : memref<16x512xf32, #tpu.memory_space<vmem>>, vector<8x64xf32>
    tpu.vector_store %arg14[%c8_105, %c128_106], %382 {strides = array<i32>} : memref<16x512xf32, #tpu.memory_space<vmem>>, vector<8x64xf32>,
    %384 = vector.extract_strided_slice %350 {offsets = [11, 0, 0], sizes = [1, 8, 64], strides = [1, 1, 1]} : vector<16x8x64xf32> to vector<1x8x64xf32>
    %385 = vector.shape_cast %384 : vector<1x8x64xf32> to vector<8x64xf32>
    %c8_107 = arith.constant 8 : index
    %c192_108 = arith.constant 192 : index
    %386 = vector.load %arg14[%c8_107, %c192_108] : memref<16x512xf32, #tpu.memory_space<vmem>>, vector<8x64xf32>
    tpu.vector_store %arg14[%c8_107, %c192_108], %385 {strides = array<i32>} : memref<16x512xf32, #tpu.memory_space<vmem>>, vector<8x64xf32>,
    %387 = vector.extract_strided_slice %350 {offsets = [12, 0, 0], sizes = [1, 8, 64], strides = [1, 1, 1]} : vector<16x8x64xf32> to vector<1x8x64xf32>
    %388 = vector.shape_cast %387 : vector<1x8x64xf32> to vector<8x64xf32>
    %c8_109 = arith.constant 8 : index
    %c256_110 = arith.constant 256 : index
    %389 = vector.load %arg14[%c8_109, %c256_110] : memref<16x512xf32, #tpu.memory_space<vmem>>, vector<8x64xf32>
    tpu.vector_store %arg14[%c8_109, %c256_110], %388 {strides = array<i32>} : memref<16x512xf32, #tpu.memory_space<vmem>>, vector<8x64xf32>,
    %390 = vector.extract_strided_slice %350 {offsets = [13, 0, 0], sizes = [1, 8, 64], strides = [1, 1, 1]} : vector<16x8x64xf32> to vector<1x8x64xf32>
    %391 = vector.shape_cast %390 : vector<1x8x64xf32> to vector<8x64xf32>
    %c8_111 = arith.constant 8 : index
    %c320_112 = arith.constant 320 : index
    %392 = vector.load %arg14[%c8_111, %c320_112] : memref<16x512xf32, #tpu.memory_space<vmem>>, vector<8x64xf32>
    tpu.vector_store %arg14[%c8_111, %c320_112], %391 {strides = array<i32>} : memref<16x512xf32, #tpu.memory_space<vmem>>, vector<8x64xf32>,
    %393 = vector.extract_strided_slice %350 {offsets = [14, 0, 0], sizes = [1, 8, 64], strides = [1, 1, 1]} : vector<16x8x64xf32> to vector<1x8x64xf32>
    %394 = vector.shape_cast %393 : vector<1x8x64xf32> to vector<8x64xf32>
    %c8_113 = arith.constant 8 : index
    %c384_114 = arith.constant 384 : index
    %395 = vector.load %arg14[%c8_113, %c384_114] : memref<16x512xf32, #tpu.memory_space<vmem>>, vector<8x64xf32>
    tpu.vector_store %arg14[%c8_113, %c384_114], %394 {strides = array<i32>} : memref<16x512xf32, #tpu.memory_space<vmem>>, vector<8x64xf32>,
    %396 = vector.extract_strided_slice %350 {offsets = [15, 0, 0], sizes = [1, 8, 64], strides = [1, 1, 1]} : vector<16x8x64xf32> to vector<1x8x64xf32>
    %397 = vector.shape_cast %396 : vector<1x8x64xf32> to vector<8x64xf32>
    %c8_115 = arith.constant 8 : index
    %c448_116 = arith.constant 448 : index
    %398 = vector.load %arg14[%c8_115, %c448_116] : memref<16x512xf32, #tpu.memory_space<vmem>>, vector<8x64xf32>
    tpu.vector_store %arg14[%c8_115, %c448_116], %397 {strides = array<i32>} : memref<16x512xf32, #tpu.memory_space<vmem>>, vector<8x64xf32>,
    %c0_117 = arith.constant 0 : index
    %c0_118 = arith.constant 0 : index
    %399 = vector.load %arg14[%c0_117, %c0_118] : memref<16x512xf32, #tpu.memory_space<vmem>>, vector<16x512xf32>
    %cst_119 = arith.constant dense<0.000000e+00> : vector<16x128xf32>
    %400 = tpu.matmul %399, %221, %cst_119 {dimension_numbers = #tpu.dot_dimension_numbers<[1], [0], [0], [1], [0, 0, 1, 1], [], []>} : vector<16x512xf32>, vector<512x128xf32>, vector<16x128xf32> -> vector<16x128xf32>
    %401 = arith.addf %400, %213 : vector<16x128xf32>
    %cst_120 = arith.constant dense<0.000000e+00> : vector<16xf32>
    %402 = vector.multi_reduction <add>, %401, %cst_120 [1] : vector<16x128xf32> to vector<16xf32>
    %403 = vector.shape_cast %402 : vector<16xf32> to vector<16x1xf32>
    %cst_121 = arith.constant 0.0333333351 : f32
    %404 = vector.broadcast %cst_121 : f32 to vector<16x1xf32>
    %405 = arith.mulf %403, %404 : vector<16x1xf32>
    %406 = vector.broadcast %405 : vector<16x1xf32> to vector<16x128xf32>
    %407 = arith.subf %401, %406 : vector<16x128xf32>
    %408 = vector.broadcast %4 : vector<1x128xf32> to vector<16x128xf32>
    %409 = arith.mulf %407, %408 : vector<16x128xf32>
    %410 = arith.mulf %409, %409 : vector<16x128xf32>
    %cst_122 = arith.constant dense<0.000000e+00> : vector<16xf32>
    %411 = vector.multi_reduction <add>, %410, %cst_122 [1] : vector<16x128xf32> to vector<16xf32>
    %412 = vector.shape_cast %411 : vector<16xf32> to vector<16x1xf32>
    %cst_123 = arith.constant 0.0333333351 : f32
    %413 = vector.broadcast %cst_123 : f32 to vector<16x1xf32>
    %414 = arith.mulf %412, %413 : vector<16x1xf32>
    %cst_124 = arith.constant 9.99999974E-6 : f32
    %415 = vector.broadcast %cst_124 : f32 to vector<16x1xf32>
    %416 = arith.addf %414, %415 : vector<16x1xf32>
    %417 = math.rsqrt %416 : vector<16x1xf32>
    %418 = vector.broadcast %417 : vector<16x1xf32> to vector<16x128xf32>
    %419 = arith.mulf %409, %418 : vector<16x128xf32>
    %c0_125 = arith.constant 0 : index
    %c0_126 = arith.constant 0 : index
    %420 = vector.load %arg9[%c0_125, %c0_126] : memref<128x1024xf32, #tpu.memory_space<vmem>>, vector<128x1024xf32>
    %cst_127 = arith.constant dense<0.000000e+00> : vector<16x1024xf32>
    %421 = tpu.matmul %419, %420, %cst_127 {dimension_numbers = #tpu.dot_dimension_numbers<[1], [0], [0], [1], [0, 0, 1, 1], [], []>} : vector<16x128xf32>, vector<128x1024xf32>, vector<16x1024xf32> -> vector<16x1024xf32>
    %cst_128 = arith.constant 0.000000e+00 : f32
    %422 = vector.broadcast %cst_128 : f32 to vector<16x1024xf32>
    %423 = arith.maximumf %421, %422 : vector<16x1024xf32>
    %c0_129 = arith.constant 0 : index
    %c0_130 = arith.constant 0 : index
    %424 = vector.load %arg10[%c0_129, %c0_130] : memref<1024x128xf32, #tpu.memory_space<vmem>>, vector<1024x128xf32>
    %cst_131 = arith.constant dense<0.000000e+00> : vector<16x128xf32>
    %425 = tpu.matmul %423, %424, %cst_131 {dimension_numbers = #tpu.dot_dimension_numbers<[1], [0], [0], [1], [0, 0, 1, 1], [], []>} : vector<16x1024xf32>, vector<1024x128xf32>, vector<16x128xf32> -> vector<16x128xf32>
    %426 = arith.addf %425, %419 : vector<16x128xf32>
    %cst_132 = arith.constant dense<0.000000e+00> : vector<16xf32>
    %427 = vector.multi_reduction <add>, %426, %cst_132 [1] : vector<16x128xf32> to vector<16xf32>
    %428 = vector.shape_cast %427 : vector<16xf32> to vector<16x1xf32>
    %cst_133 = arith.constant 0.0333333351 : f32
    %429 = vector.broadcast %cst_133 : f32 to vector<16x1xf32>
    %430 = arith.mulf %428, %429 : vector<16x1xf32>
    %431 = vector.broadcast %430 : vector<16x1xf32> to vector<16x128xf32>
    %432 = arith.subf %426, %431 : vector<16x128xf32>
    %433 = vector.broadcast %4 : vector<1x128xf32> to vector<16x128xf32>
    %434 = arith.mulf %432, %433 : vector<16x128xf32>
    %435 = arith.mulf %434, %434 : vector<16x128xf32>
    %cst_134 = arith.constant dense<0.000000e+00> : vector<16xf32>
    %436 = vector.multi_reduction <add>, %435, %cst_134 [1] : vector<16x128xf32> to vector<16xf32>
    %437 = vector.shape_cast %436 : vector<16xf32> to vector<16x1xf32>
    %cst_135 = arith.constant 0.0333333351 : f32
    %438 = vector.broadcast %cst_135 : f32 to vector<16x1xf32>
    %439 = arith.mulf %437, %438 : vector<16x1xf32>
    %cst_136 = arith.constant 9.99999974E-6 : f32
    %440 = vector.broadcast %cst_136 : f32 to vector<16x1xf32>
    %441 = arith.addf %439, %440 : vector<16x1xf32>
    %442 = math.rsqrt %441 : vector<16x1xf32>
    %443 = vector.broadcast %442 : vector<16x1xf32> to vector<16x128xf32>
    %444 = arith.mulf %434, %443 : vector<16x128xf32>
    %445 = vector.shape_cast %444 : vector<16x128xf32> to vector<2x8x128xf32>
    %c0_137 = arith.constant 0 : index
    %c0_138 = arith.constant 0 : index
    %c0_139 = arith.constant 0 : index
    %446 = vector.load %arg11[%c0_137, %c0_138, %c0_139] : memref<2x8x128xf32, #tpu.memory_space<vmem>>, vector<2x8x128xf32>
    tpu.vector_store %arg11[%c0_137, %c0_138, %c0_139], %445 {strides = array<i32>} : memref<2x8x128xf32, #tpu.memory_space<vmem>>, vector<2x8x128xf32>,
    return
  }
}

</mosaic_0001>

<llo_original>
// kernel: decoder_layer.1
$region0: #{decoder_layer.1}
  #allocation0 [shape = 'u32[]', space=smem, size = 0x4, offset = 0x4, fixed_abs, tag = 'smem constant byte address 0x4 - core index']
  #allocation1 [shape = 'u32[144,128]{1,0:T(1,128)}', space=vmem, size = 0x12000, scoped, tag = 'internal scratch']
  #allocation2 [shape = 'f32[16,512]{1,0:T(8,128)}', space=vmem, size = 0x8000, scoped, tag = 'scratch operand']
  %s0 = inlined_call_operand.vmem [shape: f32[2,8,128], index: 0, kind: input, shape index: {}]
  %s1 = inlined_call_operand.vmem [shape: f32[2,8,128], index: 1, kind: input, shape index: {}]
  %s2 = inlined_call_operand.vmem [shape: f32[2,8,128], index: 2, kind: input, shape index: {}]
  %s3 = inlined_call_operand.vmem [shape: f32[2,8,128], index: 3, kind: input, shape index: {}]
  %s4 = inlined_call_operand.vmem [shape: f32[128,1536], index: 4, kind: input, shape index: {}]
  %s5 = inlined_call_operand.vmem [shape: f32[512,128], index: 5, kind: input, shape index: {}]
  %s6 = inlined_call_operand.vmem [shape: f32[128,512], index: 6, kind: input, shape index: {}]
  %s7 = inlined_call_operand.vmem [shape: f32[128,1024], index: 7, kind: input, shape index: {}]
  %s8 = inlined_call_operand.vmem [shape: f32[512,128], index: 8, kind: input, shape index: {}]
  %s9 = inlined_call_operand.vmem [shape: f32[128,1024], index: 9, kind: input, shape index: {}]
  %s10 = inlined_call_operand.vmem [shape: f32[1024,128], index: 10, kind: input, shape index: {}]
  %s11 = inlined_call_operand.hbm [shape: f32[2,8,128], index: 11, kind: output, shape index: {0}]
  %s12 = inlined_call_operand.hbm [shape: f32[2,8,8,128], index: 12, kind: output, shape index: {1}]
  %s13 = inlined_call_operand.hbm [shape: f32[2,8,8,128], index: 13, kind: output, shape index: {2}]
  %14 = xla_tuple %s11, %s12, %s13
  %s15 = sld [smem:[#allocation0]]
  $region70: #{decoder_layer.1} parent=0
    _
  %s17 = ssub.s32 1, %s15
  %s18 = scalar_select 0, %s17, %s15
  $region1: #{decoder_layer.1} parent=0
    #allocation3 [shape = 'u8[8192]{0}', space=vmem, size = 0x2000, scoped, tag = 'output window, operand 0, single buffered']
    #allocation4 [shape = 's32[1]{0}', space=sflag, size = 0x4, scoped, tag = 'scoped memory for decoder_layer.1']
    #allocation5 [shape = 'u8[65536]{0}', space=vmem, size = 0x10000, scoped, tag = 'output window, operand 1, single buffered']
    #allocation6 [shape = 's32[1]{0}', space=sflag, size = 0x4, scoped, tag = 'scoped memory for decoder_layer.1']
    #allocation7 [shape = 'u8[65536]{0}', space=vmem, size = 0x10000, scoped, tag = 'output window, operand 2, single buffered']
    %19 = vsyncpa [#allocation4], 0
    %20 = vsyncpa [#allocation6], 0
    // Predicated region
    $region2: #{decoder_layer.1} parent=1 // pred_check
      _
    $region3: #{decoder_layer.1} parent=1 // pred_check_branch
      %22 = sbr.rel (0) target = $region5
    $region4: #{decoder_layer.1} parent=1 // pred_region
      _
    $region5: #{decoder_layer.1} parent=1 // pred_fallthru
      _
    // Predicated region
    $region6: #{decoder_layer.1} parent=1 // pred_check
      _
    $region7: #{decoder_layer.1} parent=1 // pred_check_branch
      %24 = sbr.rel (0) target = $region9
    $region8: #{decoder_layer.1} parent=1 // pred_region
      _
    $region9: #{decoder_layer.1} parent=1 // pred_fallthru
      _
    // Predicated region
    $region10: #{decoder_layer.1} parent=1 // pred_check
      _
    $region11: #{decoder_layer.1} parent=1 // pred_check_branch
      %26 = sbr.rel (0) target = $region13
    $region12: #{decoder_layer.1} parent=1 // pred_region
      _
    $region13: #{decoder_layer.1} parent=1 // pred_fallthru
      _
    // Predicated region
    $region14: #{decoder_layer.1} parent=1 // pred_check
      _
    $region15: #{decoder_layer.1} parent=1 // pred_check_branch
      %28 = sbr.rel (0) target = $region17
    $region16: #{decoder_layer.1} parent=1 // pred_region
      _
    $region17: #{decoder_layer.1} parent=1 // pred_fallthru
      _
    // Predicated region
    $region18: #{decoder_layer.1} parent=1 // pred_check
      _
    $region19: #{decoder_layer.1} parent=1 // pred_check_branch
      %30 = sbr.rel (0) target = $region21
    $region20: #{decoder_layer.1} parent=1 // pred_region
      _
    $region21: #{decoder_layer.1} parent=1 // pred_fallthru
      _
    // Predicated region
    $region22: #{decoder_layer.1} parent=1 // pred_check
      _
    $region23: #{decoder_layer.1} parent=1 // pred_check_branch
      %32 = sbr.rel (0) target = $region25
    $region24: #{decoder_layer.1} parent=1 // pred_region
      _
    $region25: #{decoder_layer.1} parent=1 // pred_fallthru
      _
    // Predicated region
    $region26: #{decoder_layer.1} parent=1 // pred_check
      _
    $region27: #{decoder_layer.1} parent=1 // pred_check_branch
      %34 = sbr.rel (0) target = $region29
    $region28: #{decoder_layer.1} parent=1 // pred_region
      _
    $region29: #{decoder_layer.1} parent=1 // pred_fallthru
      _
    // Predicated region
    $region30: #{decoder_layer.1} parent=1 // pred_check
      _
    $region31: #{decoder_layer.1} parent=1 // pred_check_branch
      %36 = sbr.rel (0) target = $region33
    $region32: #{decoder_layer.1} parent=1 // pred_region
      _
    $region33: #{decoder_layer.1} parent=1 // pred_fallthru
      _
    // Predicated region
    $region34: #{decoder_layer.1} parent=1 // pred_check
      _
    $region35: #{decoder_layer.1} parent=1 // pred_check_branch
      %38 = sbr.rel (0) target = $region37
    $region36: #{decoder_layer.1} parent=1 // pred_region
      _
    $region37: #{decoder_layer.1} parent=1 // pred_fallthru
      _
    // Predicated region
    $region38: #{decoder_layer.1} parent=1 // pred_check
      _
    $region39: #{decoder_layer.1} parent=1 // pred_check_branch
      %40 = sbr.rel (0) target = $region41
    $region40: #{decoder_layer.1} parent=1 // pred_region
      _
    $region41: #{decoder_layer.1} parent=1 // pred_fallthru
      _
    // Predicated region
    $region42: #{decoder_layer.1} parent=1 // pred_check
      _
    $region43: #{decoder_layer.1} parent=1 // pred_check_branch
      %42 = sbr.rel (0) target = $region45
    $region44: #{decoder_layer.1} parent=1 // pred_region
      _
    $region45: #{decoder_layer.1} parent=1 // pred_fallthru
      _
    %v43 = vlaneseq
    %v44 = vand.u32 %v43, 127
    %vm45 = vcmp.lt.s32.totalorder %v44, 30
    %v46 = vsel %vm45, 1, 0
    %v47 = vcvt.s32.f32 %v46
    %v48 = vld [vmem:[%s0] sm:$0xff]
    %v49 = vld [vmem:[%s0 + $0x8] sm:$0xff]
    %v50 = vld [vmem:[%s1] sm:$0xff]
    %v51 = vld [vmem:[%s1 + $0x8] sm:$0xff]
    %v52 = vld [vmem:[%s4] sm:$0xff]
    %v53 = vld [vmem:[%s4 + $0x8] sm:$0xff]
    %v54 = vld [vmem:[%s4 + $0x10] sm:$0xff]
    %v55 = vld [vmem:[%s4 + $0x18] sm:$0xff]
    %v56 = vld [vmem:[%s4 + $0x20] sm:$0xff]
    %v57 = vld [vmem:[%s4 + $0x28] sm:$0xff]
    %v58 = vld [vmem:[%s4 + $0x30] sm:$0xff]
    %v59 = vld [vmem:[%s4 + $0x38] sm:$0xff]
    %v60 = vld [vmem:[%s4 + $0x40] sm:$0xff]
    %v61 = vld [vmem:[%s4 + $0x48] sm:$0xff]
    %v62 = vld [vmem:[%s4 + $0x50] sm:$0xff]
    %v63 = vld [vmem:[%s4 + $0x58] sm:$0xff]
    %v64 = vld [vmem:[%s4 + $0x60] sm:$0xff]
    %v65 = vld [vmem:[%s4 + $0x68] sm:$0xff]
    %v66 = vld [vmem:[%s4 + $0x70] sm:$0xff]
    %v67 = vld [vmem:[%s4 + $0x78] sm:$0xff]
    %v68 = vld [vmem:[%s4 + $0x80] sm:$0xff]
    %v69 = vld [vmem:[%s4 + $0x88] sm:$0xff]
    %v70 = vld [vmem:[%s4 + $0x90] sm:$0xff]
    %v71 = vld [vmem:[%s4 + $0x98] sm:$0xff]
    %v72 = vld [vmem:[%s4 + $0xa0] sm:$0xff]
    %v73 = vld [vmem:[%s4 + $0xa8] sm:$0xff]
    %v74 = vld [vmem:[%s4 + $0xb0] sm:$0xff]
    %v75 = vld [vmem:[%s4 + $0xb8] sm:$0xff]
    %v76 = vld [vmem:[%s4 + $0xc0] sm:$0xff]
    %v77 = vld [vmem:[%s4 + $0xc8] sm:$0xff]
    %v78 = vld [vmem:[%s4 + $0xd0] sm:$0xff]
    %v79 = vld [vmem:[%s4 + $0xd8] sm:$0xff]
    %v80 = vld [vmem:[%s4 + $0xe0] sm:$0xff]
    %v81 = vld [vmem:[%s4 + $0xe8] sm:$0xff]
    %v82 = vld [vmem:[%s4 + $0xf0] sm:$0xff]
    %v83 = vld [vmem:[%s4 + $0xf8] sm:$0xff]
    %v84 = vld [vmem:[%s4 + $0x100] sm:$0xff]
    %v85 = vld [vmem:[%s4 + $0x108] sm:$0xff]
    %v86 = vld [vmem:[%s4 + $0x110] sm:$0xff]
    %v87 = vld [vmem:[%s4 + $0x118] sm:$0xff]
    %v88 = vld [vmem:[%s4 + $0x120] sm:$0xff]
    %v89 = vld [vmem:[%s4 + $0x128] sm:$0xff]
    %v90 = vld [vmem:[%s4 + $0x130] sm:$0xff]
    %v91 = vld [vmem:[%s4 + $0x138] sm:$0xff]
    %v92 = vld [vmem:[%s4 + $0x140] sm:$0xff]
    %v93 = vld [vmem:[%s4 + $0x148] sm:$0xff]
    %v94 = vld [vmem:[%s4 + $0x150] sm:$0xff]
    %v95 = vld [vmem:[%s4 + $0x158] sm:$0xff]
    %v96 = vld [vmem:[%s4 + $0x160] sm:$0xff]
    %v97 = vld [vmem:[%s4 + $0x168] sm:$0xff]
    %v98 = vld [vmem:[%s4 + $0x170] sm:$0xff]
    %v99 = vld [vmem:[%s4 + $0x178] sm:$0xff]
    %v100 = vld [vmem:[%s4 + $0x180] sm:$0xff]
    %v101 = vld [vmem:[%s4 + $0x188] sm:$0xff]
    %v102 = vld [vmem:[%s4 + $0x190] sm:$0xff]
    %v103 = vld [vmem:[%s4 + $0x198] sm:$0xff]
    %v104 = vld [vmem:[%s4 + $0x1a0] sm:$0xff]
    %v105 = vld [vmem:[%s4 + $0x1a8] sm:$0xff]
    %v106 = vld [vmem:[%s4 + $0x1b0] sm:$0xff]
    %v107 = vld [vmem:[%s4 + $0x1b8] sm:$0xff]
    %v108 = vld [vmem:[%s4 + $0x1c0] sm:$0xff]
    %v109 = vld [vmem:[%s4 + $0x1c8] sm:$0xff]
    %v110 = vld [vmem:[%s4 + $0x1d0] sm:$0xff]
    %v111 = vld [vmem:[%s4 + $0x1d8] sm:$0xff]
    %v112 = vld [vmem:[%s4 + $0x1e0] sm:$0xff]
    %v113 = vld [vmem:[%s4 + $0x1e8] sm:$0xff]
    %v114 = vld [vmem:[%s4 + $0x1f0] sm:$0xff]
    %v115 = vld [vmem:[%s4 + $0x1f8] sm:$0xff]
    %v116 = vld [vmem:[%s4 + $0x200] sm:$0xff]
    %v117 = vld [vmem:[%s4 + $0x208] sm:$0xff]
    %v118 = vld [vmem:[%s4 + $0x210] sm:$0xff]
    %v119 = vld [vmem:[%s4 + $0x218] sm:$0xff]
    %v120 = vld [vmem:[%s4 + $0x220] sm:$0xff]
    %v121 = vld [vmem:[%s4 + $0x228] sm:$0xff]
    %v122 = vld [vmem:[%s4 + $0x230] sm:$0xff]
    %v123 = vld [vmem:[%s4 + $0x238] sm:$0xff]
    %v124 = vld [vmem:[%s4 + $0x240] sm:$0xff]
    %v125 = vld [vmem:[%s4 + $0x248] sm:$0xff]
    %v126 = vld [vmem:[%s4 + $0x250] sm:$0xff]
    %v127 = vld [vmem:[%s4 + $0x258] sm:$0xff]
    %v128 = vld [vmem:[%s4 + $0x260] sm:$0xff]
    %v129 = vld [vmem:[%s4 + $0x268] sm:$0xff]
    %v130 = vld [vmem:[%s4 + $0x270] sm:$0xff]
    %v131 = vld [vmem:[%s4 + $0x278] sm:$0xff]
    %v132 = vld [vmem:[%s4 + $0x280] sm:$0xff]
    %v133 = vld [vmem:[%s4 + $0x288] sm:$0xff]
    %v134 = vld [vmem:[%s4 + $0x290] sm:$0xff]
    %v135 = vld [vmem:[%s4 + $0x298] sm:$0xff]
    %v136 = vld [vmem:[%s4 + $0x2a0] sm:$0xff]
    %v137 = vld [vmem:[%s4 + $0x2a8] sm:$0xff]
    %v138 = vld [vmem:[%s4 + $0x2b0] sm:$0xff]
    %v139 = vld [vmem:[%s4 + $0x2b8] sm:$0xff]
    %v140 = vld [vmem:[%s4 + $0x2c0] sm:$0xff]
    %v141 = vld [vmem:[%s4 + $0x2c8] sm:$0xff]
    %v142 = vld [vmem:[%s4 + $0x2d0] sm:$0xff]
    %v143 = vld [vmem:[%s4 + $0x2d8] sm:$0xff]
    %v144 = vld [vmem:[%s4 + $0x2e0] sm:$0xff]
    %v145 = vld [vmem:[%s4 + $0x2e8] sm:$0xff]
    %v146 = vld [vmem:[%s4 + $0x2f0] sm:$0xff]
    %v147 = vld [vmem:[%s4 + $0x2f8] sm:$0xff]
    %v148 = vld [vmem:[%s4 + $0x300] sm:$0xff]
    %v149 = vld [vmem:[%s4 + $0x308] sm:$0xff]
    %v150 = vld [vmem:[%s4 + $0x310] sm:$0xff]
    %v151 = vld [vmem:[%s4 + $0x318] sm:$0xff]
    %v152 = vld [vmem:[%s4 + $0x320] sm:$0xff]
    %v153 = vld [vmem:[%s4 + $0x328] sm:$0xff]
    %v154 = vld [vmem:[%s4 + $0x330] sm:$0xff]
    %v155 = vld [vmem:[%s4 + $0x338] sm:$0xff]
    %v156 = vld [vmem:[%s4 + $0x340] sm:$0xff]
    %v157 = vld [vmem:[%s4 + $0x348] sm:$0xff]
    %v158 = vld [vmem:[%s4 + $0x350] sm:$0xff]
    %v159 = vld [vmem:[%s4 + $0x358] sm:$0xff]
    %v160 = vld [vmem:[%s4 + $0x360] sm:$0xff]
    %v161 = vld [vmem:[%s4 + $0x368] sm:$0xff]
    %v162 = vld [vmem:[%s4 + $0x370] sm:$0xff]
    %v163 = vld [vmem:[%s4 + $0x378] sm:$0xff]
    %v164 = vld [vmem:[%s4 + $0x380] sm:$0xff]
    %v165 = vld [vmem:[%s4 + $0x388] sm:$0xff]
    %v166 = vld [vmem:[%s4 + $0x390] sm:$0xff]
    %v167 = vld [vmem:[%s4 + $0x398] sm:$0xff]
    %v168 = vld [vmem:[%s4 + $0x3a0] sm:$0xff]
    %v169 = vld [vmem:[%s4 + $0x3a8] sm:$0xff]
    %v170 = vld [vmem:[%s4 + $0x3b0] sm:$0xff]
    %v171 = vld [vmem:[%s4 + $0x3b8] sm:$0xff]
    %v172 = vld [vmem:[%s4 + $0x3c0] sm:$0xff]
    %v173 = vld [vmem:[%s4 + $0x3c8] sm:$0xff]
    %v174 = vld [vmem:[%s4 + $0x3d0] sm:$0xff]
    %v175 = vld [vmem:[%s4 + $0x3d8] sm:$0xff]
    %v176 = vld [vmem:[%s4 + $0x3e0] sm:$0xff]
    %v177 = vld [vmem:[%s4 + $0x3e8] sm:$0xff]
    %v178 = vld [vmem:[%s4 + $0x3f0] sm:$0xff]
    %v179 = vld [vmem:[%s4 + $0x3f8] sm:$0xff]
    %v180 = vld [vmem:[%s4 + $0x400] sm:$0xff]
    %v181 = vld [vmem:[%s4 + $0x408] sm:$0xff]
    %v182 = vld [vmem:[%s4 + $0x410] sm:$0xff]
    %v183 = vld [vmem:[%s4 + $0x418] sm:$0xff]
    %v184 = vld [vmem:[%s4 + $0x420] sm:$0xff]
    %v185 = vld [vmem:[%s4 + $0x428] sm:$0xff]
    %v186 = vld [vmem:[%s4 + $0x430] sm:$0xff]
    %v187 = vld [vmem:[%s4 + $0x438] sm:$0xff]
    %v188 = vld [vmem:[%s4 + $0x440] sm:$0xff]
    %v189 = vld [vmem:[%s4 + $0x448] sm:$0xff]
    %v190 = vld [vmem:[%s4 + $0x450] sm:$0xff]
    %v191 = vld [vmem:[%s4 + $0x458] sm:$0xff]
    %v192 = vld [vmem:[%s4 + $0x460] sm:$0xff]
    %v193 = vld [vmem:[%s4 + $0x468] sm:$0xff]
    %v194 = vld [vmem:[%s4 + $0x470] sm:$0xff]
    %v195 = vld [vmem:[%s4 + $0x478] sm:$0xff]
    %v196 = vld [vmem:[%s4 + $0x480] sm:$0xff]
    %v197 = vld [vmem:[%s4 + $0x488] sm:$0xff]
    %v198 = vld [vmem:[%s4 + $0x490] sm:$0xff]
    %v199 = vld [vmem:[%s4 + $0x498] sm:$0xff]
    %v200 = vld [vmem:[%s4 + $0x4a0] sm:$0xff]
    %v201 = vld [vmem:[%s4 + $0x4a8] sm:$0xff]
    %v202 = vld [vmem:[%s4 + $0x4b0] sm:$0xff]
    %v203 = vld [vmem:[%s4 + $0x4b8] sm:$0xff]
    %v204 = vld [vmem:[%s4 + $0x4c0] sm:$0xff]
    %v205 = vld [vmem:[%s4 + $0x4c8] sm:$0xff]
    %v206 = vld [vmem:[%s4 + $0x4d0] sm:$0xff]
    %v207 = vld [vmem:[%s4 + $0x4d8] sm:$0xff]
    %v208 = vld [vmem:[%s4 + $0x4e0] sm:$0xff]
    %v209 = vld [vmem:[%s4 + $0x4e8] sm:$0xff]
    %v210 = vld [vmem:[%s4 + $0x4f0] sm:$0xff]
    %v211 = vld [vmem:[%s4 + $0x4f8] sm:$0xff]
    %v212 = vld [vmem:[%s4 + $0x500] sm:$0xff]
    %v213 = vld [vmem:[%s4 + $0x508] sm:$0xff]
    %v214 = vld [vmem:[%s4 + $0x510] sm:$0xff]
    %v215 = vld [vmem:[%s4 + $0x518] sm:$0xff]
    %v216 = vld [vmem:[%s4 + $0x520] sm:$0xff]
    %v217 = vld [vmem:[%s4 + $0x528] sm:$0xff]
    %v218 = vld [vmem:[%s4 + $0x530] sm:$0xff]
    %v219 = vld [vmem:[%s4 + $0x538] sm:$0xff]
    %v220 = vld [vmem:[%s4 + $0x540] sm:$0xff]
    %v221 = vld [vmem:[%s4 + $0x548] sm:$0xff]
    %v222 = vld [vmem:[%s4 + $0x550] sm:$0xff]
    %v223 = vld [vmem:[%s4 + $0x558] sm:$0xff]
    %v224 = vld [vmem:[%s4 + $0x560] sm:$0xff]
    %v225 = vld [vmem:[%s4 + $0x568] sm:$0xff]
    %v226 = vld [vmem:[%s4 + $0x570] sm:$0xff]
    %v227 = vld [vmem:[%s4 + $0x578] sm:$0xff]
    %v228 = vld [vmem:[%s4 + $0x580] sm:$0xff]
    %v229 = vld [vmem:[%s4 + $0x588] sm:$0xff]
    %v230 = vld [vmem:[%s4 + $0x590] sm:$0xff]
    %v231 = vld [vmem:[%s4 + $0x598] sm:$0xff]
    %v232 = vld [vmem:[%s4 + $0x5a0] sm:$0xff]
    %v233 = vld [vmem:[%s4 + $0x5a8] sm:$0xff]
    %v234 = vld [vmem:[%s4 + $0x5b0] sm:$0xff]
    %v235 = vld [vmem:[%s4 + $0x5b8] sm:$0xff]
    %v236 = vld [vmem:[%s4 + $0x5c0] sm:$0xff]
    %v237 = vld [vmem:[%s4 + $0x5c8] sm:$0xff]
    %v238 = vld [vmem:[%s4 + $0x5d0] sm:$0xff]
    %v239 = vld [vmem:[%s4 + $0x5d8] sm:$0xff]
    %v240 = vld [vmem:[%s4 + $0x5e0] sm:$0xff]
    %v241 = vld [vmem:[%s4 + $0x5e8] sm:$0xff]
    %v242 = vld [vmem:[%s4 + $0x5f0] sm:$0xff]
    %v243 = vld [vmem:[%s4 + $0x5f8] sm:$0xff]
    %244 = vmatprep.subr.mxu0 %v53
    %245 = vmatpush1.msra.mxu0 %v52
    %246 = vmatprep.subr.mxu0 %v65
    %247 = vmatpush1.msra.mxu0 %v64
    %248 = vmatprep.subr.mxu0 %v77
    %249 = vmatpush1.msra.mxu0 %v76
    %250 = vmatprep.subr.mxu0 %v89
    %251 = vmatpush1.msra.mxu0 %v88
    %252 = vmatprep.subr.mxu0 %v101
    %253 = vmatpush1.msra.mxu0 %v100
    %254 = vmatprep.subr.mxu0 %v113
    %255 = vmatpush1.msra.mxu0 %v112
    %256 = vmatprep.subr.mxu0 %v125
    %257 = vmatpush1.msra.mxu0 %v124
    %258 = vmatprep.subr.mxu0 %v137
    %259 = vmatpush1.msra.mxu0 %v136
    %260 = vmatprep.subr.mxu0 %v149
    %261 = vmatpush1.msra.mxu0 %v148
    %262 = vmatprep.subr.mxu0 %v161
    %263 = vmatpush1.msra.mxu0 %v160
    %264 = vmatprep.subr.mxu0 %v173
    %265 = vmatpush1.msra.mxu0 %v172
    %266 = vmatprep.subr.mxu0 %v185
    %267 = vmatpush1.msra.mxu0 %v184
    %268 = vmatprep.subr.mxu0 %v197
    %269 = vmatpush1.msra.mxu0 %v196
    %270 = vmatprep.subr.mxu0 %v209
    %271 = vmatpush1.msra.mxu0 %v208
    %272 = vmatprep.subr.mxu0 %v221
    %273 = vmatpush1.msra.mxu0 %v220
    %274 = vmatprep.subr.mxu0 %v233
    %275 = vmatpush1.msra.mxu0 %v232
    %276 = vmatprep.subr.mxu0 0.0
    %277 = vmatpush1.msra.mxu0 0.0
    %278 = vmatprep.subr.mxu0 0.0
    %279 = vmatpush1.msra.mxu0 0.0
    %280 = vmatprep.subr.mxu0 0.0
    %281 = vmatpush1.msra.mxu0 0.0
    %282 = vmatprep.subr.mxu0 0.0
    %283 = vmatpush1.msra.mxu0 0.0
    %284 = vmatprep.subr.mxu0 0.0
    %285 = vmatpush1.msra.mxu0 0.0
    %286 = vmatprep.subr.mxu0 0.0
    %287 = vmatpush1.msra.mxu0 0.0
    %288 = vmatprep.subr.mxu0 0.0
    %289 = vmatpush1.msra.mxu0 0.0
    %290 = vmatprep.subr.mxu0 0.0
    %291 = vmatpush1.msra.mxu0 0.0
    %292 = vmatprep.subr.mxu0 0.0
    %293 = vmatpush1.msra.mxu0 0.0
    %294 = vmatprep.subr.mxu0 0.0
    %295 = vmatpush1.msra.mxu0 0.0
    %296 = vmatprep.subr.mxu0 0.0
    %297 = vmatpush1.msra.mxu0 0.0
    %298 = vmatprep.subr.mxu0 0.0
    %299 = vmatpush1.msra.mxu0 0.0
    %300 = vmatprep.subr.mxu0 0.0
    %301 = vmatpush1.msra.mxu0 0.0
    %302 = vmatprep.subr.mxu0 0.0
    %303 = vmatpush1.msra.mxu0 0.0
    %304 = vmatprep.subr.mxu0 0.0
    %305 = vmatpush1.msra.mxu0 0.0
    %306 = vmatprep.subr.mxu0 0.0
    %307 = vmatpush1.msra.mxu0 0.0
    %308 = vmatprep.mubr.f32.mxu0 0.0
    %309 = vmatmul.mubr.f32.gmra.mrb[0].mxu0 %v48
    %v310 = vpop.f32.mrb[0].mxu0
    %v311 = vadd.f32 0.0, %v310
    %v312 = vpop.f32.mrb[0].mxu0
    %v313 = vadd.f32 0.0, %v312
    %314 = vmatprep.mubr.f32.mxu0 0.0
    %315 = vmatmul.mubr.f32.gmra.mrb[0].mxu0 %v49
    %v316 = vpop.f32.mrb[0].mxu0
    %v317 = vadd.f32 0.0, %v316
    %v318 = vpop.f32.mrb[0].mxu0
    %v319 = vadd.f32 0.0, %v318
    %320 = vdwg.mxu0
    %321 = vmatprep.subr.mxu0 %v55
    %322 = vmatpush1.msra.mxu0 %v54
    %323 = vmatprep.subr.mxu0 %v67
    %324 = vmatpush1.msra.mxu0 %v66
    %325 = vmatprep.subr.mxu0 %v79
    %326 = vmatpush1.msra.mxu0 %v78
    %327 = vmatprep.subr.mxu0 %v91
    %328 = vmatpush1.msra.mxu0 %v90
    %329 = vmatprep.subr.mxu0 %v103
    %330 = vmatpush1.msra.mxu0 %v102
    %331 = vmatprep.subr.mxu0 %v115
    %332 = vmatpush1.msra.mxu0 %v114
    %333 = vmatprep.subr.mxu0 %v127
    %334 = vmatpush1.msra.mxu0 %v126
    %335 = vmatprep.subr.mxu0 %v139
    %336 = vmatpush1.msra.mxu0 %v138
    %337 = vmatprep.subr.mxu0 %v151
    %338 = vmatpush1.msra.mxu0 %v150
    %339 = vmatprep.subr.mxu0 %v163
    %340 = vmatpush1.msra.mxu0 %v162
    %341 = vmatprep.subr.mxu0 %v175
    %342 = vmatpush1.msra.mxu0 %v174
    %343 = vmatprep.subr.mxu0 %v187
    %344 = vmatpush1.msra.mxu0 %v186
    %345 = vmatprep.subr.mxu0 %v199
    %346 = vmatpush1.msra.mxu0 %v198
    %347 = vmatprep.subr.mxu0 %v211
    %348 = vmatpush1.msra.mxu0 %v210
    %349 = vmatprep.subr.mxu0 %v223
    %350 = vmatpush1.msra.mxu0 %v222
    %351 = vmatprep.subr.mxu0 %v235
    %352 = vmatpush1.msra.mxu0 %v234
    %353 = vmatprep.subr.mxu0 0.0
    %354 = vmatpush1.msra.mxu0 0.0
    %355 = vmatprep.subr.mxu0 0.0
    %356 = vmatpush1.msra.mxu0 0.0
    %357 = vmatprep.subr.mxu0 0.0
    %358 = vmatpush1.msra.mxu0 0.0
    %359 = vmatprep.subr.mxu0 0.0
    %360 = vmatpush1.msra.mxu0 0.0
    %361 = vmatprep.subr.mxu0 0.0
    %362 = vmatpush1.msra.mxu0 0.0
    %363 = vmatprep.subr.mxu0 0.0
    %364 = vmatpush1.msra.mxu0 0.0
    %365 = vmatprep.subr.mxu0 0.0
    %366 = vmatpush1.msra.mxu0 0.0
    %367 = vmatprep.subr.mxu0 0.0
    %368 = vmatpush1.msra.mxu0 0.0
    %369 = vmatprep.subr.mxu0 0.0
    %370 = vmatpush1.msra.mxu0 0.0
    %371 = vmatprep.subr.mxu0 0.0
    %372 = vmatpush1.msra.mxu0 0.0
    %373 = vmatprep.subr.mxu0 0.0
    %374 = vmatpush1.msra.mxu0 0.0
    %375 = vmatprep.subr.mxu0 0.0
    %376 = vmatpush1.msra.mxu0 0.0
    %377 = vmatprep.subr.mxu0 0.0
    %378 = vmatpush1.msra.mxu0 0.0
    %379 = vmatprep.subr.mxu0 0.0
    %380 = vmatpush1.msra.mxu0 0.0
    %381 = vmatprep.subr.mxu0 0.0
    %382 = vmatpush1.msra.mxu0 0.0
    %383 = vmatprep.subr.mxu0 0.0
    %384 = vmatpush1.msra.mxu0 0.0
    %385 = vmatprep.mubr.f32.mxu0 0.0
    %386 = vmatmul.mubr.f32.gmra.mrb[0].mxu0 %v48
    %v387 = vpop.f32.mrb[0].mxu0
    %v388 = vadd.f32 0.0, %v387
    %v389 = vpop.f32.mrb[0].mxu0
    %v390 = vadd.f32 0.0, %v389
    %391 = vmatprep.mubr.f32.mxu0 0.0
    %392 = vmatmul.mubr.f32.gmra.mrb[0].mxu0 %v49
    %v393 = vpop.f32.mrb[0].mxu0
    %v394 = vadd.f32 0.0, %v393
    %v395 = vpop.f32.mrb[0].mxu0
    %v396 = vadd.f32 0.0, %v395
    %397 = vdwg.mxu0
    %398 = vmatprep.subr.mxu0 %v57
    %399 = vmatpush1.msra.mxu0 %v56
    %400 = vmatprep.subr.mxu0 %v69
    %401 = vmatpush1.msra.mxu0 %v68
    %402 = vmatprep.subr.mxu0 %v81
    %403 = vmatpush1.msra.mxu0 %v80
    %404 = vmatprep.subr.mxu0 %v93
    %405 = vmatpush1.msra.mxu0 %v92
    %406 = vmatprep.subr.mxu0 %v105
    %407 = vmatpush1.msra.mxu0 %v104
    %408 = vmatprep.subr.mxu0 %v117
    %409 = vmatpush1.msra.mxu0 %v116
    %410 = vmatprep.subr.mxu0 %v129
    %411 = vmatpush1.msra.mxu0 %v128
    %412 = vmatprep.subr.mxu0 %v141
    %413 = vmatpush1.msra.mxu0 %v140
    %414 = vmatprep.subr.mxu0 %v153
    %415 = vmatpush1.msra.mxu0 %v152
    %416 = vmatprep.subr.mxu0 %v165
    %417 = vmatpush1.msra.mxu0 %v164
    %418 = vmatprep.subr.mxu0 %v177
    %419 = vmatpush1.msra.mxu0 %v176
    %420 = vmatprep.subr.mxu0 %v189
    %421 = vmatpush1.msra.mxu0 %v188
    %422 = vmatprep.subr.mxu0 %v201
    %423 = vmatpush1.msra.mxu0 %v200
    %424 = vmatprep.subr.mxu0 %v213
    %425 = vmatpush1.msra.mxu0 %v212
    %426 = vmatprep.subr.mxu0 %v225
    %427 = vmatpush1.msra.mxu0 %v224
    %428 = vmatprep.subr.mxu0 %v237
    %429 = vmatpush1.msra.mxu0 %v236
    %430 = vmatprep.subr.mxu0 0.0
    %431 = vmatpush1.msra.mxu0 0.0
    %432 = vmatprep.subr.mxu0 0.0
    %433 = vmatpush1.msra.mxu0 0.0
    %434 = vmatprep.subr.mxu0 0.0
    %435 = vmatpush1.msra.mxu0 0.0
    %436 = vmatprep.subr.mxu0 0.0
    %437 = vmatpush1.msra.mxu0 0.0
    %438 = vmatprep.subr.mxu0 0.0
    %439 = vmatpush1.msra.mxu0 0.0
    %440 = vmatprep.subr.mxu0 0.0
    %441 = vmatpush1.msra.mxu0 0.0
    %442 = vmatprep.subr.mxu0 0.0
    %443 = vmatpush1.msra.mxu0 0.0
    %444 = vmatprep.subr.mxu0 0.0
    %445 = vmatpush1.msra.mxu0 0.0
    %446 = vmatprep.subr.mxu0 0.0
    %447 = vmatpush1.msra.mxu0 0.0
    %448 = vmatprep.subr.mxu0 0.0
    %449 = vmatpush1.msra.mxu0 0.0
    %450 = vmatprep.subr.mxu0 0.0
    %451 = vmatpush1.msra.mxu0 0.0
    %452 = vmatprep.subr.mxu0 0.0
    %453 = vmatpush1.msra.mxu0 0.0
    %454 = vmatprep.subr.mxu0 0.0
    %455 = vmatpush1.msra.mxu0 0.0
    %456 = vmatprep.subr.mxu0 0.0
    %457 = vmatpush1.msra.mxu0 0.0
    %458 = vmatprep.subr.mxu0 0.0
    %459 = vmatpush1.msra.mxu0 0.0
    %460 = vmatprep.subr.mxu0 0.0
    %461 = vmatpush1.msra.mxu0 0.0
    %462 = vmatprep.mubr.f32.mxu0 0.0
    %463 = vmatmul.mubr.f32.gmra.mrb[0].mxu0 %v48
    %v464 = vpop.f32.mrb[0].mxu0
    %v465 = vadd.f32 0.0, %v464
    %v466 = vpop.f32.mrb[0].mxu0
    %v467 = vadd.f32 0.0, %v466
    %468 = vmatprep.mubr.f32.mxu0 0.0
    %469 = vmatmul.mubr.f32.gmra.mrb[0].mxu0 %v49
    %v470 = vpop.f32.mrb[0].mxu0
    %v471 = vadd.f32 0.0, %v470
    %v472 = vpop.f32.mrb[0].mxu0
    %v473 = vadd.f32 0.0, %v472
    %474 = vdwg.mxu0
    %475 = vmatprep.subr.mxu0 %v59
    %476 = vmatpush1.msra.mxu0 %v58
    %477 = vmatprep.subr.mxu0 %v71
    %478 = vmatpush1.msra.mxu0 %v70
    %479 = vmatprep.subr.mxu0 %v83
    %480 = vmatpush1.msra.mxu0 %v82
    %481 = vmatprep.subr.mxu0 %v95
    %482 = vmatpush1.msra.mxu0 %v94
    %483 = vmatprep.subr.mxu0 %v107
    %484 = vmatpush1.msra.mxu0 %v106
    %485 = vmatprep.subr.mxu0 %v119
    %486 = vmatpush1.msra.mxu0 %v118
    %487 = vmatprep.subr.mxu0 %v131
    %488 = vmatpush1.msra.mxu0 %v130
    %489 = vmatprep.subr.mxu0 %v143
    %490 = vmatpush1.msra.mxu0 %v142
    %491 = vmatprep.subr.mxu0 %v155
    %492 = vmatpush1.msra.mxu0 %v154
    %493 = vmatprep.subr.mxu0 %v167
    %494 = vmatpush1.msra.mxu0 %v166
    %495 = vmatprep.subr.mxu0 %v179
    %496 = vmatpush1.msra.mxu0 %v178
    %497 = vmatprep.subr.mxu0 %v191
    %498 = vmatpush1.msra.mxu0 %v190
    %499 = vmatprep.subr.mxu0 %v203
    %500 = vmatpush1.msra.mxu0 %v202
    %501 = vmatprep.subr.mxu0 %v215
    %502 = vmatpush1.msra.mxu0 %v214
    %503 = vmatprep.subr.mxu0 %v227
    %504 = vmatpush1.msra.mxu0 %v226
    %505 = vmatprep.subr.mxu0 %v239
    %506 = vmatpush1.msra.mxu0 %v238
    %507 = vmatprep.subr.mxu0 0.0
    %508 = vmatpush1.msra.mxu0 0.0
    %509 = vmatprep.subr.mxu0 0.0
    %510 = vmatpush1.msra.mxu0 0.0
    %511 = vmatprep.subr.mxu0 0.0
    %512 = vmatpush1.msra.mxu0 0.0
    %513 = vmatprep.subr.mxu0 0.0
    %514 = vmatpush1.msra.mxu0 0.0
    %515 = vmatprep.subr.mxu0 0.0
    %516 = vmatpush1.msra.mxu0 0.0
    %517 = vmatprep.subr.mxu0 0.0
    %518 = vmatpush1.msra.mxu0 0.0
    %519 = vmatprep.subr.mxu0 0.0
    %520 = vmatpush1.msra.mxu0 0.0
    %521 = vmatprep.subr.mxu0 0.0
    %522 = vmatpush1.msra.mxu0 0.0
    %523 = vmatprep.subr.mxu0 0.0
    %524 = vmatpush1.msra.mxu0 0.0
    %525 = vmatprep.subr.mxu0 0.0
    %526 = vmatpush1.msra.mxu0 0.0
    %527 = vmatprep.subr.mxu0 0.0
    %528 = vmatpush1.msra.mxu0 0.0
    %529 = vmatprep.subr.mxu0 0.0
    %530 = vmatpush1.msra.mxu0 0.0
    %531 = vmatprep.subr.mxu0 0.0
    %532 = vmatpush1.msra.mxu0 0.0
    %533 = vmatprep.subr.mxu0 0.0
    %534 = vmatpush1.msra.mxu0 0.0
    %535 = vmatprep.subr.mxu0 0.0
    %536 = vmatpush1.msra.mxu0 0.0
    %537 = vmatprep.subr.mxu0 0.0
    %538 = vmatpush1.msra.mxu0 0.0
    %539 = vmatprep.mubr.f32.mxu0 0.0
    %540 = vmatmul.mubr.f32.gmra.mrb[0].mxu0 %v48
    %v541 = vpop.f32.mrb[0].mxu0
    %v542 = vadd.f32 0.0, %v541
    %v543 = vpop.f32.mrb[0].mxu0
    %v544 = vadd.f32 0.0, %v543
    %545 = vmatprep.mubr.f32.mxu0 0.0
    %546 = vmatmul.mubr.f32.gmra.mrb[0].mxu0 %v49
    %v547 = vpop.f32.mrb[0].mxu0
    %v548 = vadd.f32 0.0, %v547
    %v549 = vpop.f32.mrb[0].mxu0
    %v550 = vadd.f32 0.0, %v549
    %551 = vdwg.mxu0
    %552 = vmatprep.subr.mxu0 %v61
    %553 = vmatpush1.msra.mxu0 %v60
    %554 = vmatprep.subr.mxu0 %v73
    %555 = vmatpush1.msra.mxu0 %v72
    %556 = vmatprep.subr.mxu0 %v85
    %557 = vmatpush1.msra.mxu0 %v84
    %558 = vmatprep.subr.mxu0 %v97
    %559 = vmatpush1.msra.mxu0 %v96
    %560 = vmatprep.subr.mxu0 %v109
    %561 = vmatpush1.msra.mxu0 %v108
    %562 = vmatprep.subr.mxu0 %v121
    %563 = vmatpush1.msra.mxu0 %v120
    %564 = vmatprep.subr.mxu0 %v133
    %565 = vmatpush1.msra.mxu0 %v132
    %566 = vmatprep.subr.mxu0 %v145
    %567 = vmatpush1.msra.mxu0 %v144
    %568 = vmatprep.subr.mxu0 %v157
    %569 = vmatpush1.msra.mxu0 %v156
    %570 = vmatprep.subr.mxu0 %v169
    %571 = vmatpush1.msra.mxu0 %v168
    %572 = vmatprep.subr.mxu0 %v181
    %573 = vmatpush1.msra.mxu0 %v180
    %574 = vmatprep.subr.mxu0 %v193
    %575 = vmatpush1.msra.mxu0 %v192
    %576 = vmatprep.subr.mxu0 %v205
    %577 = vmatpush1.msra.mxu0 %v204
    %578 = vmatprep.subr.mxu0 %v217
    %579 = vmatpush1.msra.mxu0 %v216
    %580 = vmatprep.subr.mxu0 %v229
    %581 = vmatpush1.msra.mxu0 %v228
    %582 = vmatprep.subr.mxu0 %v241
    %583 = vmatpush1.msra.mxu0 %v240
    %584 = vmatprep.subr.mxu0 0.0
    %585 = vmatpush1.msra.mxu0 0.0
    %586 = vmatprep.subr.mxu0 0.0
    %587 = vmatpush1.msra.mxu0 0.0
    %588 = vmatprep.subr.mxu0 0.0
    %589 = vmatpush1.msra.mxu0 0.0
    %590 = vmatprep.subr.mxu0 0.0
    %591 = vmatpush1.msra.mxu0 0.0
    %592 = vmatprep.subr.mxu0 0.0
    %593 = vmatpush1.msra.mxu0 0.0
    %594 = vmatprep.subr.mxu0 0.0
    %595 = vmatpush1.msra.mxu0 0.0
    %596 = vmatprep.subr.mxu0 0.0
    %597 = vmatpush1.msra.mxu0 0.0
    %598 = vmatprep.subr.mxu0 0.0
    %599 = vmatpush1.msra.mxu0 0.0
    %600 = vmatprep.subr.mxu0 0.0
    %601 = vmatpush1.msra.mxu0 0.0
    %602 = vmatprep.subr.mxu0 0.0
    %603 = vmatpush1.msra.mxu0 0.0
    %604 = vmatprep.subr.mxu0 0.0
    %605 = vmatpush1.msra.mxu0 0.0
    %606 = vmatprep.subr.mxu0 0.0
    %607 = vmatpush1.msra.mxu0 0.0
    %608 = vmatprep.subr.mxu0 0.0
    %609 = vmatpush1.msra.mxu0 0.0
    %610 = vmatprep.subr.mxu0 0.0
    %611 = vmatpush1.msra.mxu0 0.0
    %612 = vmatprep.subr.mxu0 0.0
    %613 = vmatpush1.msra.mxu0 0.0
    %614 = vmatprep.subr.mxu0 0.0
    %615 = vmatpush1.msra.mxu0 0.0
    %616 = vmatprep.mubr.f32.mxu0 0.0
    %617 = vmatmul.mubr.f32.gmra.mrb[0].mxu0 %v48
    %v618 = vpop.f32.mrb[0].mxu0
    %v619 = vadd.f32 0.0, %v618
    %v620 = vpop.f32.mrb[0].mxu0
    %v621 = vadd.f32 0.0, %v620
    %622 = vmatprep.mubr.f32.mxu0 0.0
    %623 = vmatmul.mubr.f32.gmra.mrb[0].mxu0 %v49
    %v624 = vpop.f32.mrb[0].mxu0
    %v625 = vadd.f32 0.0, %v624
    %v626 = vpop.f32.mrb[0].mxu0
    %v627 = vadd.f32 0.0, %v626
    %628 = vdwg.mxu0
    %629 = vmatprep.subr.mxu0 %v63
    %630 = vmatpush1.msra.mxu0 %v62
    %631 = vmatprep.subr.mxu0 %v75
    %632 = vmatpush1.msra.mxu0 %v74
    %633 = vmatprep.subr.mxu0 %v87
    %634 = vmatpush1.msra.mxu0 %v86
    %635 = vmatprep.subr.mxu0 %v99
    %636 = vmatpush1.msra.mxu0 %v98
    %637 = vmatprep.subr.mxu0 %v111
    %638 = vmatpush1.msra.mxu0 %v110
    %639 = vmatprep.subr.mxu0 %v123
    %640 = vmatpush1.msra.mxu0 %v122
    %641 = vmatprep.subr.mxu0 %v135
    %642 = vmatpush1.msra.mxu0 %v134
    %643 = vmatprep.subr.mxu0 %v147
    %644 = vmatpush1.msra.mxu0 %v146
    %645 = vmatprep.subr.mxu0 %v159
    %646 = vmatpush1.msra.mxu0 %v158
    %647 = vmatprep.subr.mxu0 %v171
    %648 = vmatpush1.msra.mxu0 %v170
    %649 = vmatprep.subr.mxu0 %v183
    %650 = vmatpush1.msra.mxu0 %v182
    %651 = vmatprep.subr.mxu0 %v195
    %652 = vmatpush1.msra.mxu0 %v194
    %653 = vmatprep.subr.mxu0 %v207
    %654 = vmatpush1.msra.mxu0 %v206
    %655 = vmatprep.subr.mxu0 %v219
    %656 = vmatpush1.msra.mxu0 %v218
    %657 = vmatprep.subr.mxu0 %v231
    %658 = vmatpush1.msra.mxu0 %v230
    %659 = vmatprep.subr.mxu0 %v243
    %660 = vmatpush1.msra.mxu0 %v242
    %661 = vmatprep.subr.mxu0 0.0
    %662 = vmatpush1.msra.mxu0 0.0
    %663 = vmatprep.subr.mxu0 0.0
    %664 = vmatpush1.msra.mxu0 0.0
    %665 = vmatprep.subr.mxu0 0.0
    %666 = vmatpush1.msra.mxu0 0.0
    %667 = vmatprep.subr.mxu0 0.0
    %668 = vmatpush1.msra.mxu0 0.0
    %669 = vmatprep.subr.mxu0 0.0
    %670 = vmatpush1.msra.mxu0 0.0
    %671 = vmatprep.subr.mxu0 0.0
    %672 = vmatpush1.msra.mxu0 0.0
    %673 = vmatprep.subr.mxu0 0.0
    %674 = vmatpush1.msra.mxu0 0.0
    %675 = vmatprep.subr.mxu0 0.0
    %676 = vmatpush1.msra.mxu0 0.0
    %677 = vmatprep.subr.mxu0 0.0
    %678 = vmatpush1.msra.mxu0 0.0
    %679 = vmatprep.subr.mxu0 0.0
    %680 = vmatpush1.msra.mxu0 0.0
    %681 = vmatprep.subr.mxu0 0.0
    %682 = vmatpush1.msra.mxu0 0.0
    %683 = vmatprep.subr.mxu0 0.0
    %684 = vmatpush1.msra.mxu0 0.0
    %685 = vmatprep.subr.mxu0 0.0
    %686 = vmatpush1.msra.mxu0 0.0
    %687 = vmatprep.subr.mxu0 0.0
    %688 = vmatpush1.msra.mxu0 0.0
    %689 = vmatprep.subr.mxu0 0.0
    %690 = vmatpush1.msra.mxu0 0.0
    %691 = vmatprep.subr.mxu0 0.0
    %692 = vmatpush1.msra.mxu0 0.0
    %693 = vmatprep.mubr.f32.mxu0 0.0
    %694 = vmatmul.mubr.f32.gmra.mrb[0].mxu0 %v48
    %v695 = vpop.f32.mrb[0].mxu0
    %v696 = vadd.f32 0.0, %v695
    %v697 = vpop.f32.mrb[0].mxu0
    %v698 = vadd.f32 0.0, %v697
    %699 = vmatprep.mubr.f32.mxu0 0.0
    %700 = vmatmul.mubr.f32.gmra.mrb[0].mxu0 %v49
    %v701 = vpop.f32.mrb[0].mxu0
    %v702 = vadd.f32 0.0, %v701
    %v703 = vpop.f32.mrb[0].mxu0
    %v704 = vadd.f32 0.0, %v703
    %705 = vdwg.mxu0
    %v706 = vld [vmem:[%s2] sm:$0xff]
    %v707 = vld [vmem:[%s2 + $0x8] sm:$0xff]
    %v708 = vld [vmem:[%s5] sm:$0xff]
    %v709 = vld [vmem:[%s5 + $0x8] sm:$0xff]
    %v710 = vld [vmem:[%s5 + $0x10] sm:$0xff]
    %v711 = vld [vmem:[%s5 + $0x18] sm:$0xff]
    %v712 = vld [vmem:[%s5 + $0x20] sm:$0xff]
    %v713 = vld [vmem:[%s5 + $0x28] sm:$0xff]
    %v714 = vld [vmem:[%s5 + $0x30] sm:$0xff]
    %v715 = vld [vmem:[%s5 + $0x38] sm:$0xff]
    %v716 = vld [vmem:[%s5 + $0x40] sm:$0xff]
    %v717 = vld [vmem:[%s5 + $0x48] sm:$0xff]
    %v718 = vld [vmem:[%s5 + $0x50] sm:$0xff]
    %v719 = vld [vmem:[%s5 + $0x58] sm:$0xff]
    %v720 = vld [vmem:[%s5 + $0x60] sm:$0xff]
    %v721 = vld [vmem:[%s5 + $0x68] sm:$0xff]
    %v722 = vld [vmem:[%s5 + $0x70] sm:$0xff]
    %v723 = vld [vmem:[%s5 + $0x78] sm:$0xff]
    %v724 = vld [vmem:[%s5 + $0x80] sm:$0xff]
    %v725 = vld [vmem:[%s5 + $0x88] sm:$0xff]
    %v726 = vld [vmem:[%s5 + $0x90] sm:$0xff]
    %v727 = vld [vmem:[%s5 + $0x98] sm:$0xff]
    %v728 = vld [vmem:[%s5 + $0xa0] sm:$0xff]
    %v729 = vld [vmem:[%s5 + $0xa8] sm:$0xff]
    %v730 = vld [vmem:[%s5 + $0xb0] sm:$0xff]
    %v731 = vld [vmem:[%s5 + $0xb8] sm:$0xff]
    %v732 = vld [vmem:[%s5 + $0xc0] sm:$0xff]
    %v733 = vld [vmem:[%s5 + $0xc8] sm:$0xff]
    %v734 = vld [vmem:[%s5 + $0xd0] sm:$0xff]
    %v735 = vld [vmem:[%s5 + $0xd8] sm:$0xff]
    %v736 = vld [vmem:[%s5 + $0xe0] sm:$0xff]
    %v737 = vld [vmem:[%s5 + $0xe8] sm:$0xff]
    %v738 = vld [vmem:[%s5 + $0xf0] sm:$0xff]
    %v739 = vld [vmem:[%s5 + $0xf8] sm:$0xff]
    %v740 = vld [vmem:[%s5 + $0x100] sm:$0xff]
    %v741 = vld [vmem:[%s5 + $0x108] sm:$0xff]
    %v742 = vld [vmem:[%s5 + $0x110] sm:$0xff]
    %v743 = vld [vmem:[%s5 + $0x118] sm:$0xff]
    %v744 = vld [vmem:[%s5 + $0x120] sm:$0xff]
    %v745 = vld [vmem:[%s5 + $0x128] sm:$0xff]
    %v746 = vld [vmem:[%s5 + $0x130] sm:$0xff]
    %v747 = vld [vmem:[%s5 + $0x138] sm:$0xff]
    %v748 = vld [vmem:[%s5 + $0x140] sm:$0xff]
    %v749 = vld [vmem:[%s5 + $0x148] sm:$0xff]
    %v750 = vld [vmem:[%s5 + $0x150] sm:$0xff]
    %v751 = vld [vmem:[%s5 + $0x158] sm:$0xff]
    %v752 = vld [vmem:[%s5 + $0x160] sm:$0xff]
    %v753 = vld [vmem:[%s5 + $0x168] sm:$0xff]
    %v754 = vld [vmem:[%s5 + $0x170] sm:$0xff]
    %v755 = vld [vmem:[%s5 + $0x178] sm:$0xff]
    %v756 = vld [vmem:[%s5 + $0x180] sm:$0xff]
    %v757 = vld [vmem:[%s5 + $0x188] sm:$0xff]
    %v758 = vld [vmem:[%s5 + $0x190] sm:$0xff]
    %v759 = vld [vmem:[%s5 + $0x198] sm:$0xff]
    %v760 = vld [vmem:[%s5 + $0x1a0] sm:$0xff]
    %v761 = vld [vmem:[%s5 + $0x1a8] sm:$0xff]
    %v762 = vld [vmem:[%s5 + $0x1b0] sm:$0xff]
    %v763 = vld [vmem:[%s5 + $0x1b8] sm:$0xff]
    %v764 = vld [vmem:[%s5 + $0x1c0] sm:$0xff]
    %v765 = vld [vmem:[%s5 + $0x1c8] sm:$0xff]
    %v766 = vld [vmem:[%s5 + $0x1d0] sm:$0xff]
    %v767 = vld [vmem:[%s5 + $0x1d8] sm:$0xff]
    %v768 = vld [vmem:[%s5 + $0x1e0] sm:$0xff]
    %v769 = vld [vmem:[%s5 + $0x1e8] sm:$0xff]
    %v770 = vld [vmem:[%s5 + $0x1f0] sm:$0xff]
    %v771 = vld [vmem:[%s5 + $0x1f8] sm:$0xff]
    %773 = vrot.lane.b32.xlu0 %v311, 64
    %v774 = vpop.permute.xlu0 %773
    %776 = vrot.lane.b32.xlu0 %v313, 64
    %v777 = vpop.permute.xlu0 %776
    %779 = vrot.lane.b32.xlu0 %v388, 64
    %v780 = vpop.permute.xlu0 %779
    %782 = vrot.lane.b32.xlu0 %v390, 64
    %v783 = vpop.permute.xlu0 %782
    %785 = vrot.lane.b32.xlu0 %v317, 64
    %v786 = vpop.permute.xlu0 %785
    %788 = vrot.lane.b32.xlu0 %v319, 64
    %v789 = vpop.permute.xlu0 %788
    %791 = vrot.lane.b32.xlu0 %v394, 64
    %v792 = vpop.permute.xlu0 %791
    %794 = vrot.lane.b32.xlu0 %v396, 64
    %v795 = vpop.permute.xlu0 %794
    %797 = vrot.lane.b32.xlu0 %v465, 64
    %v798 = vpop.permute.xlu0 %797
    %800 = vrot.lane.b32.xlu0 %v467, 64
    %v801 = vpop.permute.xlu0 %800
    %803 = vrot.lane.b32.xlu0 %v542, 64
    %v804 = vpop.permute.xlu0 %803
    %806 = vrot.lane.b32.xlu0 %v544, 64
    %v807 = vpop.permute.xlu0 %806
    %809 = vrot.lane.b32.xlu0 %v471, 64
    %v810 = vpop.permute.xlu0 %809
    %812 = vrot.lane.b32.xlu0 %v473, 64
    %v813 = vpop.permute.xlu0 %812
    %815 = vrot.lane.b32.xlu0 %v548, 64
    %v816 = vpop.permute.xlu0 %815
    %818 = vrot.lane.b32.xlu0 %v550, 64
    %v819 = vpop.permute.xlu0 %818
    %821 = vrot.lane.b32.xlu0 %v619, 64
    %v822 = vpop.permute.xlu0 %821
    %825 = vrot.lane.b32.xlu0 %v621, 64
    %v826 = vpop.permute.xlu0 %825
    %829 = vrot.lane.b32.xlu0 %v696, 64
    %v830 = vpop.permute.xlu0 %829
    %833 = vrot.lane.b32.xlu0 %v698, 64
    %v834 = vpop.permute.xlu0 %833
    %837 = vrot.lane.b32.xlu0 %v625, 64
    %v838 = vpop.permute.xlu0 %837
    %841 = vrot.lane.b32.xlu0 %v627, 64
    %v842 = vpop.permute.xlu0 %841
    %845 = vrot.lane.b32.xlu0 %v702, 64
    %v846 = vpop.permute.xlu0 %845
    %849 = vrot.lane.b32.xlu0 %v704, 64
    %v850 = vpop.permute.xlu0 %849
    %vm852 = vcmask 523264
    %v853 = vsel %vm852, %v311, 0
    %v855 = vsel %vm852, %v465, 0
    %857 = vmatprep.subr.mxu0 0.0
    %858 = vmatpush1.xpose.msra.mxu0 %v855
    %859 = vmatprep.subr.mxu0 0.0
    %860 = vmatpush1.xpose.msra.mxu0 0.0
    %861 = vmatprep.subr.mxu0 0.0
    %862 = vmatpush1.xpose.msra.mxu0 0.0
    %863 = vmatprep.subr.mxu0 0.0
    %864 = vmatpush1.xpose.msra.mxu0 0.0
    %865 = vmatprep.subr.mxu0 0.0
    %866 = vmatpush1.xpose.msra.mxu0 0.0
    %867 = vmatprep.subr.mxu0 0.0
    %868 = vmatpush1.xpose.msra.mxu0 0.0
    %869 = vmatprep.subr.mxu0 0.0
    %870 = vmatpush1.xpose.msra.mxu0 0.0
    %871 = vmatprep.subr.mxu0 0.0
    %872 = vmatpush1.xpose.msra.mxu0 0.0
    %873 = vmatprep.subr.mxu0 0.0
    %874 = vmatpush1.xpose.msra.mxu0 0.0
    %875 = vmatprep.subr.mxu0 0.0
    %876 = vmatpush1.xpose.msra.mxu0 0.0
    %877 = vmatprep.subr.mxu0 0.0
    %878 = vmatpush1.xpose.msra.mxu0 0.0
    %879 = vmatprep.subr.mxu0 0.0
    %880 = vmatpush1.xpose.msra.mxu0 0.0
    %881 = vmatprep.subr.mxu0 0.0
    %882 = vmatpush1.xpose.msra.mxu0 0.0
    %883 = vmatprep.subr.mxu0 0.0
    %884 = vmatpush1.xpose.msra.mxu0 0.0
    %885 = vmatprep.subr.mxu0 0.0
    %886 = vmatpush1.xpose.msra.mxu0 0.0
    %887 = vmatprep.subr.mxu0 0.0
    %888 = vmatpush1.xpose.msra.mxu0 0.0
    %889 = vmatprep.subr.mxu0 0.0
    %890 = vmatpush1.xpose.msra.mxu0 0.0
    %891 = vmatprep.subr.mxu0 0.0
    %892 = vmatpush1.xpose.msra.mxu0 0.0
    %893 = vmatprep.subr.mxu0 0.0
    %894 = vmatpush1.xpose.msra.mxu0 0.0
    %895 = vmatprep.subr.mxu0 0.0
    %896 = vmatpush1.xpose.msra.mxu0 0.0
    %897 = vmatprep.subr.mxu0 0.0
    %898 = vmatpush1.xpose.msra.mxu0 0.0
    %899 = vmatprep.subr.mxu0 0.0
    %900 = vmatpush1.xpose.msra.mxu0 0.0
    %901 = vmatprep.subr.mxu0 0.0
    %902 = vmatpush1.xpose.msra.mxu0 0.0
    %903 = vmatprep.subr.mxu0 0.0
    %904 = vmatpush1.xpose.msra.mxu0 0.0
    %905 = vmatprep.subr.mxu0 0.0
    %906 = vmatpush1.xpose.msra.mxu0 0.0
    %907 = vmatprep.subr.mxu0 0.0
    %908 = vmatpush1.xpose.msra.mxu0 0.0
    %909 = vmatprep.subr.mxu0 0.0
    %910 = vmatpush1.xpose.msra.mxu0 0.0
    %911 = vmatprep.subr.mxu0 0.0
    %912 = vmatpush1.xpose.msra.mxu0 0.0
    %913 = vmatprep.subr.mxu0 0.0
    %914 = vmatpush1.xpose.msra.mxu0 0.0
    %915 = vmatprep.subr.mxu0 0.0
    %916 = vmatpush1.xpose.msra.mxu0 0.0
    %917 = vmatprep.subr.mxu0 0.0
    %918 = vmatpush1.xpose.msra.mxu0 0.0
    %919 = vmatprep.subr.mxu0 0.0
    %920 = vmatpush1.xpose.msra.mxu0 0.0
    %921 = vmatprep.mubr.f32.mxu0 0.0
    %922 = vmatmul.mubr.f32.gmra.mrb[0].mxu0 %v853
    %v923 = vpop.f32.mrb[0].mxu0
    %v924 = vadd.f32 0.0, %v923
    %v925 = vpop.f32.mrb[0].mxu0
    %926 = vdwg.mxu0
    %v927 = vsel %vm852, %v774, 0
    %v929 = vsel %vm852, %v798, 0
    %931 = vmatprep.subr.mxu0 0.0
    %932 = vmatpush1.xpose.msra.mxu0 %v929
    %933 = vmatprep.subr.mxu0 0.0
    %934 = vmatpush1.xpose.msra.mxu0 0.0
    %935 = vmatprep.subr.mxu0 0.0
    %936 = vmatpush1.xpose.msra.mxu0 0.0
    %937 = vmatprep.subr.mxu0 0.0
    %938 = vmatpush1.xpose.msra.mxu0 0.0
    %939 = vmatprep.subr.mxu0 0.0
    %940 = vmatpush1.xpose.msra.mxu0 0.0
    %941 = vmatprep.subr.mxu0 0.0
    %942 = vmatpush1.xpose.msra.mxu0 0.0
    %943 = vmatprep.subr.mxu0 0.0
    %944 = vmatpush1.xpose.msra.mxu0 0.0
    %945 = vmatprep.subr.mxu0 0.0
    %946 = vmatpush1.xpose.msra.mxu0 0.0
    %947 = vmatprep.subr.mxu0 0.0
    %948 = vmatpush1.xpose.msra.mxu0 0.0
    %949 = vmatprep.subr.mxu0 0.0
    %950 = vmatpush1.xpose.msra.mxu0 0.0
    %951 = vmatprep.subr.mxu0 0.0
    %952 = vmatpush1.xpose.msra.mxu0 0.0
    %953 = vmatprep.subr.mxu0 0.0
    %954 = vmatpush1.xpose.msra.mxu0 0.0
    %955 = vmatprep.subr.mxu0 0.0
    %956 = vmatpush1.xpose.msra.mxu0 0.0
    %957 = vmatprep.subr.mxu0 0.0
    %958 = vmatpush1.xpose.msra.mxu0 0.0
    %959 = vmatprep.subr.mxu0 0.0
    %960 = vmatpush1.xpose.msra.mxu0 0.0
    %961 = vmatprep.subr.mxu0 0.0
    %962 = vmatpush1.xpose.msra.mxu0 0.0
    %963 = vmatprep.subr.mxu0 0.0
    %964 = vmatpush1.xpose.msra.mxu0 0.0
    %965 = vmatprep.subr.mxu0 0.0
    %966 = vmatpush1.xpose.msra.mxu0 0.0
    %967 = vmatprep.subr.mxu0 0.0
    %968 = vmatpush1.xpose.msra.mxu0 0.0
    %969 = vmatprep.subr.mxu0 0.0
    %970 = vmatpush1.xpose.msra.mxu0 0.0
    %971 = vmatprep.subr.mxu0 0.0
    %972 = vmatpush1.xpose.msra.mxu0 0.0
    %973 = vmatprep.subr.mxu0 0.0
    %974 = vmatpush1.xpose.msra.mxu0 0.0
    %975 = vmatprep.subr.mxu0 0.0
    %976 = vmatpush1.xpose.msra.mxu0 0.0
    %977 = vmatprep.subr.mxu0 0.0
    %978 = vmatpush1.xpose.msra.mxu0 0.0
    %979 = vmatprep.subr.mxu0 0.0
    %980 = vmatpush1.xpose.msra.mxu0 0.0
    %981 = vmatprep.subr.mxu0 0.0
    %982 = vmatpush1.xpose.msra.mxu0 0.0
    %983 = vmatprep.subr.mxu0 0.0
    %984 = vmatpush1.xpose.msra.mxu0 0.0
    %985 = vmatprep.subr.mxu0 0.0
    %986 = vmatpush1.xpose.msra.mxu0 0.0
    %987 = vmatprep.subr.mxu0 0.0
    %988 = vmatpush1.xpose.msra.mxu0 0.0
    %989 = vmatprep.subr.mxu0 0.0
    %990 = vmatpush1.xpose.msra.mxu0 0.0
    %991 = vmatprep.subr.mxu0 0.0
    %992 = vmatpush1.xpose.msra.mxu0 0.0
    %993 = vmatprep.subr.mxu0 0.0
    %994 = vmatpush1.xpose.msra.mxu0 0.0
    %995 = vmatprep.mubr.f32.mxu0 0.0
    %996 = vmatmul.mubr.f32.gmra.mrb[0].mxu0 %v927
    %v997 = vpop.f32.mrb[0].mxu0
    %v998 = vadd.f32 0.0, %v997
    %v999 = vpop.f32.mrb[0].mxu0
    %1000 = vdwg.mxu0
    %v1001 = vsel %vm852, %v313, 0
    %v1003 = vsel %vm852, %v467, 0
    %1005 = vmatprep.subr.mxu0 0.0
    %1006 = vmatpush1.xpose.msra.mxu0 %v1003
    %1007 = vmatprep.subr.mxu0 0.0
    %1008 = vmatpush1.xpose.msra.mxu0 0.0
    %1009 = vmatprep.subr.mxu0 0.0
    %1010 = vmatpush1.xpose.msra.mxu0 0.0
    %1011 = vmatprep.subr.mxu0 0.0
    %1012 = vmatpush1.xpose.msra.mxu0 0.0
    %1013 = vmatprep.subr.mxu0 0.0
    %1014 = vmatpush1.xpose.msra.mxu0 0.0
    %1015 = vmatprep.subr.mxu0 0.0
    %1016 = vmatpush1.xpose.msra.mxu0 0.0
    %1017 = vmatprep.subr.mxu0 0.0
    %1018 = vmatpush1.xpose.msra.mxu0 0.0
    %1019 = vmatprep.subr.mxu0 0.0
    %1020 = vmatpush1.xpose.msra.mxu0 0.0
    %1021 = vmatprep.subr.mxu0 0.0
    %1022 = vmatpush1.xpose.msra.mxu0 0.0
    %1023 = vmatprep.subr.mxu0 0.0
    %1024 = vmatpush1.xpose.msra.mxu0 0.0
    %1025 = vmatprep.subr.mxu0 0.0
    %1026 = vmatpush1.xpose.msra.mxu0 0.0
    %1027 = vmatprep.subr.mxu0 0.0
    %1028 = vmatpush1.xpose.msra.mxu0 0.0
    %1029 = vmatprep.subr.mxu0 0.0
    %1030 = vmatpush1.xpose.msra.mxu0 0.0
    %1031 = vmatprep.subr.mxu0 0.0
    %1032 = vmatpush1.xpose.msra.mxu0 0.0
    %1033 = vmatprep.subr.mxu0 0.0
    %1034 = vmatpush1.xpose.msra.mxu0 0.0
    %1035 = vmatprep.subr.mxu0 0.0
    %1036 = vmatpush1.xpose.msra.mxu0 0.0
    %1037 = vmatprep.subr.mxu0 0.0
    %1038 = vmatpush1.xpose.msra.mxu0 0.0
    %1039 = vmatprep.subr.mxu0 0.0
    %1040 = vmatpush1.xpose.msra.mxu0 0.0
    %1041 = vmatprep.subr.mxu0 0.0
    %1042 = vmatpush1.xpose.msra.mxu0 0.0
    %1043 = vmatprep.subr.mxu0 0.0
    %1044 = vmatpush1.xpose.msra.mxu0 0.0
    %1045 = vmatprep.subr.mxu0 0.0
    %1046 = vmatpush1.xpose.msra.mxu0 0.0
    %1047 = vmatprep.subr.mxu0 0.0
    %1048 = vmatpush1.xpose.msra.mxu0 0.0
    %1049 = vmatprep.subr.mxu0 0.0
    %1050 = vmatpush1.xpose.msra.mxu0 0.0
    %1051 = vmatprep.subr.mxu0 0.0
    %1052 = vmatpush1.xpose.msra.mxu0 0.0
    %1053 = vmatprep.subr.mxu0 0.0
    %1054 = vmatpush1.xpose.msra.mxu0 0.0
    %1055 = vmatprep.subr.mxu0 0.0
    %1056 = vmatpush1.xpose.msra.mxu0 0.0
    %1057 = vmatprep.subr.mxu0 0.0
    %1058 = vmatpush1.xpose.msra.mxu0 0.0
    %1059 = vmatprep.subr.mxu0 0.0
    %1060 = vmatpush1.xpose.msra.mxu0 0.0
    %1061 = vmatprep.subr.mxu0 0.0
    %1062 = vmatpush1.xpose.msra.mxu0 0.0
    %1063 = vmatprep.subr.mxu0 0.0
    %1064 = vmatpush1.xpose.msra.mxu0 0.0
    %1065 = vmatprep.subr.mxu0 0.0
    %1066 = vmatpush1.xpose.msra.mxu0 0.0
    %1067 = vmatprep.subr.mxu0 0.0
    %1068 = vmatpush1.xpose.msra.mxu0 0.0
    %1069 = vmatprep.mubr.f32.mxu0 0.0
    %1070 = vmatmul.mubr.f32.gmra.mrb[0].mxu0 %v1001
    %v1071 = vpop.f32.mrb[0].mxu0
    %v1072 = vadd.f32 0.0, %v1071
    %v1073 = vpop.f32.mrb[0].mxu0
    %1074 = vdwg.mxu0
    %v1075 = vsel %vm852, %v777, 0
    %v1077 = vsel %vm852, %v801, 0
    %1079 = vmatprep.subr.mxu0 0.0
    %1080 = vmatpush1.xpose.msra.mxu0 %v1077
    %1081 = vmatprep.subr.mxu0 0.0
    %1082 = vmatpush1.xpose.msra.mxu0 0.0
    %1083 = vmatprep.subr.mxu0 0.0
    %1084 = vmatpush1.xpose.msra.mxu0 0.0
    %1085 = vmatprep.subr.mxu0 0.0
    %1086 = vmatpush1.xpose.msra.mxu0 0.0
    %1087 = vmatprep.subr.mxu0 0.0
    %1088 = vmatpush1.xpose.msra.mxu0 0.0
    %1089 = vmatprep.subr.mxu0 0.0
    %1090 = vmatpush1.xpose.msra.mxu0 0.0
    %1091 = vmatprep.subr.mxu0 0.0
    %1092 = vmatpush1.xpose.msra.mxu0 0.0
    %1093 = vmatprep.subr.mxu0 0.0
    %1094 = vmatpush1.xpose.msra.mxu0 0.0
    %1095 = vmatprep.subr.mxu0 0.0
    %1096 = vmatpush1.xpose.msra.mxu0 0.0
    %1097 = vmatprep.subr.mxu0 0.0
    %1098 = vmatpush1.xpose.msra.mxu0 0.0
    %1099 = vmatprep.subr.mxu0 0.0
    %1100 = vmatpush1.xpose.msra.mxu0 0.0
    %1101 = vmatprep.subr.mxu0 0.0
    %1102 = vmatpush1.xpose.msra.mxu0 0.0
    %1103 = vmatprep.subr.mxu0 0.0
    %1104 = vmatpush1.xpose.msra.mxu0 0.0
    %1105 = vmatprep.subr.mxu0 0.0
    %1106 = vmatpush1.xpose.msra.mxu0 0.0
    %1107 = vmatprep.subr.mxu0 0.0
    %1108 = vmatpush1.xpose.msra.mxu0 0.0
    %1109 = vmatprep.subr.mxu0 0.0
    %1110 = vmatpush1.xpose.msra.mxu0 0.0
    %1111 = vmatprep.subr.mxu0 0.0
    %1112 = vmatpush1.xpose.msra.mxu0 0.0
    %1113 = vmatprep.subr.mxu0 0.0
    %1114 = vmatpush1.xpose.msra.mxu0 0.0
    %1115 = vmatprep.subr.mxu0 0.0
    %1116 = vmatpush1.xpose.msra.mxu0 0.0
    %1117 = vmatprep.subr.mxu0 0.0
    %1118 = vmatpush1.xpose.msra.mxu0 0.0
    %1119 = vmatprep.subr.mxu0 0.0
    %1120 = vmatpush1.xpose.msra.mxu0 0.0
    %1121 = vmatprep.subr.mxu0 0.0
    %1122 = vmatpush1.xpose.msra.mxu0 0.0
    %1123 = vmatprep.subr.mxu0 0.0
    %1124 = vmatpush1.xpose.msra.mxu0 0.0
    %1125 = vmatprep.subr.mxu0 0.0
    %1126 = vmatpush1.xpose.msra.mxu0 0.0
    %1127 = vmatprep.subr.mxu0 0.0
    %1128 = vmatpush1.xpose.msra.mxu0 0.0
    %1129 = vmatprep.subr.mxu0 0.0
    %1130 = vmatpush1.xpose.msra.mxu0 0.0
    %1131 = vmatprep.subr.mxu0 0.0
    %1132 = vmatpush1.xpose.msra.mxu0 0.0
    %1133 = vmatprep.subr.mxu0 0.0
    %1134 = vmatpush1.xpose.msra.mxu0 0.0
    %1135 = vmatprep.subr.mxu0 0.0
    %1136 = vmatpush1.xpose.msra.mxu0 0.0
    %1137 = vmatprep.subr.mxu0 0.0
    %1138 = vmatpush1.xpose.msra.mxu0 0.0
    %1139 = vmatprep.subr.mxu0 0.0
    %1140 = vmatpush1.xpose.msra.mxu0 0.0
    %1141 = vmatprep.subr.mxu0 0.0
    %1142 = vmatpush1.xpose.msra.mxu0 0.0
    %1143 = vmatprep.mubr.f32.mxu0 0.0
    %1144 = vmatmul.mubr.f32.gmra.mrb[0].mxu0 %v1075
    %v1145 = vpop.f32.mrb[0].mxu0
    %v1146 = vadd.f32 0.0, %v1145
    %v1147 = vpop.f32.mrb[0].mxu0
    %1148 = vdwg.mxu0
    %v1149 = vsel %vm852, %v388, 0
    %v1151 = vsel %vm852, %v542, 0
    %1153 = vmatprep.subr.mxu0 0.0
    %1154 = vmatpush1.xpose.msra.mxu0 %v1151
    %1155 = vmatprep.subr.mxu0 0.0
    %1156 = vmatpush1.xpose.msra.mxu0 0.0
    %1157 = vmatprep.subr.mxu0 0.0
    %1158 = vmatpush1.xpose.msra.mxu0 0.0
    %1159 = vmatprep.subr.mxu0 0.0
    %1160 = vmatpush1.xpose.msra.mxu0 0.0
    %1161 = vmatprep.subr.mxu0 0.0
    %1162 = vmatpush1.xpose.msra.mxu0 0.0
    %1163 = vmatprep.subr.mxu0 0.0
    %1164 = vmatpush1.xpose.msra.mxu0 0.0
    %1165 = vmatprep.subr.mxu0 0.0
    %1166 = vmatpush1.xpose.msra.mxu0 0.0
    %1167 = vmatprep.subr.mxu0 0.0
    %1168 = vmatpush1.xpose.msra.mxu0 0.0
    %1169 = vmatprep.subr.mxu0 0.0
    %1170 = vmatpush1.xpose.msra.mxu0 0.0
    %1171 = vmatprep.subr.mxu0 0.0
    %1172 = vmatpush1.xpose.msra.mxu0 0.0
    %1173 = vmatprep.subr.mxu0 0.0
    %1174 = vmatpush1.xpose.msra.mxu0 0.0
    %1175 = vmatprep.subr.mxu0 0.0
    %1176 = vmatpush1.xpose.msra.mxu0 0.0
    %1177 = vmatprep.subr.mxu0 0.0
    %1178 = vmatpush1.xpose.msra.mxu0 0.0
    %1179 = vmatprep.subr.mxu0 0.0
    %1180 = vmatpush1.xpose.msra.mxu0 0.0
    %1181 = vmatprep.subr.mxu0 0.0
    %1182 = vmatpush1.xpose.msra.mxu0 0.0
    %1183 = vmatprep.subr.mxu0 0.0
    %1184 = vmatpush1.xpose.msra.mxu0 0.0
    %1185 = vmatprep.subr.mxu0 0.0
    %1186 = vmatpush1.xpose.msra.mxu0 0.0
    %1187 = vmatprep.subr.mxu0 0.0
    %1188 = vmatpush1.xpose.msra.mxu0 0.0
    %1189 = vmatprep.subr.mxu0 0.0
    %1190 = vmatpush1.xpose.msra.mxu0 0.0
    %1191 = vmatprep.subr.mxu0 0.0
    %1192 = vmatpush1.xpose.msra.mxu0 0.0
    %1193 = vmatprep.subr.mxu0 0.0
    %1194 = vmatpush1.xpose.msra.mxu0 0.0
    %1195 = vmatprep.subr.mxu0 0.0
    %1196 = vmatpush1.xpose.msra.mxu0 0.0
    %1197 = vmatprep.subr.mxu0 0.0
    %1198 = vmatpush1.xpose.msra.mxu0 0.0
    %1199 = vmatprep.subr.mxu0 0.0
    %1200 = vmatpush1.xpose.msra.mxu0 0.0
    %1201 = vmatprep.subr.mxu0 0.0
    %1202 = vmatpush1.xpose.msra.mxu0 0.0
    %1203 = vmatprep.subr.mxu0 0.0
    %1204 = vmatpush1.xpose.msra.mxu0 0.0
    %1205 = vmatprep.subr.mxu0 0.0
    %1206 = vmatpush1.xpose.msra.mxu0 0.0
    %1207 = vmatprep.subr.mxu0 0.0
    %1208 = vmatpush1.xpose.msra.mxu0 0.0
    %1209 = vmatprep.subr.mxu0 0.0
    %1210 = vmatpush1.xpose.msra.mxu0 0.0
    %1211 = vmatprep.subr.mxu0 0.0
    %1212 = vmatpush1.xpose.msra.mxu0 0.0
    %1213 = vmatprep.subr.mxu0 0.0
    %1214 = vmatpush1.xpose.msra.mxu0 0.0
    %1215 = vmatprep.subr.mxu0 0.0
    %1216 = vmatpush1.xpose.msra.mxu0 0.0
    %1217 = vmatprep.mubr.f32.mxu0 0.0
    %1218 = vmatmul.mubr.f32.gmra.mrb[0].mxu0 %v1149
    %v1219 = vpop.f32.mrb[0].mxu0
    %v1220 = vadd.f32 0.0, %v1219
    %v1221 = vpop.f32.mrb[0].mxu0
    %1222 = vdwg.mxu0
    %v1223 = vsel %vm852, %v780, 0
    %v1225 = vsel %vm852, %v804, 0
    %1227 = vmatprep.subr.mxu0 0.0
    %1228 = vmatpush1.xpose.msra.mxu0 %v1225
    %1229 = vmatprep.subr.mxu0 0.0
    %1230 = vmatpush1.xpose.msra.mxu0 0.0
    %1231 = vmatprep.subr.mxu0 0.0
    %1232 = vmatpush1.xpose.msra.mxu0 0.0
    %1233 = vmatprep.subr.mxu0 0.0
    %1234 = vmatpush1.xpose.msra.mxu0 0.0
    %1235 = vmatprep.subr.mxu0 0.0
    %1236 = vmatpush1.xpose.msra.mxu0 0.0
    %1237 = vmatprep.subr.mxu0 0.0
    %1238 = vmatpush1.xpose.msra.mxu0 0.0
    %1239 = vmatprep.subr.mxu0 0.0
    %1240 = vmatpush1.xpose.msra.mxu0 0.0
    %1241 = vmatprep.subr.mxu0 0.0
    %1242 = vmatpush1.xpose.msra.mxu0 0.0
    %1243 = vmatprep.subr.mxu0 0.0
    %1244 = vmatpush1.xpose.msra.mxu0 0.0
    %1245 = vmatprep.subr.mxu0 0.0
    %1246 = vmatpush1.xpose.msra.mxu0 0.0
    %1247 = vmatprep.subr.mxu0 0.0
    %1248 = vmatpush1.xpose.msra.mxu0 0.0
    %1249 = vmatprep.subr.mxu0 0.0
    %1250 = vmatpush1.xpose.msra.mxu0 0.0
    %1251 = vmatprep.subr.mxu0 0.0
    %1252 = vmatpush1.xpose.msra.mxu0 0.0
    %1253 = vmatprep.subr.mxu0 0.0
    %1254 = vmatpush1.xpose.msra.mxu0 0.0
    %1255 = vmatprep.subr.mxu0 0.0
    %1256 = vmatpush1.xpose.msra.mxu0 0.0
    %1257 = vmatprep.subr.mxu0 0.0
    %1258 = vmatpush1.xpose.msra.mxu0 0.0
    %1259 = vmatprep.subr.mxu0 0.0
    %1260 = vmatpush1.xpose.msra.mxu0 0.0
    %1261 = vmatprep.subr.mxu0 0.0
    %1262 = vmatpush1.xpose.msra.mxu0 0.0
    %1263 = vmatprep.subr.mxu0 0.0
    %1264 = vmatpush1.xpose.msra.mxu0 0.0
    %1265 = vmatprep.subr.mxu0 0.0
    %1266 = vmatpush1.xpose.msra.mxu0 0.0
    %1267 = vmatprep.subr.mxu0 0.0
    %1268 = vmatpush1.xpose.msra.mxu0 0.0
    %1269 = vmatprep.subr.mxu0 0.0
    %1270 = vmatpush1.xpose.msra.mxu0 0.0
    %1271 = vmatprep.subr.mxu0 0.0
    %1272 = vmatpush1.xpose.msra.mxu0 0.0
    %1273 = vmatprep.subr.mxu0 0.0
    %1274 = vmatpush1.xpose.msra.mxu0 0.0
    %1275 = vmatprep.subr.mxu0 0.0
    %1276 = vmatpush1.xpose.msra.mxu0 0.0
    %1277 = vmatprep.subr.mxu0 0.0
    %1278 = vmatpush1.xpose.msra.mxu0 0.0
    %1279 = vmatprep.subr.mxu0 0.0
    %1280 = vmatpush1.xpose.msra.mxu0 0.0
    %1281 = vmatprep.subr.mxu0 0.0
    %1282 = vmatpush1.xpose.msra.mxu0 0.0
    %1283 = vmatprep.subr.mxu0 0.0
    %1284 = vmatpush1.xpose.msra.mxu0 0.0
    %1285 = vmatprep.subr.mxu0 0.0
    %1286 = vmatpush1.xpose.msra.mxu0 0.0
    %1287 = vmatprep.subr.mxu0 0.0
    %1288 = vmatpush1.xpose.msra.mxu0 0.0
    %1289 = vmatprep.subr.mxu0 0.0
    %1290 = vmatpush1.xpose.msra.mxu0 0.0
    %1291 = vmatprep.mubr.f32.mxu0 0.0
    %1292 = vmatmul.mubr.f32.gmra.mrb[0].mxu0 %v1223
    %v1293 = vpop.f32.mrb[0].mxu0
    %v1294 = vadd.f32 0.0, %v1293
    %v1295 = vpop.f32.mrb[0].mxu0
    %1296 = vdwg.mxu0
    %v1297 = vsel %vm852, %v390, 0
    %v1299 = vsel %vm852, %v544, 0
    %1301 = vmatprep.subr.mxu0 0.0
    %1302 = vmatpush1.xpose.msra.mxu0 %v1299
    %1303 = vmatprep.subr.mxu0 0.0
    %1304 = vmatpush1.xpose.msra.mxu0 0.0
    %1305 = vmatprep.subr.mxu0 0.0
    %1306 = vmatpush1.xpose.msra.mxu0 0.0
    %1307 = vmatprep.subr.mxu0 0.0
    %1308 = vmatpush1.xpose.msra.mxu0 0.0
    %1309 = vmatprep.subr.mxu0 0.0
    %1310 = vmatpush1.xpose.msra.mxu0 0.0
    %1311 = vmatprep.subr.mxu0 0.0
    %1312 = vmatpush1.xpose.msra.mxu0 0.0
    %1313 = vmatprep.subr.mxu0 0.0
    %1314 = vmatpush1.xpose.msra.mxu0 0.0
    %1315 = vmatprep.subr.mxu0 0.0
    %1316 = vmatpush1.xpose.msra.mxu0 0.0
    %1317 = vmatprep.subr.mxu0 0.0
    %1318 = vmatpush1.xpose.msra.mxu0 0.0
    %1319 = vmatprep.subr.mxu0 0.0
    %1320 = vmatpush1.xpose.msra.mxu0 0.0
    %1321 = vmatprep.subr.mxu0 0.0
    %1322 = vmatpush1.xpose.msra.mxu0 0.0
    %1323 = vmatprep.subr.mxu0 0.0
    %1324 = vmatpush1.xpose.msra.mxu0 0.0
    %1325 = vmatprep.subr.mxu0 0.0
    %1326 = vmatpush1.xpose.msra.mxu0 0.0
    %1327 = vmatprep.subr.mxu0 0.0
    %1328 = vmatpush1.xpose.msra.mxu0 0.0
    %1329 = vmatprep.subr.mxu0 0.0
    %1330 = vmatpush1.xpose.msra.mxu0 0.0
    %1331 = vmatprep.subr.mxu0 0.0
    %1332 = vmatpush1.xpose.msra.mxu0 0.0
    %1333 = vmatprep.subr.mxu0 0.0
    %1334 = vmatpush1.xpose.msra.mxu0 0.0
    %1335 = vmatprep.subr.mxu0 0.0
    %1336 = vmatpush1.xpose.msra.mxu0 0.0
    %1337 = vmatprep.subr.mxu0 0.0
    %1338 = vmatpush1.xpose.msra.mxu0 0.0
    %1339 = vmatprep.subr.mxu0 0.0
    %1340 = vmatpush1.xpose.msra.mxu0 0.0
    %1341 = vmatprep.subr.mxu0 0.0
    %1342 = vmatpush1.xpose.msra.mxu0 0.0
    %1343 = vmatprep.subr.mxu0 0.0
    %1344 = vmatpush1.xpose.msra.mxu0 0.0
    %1345 = vmatprep.subr.mxu0 0.0
    %1346 = vmatpush1.xpose.msra.mxu0 0.0
    %1347 = vmatprep.subr.mxu0 0.0
    %1348 = vmatpush1.xpose.msra.mxu0 0.0
    %1349 = vmatprep.subr.mxu0 0.0
    %1350 = vmatpush1.xpose.msra.mxu0 0.0
    %1351 = vmatprep.subr.mxu0 0.0
    %1352 = vmatpush1.xpose.msra.mxu0 0.0
    %1353 = vmatprep.subr.mxu0 0.0
    %1354 = vmatpush1.xpose.msra.mxu0 0.0
    %1355 = vmatprep.subr.mxu0 0.0
    %1356 = vmatpush1.xpose.msra.mxu0 0.0
    %1357 = vmatprep.subr.mxu0 0.0
    %1358 = vmatpush1.xpose.msra.mxu0 0.0
    %1359 = vmatprep.subr.mxu0 0.0
    %1360 = vmatpush1.xpose.msra.mxu0 0.0
    %1361 = vmatprep.subr.mxu0 0.0
    %1362 = vmatpush1.xpose.msra.mxu0 0.0
    %1363 = vmatprep.subr.mxu0 0.0
    %1364 = vmatpush1.xpose.msra.mxu0 0.0
    %1365 = vmatprep.mubr.f32.mxu0 0.0
    %1366 = vmatmul.mubr.f32.gmra.mrb[0].mxu0 %v1297
    %v1367 = vpop.f32.mrb[0].mxu0
    %v1368 = vadd.f32 0.0, %v1367
    %v1369 = vpop.f32.mrb[0].mxu0
    %1370 = vdwg.mxu0
    %v1371 = vsel %vm852, %v783, 0
    %v1373 = vsel %vm852, %v807, 0
    %1375 = vmatprep.subr.mxu0 0.0
    %1376 = vmatpush1.xpose.msra.mxu0 %v1373
    %1377 = vmatprep.subr.mxu0 0.0
    %1378 = vmatpush1.xpose.msra.mxu0 0.0
    %1379 = vmatprep.subr.mxu0 0.0
    %1380 = vmatpush1.xpose.msra.mxu0 0.0
    %1381 = vmatprep.subr.mxu0 0.0
    %1382 = vmatpush1.xpose.msra.mxu0 0.0
    %1383 = vmatprep.subr.mxu0 0.0
    %1384 = vmatpush1.xpose.msra.mxu0 0.0
    %1385 = vmatprep.subr.mxu0 0.0
    %1386 = vmatpush1.xpose.msra.mxu0 0.0
    %1387 = vmatprep.subr.mxu0 0.0
    %1388 = vmatpush1.xpose.msra.mxu0 0.0
    %1389 = vmatprep.subr.mxu0 0.0
    %1390 = vmatpush1.xpose.msra.mxu0 0.0
    %1391 = vmatprep.subr.mxu0 0.0
    %1392 = vmatpush1.xpose.msra.mxu0 0.0
    %1393 = vmatprep.subr.mxu0 0.0
    %1394 = vmatpush1.xpose.msra.mxu0 0.0
    %1395 = vmatprep.subr.mxu0 0.0
    %1396 = vmatpush1.xpose.msra.mxu0 0.0
    %1397 = vmatprep.subr.mxu0 0.0
    %1398 = vmatpush1.xpose.msra.mxu0 0.0
    %1399 = vmatprep.subr.mxu0 0.0
    %1400 = vmatpush1.xpose.msra.mxu0 0.0
    %1401 = vmatprep.subr.mxu0 0.0
    %1402 = vmatpush1.xpose.msra.mxu0 0.0
    %1403 = vmatprep.subr.mxu0 0.0
    %1404 = vmatpush1.xpose.msra.mxu0 0.0
    %1405 = vmatprep.subr.mxu0 0.0
    %1406 = vmatpush1.xpose.msra.mxu0 0.0
    %1407 = vmatprep.subr.mxu0 0.0
    %1408 = vmatpush1.xpose.msra.mxu0 0.0
    %1409 = vmatprep.subr.mxu0 0.0
    %1410 = vmatpush1.xpose.msra.mxu0 0.0
    %1411 = vmatprep.subr.mxu0 0.0
    %1412 = vmatpush1.xpose.msra.mxu0 0.0
    %1413 = vmatprep.subr.mxu0 0.0
    %1414 = vmatpush1.xpose.msra.mxu0 0.0
    %1415 = vmatprep.subr.mxu0 0.0
    %1416 = vmatpush1.xpose.msra.mxu0 0.0
    %1417 = vmatprep.subr.mxu0 0.0
    %1418 = vmatpush1.xpose.msra.mxu0 0.0
    %1419 = vmatprep.subr.mxu0 0.0
    %1420 = vmatpush1.xpose.msra.mxu0 0.0
    %1421 = vmatprep.subr.mxu0 0.0
    %1422 = vmatpush1.xpose.msra.mxu0 0.0
    %1423 = vmatprep.subr.mxu0 0.0
    %1424 = vmatpush1.xpose.msra.mxu0 0.0
    %1425 = vmatprep.subr.mxu0 0.0
    %1426 = vmatpush1.xpose.msra.mxu0 0.0
    %1427 = vmatprep.subr.mxu0 0.0
    %1428 = vmatpush1.xpose.msra.mxu0 0.0
    %1429 = vmatprep.subr.mxu0 0.0
    %1430 = vmatpush1.xpose.msra.mxu0 0.0
    %1431 = vmatprep.subr.mxu0 0.0
    %1432 = vmatpush1.xpose.msra.mxu0 0.0
    %1433 = vmatprep.subr.mxu0 0.0
    %1434 = vmatpush1.xpose.msra.mxu0 0.0
    %1435 = vmatprep.subr.mxu0 0.0
    %1436 = vmatpush1.xpose.msra.mxu0 0.0
    %1437 = vmatprep.subr.mxu0 0.0
    %1438 = vmatpush1.xpose.msra.mxu0 0.0
    %1439 = vmatprep.mubr.f32.mxu0 0.0
    %1440 = vmatmul.mubr.f32.gmra.mrb[0].mxu0 %v1371
    %v1441 = vpop.f32.mrb[0].mxu0
    %v1442 = vadd.f32 0.0, %v1441
    %v1443 = vpop.f32.mrb[0].mxu0
    %1444 = vdwg.mxu0
    %v1445 = vsel %vm852, %v317, 0
    %v1447 = vsel %vm852, %v471, 0
    %1449 = vmatprep.subr.mxu0 0.0
    %1450 = vmatpush1.xpose.msra.mxu0 %v1447
    %1451 = vmatprep.subr.mxu0 0.0
    %1452 = vmatpush1.xpose.msra.mxu0 0.0
    %1453 = vmatprep.subr.mxu0 0.0
    %1454 = vmatpush1.xpose.msra.mxu0 0.0
    %1455 = vmatprep.subr.mxu0 0.0
    %1456 = vmatpush1.xpose.msra.mxu0 0.0
    %1457 = vmatprep.subr.mxu0 0.0
    %1458 = vmatpush1.xpose.msra.mxu0 0.0
    %1459 = vmatprep.subr.mxu0 0.0
    %1460 = vmatpush1.xpose.msra.mxu0 0.0
    %1461 = vmatprep.subr.mxu0 0.0
    %1462 = vmatpush1.xpose.msra.mxu0 0.0
    %1463 = vmatprep.subr.mxu0 0.0
    %1464 = vmatpush1.xpose.msra.mxu0 0.0
    %1465 = vmatprep.subr.mxu0 0.0
    %1466 = vmatpush1.xpose.msra.mxu0 0.0
    %1467 = vmatprep.subr.mxu0 0.0
    %1468 = vmatpush1.xpose.msra.mxu0 0.0
    %1469 = vmatprep.subr.mxu0 0.0
    %1470 = vmatpush1.xpose.msra.mxu0 0.0
    %1471 = vmatprep.subr.mxu0 0.0
    %1472 = vmatpush1.xpose.msra.mxu0 0.0
    %1473 = vmatprep.subr.mxu0 0.0
    %1474 = vmatpush1.xpose.msra.mxu0 0.0
    %1475 = vmatprep.subr.mxu0 0.0
    %1476 = vmatpush1.xpose.msra.mxu0 0.0
    %1477 = vmatprep.subr.mxu0 0.0
    %1478 = vmatpush1.xpose.msra.mxu0 0.0
    %1479 = vmatprep.subr.mxu0 0.0
    %1480 = vmatpush1.xpose.msra.mxu0 0.0
    %1481 = vmatprep.subr.mxu0 0.0
    %1482 = vmatpush1.xpose.msra.mxu0 0.0
    %1483 = vmatprep.subr.mxu0 0.0
    %1484 = vmatpush1.xpose.msra.mxu0 0.0
    %1485 = vmatprep.subr.mxu0 0.0
    %1486 = vmatpush1.xpose.msra.mxu0 0.0
    %1487 = vmatprep.subr.mxu0 0.0
    %1488 = vmatpush1.xpose.msra.mxu0 0.0
    %1489 = vmatprep.subr.mxu0 0.0
    %1490 = vmatpush1.xpose.msra.mxu0 0.0
    %1491 = vmatprep.subr.mxu0 0.0
    %1492 = vmatpush1.xpose.msra.mxu0 0.0
    %1493 = vmatprep.subr.mxu0 0.0
    %1494 = vmatpush1.xpose.msra.mxu0 0.0
    %1495 = vmatprep.subr.mxu0 0.0
    %1496 = vmatpush1.xpose.msra.mxu0 0.0
    %1497 = vmatprep.subr.mxu0 0.0
    %1498 = vmatpush1.xpose.msra.mxu0 0.0
    %1499 = vmatprep.subr.mxu0 0.0
    %1500 = vmatpush1.xpose.msra.mxu0 0.0
    %1501 = vmatprep.subr.mxu0 0.0
    %1502 = vmatpush1.xpose.msra.mxu0 0.0
    %1503 = vmatprep.subr.mxu0 0.0
    %1504 = vmatpush1.xpose.msra.mxu0 0.0
    %1505 = vmatprep.subr.mxu0 0.0
    %1506 = vmatpush1.xpose.msra.mxu0 0.0
    %1507 = vmatprep.subr.mxu0 0.0
    %1508 = vmatpush1.xpose.msra.mxu0 0.0
    %1509 = vmatprep.subr.mxu0 0.0
    %1510 = vmatpush1.xpose.msra.mxu0 0.0
    %1511 = vmatprep.subr.mxu0 0.0
    %1512 = vmatpush1.xpose.msra.mxu0 0.0
    %1513 = vmatprep.mubr.f32.mxu0 0.0
    %1514 = vmatmul.mubr.f32.gmra.mrb[0].mxu0 %v1445
    %v1515 = vpop.f32.mrb[0].mxu0
    %v1516 = vadd.f32 0.0, %v1515
    %v1517 = vpop.f32.mrb[0].mxu0
    %1518 = vdwg.mxu0
    %v1519 = vsel %vm852, %v786, 0
    %v1521 = vsel %vm852, %v810, 0
    %1523 = vmatprep.subr.mxu0 0.0
    %1524 = vmatpush1.xpose.msra.mxu0 %v1521
    %1525 = vmatprep.subr.mxu0 0.0
    %1526 = vmatpush1.xpose.msra.mxu0 0.0
    %1527 = vmatprep.subr.mxu0 0.0
    %1528 = vmatpush1.xpose.msra.mxu0 0.0
    %1529 = vmatprep.subr.mxu0 0.0
    %1530 = vmatpush1.xpose.msra.mxu0 0.0
    %1531 = vmatprep.subr.mxu0 0.0
    %1532 = vmatpush1.xpose.msra.mxu0 0.0
    %1533 = vmatprep.subr.mxu0 0.0
    %1534 = vmatpush1.xpose.msra.mxu0 0.0
    %1535 = vmatprep.subr.mxu0 0.0
    %1536 = vmatpush1.xpose.msra.mxu0 0.0
    %1537 = vmatprep.subr.mxu0 0.0
    %1538 = vmatpush1.xpose.msra.mxu0 0.0
    %1539 = vmatprep.subr.mxu0 0.0
    %1540 = vmatpush1.xpose.msra.mxu0 0.0
    %1541 = vmatprep.subr.mxu0 0.0
    %1542 = vmatpush1.xpose.msra.mxu0 0.0
    %1543 = vmatprep.subr.mxu0 0.0
    %1544 = vmatpush1.xpose.msra.mxu0 0.0
    %1545 = vmatprep.subr.mxu0 0.0
    %1546 = vmatpush1.xpose.msra.mxu0 0.0
    %1547 = vmatprep.subr.mxu0 0.0
    %1548 = vmatpush1.xpose.msra.mxu0 0.0
    %1549 = vmatprep.subr.mxu0 0.0
    %1550 = vmatpush1.xpose.msra.mxu0 0.0
    %1551 = vmatprep.subr.mxu0 0.0
    %1552 = vmatpush1.xpose.msra.mxu0 0.0
    %1553 = vmatprep.subr.mxu0 0.0
    %1554 = vmatpush1.xpose.msra.mxu0 0.0
    %1555 = vmatprep.subr.mxu0 0.0
    %1556 = vmatpush1.xpose.msra.mxu0 0.0
    %1557 = vmatprep.subr.mxu0 0.0
    %1558 = vmatpush1.xpose.msra.mxu0 0.0
    %1559 = vmatprep.subr.mxu0 0.0
    %1560 = vmatpush1.xpose.msra.mxu0 0.0
    %1561 = vmatprep.subr.mxu0 0.0
    %1562 = vmatpush1.xpose.msra.mxu0 0.0
    %1563 = vmatprep.subr.mxu0 0.0
    %1564 = vmatpush1.xpose.msra.mxu0 0.0
    %1565 = vmatprep.subr.mxu0 0.0
    %1566 = vmatpush1.xpose.msra.mxu0 0.0
    %1567 = vmatprep.subr.mxu0 0.0
    %1568 = vmatpush1.xpose.msra.mxu0 0.0
    %1569 = vmatprep.subr.mxu0 0.0
    %1570 = vmatpush1.xpose.msra.mxu0 0.0
    %1571 = vmatprep.subr.mxu0 0.0
    %1572 = vmatpush1.xpose.msra.mxu0 0.0
    %1573 = vmatprep.subr.mxu0 0.0
    %1574 = vmatpush1.xpose.msra.mxu0 0.0
    %1575 = vmatprep.subr.mxu0 0.0
    %1576 = vmatpush1.xpose.msra.mxu0 0.0
    %1577 = vmatprep.subr.mxu0 0.0
    %1578 = vmatpush1.xpose.msra.mxu0 0.0
    %1579 = vmatprep.subr.mxu0 0.0
    %1580 = vmatpush1.xpose.msra.mxu0 0.0
    %1581 = vmatprep.subr.mxu0 0.0
    %1582 = vmatpush1.xpose.msra.mxu0 0.0
    %1583 = vmatprep.subr.mxu0 0.0
    %1584 = vmatpush1.xpose.msra.mxu0 0.0
    %1585 = vmatprep.subr.mxu0 0.0
    %1586 = vmatpush1.xpose.msra.mxu0 0.0
    %1587 = vmatprep.mubr.f32.mxu0 0.0
    %1588 = vmatmul.mubr.f32.gmra.mrb[0].mxu0 %v1519
    %v1589 = vpop.f32.mrb[0].mxu0
    %v1590 = vadd.f32 0.0, %v1589
    %v1591 = vpop.f32.mrb[0].mxu0
    %1592 = vdwg.mxu0
    %v1593 = vsel %vm852, %v319, 0
    %v1595 = vsel %vm852, %v473, 0
    %1597 = vmatprep.subr.mxu0 0.0
    %1598 = vmatpush1.xpose.msra.mxu0 %v1595
    %1599 = vmatprep.subr.mxu0 0.0
    %1600 = vmatpush1.xpose.msra.mxu0 0.0
    %1601 = vmatprep.subr.mxu0 0.0
    %1602 = vmatpush1.xpose.msra.mxu0 0.0
    %1603 = vmatprep.subr.mxu0 0.0
    %1604 = vmatpush1.xpose.msra.mxu0 0.0
    %1605 = vmatprep.subr.mxu0 0.0
    %1606 = vmatpush1.xpose.msra.mxu0 0.0
    %1607 = vmatprep.subr.mxu0 0.0
    %1608 = vmatpush1.xpose.msra.mxu0 0.0
    %1609 = vmatprep.subr.mxu0 0.0
    %1610 = vmatpush1.xpose.msra.mxu0 0.0
    %1611 = vmatprep.subr.mxu0 0.0
    %1612 = vmatpush1.xpose.msra.mxu0 0.0
    %1613 = vmatprep.subr.mxu0 0.0
    %1614 = vmatpush1.xpose.msra.mxu0 0.0
    %1615 = vmatprep.subr.mxu0 0.0
    %1616 = vmatpush1.xpose.msra.mxu0 0.0
    %1617 = vmatprep.subr.mxu0 0.0
    %1618 = vmatpush1.xpose.msra.mxu0 0.0
    %1619 = vmatprep.subr.mxu0 0.0
    %1620 = vmatpush1.xpose.msra.mxu0 0.0
    %1621 = vmatprep.subr.mxu0 0.0
    %1622 = vmatpush1.xpose.msra.mxu0 0.0
    %1623 = vmatprep.subr.mxu0 0.0
    %1624 = vmatpush1.xpose.msra.mxu0 0.0
    %1625 = vmatprep.subr.mxu0 0.0
    %1626 = vmatpush1.xpose.msra.mxu0 0.0
    %1627 = vmatprep.subr.mxu0 0.0
    %1628 = vmatpush1.xpose.msra.mxu0 0.0
    %1629 = vmatprep.subr.mxu0 0.0
    %1630 = vmatpush1.xpose.msra.mxu0 0.0
    %1631 = vmatprep.subr.mxu0 0.0
    %1632 = vmatpush1.xpose.msra.mxu0 0.0
    %1633 = vmatprep.subr.mxu0 0.0
    %1634 = vmatpush1.xpose.msra.mxu0 0.0
    %1635 = vmatprep.subr.mxu0 0.0
    %1636 = vmatpush1.xpose.msra.mxu0 0.0
    %1637 = vmatprep.subr.mxu0 0.0
    %1638 = vmatpush1.xpose.msra.mxu0 0.0
    %1639 = vmatprep.subr.mxu0 0.0
    %1640 = vmatpush1.xpose.msra.mxu0 0.0
    %1641 = vmatprep.subr.mxu0 0.0
    %1642 = vmatpush1.xpose.msra.mxu0 0.0
    %1643 = vmatprep.subr.mxu0 0.0
    %1644 = vmatpush1.xpose.msra.mxu0 0.0
    %1645 = vmatprep.subr.mxu0 0.0
    %1646 = vmatpush1.xpose.msra.mxu0 0.0
    %1647 = vmatprep.subr.mxu0 0.0
    %1648 = vmatpush1.xpose.msra.mxu0 0.0
    %1649 = vmatprep.subr.mxu0 0.0
    %1650 = vmatpush1.xpose.msra.mxu0 0.0
    %1651 = vmatprep.subr.mxu0 0.0
    %1652 = vmatpush1.xpose.msra.mxu0 0.0
    %1653 = vmatprep.subr.mxu0 0.0
    %1654 = vmatpush1.xpose.msra.mxu0 0.0
    %1655 = vmatprep.subr.mxu0 0.0
    %1656 = vmatpush1.xpose.msra.mxu0 0.0
    %1657 = vmatprep.subr.mxu0 0.0
    %1658 = vmatpush1.xpose.msra.mxu0 0.0
    %1659 = vmatprep.subr.mxu0 0.0
    %1660 = vmatpush1.xpose.msra.mxu0 0.0
    %1661 = vmatprep.mubr.f32.mxu0 0.0
    %1662 = vmatmul.mubr.f32.gmra.mrb[0].mxu0 %v1593
    %v1663 = vpop.f32.mrb[0].mxu0
    %v1664 = vadd.f32 0.0, %v1663
    %v1665 = vpop.f32.mrb[0].mxu0
    %1666 = vdwg.mxu0
    %v1667 = vsel %vm852, %v789, 0
    %v1669 = vsel %vm852, %v813, 0
    %1671 = vmatprep.subr.mxu0 0.0
    %1672 = vmatpush1.xpose.msra.mxu0 %v1669
    %1673 = vmatprep.subr.mxu0 0.0
    %1674 = vmatpush1.xpose.msra.mxu0 0.0
    %1675 = vmatprep.subr.mxu0 0.0
    %1676 = vmatpush1.xpose.msra.mxu0 0.0
    %1677 = vmatprep.subr.mxu0 0.0
    %1678 = vmatpush1.xpose.msra.mxu0 0.0
    %1679 = vmatprep.subr.mxu0 0.0
    %1680 = vmatpush1.xpose.msra.mxu0 0.0
    %1681 = vmatprep.subr.mxu0 0.0
    %1682 = vmatpush1.xpose.msra.mxu0 0.0
    %1683 = vmatprep.subr.mxu0 0.0
    %1684 = vmatpush1.xpose.msra.mxu0 0.0
    %1685 = vmatprep.subr.mxu0 0.0
    %1686 = vmatpush1.xpose.msra.mxu0 0.0
    %1687 = vmatprep.subr.mxu0 0.0
    %1688 = vmatpush1.xpose.msra.mxu0 0.0
    %1689 = vmatprep.subr.mxu0 0.0
    %1690 = vmatpush1.xpose.msra.mxu0 0.0
    %1691 = vmatprep.subr.mxu0 0.0
    %1692 = vmatpush1.xpose.msra.mxu0 0.0
    %1693 = vmatprep.subr.mxu0 0.0
    %1694 = vmatpush1.xpose.msra.mxu0 0.0
    %1695 = vmatprep.subr.mxu0 0.0
    %1696 = vmatpush1.xpose.msra.mxu0 0.0
    %1697 = vmatprep.subr.mxu0 0.0
    %1698 = vmatpush1.xpose.msra.mxu0 0.0
    %1699 = vmatprep.subr.mxu0 0.0
    %1700 = vmatpush1.xpose.msra.mxu0 0.0
    %1701 = vmatprep.subr.mxu0 0.0
    %1702 = vmatpush1.xpose.msra.mxu0 0.0
    %1703 = vmatprep.subr.mxu0 0.0
    %1704 = vmatpush1.xpose.msra.mxu0 0.0
    %1705 = vmatprep.subr.mxu0 0.0
    %1706 = vmatpush1.xpose.msra.mxu0 0.0
    %1707 = vmatprep.subr.mxu0 0.0
    %1708 = vmatpush1.xpose.msra.mxu0 0.0
    %1709 = vmatprep.subr.mxu0 0.0
    %1710 = vmatpush1.xpose.msra.mxu0 0.0
    %1711 = vmatprep.subr.mxu0 0.0
    %1712 = vmatpush1.xpose.msra.mxu0 0.0
    %1713 = vmatprep.subr.mxu0 0.0
    %1714 = vmatpush1.xpose.msra.mxu0 0.0
    %1715 = vmatprep.subr.mxu0 0.0
    %1716 = vmatpush1.xpose.msra.mxu0 0.0
    %1717 = vmatprep.subr.mxu0 0.0
    %1718 = vmatpush1.xpose.msra.mxu0 0.0
    %1719 = vmatprep.subr.mxu0 0.0
    %1720 = vmatpush1.xpose.msra.mxu0 0.0
    %1721 = vmatprep.subr.mxu0 0.0
    %1722 = vmatpush1.xpose.msra.mxu0 0.0
    %1723 = vmatprep.subr.mxu0 0.0
    %1724 = vmatpush1.xpose.msra.mxu0 0.0
    %1725 = vmatprep.subr.mxu0 0.0
    %1726 = vmatpush1.xpose.msra.mxu0 0.0
    %1727 = vmatprep.subr.mxu0 0.0
    %1728 = vmatpush1.xpose.msra.mxu0 0.0
    %1729 = vmatprep.subr.mxu0 0.0
    %1730 = vmatpush1.xpose.msra.mxu0 0.0
    %1731 = vmatprep.subr.mxu0 0.0
    %1732 = vmatpush1.xpose.msra.mxu0 0.0
    %1733 = vmatprep.subr.mxu0 0.0
    %1734 = vmatpush1.xpose.msra.mxu0 0.0
    %1735 = vmatprep.mubr.f32.mxu0 0.0
    %1736 = vmatmul.mubr.f32.gmra.mrb[0].mxu0 %v1667
    %v1737 = vpop.f32.mrb[0].mxu0
    %v1738 = vadd.f32 0.0, %v1737
    %v1739 = vpop.f32.mrb[0].mxu0
    %1740 = vdwg.mxu0
    %v1741 = vsel %vm852, %v394, 0
    %v1743 = vsel %vm852, %v548, 0
    %1745 = vmatprep.subr.mxu0 0.0
    %1746 = vmatpush1.xpose.msra.mxu0 %v1743
    %1747 = vmatprep.subr.mxu0 0.0
    %1748 = vmatpush1.xpose.msra.mxu0 0.0
    %1749 = vmatprep.subr.mxu0 0.0
    %1750 = vmatpush1.xpose.msra.mxu0 0.0
    %1751 = vmatprep.subr.mxu0 0.0
    %1752 = vmatpush1.xpose.msra.mxu0 0.0
    %1753 = vmatprep.subr.mxu0 0.0
    %1754 = vmatpush1.xpose.msra.mxu0 0.0
    %1755 = vmatprep.subr.mxu0 0.0
    %1756 = vmatpush1.xpose.msra.mxu0 0.0
    %1757 = vmatprep.subr.mxu0 0.0
    %1758 = vmatpush1.xpose.msra.mxu0 0.0
    %1759 = vmatprep.subr.mxu0 0.0
    %1760 = vmatpush1.xpose.msra.mxu0 0.0
    %1761 = vmatprep.subr.mxu0 0.0
    %1762 = vmatpush1.xpose.msra.mxu0 0.0
    %1763 = vmatprep.subr.mxu0 0.0
    %1764 = vmatpush1.xpose.msra.mxu0 0.0
    %1765 = vmatprep.subr.mxu0 0.0
    %1766 = vmatpush1.xpose.msra.mxu0 0.0
    %1767 = vmatprep.subr.mxu0 0.0
    %1768 = vmatpush1.xpose.msra.mxu0 0.0
    %1769 = vmatprep.subr.mxu0 0.0
    %1770 = vmatpush1.xpose.msra.mxu0 0.0
    %1771 = vmatprep.subr.mxu0 0.0
    %1772 = vmatpush1.xpose.msra.mxu0 0.0
    %1773 = vmatprep.subr.mxu0 0.0
    %1774 = vmatpush1.xpose.msra.mxu0 0.0
    %1775 = vmatprep.subr.mxu0 0.0
    %1776 = vmatpush1.xpose.msra.mxu0 0.0
    %1777 = vmatprep.subr.mxu0 0.0
    %1778 = vmatpush1.xpose.msra.mxu0 0.0
    %1779 = vmatprep.subr.mxu0 0.0
    %1780 = vmatpush1.xpose.msra.mxu0 0.0
    %1781 = vmatprep.subr.mxu0 0.0
    %1782 = vmatpush1.xpose.msra.mxu0 0.0
    %1783 = vmatprep.subr.mxu0 0.0
    %1784 = vmatpush1.xpose.msra.mxu0 0.0
    %1785 = vmatprep.subr.mxu0 0.0
    %1786 = vmatpush1.xpose.msra.mxu0 0.0
    %1787 = vmatprep.subr.mxu0 0.0
    %1788 = vmatpush1.xpose.msra.mxu0 0.0
    %1789 = vmatprep.subr.mxu0 0.0
    %1790 = vmatpush1.xpose.msra.mxu0 0.0
    %1791 = vmatprep.subr.mxu0 0.0
    %1792 = vmatpush1.xpose.msra.mxu0 0.0
    %1793 = vmatprep.subr.mxu0 0.0
    %1794 = vmatpush1.xpose.msra.mxu0 0.0
    %1795 = vmatprep.subr.mxu0 0.0
    %1796 = vmatpush1.xpose.msra.mxu0 0.0
    %1797 = vmatprep.subr.mxu0 0.0
    %1798 = vmatpush1.xpose.msra.mxu0 0.0
    %1799 = vmatprep.subr.mxu0 0.0
    %1800 = vmatpush1.xpose.msra.mxu0 0.0
    %1801 = vmatprep.subr.mxu0 0.0
    %1802 = vmatpush1.xpose.msra.mxu0 0.0
    %1803 = vmatprep.subr.mxu0 0.0
    %1804 = vmatpush1.xpose.msra.mxu0 0.0
    %1805 = vmatprep.subr.mxu0 0.0
    %1806 = vmatpush1.xpose.msra.mxu0 0.0
    %1807 = vmatprep.subr.mxu0 0.0
    %1808 = vmatpush1.xpose.msra.mxu0 0.0
    %1809 = vmatprep.mubr.f32.mxu0 0.0
    %1810 = vmatmul.mubr.f32.gmra.mrb[0].mxu0 %v1741
    %v1811 = vpop.f32.mrb[0].mxu0
    %v1812 = vadd.f32 0.0, %v1811
    %v1813 = vpop.f32.mrb[0].mxu0
    %1814 = vdwg.mxu0
    %v1815 = vsel %vm852, %v792, 0
    %v1817 = vsel %vm852, %v816, 0
    %1819 = vmatprep.subr.mxu0 0.0
    %1820 = vmatpush1.xpose.msra.mxu0 %v1817
    %1821 = vmatprep.subr.mxu0 0.0
    %1822 = vmatpush1.xpose.msra.mxu0 0.0
    %1823 = vmatprep.subr.mxu0 0.0
    %1824 = vmatpush1.xpose.msra.mxu0 0.0
    %1825 = vmatprep.subr.mxu0 0.0
    %1826 = vmatpush1.xpose.msra.mxu0 0.0
    %1827 = vmatprep.subr.mxu0 0.0
    %1828 = vmatpush1.xpose.msra.mxu0 0.0
    %1829 = vmatprep.subr.mxu0 0.0
    %1830 = vmatpush1.xpose.msra.mxu0 0.0
    %1831 = vmatprep.subr.mxu0 0.0
    %1832 = vmatpush1.xpose.msra.mxu0 0.0
    %1833 = vmatprep.subr.mxu0 0.0
    %1834 = vmatpush1.xpose.msra.mxu0 0.0
    %1835 = vmatprep.subr.mxu0 0.0
    %1836 = vmatpush1.xpose.msra.mxu0 0.0
    %1837 = vmatprep.subr.mxu0 0.0
    %1838 = vmatpush1.xpose.msra.mxu0 0.0
    %1839 = vmatprep.subr.mxu0 0.0
    %1840 = vmatpush1.xpose.msra.mxu0 0.0
    %1841 = vmatprep.subr.mxu0 0.0
    %1842 = vmatpush1.xpose.msra.mxu0 0.0
    %1843 = vmatprep.subr.mxu0 0.0
    %1844 = vmatpush1.xpose.msra.mxu0 0.0
    %1845 = vmatprep.subr.mxu0 0.0
    %1846 = vmatpush1.xpose.msra.mxu0 0.0
    %1847 = vmatprep.subr.mxu0 0.0
    %1848 = vmatpush1.xpose.msra.mxu0 0.0
    %1849 = vmatprep.subr.mxu0 0.0
    %1850 = vmatpush1.xpose.msra.mxu0 0.0
    %1851 = vmatprep.subr.mxu0 0.0
    %1852 = vmatpush1.xpose.msra.mxu0 0.0
    %1853 = vmatprep.subr.mxu0 0.0
    %1854 = vmatpush1.xpose.msra.mxu0 0.0
    %1855 = vmatprep.subr.mxu0 0.0
    %1856 = vmatpush1.xpose.msra.mxu0 0.0
    %1857 = vmatprep.subr.mxu0 0.0
    %1858 = vmatpush1.xpose.msra.mxu0 0.0
    %1859 = vmatprep.subr.mxu0 0.0
    %1860 = vmatpush1.xpose.msra.mxu0 0.0
    %1861 = vmatprep.subr.mxu0 0.0
    %1862 = vmatpush1.xpose.msra.mxu0 0.0
    %1863 = vmatprep.subr.mxu0 0.0
    %1864 = vmatpush1.xpose.msra.mxu0 0.0
    %1865 = vmatprep.subr.mxu0 0.0
    %1866 = vmatpush1.xpose.msra.mxu0 0.0
    %1867 = vmatprep.subr.mxu0 0.0
    %1868 = vmatpush1.xpose.msra.mxu0 0.0
    %1869 = vmatprep.subr.mxu0 0.0
    %1870 = vmatpush1.xpose.msra.mxu0 0.0
    %1871 = vmatprep.subr.mxu0 0.0
    %1872 = vmatpush1.xpose.msra.mxu0 0.0
    %1873 = vmatprep.subr.mxu0 0.0
    %1874 = vmatpush1.xpose.msra.mxu0 0.0
    %1875 = vmatprep.subr.mxu0 0.0
    %1876 = vmatpush1.xpose.msra.mxu0 0.0
    %1877 = vmatprep.subr.mxu0 0.0
    %1878 = vmatpush1.xpose.msra.mxu0 0.0
    %1879 = vmatprep.subr.mxu0 0.0
    %1880 = vmatpush1.xpose.msra.mxu0 0.0
    %1881 = vmatprep.subr.mxu0 0.0
    %1882 = vmatpush1.xpose.msra.mxu0 0.0
    %1883 = vmatprep.mubr.f32.mxu0 0.0
    %1884 = vmatmul.mubr.f32.gmra.mrb[0].mxu0 %v1815
    %v1885 = vpop.f32.mrb[0].mxu0
    %v1886 = vadd.f32 0.0, %v1885
    %v1887 = vpop.f32.mrb[0].mxu0
    %1888 = vdwg.mxu0
    %v1889 = vsel %vm852, %v396, 0
    %v1891 = vsel %vm852, %v550, 0
    %1893 = vmatprep.subr.mxu0 0.0
    %1894 = vmatpush1.xpose.msra.mxu0 %v1891
    %1895 = vmatprep.subr.mxu0 0.0
    %1896 = vmatpush1.xpose.msra.mxu0 0.0
    %1897 = vmatprep.subr.mxu0 0.0
    %1898 = vmatpush1.xpose.msra.mxu0 0.0
    %1899 = vmatprep.subr.mxu0 0.0
    %1900 = vmatpush1.xpose.msra.mxu0 0.0
    %1901 = vmatprep.subr.mxu0 0.0
    %1902 = vmatpush1.xpose.msra.mxu0 0.0
    %1903 = vmatprep.subr.mxu0 0.0
    %1904 = vmatpush1.xpose.msra.mxu0 0.0
    %1905 = vmatprep.subr.mxu0 0.0
    %1906 = vmatpush1.xpose.msra.mxu0 0.0
    %1907 = vmatprep.subr.mxu0 0.0
    %1908 = vmatpush1.xpose.msra.mxu0 0.0
    %1909 = vmatprep.subr.mxu0 0.0
    %1910 = vmatpush1.xpose.msra.mxu0 0.0
    %1911 = vmatprep.subr.mxu0 0.0
    %1912 = vmatpush1.xpose.msra.mxu0 0.0
    %1913 = vmatprep.subr.mxu0 0.0
    %1914 = vmatpush1.xpose.msra.mxu0 0.0
    %1915 = vmatprep.subr.mxu0 0.0
    %1916 = vmatpush1.xpose.msra.mxu0 0.0
    %1917 = vmatprep.subr.mxu0 0.0
    %1918 = vmatpush1.xpose.msra.mxu0 0.0
    %1919 = vmatprep.subr.mxu0 0.0
    %1920 = vmatpush1.xpose.msra.mxu0 0.0
    %1921 = vmatprep.subr.mxu0 0.0
    %1922 = vmatpush1.xpose.msra.mxu0 0.0
    %1923 = vmatprep.subr.mxu0 0.0
    %1924 = vmatpush1.xpose.msra.mxu0 0.0
    %1925 = vmatprep.subr.mxu0 0.0
    %1926 = vmatpush1.xpose.msra.mxu0 0.0
    %1927 = vmatprep.subr.mxu0 0.0
    %1928 = vmatpush1.xpose.msra.mxu0 0.0
    %1929 = vmatprep.subr.mxu0 0.0
    %1930 = vmatpush1.xpose.msra.mxu0 0.0
    %1931 = vmatprep.subr.mxu0 0.0
    %1932 = vmatpush1.xpose.msra.mxu0 0.0
    %1933 = vmatprep.subr.mxu0 0.0
    %1934 = vmatpush1.xpose.msra.mxu0 0.0
    %1935 = vmatprep.subr.mxu0 0.0
    %1936 = vmatpush1.xpose.msra.mxu0 0.0
    %1937 = vmatprep.subr.mxu0 0.0
    %1938 = vmatpush1.xpose.msra.mxu0 0.0
    %1939 = vmatprep.subr.mxu0 0.0
    %1940 = vmatpush1.xpose.msra.mxu0 0.0
    %1941 = vmatprep.subr.mxu0 0.0
    %1942 = vmatpush1.xpose.msra.mxu0 0.0
    %1943 = vmatprep.subr.mxu0 0.0
    %1944 = vmatpush1.xpose.msra.mxu0 0.0
    %1945 = vmatprep.subr.mxu0 0.0
    %1946 = vmatpush1.xpose.msra.mxu0 0.0
    %1947 = vmatprep.subr.mxu0 0.0
    %1948 = vmatpush1.xpose.msra.mxu0 0.0
    %1949 = vmatprep.subr.mxu0 0.0
    %1950 = vmatpush1.xpose.msra.mxu0 0.0
    %1951 = vmatprep.subr.mxu0 0.0
    %1952 = vmatpush1.xpose.msra.mxu0 0.0
    %1953 = vmatprep.subr.mxu0 0.0
    %1954 = vmatpush1.xpose.msra.mxu0 0.0
    %1955 = vmatprep.subr.mxu0 0.0
    %1956 = vmatpush1.xpose.msra.mxu0 0.0
    %1957 = vmatprep.mubr.f32.mxu0 0.0
    %1958 = vmatmul.mubr.f32.gmra.mrb[0].mxu0 %v1889
    %v1959 = vpop.f32.mrb[0].mxu0
    %v1960 = vadd.f32 0.0, %v1959
    %v1961 = vpop.f32.mrb[0].mxu0
    %1962 = vdwg.mxu0
    %v1963 = vsel %vm852, %v795, 0
    %v1965 = vsel %vm852, %v819, 0
    %1967 = vmatprep.subr.mxu0 0.0
    %1968 = vmatpush1.xpose.msra.mxu0 %v1965
    %1969 = vmatprep.subr.mxu0 0.0
    %1970 = vmatpush1.xpose.msra.mxu0 0.0
    %1971 = vmatprep.subr.mxu0 0.0
    %1972 = vmatpush1.xpose.msra.mxu0 0.0
    %1973 = vmatprep.subr.mxu0 0.0
    %1974 = vmatpush1.xpose.msra.mxu0 0.0
    %1975 = vmatprep.subr.mxu0 0.0
    %1976 = vmatpush1.xpose.msra.mxu0 0.0
    %1977 = vmatprep.subr.mxu0 0.0
    %1978 = vmatpush1.xpose.msra.mxu0 0.0
    %1979 = vmatprep.subr.mxu0 0.0
    %1980 = vmatpush1.xpose.msra.mxu0 0.0
    %1981 = vmatprep.subr.mxu0 0.0
    %1982 = vmatpush1.xpose.msra.mxu0 0.0
    %1983 = vmatprep.subr.mxu0 0.0
    %1984 = vmatpush1.xpose.msra.mxu0 0.0
    %1985 = vmatprep.subr.mxu0 0.0
    %1986 = vmatpush1.xpose.msra.mxu0 0.0
    %1987 = vmatprep.subr.mxu0 0.0
    %1988 = vmatpush1.xpose.msra.mxu0 0.0
    %1989 = vmatprep.subr.mxu0 0.0
    %1990 = vmatpush1.xpose.msra.mxu0 0.0
    %1991 = vmatprep.subr.mxu0 0.0
    %1992 = vmatpush1.xpose.msra.mxu0 0.0
    %1993 = vmatprep.subr.mxu0 0.0
    %1994 = vmatpush1.xpose.msra.mxu0 0.0
    %1995 = vmatprep.subr.mxu0 0.0
    %1996 = vmatpush1.xpose.msra.mxu0 0.0
    %1997 = vmatprep.subr.mxu0 0.0
    %1998 = vmatpush1.xpose.msra.mxu0 0.0
    %1999 = vmatprep.subr.mxu0 0.0
    %2000 = vmatpush1.xpose.msra.mxu0 0.0
    %2001 = vmatprep.subr.mxu0 0.0
    %2002 = vmatpush1.xpose.msra.mxu0 0.0
    %2003 = vmatprep.subr.mxu0 0.0
    %2004 = vmatpush1.xpose.msra.mxu0 0.0
    %2005 = vmatprep.subr.mxu0 0.0
    %2006 = vmatpush1.xpose.msra.mxu0 0.0
    %2007 = vmatprep.subr.mxu0 0.0
    %2008 = vmatpush1.xpose.msra.mxu0 0.0
    %2009 = vmatprep.subr.mxu0 0.0
    %2010 = vmatpush1.xpose.msra.mxu0 0.0
    %2011 = vmatprep.subr.mxu0 0.0
    %2012 = vmatpush1.xpose.msra.mxu0 0.0
    %2013 = vmatprep.subr.mxu0 0.0
    %2014 = vmatpush1.xpose.msra.mxu0 0.0
    %2015 = vmatprep.subr.mxu0 0.0
    %2016 = vmatpush1.xpose.msra.mxu0 0.0
    %2017 = vmatprep.subr.mxu0 0.0
    %2018 = vmatpush1.xpose.msra.mxu0 0.0
    %2019 = vmatprep.subr.mxu0 0.0
    %2020 = vmatpush1.xpose.msra.mxu0 0.0
    %2021 = vmatprep.subr.mxu0 0.0
    %2022 = vmatpush1.xpose.msra.mxu0 0.0
    %2023 = vmatprep.subr.mxu0 0.0
    %2024 = vmatpush1.xpose.msra.mxu0 0.0
    %2025 = vmatprep.subr.mxu0 0.0
    %2026 = vmatpush1.xpose.msra.mxu0 0.0
    %2027 = vmatprep.subr.mxu0 0.0
    %2028 = vmatpush1.xpose.msra.mxu0 0.0
    %2029 = vmatprep.subr.mxu0 0.0
    %2030 = vmatpush1.xpose.msra.mxu0 0.0
    %2031 = vmatprep.mubr.f32.mxu0 0.0
    %2032 = vmatmul.mubr.f32.gmra.mrb[0].mxu0 %v1963
    %v2033 = vpop.f32.mrb[0].mxu0
    %v2034 = vadd.f32 0.0, %v2033
    %v2035 = vpop.f32.mrb[0].mxu0
    %2036 = vdwg.mxu0
    %vm2037 = vcmp.gt.f32.partialorder %v706, 0.5
    %vm2038 = vcmp.gt.f32.partialorder %v707, 0.5
    %v2039 = vsel %vm2037, 1, 0
    %v2040 = vsel %vm2038, 1, 0
    %vm2041 = vcmp.eq.s32.totalorder %v2039, 1
    %vm2042 = vcmp.eq.s32.totalorder %v2040, 1
    %v2043 = vsel %vm2041, -10000.0, %v924
    %v2044 = vsel %vm2041, -10000.0, %v998
    %v2045 = vsel %vm2041, -10000.0, %v1072
    %v2046 = vsel %vm2041, -10000.0, %v1146
    %v2047 = vsel %vm2041, -10000.0, %v1220
    %v2048 = vsel %vm2041, -10000.0, %v1294
    %v2049 = vsel %vm2041, -10000.0, %v1368
    %v2050 = vsel %vm2041, -10000.0, %v1442
    %v2051 = vsel %vm2042, -10000.0, %v1516
    %v2052 = vsel %vm2042, -10000.0, %v1590
    %v2053 = vsel %vm2042, -10000.0, %v1664
    %v2054 = vsel %vm2042, -10000.0, %v1738
    %v2055 = vsel %vm2042, -10000.0, %v1812
    %v2056 = vsel %vm2042, -10000.0, %v1886
    %v2057 = vsel %vm2042, -10000.0, %v1960
    %v2058 = vsel %vm2042, -10000.0, %v2034
    %vm2059 = vcmask 64512
    %v2060 = vsel %vm2059, %v2043, -inf
    %2061 = vmax.xlane.f32.xlu0 %v2060
    %v2062 = vpop.xlane.xlu0 %2061
    %v2063 = vsel %vm2059, %v2044, -inf
    %2064 = vmax.xlane.f32.xlu0 %v2063
    %v2065 = vpop.xlane.xlu0 %2064
    %v2066 = vsel %vm2059, %v2045, -inf
    %2067 = vmax.xlane.f32.xlu0 %v2066
    %v2068 = vpop.xlane.xlu0 %2067
    %v2069 = vsel %vm2059, %v2046, -inf
    %2070 = vmax.xlane.f32.xlu0 %v2069
    %v2071 = vpop.xlane.xlu0 %2070
    %v2072 = vsel %vm2059, %v2047, -inf
    %2073 = vmax.xlane.f32.xlu0 %v2072
    %v2074 = vpop.xlane.xlu0 %2073
    %v2075 = vsel %vm2059, %v2048, -inf
    %2076 = vmax.xlane.f32.xlu0 %v2075
    %v2077 = vpop.xlane.xlu0 %2076
    %v2078 = vsel %vm2059, %v2049, -inf
    %2079 = vmax.xlane.f32.xlu0 %v2078
    %v2080 = vpop.xlane.xlu0 %2079
    %v2081 = vsel %vm2059, %v2050, -inf
    %2082 = vmax.xlane.f32.xlu0 %v2081
    %v2083 = vpop.xlane.xlu0 %2082
    %v2084 = vsel %vm2059, %v2051, -inf
    %2085 = vmax.xlane.f32.xlu0 %v2084
    %v2086 = vpop.xlane.xlu0 %2085
    %v2087 = vsel %vm2059, %v2052, -inf
    %2088 = vmax.xlane.f32.xlu0 %v2087
    %v2089 = vpop.xlane.xlu0 %2088
    %v2090 = vsel %vm2059, %v2053, -inf
    %2091 = vmax.xlane.f32.xlu0 %v2090
    %v2092 = vpop.xlane.xlu0 %2091
    %v2093 = vsel %vm2059, %v2054, -inf
    %2094 = vmax.xlane.f32.xlu0 %v2093
    %v2095 = vpop.xlane.xlu0 %2094
    %v2096 = vsel %vm2059, %v2055, -inf
    %2097 = vmax.xlane.f32.xlu0 %v2096
    %v2098 = vpop.xlane.xlu0 %2097
    %v2099 = vsel %vm2059, %v2056, -inf
    %2100 = vmax.xlane.f32.xlu0 %v2099
    %v2101 = vpop.xlane.xlu0 %2100
    %v2102 = vsel %vm2059, %v2057, -inf
    %2103 = vmax.xlane.f32.xlu0 %v2102
    %v2104 = vpop.xlane.xlu0 %2103
    %v2105 = vsel %vm2059, %v2058, -inf
    %2106 = vmax.xlane.f32.xlu0 %v2105
    %v2107 = vpop.xlane.xlu0 %2106
    %v2108 = vsub.f32 %v2043, %v2062
    %v2109 = vsub.f32 %v2044, %v2065
    %v2110 = vsub.f32 %v2045, %v2068
    %v2111 = vsub.f32 %v2046, %v2071
    %v2112 = vsub.f32 %v2047, %v2074
    %v2113 = vsub.f32 %v2048, %v2077
    %v2114 = vsub.f32 %v2049, %v2080
    %v2115 = vsub.f32 %v2050, %v2083
    %v2116 = vsub.f32 %v2051, %v2086
    %v2117 = vsub.f32 %v2052, %v2089
    %v2118 = vsub.f32 %v2053, %v2092
    %v2119 = vsub.f32 %v2054, %v2095
    %v2120 = vsub.f32 %v2055, %v2098
    %v2121 = vsub.f32 %v2056, %v2101
    %v2122 = vsub.f32 %v2057, %v2104
    %v2123 = vsub.f32 %v2058, %v2107
    %v2124 = vmul.f32 %v2108, 1.442695
    %v2125 = vpow.pop %v2124
    %v2126 = vmul.f32 %v2109, 1.442695
    %v2127 = vpow.pop %v2126
    %v2128 = vmul.f32 %v2110, 1.442695
    %v2129 = vpow.pop %v2128
    %v2130 = vmul.f32 %v2111, 1.442695
    %v2131 = vpow.pop %v2130
    %v2132 = vmul.f32 %v2112, 1.442695
    %v2133 = vpow.pop %v2132
    %v2134 = vmul.f32 %v2113, 1.442695
    %v2135 = vpow.pop %v2134
    %v2136 = vmul.f32 %v2114, 1.442695
    %v2137 = vpow.pop %v2136
    %v2138 = vmul.f32 %v2115, 1.442695
    %v2139 = vpow.pop %v2138
    %v2140 = vmul.f32 %v2116, 1.442695
    %v2141 = vpow.pop %v2140
    %v2142 = vmul.f32 %v2117, 1.442695
    %v2143 = vpow.pop %v2142
    %v2144 = vmul.f32 %v2118, 1.442695
    %v2145 = vpow.pop %v2144
    %v2146 = vmul.f32 %v2119, 1.442695
    %v2147 = vpow.pop %v2146
    %v2148 = vmul.f32 %v2120, 1.442695
    %v2149 = vpow.pop %v2148
    %v2150 = vmul.f32 %v2121, 1.442695
    %v2151 = vpow.pop %v2150
    %v2152 = vmul.f32 %v2122, 1.442695
    %v2153 = vpow.pop %v2152
    %v2154 = vmul.f32 %v2123, 1.442695
    %v2155 = vpow.pop %v2154
    %v2156 = vsel %vm2059, %v2125, 0.0
    %2157 = vadd.xlane.f32.xlu0 %v2156
    %v2158 = vpop.xlane.xlu0 %2157
    %v2159 = vsel %vm2059, %v2127, 0.0
    %2160 = vadd.xlane.f32.xlu0 %v2159
    %v2161 = vpop.xlane.xlu0 %2160
    %v2162 = vsel %vm2059, %v2129, 0.0
    %2163 = vadd.xlane.f32.xlu0 %v2162
    %v2164 = vpop.xlane.xlu0 %2163
    %v2165 = vsel %vm2059, %v2131, 0.0
    %2166 = vadd.xlane.f32.xlu0 %v2165
    %v2167 = vpop.xlane.xlu0 %2166
    %v2168 = vsel %vm2059, %v2133, 0.0
    %2169 = vadd.xlane.f32.xlu0 %v2168
    %v2170 = vpop.xlane.xlu0 %2169
    %v2171 = vsel %vm2059, %v2135, 0.0
    %2172 = vadd.xlane.f32.xlu0 %v2171
    %v2173 = vpop.xlane.xlu0 %2172
    %v2174 = vsel %vm2059, %v2137, 0.0
    %2175 = vadd.xlane.f32.xlu0 %v2174
    %v2176 = vpop.xlane.xlu0 %2175
    %v2177 = vsel %vm2059, %v2139, 0.0
    %2178 = vadd.xlane.f32.xlu0 %v2177
    %v2179 = vpop.xlane.xlu0 %2178
    %v2180 = vsel %vm2059, %v2141, 0.0
    %2181 = vadd.xlane.f32.xlu0 %v2180
    %v2182 = vpop.xlane.xlu0 %2181
    %v2183 = vsel %vm2059, %v2143, 0.0
    %2184 = vadd.xlane.f32.xlu0 %v2183
    %v2185 = vpop.xlane.xlu0 %2184
    %v2186 = vsel %vm2059, %v2145, 0.0
    %2187 = vadd.xlane.f32.xlu0 %v2186
    %v2188 = vpop.xlane.xlu0 %2187
    %v2189 = vsel %vm2059, %v2147, 0.0
    %2190 = vadd.xlane.f32.xlu0 %v2189
    %v2191 = vpop.xlane.xlu0 %2190
    %v2192 = vsel %vm2059, %v2149, 0.0
    %2193 = vadd.xlane.f32.xlu0 %v2192
    %v2194 = vpop.xlane.xlu0 %2193
    %v2195 = vsel %vm2059, %v2151, 0.0
    %2196 = vadd.xlane.f32.xlu0 %v2195
    %v2197 = vpop.xlane.xlu0 %2196
    %v2198 = vsel %vm2059, %v2153, 0.0
    %2199 = vadd.xlane.f32.xlu0 %v2198
    %v2200 = vpop.xlane.xlu0 %2199
    %v2201 = vsel %vm2059, %v2155, 0.0
    %2202 = vadd.xlane.f32.xlu0 %v2201
    %v2203 = vpop.xlane.xlu0 %2202
    %v2204 = vrcp.pop %v2158
    %v2205 = vmul.f32 %v2125, %v2204
    %v2206 = vrcp.pop %v2161
    %v2207 = vmul.f32 %v2127, %v2206
    %v2208 = vrcp.pop %v2164
    %v2209 = vmul.f32 %v2129, %v2208
    %v2210 = vrcp.pop %v2167
    %v2211 = vmul.f32 %v2131, %v2210
    %v2212 = vrcp.pop %v2170
    %v2213 = vmul.f32 %v2133, %v2212
    %v2214 = vrcp.pop %v2173
    %v2215 = vmul.f32 %v2135, %v2214
    %v2216 = vrcp.pop %v2176
    %v2217 = vmul.f32 %v2137, %v2216
    %v2218 = vrcp.pop %v2179
    %v2219 = vmul.f32 %v2139, %v2218
    %v2220 = vrcp.pop %v2182
    %v2221 = vmul.f32 %v2141, %v2220
    %v2222 = vrcp.pop %v2185
    %v2223 = vmul.f32 %v2143, %v2222
    %v2224 = vrcp.pop %v2188
    %v2225 = vmul.f32 %v2145, %v2224
    %v2226 = vrcp.pop %v2191
    %v2227 = vmul.f32 %v2147, %v2226
    %v2228 = vrcp.pop %v2194
    %v2229 = vmul.f32 %v2149, %v2228
    %v2230 = vrcp.pop %v2197
    %v2231 = vmul.f32 %v2151, %v2230
    %v2232 = vrcp.pop %v2200
    %v2233 = vmul.f32 %v2153, %v2232
    %v2234 = vrcp.pop %v2203
    %v2235 = vmul.f32 %v2155, %v2234
    %2236 = vst [vmem:[#allocation5] sm:$0xff] 0.0
    %2237 = vst [vmem:[#allocation5 + $0x8] sm:$0xff] 0.0
    %2238 = vst [vmem:[#allocation5 + $0x10] sm:$0xff] 0.0
    %2239 = vst [vmem:[#allocation5 + $0x18] sm:$0xff] 0.0
    %2240 = vst [vmem:[#allocation5 + $0x20] sm:$0xff] 0.0
    %2241 = vst [vmem:[#allocation5 + $0x28] sm:$0xff] 0.0
    %2242 = vst [vmem:[#allocation5 + $0x30] sm:$0xff] 0.0
    %2243 = vst [vmem:[#allocation5 + $0x38] sm:$0xff] 0.0
    %2244 = vst [vmem:[#allocation5 + $0x40] sm:$0xff] 0.0
    %2245 = vst [vmem:[#allocation5 + $0x48] sm:$0xff] 0.0
    %2246 = vst [vmem:[#allocation5 + $0x50] sm:$0xff] 0.0
    %2247 = vst [vmem:[#allocation5 + $0x58] sm:$0xff] 0.0
    %2248 = vst [vmem:[#allocation5 + $0x60] sm:$0xff] 0.0
    %2249 = vst [vmem:[#allocation5 + $0x68] sm:$0xff] 0.0
    %2250 = vst [vmem:[#allocation5 + $0x70] sm:$0xff] 0.0
    %2251 = vst [vmem:[#allocation5 + $0x78] sm:$0xff] 0.0
    %2252 = vst.msk [vmem:[#allocation5] sm:$0xff] %vm2059, %v2205
    %2253 = vst.msk [vmem:[#allocation5 + $0x8] sm:$0xff] %vm2059, %v2207
    %2254 = vst.msk [vmem:[#allocation5 + $0x10] sm:$0xff] %vm2059, %v2209
    %2255 = vst.msk [vmem:[#allocation5 + $0x18] sm:$0xff] %vm2059, %v2211
    %2256 = vst.msk [vmem:[#allocation5 + $0x20] sm:$0xff] %vm2059, %v2213
    %2257 = vst.msk [vmem:[#allocation5 + $0x28] sm:$0xff] %vm2059, %v2215
    %2258 = vst.msk [vmem:[#allocation5 + $0x30] sm:$0xff] %vm2059, %v2217
    %2259 = vst.msk [vmem:[#allocation5 + $0x38] sm:$0xff] %vm2059, %v2219
    %2260 = vst.msk [vmem:[#allocation5 + $0x40] sm:$0xff] %vm2059, %v2221
    %2261 = vst.msk [vmem:[#allocation5 + $0x48] sm:$0xff] %vm2059, %v2223
    %2262 = vst.msk [vmem:[#allocation5 + $0x50] sm:$0xff] %vm2059, %v2225
    %2263 = vst.msk [vmem:[#allocation5 + $0x58] sm:$0xff] %vm2059, %v2227
    %2264 = vst.msk [vmem:[#allocation5 + $0x60] sm:$0xff] %vm2059, %v2229
    %2265 = vst.msk [vmem:[#allocation5 + $0x68] sm:$0xff] %vm2059, %v2231
    %2266 = vst.msk [vmem:[#allocation5 + $0x70] sm:$0xff] %vm2059, %v2233
    %2267 = vst.msk [vmem:[#allocation5 + $0x78] sm:$0xff] %vm2059, %v2235
    %v2269 = vsel %vm2059, %v2205, 0
    %2271 = vmatprep.subr.mxu0 0.0
    %2272 = vmatpush1.msra.mxu0 %v619
    %2273 = vmatprep.subr.mxu0 0.0
    %2274 = vmatpush1.msra.mxu0 0.0
    %2275 = vmatprep.subr.mxu0 0.0
    %2276 = vmatpush1.msra.mxu0 0.0
    %2277 = vmatprep.subr.mxu0 0.0
    %2278 = vmatpush1.msra.mxu0 0.0
    %2279 = vmatprep.subr.mxu0 0.0
    %2280 = vmatpush1.msra.mxu0 0.0
    %2281 = vmatprep.subr.mxu0 0.0
    %2282 = vmatpush1.msra.mxu0 0.0
    %2283 = vmatprep.subr.mxu0 0.0
    %2284 = vmatpush1.msra.mxu0 0.0
    %2285 = vmatprep.subr.mxu0 0.0
    %2286 = vmatpush1.msra.mxu0 0.0
    %2287 = vmatprep.subr.mxu0 0.0
    %2288 = vmatpush1.msra.mxu0 0.0
    %2289 = vmatprep.subr.mxu0 0.0
    %2290 = vmatpush1.msra.mxu0 0.0
    %2291 = vmatprep.subr.mxu0 0.0
    %2292 = vmatpush1.msra.mxu0 0.0
    %2293 = vmatprep.subr.mxu0 0.0
    %2294 = vmatpush1.msra.mxu0 0.0
    %2295 = vmatprep.subr.mxu0 0.0
    %2296 = vmatpush1.msra.mxu0 0.0
    %2297 = vmatprep.subr.mxu0 0.0
    %2298 = vmatpush1.msra.mxu0 0.0
    %2299 = vmatprep.subr.mxu0 0.0
    %2300 = vmatpush1.msra.mxu0 0.0
    %2301 = vmatprep.subr.mxu0 0.0
    %2302 = vmatpush1.msra.mxu0 0.0
    %2303 = vmatprep.subr.mxu0 0.0
    %2304 = vmatpush1.msra.mxu0 0.0
    %2305 = vmatprep.subr.mxu0 0.0
    %2306 = vmatpush1.msra.mxu0 0.0
    %2307 = vmatprep.subr.mxu0 0.0
    %2308 = vmatpush1.msra.mxu0 0.0
    %2309 = vmatprep.subr.mxu0 0.0
    %2310 = vmatpush1.msra.mxu0 0.0
    %2311 = vmatprep.subr.mxu0 0.0
    %2312 = vmatpush1.msra.mxu0 0.0
    %2313 = vmatprep.subr.mxu0 0.0
    %2314 = vmatpush1.msra.mxu0 0.0
    %2315 = vmatprep.subr.mxu0 0.0
    %2316 = vmatpush1.msra.mxu0 0.0
    %2317 = vmatprep.subr.mxu0 0.0
    %2318 = vmatpush1.msra.mxu0 0.0
    %2319 = vmatprep.subr.mxu0 0.0
    %2320 = vmatpush1.msra.mxu0 0.0
    %2321 = vmatprep.subr.mxu0 0.0
    %2322 = vmatpush1.msra.mxu0 0.0
    %2323 = vmatprep.subr.mxu0 0.0
    %2324 = vmatpush1.msra.mxu0 0.0
    %2325 = vmatprep.subr.mxu0 0.0
    %2326 = vmatpush1.msra.mxu0 0.0
    %2327 = vmatprep.subr.mxu0 0.0
    %2328 = vmatpush1.msra.mxu0 0.0
    %2329 = vmatprep.subr.mxu0 0.0
    %2330 = vmatpush1.msra.mxu0 0.0
    %2331 = vmatprep.subr.mxu0 0.0
    %2332 = vmatpush1.msra.mxu0 0.0
    %2333 = vmatprep.subr.mxu0 0.0
    %2334 = vmatpush1.msra.mxu0 0.0
    %2335 = vmatprep.mubr.f32.mxu0 0.0
    %2336 = vmatmul.mubr.f32.gmra.mrb[0].mxu0 %v2269
    %v2337 = vpop.f32.mrb[0].mxu0
    %v2338 = vadd.f32 0.0, %v2337
    %v2339 = vpop.f32.mrb[0].mxu0
    %2340 = vdwg.mxu0
    %v2342 = vsel %vm2059, %v2207, 0
    %2344 = vmatprep.subr.mxu0 0.0
    %2345 = vmatpush1.msra.mxu0 %v822
    %2346 = vmatprep.subr.mxu0 0.0
    %2347 = vmatpush1.msra.mxu0 0.0
    %2348 = vmatprep.subr.mxu0 0.0
    %2349 = vmatpush1.msra.mxu0 0.0
    %2350 = vmatprep.subr.mxu0 0.0
    %2351 = vmatpush1.msra.mxu0 0.0
    %2352 = vmatprep.subr.mxu0 0.0
    %2353 = vmatpush1.msra.mxu0 0.0
    %2354 = vmatprep.subr.mxu0 0.0
    %2355 = vmatpush1.msra.mxu0 0.0
    %2356 = vmatprep.subr.mxu0 0.0
    %2357 = vmatpush1.msra.mxu0 0.0
    %2358 = vmatprep.subr.mxu0 0.0
    %2359 = vmatpush1.msra.mxu0 0.0
    %2360 = vmatprep.subr.mxu0 0.0
    %2361 = vmatpush1.msra.mxu0 0.0
    %2362 = vmatprep.subr.mxu0 0.0
    %2363 = vmatpush1.msra.mxu0 0.0
    %2364 = vmatprep.subr.mxu0 0.0
    %2365 = vmatpush1.msra.mxu0 0.0
    %2366 = vmatprep.subr.mxu0 0.0
    %2367 = vmatpush1.msra.mxu0 0.0
    %2368 = vmatprep.subr.mxu0 0.0
    %2369 = vmatpush1.msra.mxu0 0.0
    %2370 = vmatprep.subr.mxu0 0.0
    %2371 = vmatpush1.msra.mxu0 0.0
    %2372 = vmatprep.subr.mxu0 0.0
    %2373 = vmatpush1.msra.mxu0 0.0
    %2374 = vmatprep.subr.mxu0 0.0
    %2375 = vmatpush1.msra.mxu0 0.0
    %2376 = vmatprep.subr.mxu0 0.0
    %2377 = vmatpush1.msra.mxu0 0.0
    %2378 = vmatprep.subr.mxu0 0.0
    %2379 = vmatpush1.msra.mxu0 0.0
    %2380 = vmatprep.subr.mxu0 0.0
    %2381 = vmatpush1.msra.mxu0 0.0
    %2382 = vmatprep.subr.mxu0 0.0
    %2383 = vmatpush1.msra.mxu0 0.0
    %2384 = vmatprep.subr.mxu0 0.0
    %2385 = vmatpush1.msra.mxu0 0.0
    %2386 = vmatprep.subr.mxu0 0.0
    %2387 = vmatpush1.msra.mxu0 0.0
    %2388 = vmatprep.subr.mxu0 0.0
    %2389 = vmatpush1.msra.mxu0 0.0
    %2390 = vmatprep.subr.mxu0 0.0
    %2391 = vmatpush1.msra.mxu0 0.0
    %2392 = vmatprep.subr.mxu0 0.0
    %2393 = vmatpush1.msra.mxu0 0.0
    %2394 = vmatprep.subr.mxu0 0.0
    %2395 = vmatpush1.msra.mxu0 0.0
    %2396 = vmatprep.subr.mxu0 0.0
    %2397 = vmatpush1.msra.mxu0 0.0
    %2398 = vmatprep.subr.mxu0 0.0
    %2399 = vmatpush1.msra.mxu0 0.0
    %2400 = vmatprep.subr.mxu0 0.0
    %2401 = vmatpush1.msra.mxu0 0.0
    %2402 = vmatprep.subr.mxu0 0.0
    %2403 = vmatpush1.msra.mxu0 0.0
    %2404 = vmatprep.subr.mxu0 0.0
    %2405 = vmatpush1.msra.mxu0 0.0
    %2406 = vmatprep.subr.mxu0 0.0
    %2407 = vmatpush1.msra.mxu0 0.0
    %2408 = vmatprep.mubr.f32.mxu0 0.0
    %2409 = vmatmul.mubr.f32.gmra.mrb[0].mxu0 %v2342
    %v2410 = vpop.f32.mrb[0].mxu0
    %v2411 = vadd.f32 0.0, %v2410
    %v2412 = vpop.f32.mrb[0].mxu0
    %2413 = vdwg.mxu0
    %v2415 = vsel %vm2059, %v2209, 0
    %2417 = vmatprep.subr.mxu0 0.0
    %2418 = vmatpush1.msra.mxu0 %v621
    %2419 = vmatprep.subr.mxu0 0.0
    %2420 = vmatpush1.msra.mxu0 0.0
    %2421 = vmatprep.subr.mxu0 0.0
    %2422 = vmatpush1.msra.mxu0 0.0
    %2423 = vmatprep.subr.mxu0 0.0
    %2424 = vmatpush1.msra.mxu0 0.0
    %2425 = vmatprep.subr.mxu0 0.0
    %2426 = vmatpush1.msra.mxu0 0.0
    %2427 = vmatprep.subr.mxu0 0.0
    %2428 = vmatpush1.msra.mxu0 0.0
    %2429 = vmatprep.subr.mxu0 0.0
    %2430 = vmatpush1.msra.mxu0 0.0
    %2431 = vmatprep.subr.mxu0 0.0
    %2432 = vmatpush1.msra.mxu0 0.0
    %2433 = vmatprep.subr.mxu0 0.0
    %2434 = vmatpush1.msra.mxu0 0.0
    %2435 = vmatprep.subr.mxu0 0.0
    %2436 = vmatpush1.msra.mxu0 0.0
    %2437 = vmatprep.subr.mxu0 0.0
    %2438 = vmatpush1.msra.mxu0 0.0
    %2439 = vmatprep.subr.mxu0 0.0
    %2440 = vmatpush1.msra.mxu0 0.0
    %2441 = vmatprep.subr.mxu0 0.0
    %2442 = vmatpush1.msra.mxu0 0.0
    %2443 = vmatprep.subr.mxu0 0.0
    %2444 = vmatpush1.msra.mxu0 0.0
    %2445 = vmatprep.subr.mxu0 0.0
    %2446 = vmatpush1.msra.mxu0 0.0
    %2447 = vmatprep.subr.mxu0 0.0
    %2448 = vmatpush1.msra.mxu0 0.0
    %2449 = vmatprep.subr.mxu0 0.0
    %2450 = vmatpush1.msra.mxu0 0.0
    %2451 = vmatprep.subr.mxu0 0.0
    %2452 = vmatpush1.msra.mxu0 0.0
    %2453 = vmatprep.subr.mxu0 0.0
    %2454 = vmatpush1.msra.mxu0 0.0
    %2455 = vmatprep.subr.mxu0 0.0
    %2456 = vmatpush1.msra.mxu0 0.0
    %2457 = vmatprep.subr.mxu0 0.0
    %2458 = vmatpush1.msra.mxu0 0.0
    %2459 = vmatprep.subr.mxu0 0.0
    %2460 = vmatpush1.msra.mxu0 0.0
    %2461 = vmatprep.subr.mxu0 0.0
    %2462 = vmatpush1.msra.mxu0 0.0
    %2463 = vmatprep.subr.mxu0 0.0
    %2464 = vmatpush1.msra.mxu0 0.0
    %2465 = vmatprep.subr.mxu0 0.0
    %2466 = vmatpush1.msra.mxu0 0.0
    %2467 = vmatprep.subr.mxu0 0.0
    %2468 = vmatpush1.msra.mxu0 0.0
    %2469 = vmatprep.subr.mxu0 0.0
    %2470 = vmatpush1.msra.mxu0 0.0
    %2471 = vmatprep.subr.mxu0 0.0
    %2472 = vmatpush1.msra.mxu0 0.0
    %2473 = vmatprep.subr.mxu0 0.0
    %2474 = vmatpush1.msra.mxu0 0.0
    %2475 = vmatprep.subr.mxu0 0.0
    %2476 = vmatpush1.msra.mxu0 0.0
    %2477 = vmatprep.subr.mxu0 0.0
    %2478 = vmatpush1.msra.mxu0 0.0
    %2479 = vmatprep.subr.mxu0 0.0
    %2480 = vmatpush1.msra.mxu0 0.0
    %2481 = vmatprep.mubr.f32.mxu0 0.0
    %2482 = vmatmul.mubr.f32.gmra.mrb[0].mxu0 %v2415
    %v2483 = vpop.f32.mrb[0].mxu0
    %v2484 = vadd.f32 0.0, %v2483
    %v2485 = vpop.f32.mrb[0].mxu0
    %2486 = vdwg.mxu0
    %v2488 = vsel %vm2059, %v2211, 0
    %2490 = vmatprep.subr.mxu0 0.0
    %2491 = vmatpush1.msra.mxu0 %v826
    %2492 = vmatprep.subr.mxu0 0.0
    %2493 = vmatpush1.msra.mxu0 0.0
    %2494 = vmatprep.subr.mxu0 0.0
    %2495 = vmatpush1.msra.mxu0 0.0
    %2496 = vmatprep.subr.mxu0 0.0
    %2497 = vmatpush1.msra.mxu0 0.0
    %2498 = vmatprep.subr.mxu0 0.0
    %2499 = vmatpush1.msra.mxu0 0.0
    %2500 = vmatprep.subr.mxu0 0.0
    %2501 = vmatpush1.msra.mxu0 0.0
    %2502 = vmatprep.subr.mxu0 0.0
    %2503 = vmatpush1.msra.mxu0 0.0
    %2504 = vmatprep.subr.mxu0 0.0
    %2505 = vmatpush1.msra.mxu0 0.0
    %2506 = vmatprep.subr.mxu0 0.0
    %2507 = vmatpush1.msra.mxu0 0.0
    %2508 = vmatprep.subr.mxu0 0.0
    %2509 = vmatpush1.msra.mxu0 0.0
    %2510 = vmatprep.subr.mxu0 0.0
    %2511 = vmatpush1.msra.mxu0 0.0
    %2512 = vmatprep.subr.mxu0 0.0
    %2513 = vmatpush1.msra.mxu0 0.0
    %2514 = vmatprep.subr.mxu0 0.0
    %2515 = vmatpush1.msra.mxu0 0.0
    %2516 = vmatprep.subr.mxu0 0.0
    %2517 = vmatpush1.msra.mxu0 0.0
    %2518 = vmatprep.subr.mxu0 0.0
    %2519 = vmatpush1.msra.mxu0 0.0
    %2520 = vmatprep.subr.mxu0 0.0
    %2521 = vmatpush1.msra.mxu0 0.0
    %2522 = vmatprep.subr.mxu0 0.0
    %2523 = vmatpush1.msra.mxu0 0.0
    %2524 = vmatprep.subr.mxu0 0.0
    %2525 = vmatpush1.msra.mxu0 0.0
    %2526 = vmatprep.subr.mxu0 0.0
    %2527 = vmatpush1.msra.mxu0 0.0
    %2528 = vmatprep.subr.mxu0 0.0
    %2529 = vmatpush1.msra.mxu0 0.0
    %2530 = vmatprep.subr.mxu0 0.0
    %2531 = vmatpush1.msra.mxu0 0.0
    %2532 = vmatprep.subr.mxu0 0.0
    %2533 = vmatpush1.msra.mxu0 0.0
    %2534 = vmatprep.subr.mxu0 0.0
    %2535 = vmatpush1.msra.mxu0 0.0
    %2536 = vmatprep.subr.mxu0 0.0
    %2537 = vmatpush1.msra.mxu0 0.0
    %2538 = vmatprep.subr.mxu0 0.0
    %2539 = vmatpush1.msra.mxu0 0.0
    %2540 = vmatprep.subr.mxu0 0.0
    %2541 = vmatpush1.msra.mxu0 0.0
    %2542 = vmatprep.subr.mxu0 0.0
    %2543 = vmatpush1.msra.mxu0 0.0
    %2544 = vmatprep.subr.mxu0 0.0
    %2545 = vmatpush1.msra.mxu0 0.0
    %2546 = vmatprep.subr.mxu0 0.0
    %2547 = vmatpush1.msra.mxu0 0.0
    %2548 = vmatprep.subr.mxu0 0.0
    %2549 = vmatpush1.msra.mxu0 0.0
    %2550 = vmatprep.subr.mxu0 0.0
    %2551 = vmatpush1.msra.mxu0 0.0
    %2552 = vmatprep.subr.mxu0 0.0
    %2553 = vmatpush1.msra.mxu0 0.0
    %2554 = vmatprep.mubr.f32.mxu0 0.0
    %2555 = vmatmul.mubr.f32.gmra.mrb[0].mxu0 %v2488
    %v2556 = vpop.f32.mrb[0].mxu0
    %v2557 = vadd.f32 0.0, %v2556
    %v2558 = vpop.f32.mrb[0].mxu0
    %2559 = vdwg.mxu0
    %v2561 = vsel %vm2059, %v2213, 0
    %2563 = vmatprep.subr.mxu0 0.0
    %2564 = vmatpush1.msra.mxu0 %v696
    %2565 = vmatprep.subr.mxu0 0.0
    %2566 = vmatpush1.msra.mxu0 0.0
    %2567 = vmatprep.subr.mxu0 0.0
    %2568 = vmatpush1.msra.mxu0 0.0
    %2569 = vmatprep.subr.mxu0 0.0
    %2570 = vmatpush1.msra.mxu0 0.0
    %2571 = vmatprep.subr.mxu0 0.0
    %2572 = vmatpush1.msra.mxu0 0.0
    %2573 = vmatprep.subr.mxu0 0.0
    %2574 = vmatpush1.msra.mxu0 0.0
    %2575 = vmatprep.subr.mxu0 0.0
    %2576 = vmatpush1.msra.mxu0 0.0
    %2577 = vmatprep.subr.mxu0 0.0
    %2578 = vmatpush1.msra.mxu0 0.0
    %2579 = vmatprep.subr.mxu0 0.0
    %2580 = vmatpush1.msra.mxu0 0.0
    %2581 = vmatprep.subr.mxu0 0.0
    %2582 = vmatpush1.msra.mxu0 0.0
    %2583 = vmatprep.subr.mxu0 0.0
    %2584 = vmatpush1.msra.mxu0 0.0
    %2585 = vmatprep.subr.mxu0 0.0
    %2586 = vmatpush1.msra.mxu0 0.0
    %2587 = vmatprep.subr.mxu0 0.0
    %2588 = vmatpush1.msra.mxu0 0.0
    %2589 = vmatprep.subr.mxu0 0.0
    %2590 = vmatpush1.msra.mxu0 0.0
    %2591 = vmatprep.subr.mxu0 0.0
    %2592 = vmatpush1.msra.mxu0 0.0
    %2593 = vmatprep.subr.mxu0 0.0
    %2594 = vmatpush1.msra.mxu0 0.0
    %2595 = vmatprep.subr.mxu0 0.0
    %2596 = vmatpush1.msra.mxu0 0.0
    %2597 = vmatprep.subr.mxu0 0.0
    %2598 = vmatpush1.msra.mxu0 0.0
    %2599 = vmatprep.subr.mxu0 0.0
    %2600 = vmatpush1.msra.mxu0 0.0
    %2601 = vmatprep.subr.mxu0 0.0
    %2602 = vmatpush1.msra.mxu0 0.0
    %2603 = vmatprep.subr.mxu0 0.0
    %2604 = vmatpush1.msra.mxu0 0.0
    %2605 = vmatprep.subr.mxu0 0.0
    %2606 = vmatpush1.msra.mxu0 0.0
    %2607 = vmatprep.subr.mxu0 0.0
    %2608 = vmatpush1.msra.mxu0 0.0
    %2609 = vmatprep.subr.mxu0 0.0
    %2610 = vmatpush1.msra.mxu0 0.0
    %2611 = vmatprep.subr.mxu0 0.0
    %2612 = vmatpush1.msra.mxu0 0.0
    %2613 = vmatprep.subr.mxu0 0.0
    %2614 = vmatpush1.msra.mxu0 0.0
    %2615 = vmatprep.subr.mxu0 0.0
    %2616 = vmatpush1.msra.mxu0 0.0
    %2617 = vmatprep.subr.mxu0 0.0
    %2618 = vmatpush1.msra.mxu0 0.0
    %2619 = vmatprep.subr.mxu0 0.0
    %2620 = vmatpush1.msra.mxu0 0.0
    %2621 = vmatprep.subr.mxu0 0.0
    %2622 = vmatpush1.msra.mxu0 0.0
    %2623 = vmatprep.subr.mxu0 0.0
    %2624 = vmatpush1.msra.mxu0 0.0
    %2625 = vmatprep.subr.mxu0 0.0
    %2626 = vmatpush1.msra.mxu0 0.0
    %2627 = vmatprep.mubr.f32.mxu0 0.0
    %2628 = vmatmul.mubr.f32.gmra.mrb[0].mxu0 %v2561
    %v2629 = vpop.f32.mrb[0].mxu0
    %v2630 = vadd.f32 0.0, %v2629
    %v2631 = vpop.f32.mrb[0].mxu0
    %2632 = vdwg.mxu0
    %v2634 = vsel %vm2059, %v2215, 0
    %2636 = vmatprep.subr.mxu0 0.0
    %2637 = vmatpush1.msra.mxu0 %v830
    %2638 = vmatprep.subr.mxu0 0.0
    %2639 = vmatpush1.msra.mxu0 0.0
    %2640 = vmatprep.subr.mxu0 0.0
    %2641 = vmatpush1.msra.mxu0 0.0
    %2642 = vmatprep.subr.mxu0 0.0
    %2643 = vmatpush1.msra.mxu0 0.0
    %2644 = vmatprep.subr.mxu0 0.0
    %2645 = vmatpush1.msra.mxu0 0.0
    %2646 = vmatprep.subr.mxu0 0.0
    %2647 = vmatpush1.msra.mxu0 0.0
    %2648 = vmatprep.subr.mxu0 0.0
    %2649 = vmatpush1.msra.mxu0 0.0
    %2650 = vmatprep.subr.mxu0 0.0
    %2651 = vmatpush1.msra.mxu0 0.0
    %2652 = vmatprep.subr.mxu0 0.0
    %2653 = vmatpush1.msra.mxu0 0.0
    %2654 = vmatprep.subr.mxu0 0.0
    %2655 = vmatpush1.msra.mxu0 0.0
    %2656 = vmatprep.subr.mxu0 0.0
    %2657 = vmatpush1.msra.mxu0 0.0
    %2658 = vmatprep.subr.mxu0 0.0
    %2659 = vmatpush1.msra.mxu0 0.0
    %2660 = vmatprep.subr.mxu0 0.0
    %2661 = vmatpush1.msra.mxu0 0.0
    %2662 = vmatprep.subr.mxu0 0.0
    %2663 = vmatpush1.msra.mxu0 0.0
    %2664 = vmatprep.subr.mxu0 0.0
    %2665 = vmatpush1.msra.mxu0 0.0
    %2666 = vmatprep.subr.mxu0 0.0
    %2667 = vmatpush1.msra.mxu0 0.0
    %2668 = vmatprep.subr.mxu0 0.0
    %2669 = vmatpush1.msra.mxu0 0.0
    %2670 = vmatprep.subr.mxu0 0.0
    %2671 = vmatpush1.msra.mxu0 0.0
    %2672 = vmatprep.subr.mxu0 0.0
    %2673 = vmatpush1.msra.mxu0 0.0
    %2674 = vmatprep.subr.mxu0 0.0
    %2675 = vmatpush1.msra.mxu0 0.0
    %2676 = vmatprep.subr.mxu0 0.0
    %2677 = vmatpush1.msra.mxu0 0.0
    %2678 = vmatprep.subr.mxu0 0.0
    %2679 = vmatpush1.msra.mxu0 0.0
    %2680 = vmatprep.subr.mxu0 0.0
    %2681 = vmatpush1.msra.mxu0 0.0
    %2682 = vmatprep.subr.mxu0 0.0
    %2683 = vmatpush1.msra.mxu0 0.0
    %2684 = vmatprep.subr.mxu0 0.0
    %2685 = vmatpush1.msra.mxu0 0.0
    %2686 = vmatprep.subr.mxu0 0.0
    %2687 = vmatpush1.msra.mxu0 0.0
    %2688 = vmatprep.subr.mxu0 0.0
    %2689 = vmatpush1.msra.mxu0 0.0
    %2690 = vmatprep.subr.mxu0 0.0
    %2691 = vmatpush1.msra.mxu0 0.0
    %2692 = vmatprep.subr.mxu0 0.0
    %2693 = vmatpush1.msra.mxu0 0.0
    %2694 = vmatprep.subr.mxu0 0.0
    %2695 = vmatpush1.msra.mxu0 0.0
    %2696 = vmatprep.subr.mxu0 0.0
    %2697 = vmatpush1.msra.mxu0 0.0
    %2698 = vmatprep.subr.mxu0 0.0
    %2699 = vmatpush1.msra.mxu0 0.0
    %2700 = vmatprep.mubr.f32.mxu0 0.0
    %2701 = vmatmul.mubr.f32.gmra.mrb[0].mxu0 %v2634
    %v2702 = vpop.f32.mrb[0].mxu0
    %v2703 = vadd.f32 0.0, %v2702
    %v2704 = vpop.f32.mrb[0].mxu0
    %2705 = vdwg.mxu0
    %v2707 = vsel %vm2059, %v2217, 0
    %2709 = vmatprep.subr.mxu0 0.0
    %2710 = vmatpush1.msra.mxu0 %v698
    %2711 = vmatprep.subr.mxu0 0.0
    %2712 = vmatpush1.msra.mxu0 0.0
    %2713 = vmatprep.subr.mxu0 0.0
    %2714 = vmatpush1.msra.mxu0 0.0
    %2715 = vmatprep.subr.mxu0 0.0
    %2716 = vmatpush1.msra.mxu0 0.0
    %2717 = vmatprep.subr.mxu0 0.0
    %2718 = vmatpush1.msra.mxu0 0.0
    %2719 = vmatprep.subr.mxu0 0.0
    %2720 = vmatpush1.msra.mxu0 0.0
    %2721 = vmatprep.subr.mxu0 0.0
    %2722 = vmatpush1.msra.mxu0 0.0
    %2723 = vmatprep.subr.mxu0 0.0
    %2724 = vmatpush1.msra.mxu0 0.0
    %2725 = vmatprep.subr.mxu0 0.0
    %2726 = vmatpush1.msra.mxu0 0.0
    %2727 = vmatprep.subr.mxu0 0.0
    %2728 = vmatpush1.msra.mxu0 0.0
    %2729 = vmatprep.subr.mxu0 0.0
    %2730 = vmatpush1.msra.mxu0 0.0
    %2731 = vmatprep.subr.mxu0 0.0
    %2732 = vmatpush1.msra.mxu0 0.0
    %2733 = vmatprep.subr.mxu0 0.0
    %2734 = vmatpush1.msra.mxu0 0.0
    %2735 = vmatprep.subr.mxu0 0.0
    %2736 = vmatpush1.msra.mxu0 0.0
    %2737 = vmatprep.subr.mxu0 0.0
    %2738 = vmatpush1.msra.mxu0 0.0
    %2739 = vmatprep.subr.mxu0 0.0
    %2740 = vmatpush1.msra.mxu0 0.0
    %2741 = vmatprep.subr.mxu0 0.0
    %2742 = vmatpush1.msra.mxu0 0.0
    %2743 = vmatprep.subr.mxu0 0.0
    %2744 = vmatpush1.msra.mxu0 0.0
    %2745 = vmatprep.subr.mxu0 0.0
    %2746 = vmatpush1.msra.mxu0 0.0
    %2747 = vmatprep.subr.mxu0 0.0
    %2748 = vmatpush1.msra.mxu0 0.0
    %2749 = vmatprep.subr.mxu0 0.0
    %2750 = vmatpush1.msra.mxu0 0.0
    %2751 = vmatprep.subr.mxu0 0.0
    %2752 = vmatpush1.msra.mxu0 0.0
    %2753 = vmatprep.subr.mxu0 0.0
    %2754 = vmatpush1.msra.mxu0 0.0
    %2755 = vmatprep.subr.mxu0 0.0
    %2756 = vmatpush1.msra.mxu0 0.0
    %2757 = vmatprep.subr.mxu0 0.0
    %2758 = vmatpush1.msra.mxu0 0.0
    %2759 = vmatprep.subr.mxu0 0.0
    %2760 = vmatpush1.msra.mxu0 0.0
    %2761 = vmatprep.subr.mxu0 0.0
    %2762 = vmatpush1.msra.mxu0 0.0
    %2763 = vmatprep.subr.mxu0 0.0
    %2764 = vmatpush1.msra.mxu0 0.0
    %2765 = vmatprep.subr.mxu0 0.0
    %2766 = vmatpush1.msra.mxu0 0.0
    %2767 = vmatprep.subr.mxu0 0.0
    %2768 = vmatpush1.msra.mxu0 0.0
    %2769 = vmatprep.subr.mxu0 0.0
    %2770 = vmatpush1.msra.mxu0 0.0
    %2771 = vmatprep.subr.mxu0 0.0
    %2772 = vmatpush1.msra.mxu0 0.0
    %2773 = vmatprep.mubr.f32.mxu0 0.0
    %2774 = vmatmul.mubr.f32.gmra.mrb[0].mxu0 %v2707
    %v2775 = vpop.f32.mrb[0].mxu0
    %v2776 = vadd.f32 0.0, %v2775
    %v2777 = vpop.f32.mrb[0].mxu0
    %2778 = vdwg.mxu0
    %v2780 = vsel %vm2059, %v2219, 0
    %2782 = vmatprep.subr.mxu0 0.0
    %2783 = vmatpush1.msra.mxu0 %v834
    %2784 = vmatprep.subr.mxu0 0.0
    %2785 = vmatpush1.msra.mxu0 0.0
    %2786 = vmatprep.subr.mxu0 0.0
    %2787 = vmatpush1.msra.mxu0 0.0
    %2788 = vmatprep.subr.mxu0 0.0
    %2789 = vmatpush1.msra.mxu0 0.0
    %2790 = vmatprep.subr.mxu0 0.0
    %2791 = vmatpush1.msra.mxu0 0.0
    %2792 = vmatprep.subr.mxu0 0.0
    %2793 = vmatpush1.msra.mxu0 0.0
    %2794 = vmatprep.subr.mxu0 0.0
    %2795 = vmatpush1.msra.mxu0 0.0
    %2796 = vmatprep.subr.mxu0 0.0
    %2797 = vmatpush1.msra.mxu0 0.0
    %2798 = vmatprep.subr.mxu0 0.0
    %2799 = vmatpush1.msra.mxu0 0.0
    %2800 = vmatprep.subr.mxu0 0.0
    %2801 = vmatpush1.msra.mxu0 0.0
    %2802 = vmatprep.subr.mxu0 0.0
    %2803 = vmatpush1.msra.mxu0 0.0
    %2804 = vmatprep.subr.mxu0 0.0
    %2805 = vmatpush1.msra.mxu0 0.0
    %2806 = vmatprep.subr.mxu0 0.0
    %2807 = vmatpush1.msra.mxu0 0.0
    %2808 = vmatprep.subr.mxu0 0.0
    %2809 = vmatpush1.msra.mxu0 0.0
    %2810 = vmatprep.subr.mxu0 0.0
    %2811 = vmatpush1.msra.mxu0 0.0
    %2812 = vmatprep.subr.mxu0 0.0
    %2813 = vmatpush1.msra.mxu0 0.0
    %2814 = vmatprep.subr.mxu0 0.0
    %2815 = vmatpush1.msra.mxu0 0.0
    %2816 = vmatprep.subr.mxu0 0.0
    %2817 = vmatpush1.msra.mxu0 0.0
    %2818 = vmatprep.subr.mxu0 0.0
    %2819 = vmatpush1.msra.mxu0 0.0
    %2820 = vmatprep.subr.mxu0 0.0
    %2821 = vmatpush1.msra.mxu0 0.0
    %2822 = vmatprep.subr.mxu0 0.0
    %2823 = vmatpush1.msra.mxu0 0.0
    %2824 = vmatprep.subr.mxu0 0.0
    %2825 = vmatpush1.msra.mxu0 0.0
    %2826 = vmatprep.subr.mxu0 0.0
    %2827 = vmatpush1.msra.mxu0 0.0
    %2828 = vmatprep.subr.mxu0 0.0
    %2829 = vmatpush1.msra.mxu0 0.0
    %2830 = vmatprep.subr.mxu0 0.0
    %2831 = vmatpush1.msra.mxu0 0.0
    %2832 = vmatprep.subr.mxu0 0.0
    %2833 = vmatpush1.msra.mxu0 0.0
    %2834 = vmatprep.subr.mxu0 0.0
    %2835 = vmatpush1.msra.mxu0 0.0
    %2836 = vmatprep.subr.mxu0 0.0
    %2837 = vmatpush1.msra.mxu0 0.0
    %2838 = vmatprep.subr.mxu0 0.0
    %2839 = vmatpush1.msra.mxu0 0.0
    %2840 = vmatprep.subr.mxu0 0.0
    %2841 = vmatpush1.msra.mxu0 0.0
    %2842 = vmatprep.subr.mxu0 0.0
    %2843 = vmatpush1.msra.mxu0 0.0
    %2844 = vmatprep.subr.mxu0 0.0
    %2845 = vmatpush1.msra.mxu0 0.0
    %2846 = vmatprep.mubr.f32.mxu0 0.0
    %2847 = vmatmul.mubr.f32.gmra.mrb[0].mxu0 %v2780
    %v2848 = vpop.f32.mrb[0].mxu0
    %v2849 = vadd.f32 0.0, %v2848
    %v2850 = vpop.f32.mrb[0].mxu0
    %2851 = vdwg.mxu0
    %v2853 = vsel %vm2059, %v2221, 0
    %2855 = vmatprep.subr.mxu0 0.0
    %2856 = vmatpush1.msra.mxu0 %v625
    %2857 = vmatprep.subr.mxu0 0.0
    %2858 = vmatpush1.msra.mxu0 0.0
    %2859 = vmatprep.subr.mxu0 0.0
    %2860 = vmatpush1.msra.mxu0 0.0
    %2861 = vmatprep.subr.mxu0 0.0
    %2862 = vmatpush1.msra.mxu0 0.0
    %2863 = vmatprep.subr.mxu0 0.0
    %2864 = vmatpush1.msra.mxu0 0.0
    %2865 = vmatprep.subr.mxu0 0.0
    %2866 = vmatpush1.msra.mxu0 0.0
    %2867 = vmatprep.subr.mxu0 0.0
    %2868 = vmatpush1.msra.mxu0 0.0
    %2869 = vmatprep.subr.mxu0 0.0
    %2870 = vmatpush1.msra.mxu0 0.0
    %2871 = vmatprep.subr.mxu0 0.0
    %2872 = vmatpush1.msra.mxu0 0.0
    %2873 = vmatprep.subr.mxu0 0.0
    %2874 = vmatpush1.msra.mxu0 0.0
    %2875 = vmatprep.subr.mxu0 0.0
    %2876 = vmatpush1.msra.mxu0 0.0
    %2877 = vmatprep.subr.mxu0 0.0
    %2878 = vmatpush1.msra.mxu0 0.0
    %2879 = vmatprep.subr.mxu0 0.0
    %2880 = vmatpush1.msra.mxu0 0.0
    %2881 = vmatprep.subr.mxu0 0.0
    %2882 = vmatpush1.msra.mxu0 0.0
    %2883 = vmatprep.subr.mxu0 0.0
    %2884 = vmatpush1.msra.mxu0 0.0
    %2885 = vmatprep.subr.mxu0 0.0
    %2886 = vmatpush1.msra.mxu0 0.0
    %2887 = vmatprep.subr.mxu0 0.0
    %2888 = vmatpush1.msra.mxu0 0.0
    %2889 = vmatprep.subr.mxu0 0.0
    %2890 = vmatpush1.msra.mxu0 0.0
    %2891 = vmatprep.subr.mxu0 0.0
    %2892 = vmatpush1.msra.mxu0 0.0
    %2893 = vmatprep.subr.mxu0 0.0
    %2894 = vmatpush1.msra.mxu0 0.0
    %2895 = vmatprep.subr.mxu0 0.0
    %2896 = vmatpush1.msra.mxu0 0.0
    %2897 = vmatprep.subr.mxu0 0.0
    %2898 = vmatpush1.msra.mxu0 0.0
    %2899 = vmatprep.subr.mxu0 0.0
    %2900 = vmatpush1.msra.mxu0 0.0
    %2901 = vmatprep.subr.mxu0 0.0
    %2902 = vmatpush1.msra.mxu0 0.0
    %2903 = vmatprep.subr.mxu0 0.0
    %2904 = vmatpush1.msra.mxu0 0.0
    %2905 = vmatprep.subr.mxu0 0.0
    %2906 = vmatpush1.msra.mxu0 0.0
    %2907 = vmatprep.subr.mxu0 0.0
    %2908 = vmatpush1.msra.mxu0 0.0
    %2909 = vmatprep.subr.mxu0 0.0
    %2910 = vmatpush1.msra.mxu0 0.0
    %2911 = vmatprep.subr.mxu0 0.0
    %2912 = vmatpush1.msra.mxu0 0.0
    %2913 = vmatprep.subr.mxu0 0.0
    %2914 = vmatpush1.msra.mxu0 0.0
    %2915 = vmatprep.subr.mxu0 0.0
    %2916 = vmatpush1.msra.mxu0 0.0
    %2917 = vmatprep.subr.mxu0 0.0
    %2918 = vmatpush1.msra.mxu0 0.0
    %2919 = vmatprep.mubr.f32.mxu0 0.0
    %2920 = vmatmul.mubr.f32.gmra.mrb[0].mxu0 %v2853
    %v2921 = vpop.f32.mrb[0].mxu0
    %v2922 = vadd.f32 0.0, %v2921
    %v2923 = vpop.f32.mrb[0].mxu0
    %2924 = vdwg.mxu0
    %v2926 = vsel %vm2059, %v2223, 0
    %2928 = vmatprep.subr.mxu0 0.0
    %2929 = vmatpush1.msra.mxu0 %v838
    %2930 = vmatprep.subr.mxu0 0.0
    %2931 = vmatpush1.msra.mxu0 0.0
    %2932 = vmatprep.subr.mxu0 0.0
    %2933 = vmatpush1.msra.mxu0 0.0
    %2934 = vmatprep.subr.mxu0 0.0
    %2935 = vmatpush1.msra.mxu0 0.0
    %2936 = vmatprep.subr.mxu0 0.0
    %2937 = vmatpush1.msra.mxu0 0.0
    %2938 = vmatprep.subr.mxu0 0.0
    %2939 = vmatpush1.msra.mxu0 0.0
    %2940 = vmatprep.subr.mxu0 0.0
    %2941 = vmatpush1.msra.mxu0 0.0
    %2942 = vmatprep.subr.mxu0 0.0
    %2943 = vmatpush1.msra.mxu0 0.0
    %2944 = vmatprep.subr.mxu0 0.0
    %2945 = vmatpush1.msra.mxu0 0.0
    %2946 = vmatprep.subr.mxu0 0.0
    %2947 = vmatpush1.msra.mxu0 0.0
    %2948 = vmatprep.subr.mxu0 0.0
    %2949 = vmatpush1.msra.mxu0 0.0
    %2950 = vmatprep.subr.mxu0 0.0
    %2951 = vmatpush1.msra.mxu0 0.0
    %2952 = vmatprep.subr.mxu0 0.0
    %2953 = vmatpush1.msra.mxu0 0.0
    %2954 = vmatprep.subr.mxu0 0.0
    %2955 = vmatpush1.msra.mxu0 0.0
    %2956 = vmatprep.subr.mxu0 0.0
    %2957 = vmatpush1.msra.mxu0 0.0
    %2958 = vmatprep.subr.mxu0 0.0
    %2959 = vmatpush1.msra.mxu0 0.0
    %2960 = vmatprep.subr.mxu0 0.0
    %2961 = vmatpush1.msra.mxu0 0.0
    %2962 = vmatprep.subr.mxu0 0.0
    %2963 = vmatpush1.msra.mxu0 0.0
    %2964 = vmatprep.subr.mxu0 0.0
    %2965 = vmatpush1.msra.mxu0 0.0
    %2966 = vmatprep.subr.mxu0 0.0
    %2967 = vmatpush1.msra.mxu0 0.0
    %2968 = vmatprep.subr.mxu0 0.0
    %2969 = vmatpush1.msra.mxu0 0.0
    %2970 = vmatprep.subr.mxu0 0.0
    %2971 = vmatpush1.msra.mxu0 0.0
    %2972 = vmatprep.subr.mxu0 0.0
    %2973 = vmatpush1.msra.mxu0 0.0
    %2974 = vmatprep.subr.mxu0 0.0
    %2975 = vmatpush1.msra.mxu0 0.0
    %2976 = vmatprep.subr.mxu0 0.0
    %2977 = vmatpush1.msra.mxu0 0.0
    %2978 = vmatprep.subr.mxu0 0.0
    %2979 = vmatpush1.msra.mxu0 0.0
    %2980 = vmatprep.subr.mxu0 0.0
    %2981 = vmatpush1.msra.mxu0 0.0
    %2982 = vmatprep.subr.mxu0 0.0
    %2983 = vmatpush1.msra.mxu0 0.0
    %2984 = vmatprep.subr.mxu0 0.0
    %2985 = vmatpush1.msra.mxu0 0.0
    %2986 = vmatprep.subr.mxu0 0.0
    %2987 = vmatpush1.msra.mxu0 0.0
    %2988 = vmatprep.subr.mxu0 0.0
    %2989 = vmatpush1.msra.mxu0 0.0
    %2990 = vmatprep.subr.mxu0 0.0
    %2991 = vmatpush1.msra.mxu0 0.0
    %2992 = vmatprep.mubr.f32.mxu0 0.0
    %2993 = vmatmul.mubr.f32.gmra.mrb[0].mxu0 %v2926
    %v2994 = vpop.f32.mrb[0].mxu0
    %v2995 = vadd.f32 0.0, %v2994
    %v2996 = vpop.f32.mrb[0].mxu0
    %2997 = vdwg.mxu0
    %v2999 = vsel %vm2059, %v2225, 0
    %3001 = vmatprep.subr.mxu0 0.0
    %3002 = vmatpush1.msra.mxu0 %v627
    %3003 = vmatprep.subr.mxu0 0.0
    %3004 = vmatpush1.msra.mxu0 0.0
    %3005 = vmatprep.subr.mxu0 0.0
    %3006 = vmatpush1.msra.mxu0 0.0
    %3007 = vmatprep.subr.mxu0 0.0
    %3008 = vmatpush1.msra.mxu0 0.0
    %3009 = vmatprep.subr.mxu0 0.0
    %3010 = vmatpush1.msra.mxu0 0.0
    %3011 = vmatprep.subr.mxu0 0.0
    %3012 = vmatpush1.msra.mxu0 0.0
    %3013 = vmatprep.subr.mxu0 0.0
    %3014 = vmatpush1.msra.mxu0 0.0
    %3015 = vmatprep.subr.mxu0 0.0
    %3016 = vmatpush1.msra.mxu0 0.0
    %3017 = vmatprep.subr.mxu0 0.0
    %3018 = vmatpush1.msra.mxu0 0.0
    %3019 = vmatprep.subr.mxu0 0.0
    %3020 = vmatpush1.msra.mxu0 0.0
    %3021 = vmatprep.subr.mxu0 0.0
    %3022 = vmatpush1.msra.mxu0 0.0
    %3023 = vmatprep.subr.mxu0 0.0
    %3024 = vmatpush1.msra.mxu0 0.0
    %3025 = vmatprep.subr.mxu0 0.0
    %3026 = vmatpush1.msra.mxu0 0.0
    %3027 = vmatprep.subr.mxu0 0.0
    %3028 = vmatpush1.msra.mxu0 0.0
    %3029 = vmatprep.subr.mxu0 0.0
    %3030 = vmatpush1.msra.mxu0 0.0
    %3031 = vmatprep.subr.mxu0 0.0
    %3032 = vmatpush1.msra.mxu0 0.0
    %3033 = vmatprep.subr.mxu0 0.0
    %3034 = vmatpush1.msra.mxu0 0.0
    %3035 = vmatprep.subr.mxu0 0.0
    %3036 = vmatpush1.msra.mxu0 0.0
    %3037 = vmatprep.subr.mxu0 0.0
    %3038 = vmatpush1.msra.mxu0 0.0
    %3039 = vmatprep.subr.mxu0 0.0
    %3040 = vmatpush1.msra.mxu0 0.0
    %3041 = vmatprep.subr.mxu0 0.0
    %3042 = vmatpush1.msra.mxu0 0.0
    %3043 = vmatprep.subr.mxu0 0.0
    %3044 = vmatpush1.msra.mxu0 0.0
    %3045 = vmatprep.subr.mxu0 0.0
    %3046 = vmatpush1.msra.mxu0 0.0
    %3047 = vmatprep.subr.mxu0 0.0
    %3048 = vmatpush1.msra.mxu0 0.0
    %3049 = vmatprep.subr.mxu0 0.0
    %3050 = vmatpush1.msra.mxu0 0.0
    %3051 = vmatprep.subr.mxu0 0.0
    %3052 = vmatpush1.msra.mxu0 0.0
    %3053 = vmatprep.subr.mxu0 0.0
    %3054 = vmatpush1.msra.mxu0 0.0
    %3055 = vmatprep.subr.mxu0 0.0
    %3056 = vmatpush1.msra.mxu0 0.0
    %3057 = vmatprep.subr.mxu0 0.0
    %3058 = vmatpush1.msra.mxu0 0.0
    %3059 = vmatprep.subr.mxu0 0.0
    %3060 = vmatpush1.msra.mxu0 0.0
    %3061 = vmatprep.subr.mxu0 0.0
    %3062 = vmatpush1.msra.mxu0 0.0
    %3063 = vmatprep.subr.mxu0 0.0
    %3064 = vmatpush1.msra.mxu0 0.0
    %3065 = vmatprep.mubr.f32.mxu0 0.0
    %3066 = vmatmul.mubr.f32.gmra.mrb[0].mxu0 %v2999
    %v3067 = vpop.f32.mrb[0].mxu0
    %v3068 = vadd.f32 0.0, %v3067
    %v3069 = vpop.f32.mrb[0].mxu0
    %3070 = vdwg.mxu0
    %v3072 = vsel %vm2059, %v2227, 0
    %3074 = vmatprep.subr.mxu0 0.0
    %3075 = vmatpush1.msra.mxu0 %v842
    %3076 = vmatprep.subr.mxu0 0.0
    %3077 = vmatpush1.msra.mxu0 0.0
    %3078 = vmatprep.subr.mxu0 0.0
    %3079 = vmatpush1.msra.mxu0 0.0
    %3080 = vmatprep.subr.mxu0 0.0
    %3081 = vmatpush1.msra.mxu0 0.0
    %3082 = vmatprep.subr.mxu0 0.0
    %3083 = vmatpush1.msra.mxu0 0.0
    %3084 = vmatprep.subr.mxu0 0.0
    %3085 = vmatpush1.msra.mxu0 0.0
    %3086 = vmatprep.subr.mxu0 0.0
    %3087 = vmatpush1.msra.mxu0 0.0
    %3088 = vmatprep.subr.mxu0 0.0
    %3089 = vmatpush1.msra.mxu0 0.0
    %3090 = vmatprep.subr.mxu0 0.0
    %3091 = vmatpush1.msra.mxu0 0.0
    %3092 = vmatprep.subr.mxu0 0.0
    %3093 = vmatpush1.msra.mxu0 0.0
    %3094 = vmatprep.subr.mxu0 0.0
    %3095 = vmatpush1.msra.mxu0 0.0
    %3096 = vmatprep.subr.mxu0 0.0
    %3097 = vmatpush1.msra.mxu0 0.0
    %3098 = vmatprep.subr.mxu0 0.0
    %3099 = vmatpush1.msra.mxu0 0.0
    %3100 = vmatprep.subr.mxu0 0.0
    %3101 = vmatpush1.msra.mxu0 0.0
    %3102 = vmatprep.subr.mxu0 0.0
    %3103 = vmatpush1.msra.mxu0 0.0
    %3104 = vmatprep.subr.mxu0 0.0
    %3105 = vmatpush1.msra.mxu0 0.0
    %3106 = vmatprep.subr.mxu0 0.0
    %3107 = vmatpush1.msra.mxu0 0.0
    %3108 = vmatprep.subr.mxu0 0.0
    %3109 = vmatpush1.msra.mxu0 0.0
    %3110 = vmatprep.subr.mxu0 0.0
    %3111 = vmatpush1.msra.mxu0 0.0
    %3112 = vmatprep.subr.mxu0 0.0
    %3113 = vmatpush1.msra.mxu0 0.0
    %3114 = vmatprep.subr.mxu0 0.0
    %3115 = vmatpush1.msra.mxu0 0.0
    %3116 = vmatprep.subr.mxu0 0.0
    %3117 = vmatpush1.msra.mxu0 0.0
    %3118 = vmatprep.subr.mxu0 0.0
    %3119 = vmatpush1.msra.mxu0 0.0
    %3120 = vmatprep.subr.mxu0 0.0
    %3121 = vmatpush1.msra.mxu0 0.0
    %3122 = vmatprep.subr.mxu0 0.0
    %3123 = vmatpush1.msra.mxu0 0.0
    %3124 = vmatprep.subr.mxu0 0.0
    %3125 = vmatpush1.msra.mxu0 0.0
    %3126 = vmatprep.subr.mxu0 0.0
    %3127 = vmatpush1.msra.mxu0 0.0
    %3128 = vmatprep.subr.mxu0 0.0
    %3129 = vmatpush1.msra.mxu0 0.0
    %3130 = vmatprep.subr.mxu0 0.0
    %3131 = vmatpush1.msra.mxu0 0.0
    %3132 = vmatprep.subr.mxu0 0.0
    %3133 = vmatpush1.msra.mxu0 0.0
    %3134 = vmatprep.subr.mxu0 0.0
    %3135 = vmatpush1.msra.mxu0 0.0
    %3136 = vmatprep.subr.mxu0 0.0
    %3137 = vmatpush1.msra.mxu0 0.0
    %3138 = vmatprep.mubr.f32.mxu0 0.0
    %3139 = vmatmul.mubr.f32.gmra.mrb[0].mxu0 %v3072
    %v3140 = vpop.f32.mrb[0].mxu0
    %v3141 = vadd.f32 0.0, %v3140
    %v3142 = vpop.f32.mrb[0].mxu0
    %3143 = vdwg.mxu0
    %v3145 = vsel %vm2059, %v2229, 0
    %3147 = vmatprep.subr.mxu0 0.0
    %3148 = vmatpush1.msra.mxu0 %v702
    %3149 = vmatprep.subr.mxu0 0.0
    %3150 = vmatpush1.msra.mxu0 0.0
    %3151 = vmatprep.subr.mxu0 0.0
    %3152 = vmatpush1.msra.mxu0 0.0
    %3153 = vmatprep.subr.mxu0 0.0
    %3154 = vmatpush1.msra.mxu0 0.0
    %3155 = vmatprep.subr.mxu0 0.0
    %3156 = vmatpush1.msra.mxu0 0.0
    %3157 = vmatprep.subr.mxu0 0.0
    %3158 = vmatpush1.msra.mxu0 0.0
    %3159 = vmatprep.subr.mxu0 0.0
    %3160 = vmatpush1.msra.mxu0 0.0
    %3161 = vmatprep.subr.mxu0 0.0
    %3162 = vmatpush1.msra.mxu0 0.0
    %3163 = vmatprep.subr.mxu0 0.0
    %3164 = vmatpush1.msra.mxu0 0.0
    %3165 = vmatprep.subr.mxu0 0.0
    %3166 = vmatpush1.msra.mxu0 0.0
    %3167 = vmatprep.subr.mxu0 0.0
    %3168 = vmatpush1.msra.mxu0 0.0
    %3169 = vmatprep.subr.mxu0 0.0
    %3170 = vmatpush1.msra.mxu0 0.0
    %3171 = vmatprep.subr.mxu0 0.0
    %3172 = vmatpush1.msra.mxu0 0.0
    %3173 = vmatprep.subr.mxu0 0.0
    %3174 = vmatpush1.msra.mxu0 0.0
    %3175 = vmatprep.subr.mxu0 0.0
    %3176 = vmatpush1.msra.mxu0 0.0
    %3177 = vmatprep.subr.mxu0 0.0
    %3178 = vmatpush1.msra.mxu0 0.0
    %3179 = vmatprep.subr.mxu0 0.0
    %3180 = vmatpush1.msra.mxu0 0.0
    %3181 = vmatprep.subr.mxu0 0.0
    %3182 = vmatpush1.msra.mxu0 0.0
    %3183 = vmatprep.subr.mxu0 0.0
    %3184 = vmatpush1.msra.mxu0 0.0
    %3185 = vmatprep.subr.mxu0 0.0
    %3186 = vmatpush1.msra.mxu0 0.0
    %3187 = vmatprep.subr.mxu0 0.0
    %3188 = vmatpush1.msra.mxu0 0.0
    %3189 = vmatprep.subr.mxu0 0.0
    %3190 = vmatpush1.msra.mxu0 0.0
    %3191 = vmatprep.subr.mxu0 0.0
    %3192 = vmatpush1.msra.mxu0 0.0
    %3193 = vmatprep.subr.mxu0 0.0
    %3194 = vmatpush1.msra.mxu0 0.0
    %3195 = vmatprep.subr.mxu0 0.0
    %3196 = vmatpush1.msra.mxu0 0.0
    %3197 = vmatprep.subr.mxu0 0.0
    %3198 = vmatpush1.msra.mxu0 0.0
    %3199 = vmatprep.subr.mxu0 0.0
    %3200 = vmatpush1.msra.mxu0 0.0
    %3201 = vmatprep.subr.mxu0 0.0
    %3202 = vmatpush1.msra.mxu0 0.0
    %3203 = vmatprep.subr.mxu0 0.0
    %3204 = vmatpush1.msra.mxu0 0.0
    %3205 = vmatprep.subr.mxu0 0.0
    %3206 = vmatpush1.msra.mxu0 0.0
    %3207 = vmatprep.subr.mxu0 0.0
    %3208 = vmatpush1.msra.mxu0 0.0
    %3209 = vmatprep.subr.mxu0 0.0
    %3210 = vmatpush1.msra.mxu0 0.0
    %3211 = vmatprep.mubr.f32.mxu0 0.0
    %3212 = vmatmul.mubr.f32.gmra.mrb[0].mxu0 %v3145
    %v3213 = vpop.f32.mrb[0].mxu0
    %v3214 = vadd.f32 0.0, %v3213
    %v3215 = vpop.f32.mrb[0].mxu0
    %3216 = vdwg.mxu0
    %v3218 = vsel %vm2059, %v2231, 0
    %3220 = vmatprep.subr.mxu0 0.0
    %3221 = vmatpush1.msra.mxu0 %v846
    %3222 = vmatprep.subr.mxu0 0.0
    %3223 = vmatpush1.msra.mxu0 0.0
    %3224 = vmatprep.subr.mxu0 0.0
    %3225 = vmatpush1.msra.mxu0 0.0
    %3226 = vmatprep.subr.mxu0 0.0
    %3227 = vmatpush1.msra.mxu0 0.0
    %3228 = vmatprep.subr.mxu0 0.0
    %3229 = vmatpush1.msra.mxu0 0.0
    %3230 = vmatprep.subr.mxu0 0.0
    %3231 = vmatpush1.msra.mxu0 0.0
    %3232 = vmatprep.subr.mxu0 0.0
    %3233 = vmatpush1.msra.mxu0 0.0
    %3234 = vmatprep.subr.mxu0 0.0
    %3235 = vmatpush1.msra.mxu0 0.0
    %3236 = vmatprep.subr.mxu0 0.0
    %3237 = vmatpush1.msra.mxu0 0.0
    %3238 = vmatprep.subr.mxu0 0.0
    %3239 = vmatpush1.msra.mxu0 0.0
    %3240 = vmatprep.subr.mxu0 0.0
    %3241 = vmatpush1.msra.mxu0 0.0
    %3242 = vmatprep.subr.mxu0 0.0
    %3243 = vmatpush1.msra.mxu0 0.0
    %3244 = vmatprep.subr.mxu0 0.0
    %3245 = vmatpush1.msra.mxu0 0.0
    %3246 = vmatprep.subr.mxu0 0.0
    %3247 = vmatpush1.msra.mxu0 0.0
    %3248 = vmatprep.subr.mxu0 0.0
    %3249 = vmatpush1.msra.mxu0 0.0
    %3250 = vmatprep.subr.mxu0 0.0
    %3251 = vmatpush1.msra.mxu0 0.0
    %3252 = vmatprep.subr.mxu0 0.0
    %3253 = vmatpush1.msra.mxu0 0.0
    %3254 = vmatprep.subr.mxu0 0.0
    %3255 = vmatpush1.msra.mxu0 0.0
    %3256 = vmatprep.subr.mxu0 0.0
    %3257 = vmatpush1.msra.mxu0 0.0
    %3258 = vmatprep.subr.mxu0 0.0
    %3259 = vmatpush1.msra.mxu0 0.0
    %3260 = vmatprep.subr.mxu0 0.0
    %3261 = vmatpush1.msra.mxu0 0.0
    %3262 = vmatprep.subr.mxu0 0.0
    %3263 = vmatpush1.msra.mxu0 0.0
    %3264 = vmatprep.subr.mxu0 0.0
    %3265 = vmatpush1.msra.mxu0 0.0
    %3266 = vmatprep.subr.mxu0 0.0
    %3267 = vmatpush1.msra.mxu0 0.0
    %3268 = vmatprep.subr.mxu0 0.0
    %3269 = vmatpush1.msra.mxu0 0.0
    %3270 = vmatprep.subr.mxu0 0.0
    %3271 = vmatpush1.msra.mxu0 0.0
    %3272 = vmatprep.subr.mxu0 0.0
    %3273 = vmatpush1.msra.mxu0 0.0
    %3274 = vmatprep.subr.mxu0 0.0
    %3275 = vmatpush1.msra.mxu0 0.0
    %3276 = vmatprep.subr.mxu0 0.0
    %3277 = vmatpush1.msra.mxu0 0.0
    %3278 = vmatprep.subr.mxu0 0.0
    %3279 = vmatpush1.msra.mxu0 0.0
    %3280 = vmatprep.subr.mxu0 0.0
    %3281 = vmatpush1.msra.mxu0 0.0
    %3282 = vmatprep.subr.mxu0 0.0
    %3283 = vmatpush1.msra.mxu0 0.0
    %3284 = vmatprep.mubr.f32.mxu0 0.0
    %3285 = vmatmul.mubr.f32.gmra.mrb[0].mxu0 %v3218
    %v3286 = vpop.f32.mrb[0].mxu0
    %v3287 = vadd.f32 0.0, %v3286
    %v3288 = vpop.f32.mrb[0].mxu0
    %3289 = vdwg.mxu0
    %v3291 = vsel %vm2059, %v2233, 0
    %3293 = vmatprep.subr.mxu0 0.0
    %3294 = vmatpush1.msra.mxu0 %v704
    %3295 = vmatprep.subr.mxu0 0.0
    %3296 = vmatpush1.msra.mxu0 0.0
    %3297 = vmatprep.subr.mxu0 0.0
    %3298 = vmatpush1.msra.mxu0 0.0
    %3299 = vmatprep.subr.mxu0 0.0
    %3300 = vmatpush1.msra.mxu0 0.0
    %3301 = vmatprep.subr.mxu0 0.0
    %3302 = vmatpush1.msra.mxu0 0.0
    %3303 = vmatprep.subr.mxu0 0.0
    %3304 = vmatpush1.msra.mxu0 0.0
    %3305 = vmatprep.subr.mxu0 0.0
    %3306 = vmatpush1.msra.mxu0 0.0
    %3307 = vmatprep.subr.mxu0 0.0
    %3308 = vmatpush1.msra.mxu0 0.0
    %3309 = vmatprep.subr.mxu0 0.0
    %3310 = vmatpush1.msra.mxu0 0.0
    %3311 = vmatprep.subr.mxu0 0.0
    %3312 = vmatpush1.msra.mxu0 0.0
    %3313 = vmatprep.subr.mxu0 0.0
    %3314 = vmatpush1.msra.mxu0 0.0
    %3315 = vmatprep.subr.mxu0 0.0
    %3316 = vmatpush1.msra.mxu0 0.0
    %3317 = vmatprep.subr.mxu0 0.0
    %3318 = vmatpush1.msra.mxu0 0.0
    %3319 = vmatprep.subr.mxu0 0.0
    %3320 = vmatpush1.msra.mxu0 0.0
    %3321 = vmatprep.subr.mxu0 0.0
    %3322 = vmatpush1.msra.mxu0 0.0
    %3323 = vmatprep.subr.mxu0 0.0
    %3324 = vmatpush1.msra.mxu0 0.0
    %3325 = vmatprep.subr.mxu0 0.0
    %3326 = vmatpush1.msra.mxu0 0.0
    %3327 = vmatprep.subr.mxu0 0.0
    %3328 = vmatpush1.msra.mxu0 0.0
    %3329 = vmatprep.subr.mxu0 0.0
    %3330 = vmatpush1.msra.mxu0 0.0
    %3331 = vmatprep.subr.mxu0 0.0
    %3332 = vmatpush1.msra.mxu0 0.0
    %3333 = vmatprep.subr.mxu0 0.0
    %3334 = vmatpush1.msra.mxu0 0.0
    %3335 = vmatprep.subr.mxu0 0.0
    %3336 = vmatpush1.msra.mxu0 0.0
    %3337 = vmatprep.subr.mxu0 0.0
    %3338 = vmatpush1.msra.mxu0 0.0
    %3339 = vmatprep.subr.mxu0 0.0
    %3340 = vmatpush1.msra.mxu0 0.0
    %3341 = vmatprep.subr.mxu0 0.0
    %3342 = vmatpush1.msra.mxu0 0.0
    %3343 = vmatprep.subr.mxu0 0.0
    %3344 = vmatpush1.msra.mxu0 0.0
    %3345 = vmatprep.subr.mxu0 0.0
    %3346 = vmatpush1.msra.mxu0 0.0
    %3347 = vmatprep.subr.mxu0 0.0
    %3348 = vmatpush1.msra.mxu0 0.0
    %3349 = vmatprep.subr.mxu0 0.0
    %3350 = vmatpush1.msra.mxu0 0.0
    %3351 = vmatprep.subr.mxu0 0.0
    %3352 = vmatpush1.msra.mxu0 0.0
    %3353 = vmatprep.subr.mxu0 0.0
    %3354 = vmatpush1.msra.mxu0 0.0
    %3355 = vmatprep.subr.mxu0 0.0
    %3356 = vmatpush1.msra.mxu0 0.0
    %3357 = vmatprep.mubr.f32.mxu0 0.0
    %3358 = vmatmul.mubr.f32.gmra.mrb[0].mxu0 %v3291
    %v3359 = vpop.f32.mrb[0].mxu0
    %v3360 = vadd.f32 0.0, %v3359
    %v3361 = vpop.f32.mrb[0].mxu0
    %3362 = vdwg.mxu0
    %v3364 = vsel %vm2059, %v2235, 0
    %3366 = vmatprep.subr.mxu0 0.0
    %3367 = vmatpush1.msra.mxu0 %v850
    %3368 = vmatprep.subr.mxu0 0.0
    %3369 = vmatpush1.msra.mxu0 0.0
    %3370 = vmatprep.subr.mxu0 0.0
    %3371 = vmatpush1.msra.mxu0 0.0
    %3372 = vmatprep.subr.mxu0 0.0
    %3373 = vmatpush1.msra.mxu0 0.0
    %3374 = vmatprep.subr.mxu0 0.0
    %3375 = vmatpush1.msra.mxu0 0.0
    %3376 = vmatprep.subr.mxu0 0.0
    %3377 = vmatpush1.msra.mxu0 0.0
    %3378 = vmatprep.subr.mxu0 0.0
    %3379 = vmatpush1.msra.mxu0 0.0
    %3380 = vmatprep.subr.mxu0 0.0
    %3381 = vmatpush1.msra.mxu0 0.0
    %3382 = vmatprep.subr.mxu0 0.0
    %3383 = vmatpush1.msra.mxu0 0.0
    %3384 = vmatprep.subr.mxu0 0.0
    %3385 = vmatpush1.msra.mxu0 0.0
    %3386 = vmatprep.subr.mxu0 0.0
    %3387 = vmatpush1.msra.mxu0 0.0
    %3388 = vmatprep.subr.mxu0 0.0
    %3389 = vmatpush1.msra.mxu0 0.0
    %3390 = vmatprep.subr.mxu0 0.0
    %3391 = vmatpush1.msra.mxu0 0.0
    %3392 = vmatprep.subr.mxu0 0.0
    %3393 = vmatpush1.msra.mxu0 0.0
    %3394 = vmatprep.subr.mxu0 0.0
    %3395 = vmatpush1.msra.mxu0 0.0
    %3396 = vmatprep.subr.mxu0 0.0
    %3397 = vmatpush1.msra.mxu0 0.0
    %3398 = vmatprep.subr.mxu0 0.0
    %3399 = vmatpush1.msra.mxu0 0.0
    %3400 = vmatprep.subr.mxu0 0.0
    %3401 = vmatpush1.msra.mxu0 0.0
    %3402 = vmatprep.subr.mxu0 0.0
    %3403 = vmatpush1.msra.mxu0 0.0
    %3404 = vmatprep.subr.mxu0 0.0
    %3405 = vmatpush1.msra.mxu0 0.0
    %3406 = vmatprep.subr.mxu0 0.0
    %3407 = vmatpush1.msra.mxu0 0.0
    %3408 = vmatprep.subr.mxu0 0.0
    %3409 = vmatpush1.msra.mxu0 0.0
    %3410 = vmatprep.subr.mxu0 0.0
    %3411 = vmatpush1.msra.mxu0 0.0
    %3412 = vmatprep.subr.mxu0 0.0
    %3413 = vmatpush1.msra.mxu0 0.0
    %3414 = vmatprep.subr.mxu0 0.0
    %3415 = vmatpush1.msra.mxu0 0.0
    %3416 = vmatprep.subr.mxu0 0.0
    %3417 = vmatpush1.msra.mxu0 0.0
    %3418 = vmatprep.subr.mxu0 0.0
    %3419 = vmatpush1.msra.mxu0 0.0
    %3420 = vmatprep.subr.mxu0 0.0
    %3421 = vmatpush1.msra.mxu0 0.0
    %3422 = vmatprep.subr.mxu0 0.0
    %3423 = vmatpush1.msra.mxu0 0.0
    %3424 = vmatprep.subr.mxu0 0.0
    %3425 = vmatpush1.msra.mxu0 0.0
    %3426 = vmatprep.subr.mxu0 0.0
    %3427 = vmatpush1.msra.mxu0 0.0
    %3428 = vmatprep.subr.mxu0 0.0
    %3429 = vmatpush1.msra.mxu0 0.0
    %3430 = vmatprep.mubr.f32.mxu0 0.0
    %3431 = vmatmul.mubr.f32.gmra.mrb[0].mxu0 %v3364
    %v3432 = vpop.f32.mrb[0].mxu0
    %v3433 = vadd.f32 0.0, %v3432
    %v3434 = vpop.f32.mrb[0].mxu0
    %3435 = vdwg.mxu0
    %3436 = vst.msk [vmem:[#allocation2] sm:$0xff] %vm852, %v2338
    %3438 = vrot.lane.b32.xlu0 %v2411, 64
    %v3439 = vpop.permute.xlu0 %3438
    %vm3441 = vcmask 1048064
    %3442 = vst.msk [vmem:[#allocation2] sm:$0xff] %vm3441, %v3439
    %3443 = vst.msk [vmem:[#allocation2 + $0x8] sm:$0xff] %vm852, %v2484
    %3445 = vrot.lane.b32.xlu0 %v2557, 64
    %v3446 = vpop.permute.xlu0 %3445
    %3448 = vst.msk [vmem:[#allocation2 + $0x8] sm:$0xff] %vm3441, %v3446
    %3449 = vst.msk [vmem:[#allocation2 + $0x10] sm:$0xff] %vm852, %v2630
    %3451 = vrot.lane.b32.xlu0 %v2703, 64
    %v3452 = vpop.permute.xlu0 %3451
    %3454 = vst.msk [vmem:[#allocation2 + $0x10] sm:$0xff] %vm3441, %v3452
    %3455 = vst.msk [vmem:[#allocation2 + $0x18] sm:$0xff] %vm852, %v2776
    %3457 = vrot.lane.b32.xlu0 %v2849, 64
    %v3458 = vpop.permute.xlu0 %3457
    %3460 = vst.msk [vmem:[#allocation2 + $0x18] sm:$0xff] %vm3441, %v3458
    %3461 = vst.msk [vmem:[#allocation2 + $0x20] sm:$0xff] %vm852, %v2922
    %3463 = vrot.lane.b32.xlu0 %v2995, 64
    %v3464 = vpop.permute.xlu0 %3463
    %3466 = vst.msk [vmem:[#allocation2 + $0x20] sm:$0xff] %vm3441, %v3464
    %3467 = vst.msk [vmem:[#allocation2 + $0x28] sm:$0xff] %vm852, %v3068
    %3469 = vrot.lane.b32.xlu0 %v3141, 64
    %v3470 = vpop.permute.xlu0 %3469
    %3472 = vst.msk [vmem:[#allocation2 + $0x28] sm:$0xff] %vm3441, %v3470
    %3473 = vst.msk [vmem:[#allocation2 + $0x30] sm:$0xff] %vm852, %v3214
    %3475 = vrot.lane.b32.xlu0 %v3287, 64
    %v3476 = vpop.permute.xlu0 %3475
    %3478 = vst.msk [vmem:[#allocation2 + $0x30] sm:$0xff] %vm3441, %v3476
    %3479 = vst.msk [vmem:[#allocation2 + $0x38] sm:$0xff] %vm852, %v3360
    %3481 = vrot.lane.b32.xlu0 %v3433, 64
    %v3482 = vpop.permute.xlu0 %3481
    %3484 = vst.msk [vmem:[#allocation2 + $0x38] sm:$0xff] %vm3441, %v3482
    %v3485 = vld [vmem:[#allocation2] sm:$0xff]
    %v3486 = vld [vmem:[#allocation2 + $0x8] sm:$0xff]
    %v3487 = vld [vmem:[#allocation2 + $0x10] sm:$0xff]
    %v3488 = vld [vmem:[#allocation2 + $0x18] sm:$0xff]
    %v3489 = vld [vmem:[#allocation2 + $0x20] sm:$0xff]
    %v3490 = vld [vmem:[#allocation2 + $0x28] sm:$0xff]
    %v3491 = vld [vmem:[#allocation2 + $0x30] sm:$0xff]
    %v3492 = vld [vmem:[#allocation2 + $0x38] sm:$0xff]
    %3493 = vmatprep.subr.mxu0 0.0
    %3494 = vmatpush1.msra.mxu0 %v708
    %3495 = vmatprep.subr.mxu0 0.0
    %3496 = vmatpush1.msra.mxu0 %v709
    %3497 = vmatprep.subr.mxu0 0.0
    %3498 = vmatpush1.msra.mxu0 %v710
    %3499 = vmatprep.subr.mxu0 0.0
    %3500 = vmatpush1.msra.mxu0 %v711
    %3501 = vmatprep.subr.mxu0 0.0
    %3502 = vmatpush1.msra.mxu0 %v712
    %3503 = vmatprep.subr.mxu0 0.0
    %3504 = vmatpush1.msra.mxu0 %v713
    %3505 = vmatprep.subr.mxu0 0.0
    %3506 = vmatpush1.msra.mxu0 %v714
    %3507 = vmatprep.subr.mxu0 0.0
    %3508 = vmatpush1.msra.mxu0 %v715
    %3509 = vmatprep.subr.mxu0 0.0
    %3510 = vmatpush1.msra.mxu0 %v716
    %3511 = vmatprep.subr.mxu0 0.0
    %3512 = vmatpush1.msra.mxu0 %v717
    %3513 = vmatprep.subr.mxu0 0.0
    %3514 = vmatpush1.msra.mxu0 %v718
    %3515 = vmatprep.subr.mxu0 0.0
    %3516 = vmatpush1.msra.mxu0 %v719
    %3517 = vmatprep.subr.mxu0 0.0
    %3518 = vmatpush1.msra.mxu0 %v720
    %3519 = vmatprep.subr.mxu0 0.0
    %3520 = vmatpush1.msra.mxu0 %v721
    %3521 = vmatprep.subr.mxu0 0.0
    %3522 = vmatpush1.msra.mxu0 %v722
    %3523 = vmatprep.subr.mxu0 0.0
    %3524 = vmatpush1.msra.mxu0 %v723
    %3525 = vmatprep.subr.mxu0 0.0
    %3526 = vmatpush1.msra.mxu0 %v724
    %3527 = vmatprep.subr.mxu0 0.0
    %3528 = vmatpush1.msra.mxu0 %v725
    %3529 = vmatprep.subr.mxu0 0.0
    %3530 = vmatpush1.msra.mxu0 %v726
    %3531 = vmatprep.subr.mxu0 0.0
    %3532 = vmatpush1.msra.mxu0 %v727
    %3533 = vmatprep.subr.mxu0 0.0
    %3534 = vmatpush1.msra.mxu0 %v728
    %3535 = vmatprep.subr.mxu0 0.0
    %3536 = vmatpush1.msra.mxu0 %v729
    %3537 = vmatprep.subr.mxu0 0.0
    %3538 = vmatpush1.msra.mxu0 %v730
    %3539 = vmatprep.subr.mxu0 0.0
    %3540 = vmatpush1.msra.mxu0 %v731
    %3541 = vmatprep.subr.mxu0 0.0
    %3542 = vmatpush1.msra.mxu0 %v732
    %3543 = vmatprep.subr.mxu0 0.0
    %3544 = vmatpush1.msra.mxu0 %v733
    %3545 = vmatprep.subr.mxu0 0.0
    %3546 = vmatpush1.msra.mxu0 %v734
    %3547 = vmatprep.subr.mxu0 0.0
    %3548 = vmatpush1.msra.mxu0 %v735
    %3549 = vmatprep.subr.mxu0 0.0
    %3550 = vmatpush1.msra.mxu0 %v736
    %3551 = vmatprep.subr.mxu0 0.0
    %3552 = vmatpush1.msra.mxu0 %v737
    %3553 = vmatprep.subr.mxu0 0.0
    %3554 = vmatpush1.msra.mxu0 %v738
    %3555 = vmatprep.subr.mxu0 0.0
    %3556 = vmatpush1.msra.mxu0 %v739
    %3557 = vmatprep.mubr.f32.mxu0 %v3486
    %3558 = vmatmul.mubr.f32.gmra.mrb[0].mxu0 %v3485
    %v3559 = vpop.f32.mrb[0].mxu0
    %v3560 = vadd.f32 %v48, %v3559
    %v3561 = vpop.f32.mrb[0].mxu0
    %3562 = vmatprep.mubr.f32.mxu0 %v3490
    %3563 = vmatmul.mubr.f32.gmra.mrb[0].mxu0 %v3489
    %v3564 = vpop.f32.mrb[0].mxu0
    %v3565 = vadd.f32 %v49, %v3564
    %v3566 = vpop.f32.mrb[0].mxu0
    %3567 = vdwg.mxu0
    %3568 = vmatprep.subr.mxu0 0.0
    %3569 = vmatpush1.msra.mxu0 %v740
    %3570 = vmatprep.subr.mxu0 0.0
    %3571 = vmatpush1.msra.mxu0 %v741
    %3572 = vmatprep.subr.mxu0 0.0
    %3573 = vmatpush1.msra.mxu0 %v742
    %3574 = vmatprep.subr.mxu0 0.0
    %3575 = vmatpush1.msra.mxu0 %v743
    %3576 = vmatprep.subr.mxu0 0.0
    %3577 = vmatpush1.msra.mxu0 %v744
    %3578 = vmatprep.subr.mxu0 0.0
    %3579 = vmatpush1.msra.mxu0 %v745
    %3580 = vmatprep.subr.mxu0 0.0
    %3581 = vmatpush1.msra.mxu0 %v746
    %3582 = vmatprep.subr.mxu0 0.0
    %3583 = vmatpush1.msra.mxu0 %v747
    %3584 = vmatprep.subr.mxu0 0.0
    %3585 = vmatpush1.msra.mxu0 %v748
    %3586 = vmatprep.subr.mxu0 0.0
    %3587 = vmatpush1.msra.mxu0 %v749
    %3588 = vmatprep.subr.mxu0 0.0
    %3589 = vmatpush1.msra.mxu0 %v750
    %3590 = vmatprep.subr.mxu0 0.0
    %3591 = vmatpush1.msra.mxu0 %v751
    %3592 = vmatprep.subr.mxu0 0.0
    %3593 = vmatpush1.msra.mxu0 %v752
    %3594 = vmatprep.subr.mxu0 0.0
    %3595 = vmatpush1.msra.mxu0 %v753
    %3596 = vmatprep.subr.mxu0 0.0
    %3597 = vmatpush1.msra.mxu0 %v754
    %3598 = vmatprep.subr.mxu0 0.0
    %3599 = vmatpush1.msra.mxu0 %v755
    %3600 = vmatprep.subr.mxu0 0.0
    %3601 = vmatpush1.msra.mxu0 %v756
    %3602 = vmatprep.subr.mxu0 0.0
    %3603 = vmatpush1.msra.mxu0 %v757
    %3604 = vmatprep.subr.mxu0 0.0
    %3605 = vmatpush1.msra.mxu0 %v758
    %3606 = vmatprep.subr.mxu0 0.0
    %3607 = vmatpush1.msra.mxu0 %v759
    %3608 = vmatprep.subr.mxu0 0.0
    %3609 = vmatpush1.msra.mxu0 %v760
    %3610 = vmatprep.subr.mxu0 0.0
    %3611 = vmatpush1.msra.mxu0 %v761
    %3612 = vmatprep.subr.mxu0 0.0
    %3613 = vmatpush1.msra.mxu0 %v762
    %3614 = vmatprep.subr.mxu0 0.0
    %3615 = vmatpush1.msra.mxu0 %v763
    %3616 = vmatprep.subr.mxu0 0.0
    %3617 = vmatpush1.msra.mxu0 %v764
    %3618 = vmatprep.subr.mxu0 0.0
    %3619 = vmatpush1.msra.mxu0 %v765
    %3620 = vmatprep.subr.mxu0 0.0
    %3621 = vmatpush1.msra.mxu0 %v766
    %3622 = vmatprep.subr.mxu0 0.0
    %3623 = vmatpush1.msra.mxu0 %v767
    %3624 = vmatprep.subr.mxu0 0.0
    %3625 = vmatpush1.msra.mxu0 %v768
    %3626 = vmatprep.subr.mxu0 0.0
    %3627 = vmatpush1.msra.mxu0 %v769
    %3628 = vmatprep.subr.mxu0 0.0
    %3629 = vmatpush1.msra.mxu0 %v770
    %3630 = vmatprep.subr.mxu0 0.0
    %3631 = vmatpush1.msra.mxu0 %v771
    %3632 = vmatprep.mubr.f32.mxu0 %v3488
    %3633 = vmatmul.mubr.f32.gmra.mrb[0].mxu0 %v3487
    %v3634 = vpop.f32.mrb[0].mxu0
    %v3635 = vadd.f32 %v3560, %v3634
    %v3636 = vpop.f32.mrb[0].mxu0
    %3637 = vmatprep.mubr.f32.mxu0 %v3492
    %3638 = vmatmul.mubr.f32.gmra.mrb[0].mxu0 %v3491
    %v3639 = vpop.f32.mrb[0].mxu0
    %v3640 = vadd.f32 %v3565, %v3639
    %v3641 = vpop.f32.mrb[0].mxu0
    %3642 = vdwg.mxu0
    %3643 = vadd.xlane.f32.xlu0 %v3635
    %v3644 = vpop.xlane.xlu0 %3643
    %3645 = vadd.xlane.f32.xlu0 %v3640
    %v3646 = vpop.xlane.xlu0 %3645
    %v3647 = vmul.f32 %v3644, 0.033333335
    %v3648 = vmul.f32 %v3646, 0.033333335
    %v3649 = vsub.f32 %v3635, %v3647
    %v3650 = vsub.f32 %v3640, %v3648
    %v3651 = vmul.f32 %v3649, %v47
    %v3652 = vmul.f32 %v3650, %v47
    %v3653 = vmul.f32 %v3651, %v3651
    %v3654 = vmul.f32 %v3652, %v3652
    %3655 = vadd.xlane.f32.xlu0 %v3653
    %v3656 = vpop.xlane.xlu0 %3655
    %3657 = vadd.xlane.f32.xlu0 %v3654
    %v3658 = vpop.xlane.xlu0 %3657
    %v3659 = vmul.f32 %v3656, 0.033333335
    %v3660 = vmul.f32 %v3658, 0.033333335
    %v3661 = vadd.f32 %v3659, 1e-05
    %v3662 = vadd.f32 %v3660, 1e-05
    %v3663 = vrsqrt.pop %v3661
    %v3664 = vrsqrt.pop %v3662
    %v3665 = vmul.f32 %v3651, %v3663
    %v3666 = vmul.f32 %v3652, %v3664
    %v3667 = vld [vmem:[%s6] sm:$0xff]
    %v3668 = vld [vmem:[%s6 + $0x8] sm:$0xff]
    %v3669 = vld [vmem:[%s6 + $0x10] sm:$0xff]
    %v3670 = vld [vmem:[%s6 + $0x18] sm:$0xff]
    %v3671 = vld [vmem:[%s6 + $0x20] sm:$0xff]
    %v3672 = vld [vmem:[%s6 + $0x28] sm:$0xff]
    %v3673 = vld [vmem:[%s6 + $0x30] sm:$0xff]
    %v3674 = vld [vmem:[%s6 + $0x38] sm:$0xff]
    %v3675 = vld [vmem:[%s6 + $0x40] sm:$0xff]
    %v3676 = vld [vmem:[%s6 + $0x48] sm:$0xff]
    %v3677 = vld [vmem:[%s6 + $0x50] sm:$0xff]
    %v3678 = vld [vmem:[%s6 + $0x58] sm:$0xff]
    %v3679 = vld [vmem:[%s6 + $0x60] sm:$0xff]
    %v3680 = vld [vmem:[%s6 + $0x68] sm:$0xff]
    %v3681 = vld [vmem:[%s6 + $0x70] sm:$0xff]
    %v3682 = vld [vmem:[%s6 + $0x78] sm:$0xff]
    %v3683 = vld [vmem:[%s6 + $0x80] sm:$0xff]
    %v3684 = vld [vmem:[%s6 + $0x88] sm:$0xff]
    %v3685 = vld [vmem:[%s6 + $0x90] sm:$0xff]
    %v3686 = vld [vmem:[%s6 + $0x98] sm:$0xff]
    %v3687 = vld [vmem:[%s6 + $0xa0] sm:$0xff]
    %v3688 = vld [vmem:[%s6 + $0xa8] sm:$0xff]
    %v3689 = vld [vmem:[%s6 + $0xb0] sm:$0xff]
    %v3690 = vld [vmem:[%s6 + $0xb8] sm:$0xff]
    %v3691 = vld [vmem:[%s6 + $0xc0] sm:$0xff]
    %v3692 = vld [vmem:[%s6 + $0xc8] sm:$0xff]
    %v3693 = vld [vmem:[%s6 + $0xd0] sm:$0xff]
    %v3694 = vld [vmem:[%s6 + $0xd8] sm:$0xff]
    %v3695 = vld [vmem:[%s6 + $0xe0] sm:$0xff]
    %v3696 = vld [vmem:[%s6 + $0xe8] sm:$0xff]
    %v3697 = vld [vmem:[%s6 + $0xf0] sm:$0xff]
    %v3698 = vld [vmem:[%s6 + $0xf8] sm:$0xff]
    %v3699 = vld [vmem:[%s6 + $0x100] sm:$0xff]
    %v3700 = vld [vmem:[%s6 + $0x108] sm:$0xff]
    %v3701 = vld [vmem:[%s6 + $0x110] sm:$0xff]
    %v3702 = vld [vmem:[%s6 + $0x118] sm:$0xff]
    %v3703 = vld [vmem:[%s6 + $0x120] sm:$0xff]
    %v3704 = vld [vmem:[%s6 + $0x128] sm:$0xff]
    %v3705 = vld [vmem:[%s6 + $0x130] sm:$0xff]
    %v3706 = vld [vmem:[%s6 + $0x138] sm:$0xff]
    %v3707 = vld [vmem:[%s6 + $0x140] sm:$0xff]
    %v3708 = vld [vmem:[%s6 + $0x148] sm:$0xff]
    %v3709 = vld [vmem:[%s6 + $0x150] sm:$0xff]
    %v3710 = vld [vmem:[%s6 + $0x158] sm:$0xff]
    %v3711 = vld [vmem:[%s6 + $0x160] sm:$0xff]
    %v3712 = vld [vmem:[%s6 + $0x168] sm:$0xff]
    %v3713 = vld [vmem:[%s6 + $0x170] sm:$0xff]
    %v3714 = vld [vmem:[%s6 + $0x178] sm:$0xff]
    %v3715 = vld [vmem:[%s6 + $0x180] sm:$0xff]
    %v3716 = vld [vmem:[%s6 + $0x188] sm:$0xff]
    %v3717 = vld [vmem:[%s6 + $0x190] sm:$0xff]
    %v3718 = vld [vmem:[%s6 + $0x198] sm:$0xff]
    %v3719 = vld [vmem:[%s6 + $0x1a0] sm:$0xff]
    %v3720 = vld [vmem:[%s6 + $0x1a8] sm:$0xff]
    %v3721 = vld [vmem:[%s6 + $0x1b0] sm:$0xff]
    %v3722 = vld [vmem:[%s6 + $0x1b8] sm:$0xff]
    %v3723 = vld [vmem:[%s6 + $0x1c0] sm:$0xff]
    %v3724 = vld [vmem:[%s6 + $0x1c8] sm:$0xff]
    %v3725 = vld [vmem:[%s6 + $0x1d0] sm:$0xff]
    %v3726 = vld [vmem:[%s6 + $0x1d8] sm:$0xff]
    %v3727 = vld [vmem:[%s6 + $0x1e0] sm:$0xff]
    %v3728 = vld [vmem:[%s6 + $0x1e8] sm:$0xff]
    %v3729 = vld [vmem:[%s6 + $0x1f0] sm:$0xff]
    %v3730 = vld [vmem:[%s6 + $0x1f8] sm:$0xff]
    %3731 = vmatprep.subr.mxu0 %v3668
    %3732 = vmatpush1.msra.mxu0 %v3667
    %3733 = vmatprep.subr.mxu0 %v3672
    %3734 = vmatpush1.msra.mxu0 %v3671
    %3735 = vmatprep.subr.mxu0 %v3676
    %3736 = vmatpush1.msra.mxu0 %v3675
    %3737 = vmatprep.subr.mxu0 %v3680
    %3738 = vmatpush1.msra.mxu0 %v3679
    %3739 = vmatprep.subr.mxu0 %v3684
    %3740 = vmatpush1.msra.mxu0 %v3683
    %3741 = vmatprep.subr.mxu0 %v3688
    %3742 = vmatpush1.msra.mxu0 %v3687
    %3743 = vmatprep.subr.mxu0 %v3692
    %3744 = vmatpush1.msra.mxu0 %v3691
    %3745 = vmatprep.subr.mxu0 %v3696
    %3746 = vmatpush1.msra.mxu0 %v3695
    %3747 = vmatprep.subr.mxu0 %v3700
    %3748 = vmatpush1.msra.mxu0 %v3699
    %3749 = vmatprep.subr.mxu0 %v3704
    %3750 = vmatpush1.msra.mxu0 %v3703
    %3751 = vmatprep.subr.mxu0 %v3708
    %3752 = vmatpush1.msra.mxu0 %v3707
    %3753 = vmatprep.subr.mxu0 %v3712
    %3754 = vmatpush1.msra.mxu0 %v3711
    %3755 = vmatprep.subr.mxu0 %v3716
    %3756 = vmatpush1.msra.mxu0 %v3715
    %3757 = vmatprep.subr.mxu0 %v3720
    %3758 = vmatpush1.msra.mxu0 %v3719
    %3759 = vmatprep.subr.mxu0 %v3724
    %3760 = vmatpush1.msra.mxu0 %v3723
    %3761 = vmatprep.subr.mxu0 %v3728
    %3762 = vmatpush1.msra.mxu0 %v3727
    %3763 = vmatprep.subr.mxu0 0.0
    %3764 = vmatpush1.msra.mxu0 0.0
    %3765 = vmatprep.subr.mxu0 0.0
    %3766 = vmatpush1.msra.mxu0 0.0
    %3767 = vmatprep.subr.mxu0 0.0
    %3768 = vmatpush1.msra.mxu0 0.0
    %3769 = vmatprep.subr.mxu0 0.0
    %3770 = vmatpush1.msra.mxu0 0.0
    %3771 = vmatprep.subr.mxu0 0.0
    %3772 = vmatpush1.msra.mxu0 0.0
    %3773 = vmatprep.subr.mxu0 0.0
    %3774 = vmatpush1.msra.mxu0 0.0
    %3775 = vmatprep.subr.mxu0 0.0
    %3776 = vmatpush1.msra.mxu0 0.0
    %3777 = vmatprep.subr.mxu0 0.0
    %3778 = vmatpush1.msra.mxu0 0.0
    %3779 = vmatprep.subr.mxu0 0.0
    %3780 = vmatpush1.msra.mxu0 0.0
    %3781 = vmatprep.subr.mxu0 0.0
    %3782 = vmatpush1.msra.mxu0 0.0
    %3783 = vmatprep.subr.mxu0 0.0
    %3784 = vmatpush1.msra.mxu0 0.0
    %3785 = vmatprep.subr.mxu0 0.0
    %3786 = vmatpush1.msra.mxu0 0.0
    %3787 = vmatprep.subr.mxu0 0.0
    %3788 = vmatpush1.msra.mxu0 0.0
    %3789 = vmatprep.subr.mxu0 0.0
    %3790 = vmatpush1.msra.mxu0 0.0
    %3791 = vmatprep.subr.mxu0 0.0
    %3792 = vmatpush1.msra.mxu0 0.0
    %3793 = vmatprep.subr.mxu0 0.0
    %3794 = vmatpush1.msra.mxu0 0.0
    %3795 = vmatprep.mubr.f32.mxu0 0.0
    %3796 = vmatmul.mubr.f32.gmra.mrb[0].mxu0 %v3665
    %v3797 = vpop.f32.mrb[0].mxu0
    %v3798 = vadd.f32 0.0, %v3797
    %v3799 = vpop.f32.mrb[0].mxu0
    %v3800 = vadd.f32 0.0, %v3799
    %3801 = vmatprep.mubr.f32.mxu0 0.0
    %3802 = vmatmul.mubr.f32.gmra.mrb[0].mxu0 %v3666
    %v3803 = vpop.f32.mrb[0].mxu0
    %v3804 = vadd.f32 0.0, %v3803
    %v3805 = vpop.f32.mrb[0].mxu0
    %v3806 = vadd.f32 0.0, %v3805
    %3807 = vdwg.mxu0
    %3808 = vmatprep.subr.mxu0 %v3670
    %3809 = vmatpush1.msra.mxu0 %v3669
    %3810 = vmatprep.subr.mxu0 %v3674
    %3811 = vmatpush1.msra.mxu0 %v3673
    %3812 = vmatprep.subr.mxu0 %v3678
    %3813 = vmatpush1.msra.mxu0 %v3677
    %3814 = vmatprep.subr.mxu0 %v3682
    %3815 = vmatpush1.msra.mxu0 %v3681
    %3816 = vmatprep.subr.mxu0 %v3686
    %3817 = vmatpush1.msra.mxu0 %v3685
    %3818 = vmatprep.subr.mxu0 %v3690
    %3819 = vmatpush1.msra.mxu0 %v3689
    %3820 = vmatprep.subr.mxu0 %v3694
    %3821 = vmatpush1.msra.mxu0 %v3693
    %3822 = vmatprep.subr.mxu0 %v3698
    %3823 = vmatpush1.msra.mxu0 %v3697
    %3824 = vmatprep.subr.mxu0 %v3702
    %3825 = vmatpush1.msra.mxu0 %v3701
    %3826 = vmatprep.subr.mxu0 %v3706
    %3827 = vmatpush1.msra.mxu0 %v3705
    %3828 = vmatprep.subr.mxu0 %v3710
    %3829 = vmatpush1.msra.mxu0 %v3709
    %3830 = vmatprep.subr.mxu0 %v3714
    %3831 = vmatpush1.msra.mxu0 %v3713
    %3832 = vmatprep.subr.mxu0 %v3718
    %3833 = vmatpush1.msra.mxu0 %v3717
    %3834 = vmatprep.subr.mxu0 %v3722
    %3835 = vmatpush1.msra.mxu0 %v3721
    %3836 = vmatprep.subr.mxu0 %v3726
    %3837 = vmatpush1.msra.mxu0 %v3725
    %3838 = vmatprep.subr.mxu0 %v3730
    %3839 = vmatpush1.msra.mxu0 %v3729
    %3840 = vmatprep.subr.mxu0 0.0
    %3841 = vmatpush1.msra.mxu0 0.0
    %3842 = vmatprep.subr.mxu0 0.0
    %3843 = vmatpush1.msra.mxu0 0.0
    %3844 = vmatprep.subr.mxu0 0.0
    %3845 = vmatpush1.msra.mxu0 0.0
    %3846 = vmatprep.subr.mxu0 0.0
    %3847 = vmatpush1.msra.mxu0 0.0
    %3848 = vmatprep.subr.mxu0 0.0
    %3849 = vmatpush1.msra.mxu0 0.0
    %3850 = vmatprep.subr.mxu0 0.0
    %3851 = vmatpush1.msra.mxu0 0.0
    %3852 = vmatprep.subr.mxu0 0.0
    %3853 = vmatpush1.msra.mxu0 0.0
    %3854 = vmatprep.subr.mxu0 0.0
    %3855 = vmatpush1.msra.mxu0 0.0
    %3856 = vmatprep.subr.mxu0 0.0
    %3857 = vmatpush1.msra.mxu0 0.0
    %3858 = vmatprep.subr.mxu0 0.0
    %3859 = vmatpush1.msra.mxu0 0.0
    %3860 = vmatprep.subr.mxu0 0.0
    %3861 = vmatpush1.msra.mxu0 0.0
    %3862 = vmatprep.subr.mxu0 0.0
    %3863 = vmatpush1.msra.mxu0 0.0
    %3864 = vmatprep.subr.mxu0 0.0
    %3865 = vmatpush1.msra.mxu0 0.0
    %3866 = vmatprep.subr.mxu0 0.0
    %3867 = vmatpush1.msra.mxu0 0.0
    %3868 = vmatprep.subr.mxu0 0.0
    %3869 = vmatpush1.msra.mxu0 0.0
    %3870 = vmatprep.subr.mxu0 0.0
    %3871 = vmatpush1.msra.mxu0 0.0
    %3872 = vmatprep.mubr.f32.mxu0 0.0
    %3873 = vmatmul.mubr.f32.gmra.mrb[0].mxu0 %v3665
    %v3874 = vpop.f32.mrb[0].mxu0
    %v3875 = vadd.f32 0.0, %v3874
    %v3876 = vpop.f32.mrb[0].mxu0
    %v3877 = vadd.f32 0.0, %v3876
    %3878 = vmatprep.mubr.f32.mxu0 0.0
    %3879 = vmatmul.mubr.f32.gmra.mrb[0].mxu0 %v3666
    %v3880 = vpop.f32.mrb[0].mxu0
    %v3881 = vadd.f32 0.0, %v3880
    %v3882 = vpop.f32.mrb[0].mxu0
    %v3883 = vadd.f32 0.0, %v3882
    %3884 = vdwg.mxu0
    %v3885 = vld [vmem:[%s7] sm:$0xff]
    %v3886 = vld [vmem:[%s7 + $0x8] sm:$0xff]
    %v3887 = vld [vmem:[%s7 + $0x10] sm:$0xff]
    %v3888 = vld [vmem:[%s7 + $0x18] sm:$0xff]
    %v3889 = vld [vmem:[%s7 + $0x20] sm:$0xff]
    %v3890 = vld [vmem:[%s7 + $0x28] sm:$0xff]
    %v3891 = vld [vmem:[%s7 + $0x30] sm:$0xff]
    %v3892 = vld [vmem:[%s7 + $0x38] sm:$0xff]
    %v3893 = vld [vmem:[%s7 + $0x40] sm:$0xff]
    %v3894 = vld [vmem:[%s7 + $0x48] sm:$0xff]
    %v3895 = vld [vmem:[%s7 + $0x50] sm:$0xff]
    %v3896 = vld [vmem:[%s7 + $0x58] sm:$0xff]
    %v3897 = vld [vmem:[%s7 + $0x60] sm:$0xff]
    %v3898 = vld [vmem:[%s7 + $0x68] sm:$0xff]
    %v3899 = vld [vmem:[%s7 + $0x70] sm:$0xff]
    %v3900 = vld [vmem:[%s7 + $0x78] sm:$0xff]
    %v3901 = vld [vmem:[%s7 + $0x80] sm:$0xff]
    %v3902 = vld [vmem:[%s7 + $0x88] sm:$0xff]
    %v3903 = vld [vmem:[%s7 + $0x90] sm:$0xff]
    %v3904 = vld [vmem:[%s7 + $0x98] sm:$0xff]
    %v3905 = vld [vmem:[%s7 + $0xa0] sm:$0xff]
    %v3906 = vld [vmem:[%s7 + $0xa8] sm:$0xff]
    %v3907 = vld [vmem:[%s7 + $0xb0] sm:$0xff]
    %v3908 = vld [vmem:[%s7 + $0xb8] sm:$0xff]
    %v3909 = vld [vmem:[%s7 + $0xc0] sm:$0xff]
    %v3910 = vld [vmem:[%s7 + $0xc8] sm:$0xff]
    %v3911 = vld [vmem:[%s7 + $0xd0] sm:$0xff]
    %v3912 = vld [vmem:[%s7 + $0xd8] sm:$0xff]
    %v3913 = vld [vmem:[%s7 + $0xe0] sm:$0xff]
    %v3914 = vld [vmem:[%s7 + $0xe8] sm:$0xff]
    %v3915 = vld [vmem:[%s7 + $0xf0] sm:$0xff]
    %v3916 = vld [vmem:[%s7 + $0xf8] sm:$0xff]
    %v3917 = vld [vmem:[%s7 + $0x100] sm:$0xff]
    %v3918 = vld [vmem:[%s7 + $0x108] sm:$0xff]
    %v3919 = vld [vmem:[%s7 + $0x110] sm:$0xff]
    %v3920 = vld [vmem:[%s7 + $0x118] sm:$0xff]
    %v3921 = vld [vmem:[%s7 + $0x120] sm:$0xff]
    %v3922 = vld [vmem:[%s7 + $0x128] sm:$0xff]
    %v3923 = vld [vmem:[%s7 + $0x130] sm:$0xff]
    %v3924 = vld [vmem:[%s7 + $0x138] sm:$0xff]
    %v3925 = vld [vmem:[%s7 + $0x140] sm:$0xff]
    %v3926 = vld [vmem:[%s7 + $0x148] sm:$0xff]
    %v3927 = vld [vmem:[%s7 + $0x150] sm:$0xff]
    %v3928 = vld [vmem:[%s7 + $0x158] sm:$0xff]
    %v3929 = vld [vmem:[%s7 + $0x160] sm:$0xff]
    %v3930 = vld [vmem:[%s7 + $0x168] sm:$0xff]
    %v3931 = vld [vmem:[%s7 + $0x170] sm:$0xff]
    %v3932 = vld [vmem:[%s7 + $0x178] sm:$0xff]
    %v3933 = vld [vmem:[%s7 + $0x180] sm:$0xff]
    %v3934 = vld [vmem:[%s7 + $0x188] sm:$0xff]
    %v3935 = vld [vmem:[%s7 + $0x190] sm:$0xff]
    %v3936 = vld [vmem:[%s7 + $0x198] sm:$0xff]
    %v3937 = vld [vmem:[%s7 + $0x1a0] sm:$0xff]
    %v3938 = vld [vmem:[%s7 + $0x1a8] sm:$0xff]
    %v3939 = vld [vmem:[%s7 + $0x1b0] sm:$0xff]
    %v3940 = vld [vmem:[%s7 + $0x1b8] sm:$0xff]
    %v3941 = vld [vmem:[%s7 + $0x1c0] sm:$0xff]
    %v3942 = vld [vmem:[%s7 + $0x1c8] sm:$0xff]
    %v3943 = vld [vmem:[%s7 + $0x1d0] sm:$0xff]
    %v3944 = vld [vmem:[%s7 + $0x1d8] sm:$0xff]
    %v3945 = vld [vmem:[%s7 + $0x1e0] sm:$0xff]
    %v3946 = vld [vmem:[%s7 + $0x1e8] sm:$0xff]
    %v3947 = vld [vmem:[%s7 + $0x1f0] sm:$0xff]
    %v3948 = vld [vmem:[%s7 + $0x1f8] sm:$0xff]
    %v3949 = vld [vmem:[%s7 + $0x200] sm:$0xff]
    %v3950 = vld [vmem:[%s7 + $0x208] sm:$0xff]
    %v3951 = vld [vmem:[%s7 + $0x210] sm:$0xff]
    %v3952 = vld [vmem:[%s7 + $0x218] sm:$0xff]
    %v3953 = vld [vmem:[%s7 + $0x220] sm:$0xff]
    %v3954 = vld [vmem:[%s7 + $0x228] sm:$0xff]
    %v3955 = vld [vmem:[%s7 + $0x230] sm:$0xff]
    %v3956 = vld [vmem:[%s7 + $0x238] sm:$0xff]
    %v3957 = vld [vmem:[%s7 + $0x240] sm:$0xff]
    %v3958 = vld [vmem:[%s7 + $0x248] sm:$0xff]
    %v3959 = vld [vmem:[%s7 + $0x250] sm:$0xff]
    %v3960 = vld [vmem:[%s7 + $0x258] sm:$0xff]
    %v3961 = vld [vmem:[%s7 + $0x260] sm:$0xff]
    %v3962 = vld [vmem:[%s7 + $0x268] sm:$0xff]
    %v3963 = vld [vmem:[%s7 + $0x270] sm:$0xff]
    %v3964 = vld [vmem:[%s7 + $0x278] sm:$0xff]
    %v3965 = vld [vmem:[%s7 + $0x280] sm:$0xff]
    %v3966 = vld [vmem:[%s7 + $0x288] sm:$0xff]
    %v3967 = vld [vmem:[%s7 + $0x290] sm:$0xff]
    %v3968 = vld [vmem:[%s7 + $0x298] sm:$0xff]
    %v3969 = vld [vmem:[%s7 + $0x2a0] sm:$0xff]
    %v3970 = vld [vmem:[%s7 + $0x2a8] sm:$0xff]
    %v3971 = vld [vmem:[%s7 + $0x2b0] sm:$0xff]
    %v3972 = vld [vmem:[%s7 + $0x2b8] sm:$0xff]
    %v3973 = vld [vmem:[%s7 + $0x2c0] sm:$0xff]
    %v3974 = vld [vmem:[%s7 + $0x2c8] sm:$0xff]
    %v3975 = vld [vmem:[%s7 + $0x2d0] sm:$0xff]
    %v3976 = vld [vmem:[%s7 + $0x2d8] sm:$0xff]
    %v3977 = vld [vmem:[%s7 + $0x2e0] sm:$0xff]
    %v3978 = vld [vmem:[%s7 + $0x2e8] sm:$0xff]
    %v3979 = vld [vmem:[%s7 + $0x2f0] sm:$0xff]
    %v3980 = vld [vmem:[%s7 + $0x2f8] sm:$0xff]
    %v3981 = vld [vmem:[%s7 + $0x300] sm:$0xff]
    %v3982 = vld [vmem:[%s7 + $0x308] sm:$0xff]
    %v3983 = vld [vmem:[%s7 + $0x310] sm:$0xff]
    %v3984 = vld [vmem:[%s7 + $0x318] sm:$0xff]
    %v3985 = vld [vmem:[%s7 + $0x320] sm:$0xff]
    %v3986 = vld [vmem:[%s7 + $0x328] sm:$0xff]
    %v3987 = vld [vmem:[%s7 + $0x330] sm:$0xff]
    %v3988 = vld [vmem:[%s7 + $0x338] sm:$0xff]
    %v3989 = vld [vmem:[%s7 + $0x340] sm:$0xff]
    %v3990 = vld [vmem:[%s7 + $0x348] sm:$0xff]
    %v3991 = vld [vmem:[%s7 + $0x350] sm:$0xff]
    %v3992 = vld [vmem:[%s7 + $0x358] sm:$0xff]
    %v3993 = vld [vmem:[%s7 + $0x360] sm:$0xff]
    %v3994 = vld [vmem:[%s7 + $0x368] sm:$0xff]
    %v3995 = vld [vmem:[%s7 + $0x370] sm:$0xff]
    %v3996 = vld [vmem:[%s7 + $0x378] sm:$0xff]
    %v3997 = vld [vmem:[%s7 + $0x380] sm:$0xff]
    %v3998 = vld [vmem:[%s7 + $0x388] sm:$0xff]
    %v3999 = vld [vmem:[%s7 + $0x390] sm:$0xff]
    %v4000 = vld [vmem:[%s7 + $0x398] sm:$0xff]
    %v4001 = vld [vmem:[%s7 + $0x3a0] sm:$0xff]
    %v4002 = vld [vmem:[%s7 + $0x3a8] sm:$0xff]
    %v4003 = vld [vmem:[%s7 + $0x3b0] sm:$0xff]
    %v4004 = vld [vmem:[%s7 + $0x3b8] sm:$0xff]
    %v4005 = vld [vmem:[%s7 + $0x3c0] sm:$0xff]
    %v4006 = vld [vmem:[%s7 + $0x3c8] sm:$0xff]
    %v4007 = vld [vmem:[%s7 + $0x3d0] sm:$0xff]
    %v4008 = vld [vmem:[%s7 + $0x3d8] sm:$0xff]
    %v4009 = vld [vmem:[%s7 + $0x3e0] sm:$0xff]
    %v4010 = vld [vmem:[%s7 + $0x3e8] sm:$0xff]
    %v4011 = vld [vmem:[%s7 + $0x3f0] sm:$0xff]
    %v4012 = vld [vmem:[%s7 + $0x3f8] sm:$0xff]
    %4013 = vmatprep.subr.mxu0 %v3886
    %4014 = vmatpush1.msra.mxu0 %v3885
    %4015 = vmatprep.subr.mxu0 %v3894
    %4016 = vmatpush1.msra.mxu0 %v3893
    %4017 = vmatprep.subr.mxu0 %v3902
    %4018 = vmatpush1.msra.mxu0 %v3901
    %4019 = vmatprep.subr.mxu0 %v3910
    %4020 = vmatpush1.msra.mxu0 %v3909
    %4021 = vmatprep.subr.mxu0 %v3918
    %4022 = vmatpush1.msra.mxu0 %v3917
    %4023 = vmatprep.subr.mxu0 %v3926
    %4024 = vmatpush1.msra.mxu0 %v3925
    %4025 = vmatprep.subr.mxu0 %v3934
    %4026 = vmatpush1.msra.mxu0 %v3933
    %4027 = vmatprep.subr.mxu0 %v3942
    %4028 = vmatpush1.msra.mxu0 %v3941
    %4029 = vmatprep.subr.mxu0 %v3950
    %4030 = vmatpush1.msra.mxu0 %v3949
    %4031 = vmatprep.subr.mxu0 %v3958
    %4032 = vmatpush1.msra.mxu0 %v3957
    %4033 = vmatprep.subr.mxu0 %v3966
    %4034 = vmatpush1.msra.mxu0 %v3965
    %4035 = vmatprep.subr.mxu0 %v3974
    %4036 = vmatpush1.msra.mxu0 %v3973
    %4037 = vmatprep.subr.mxu0 %v3982
    %4038 = vmatpush1.msra.mxu0 %v3981
    %4039 = vmatprep.subr.mxu0 %v3990
    %4040 = vmatpush1.msra.mxu0 %v3989
    %4041 = vmatprep.subr.mxu0 %v3998
    %4042 = vmatpush1.msra.mxu0 %v3997
    %4043 = vmatprep.subr.mxu0 %v4006
    %4044 = vmatpush1.msra.mxu0 %v4005
    %4045 = vmatprep.subr.mxu0 0.0
    %4046 = vmatpush1.msra.mxu0 0.0
    %4047 = vmatprep.subr.mxu0 0.0
    %4048 = vmatpush1.msra.mxu0 0.0
    %4049 = vmatprep.subr.mxu0 0.0
    %4050 = vmatpush1.msra.mxu0 0.0
    %4051 = vmatprep.subr.mxu0 0.0
    %4052 = vmatpush1.msra.mxu0 0.0
    %4053 = vmatprep.subr.mxu0 0.0
    %4054 = vmatpush1.msra.mxu0 0.0
    %4055 = vmatprep.subr.mxu0 0.0
    %4056 = vmatpush1.msra.mxu0 0.0
    %4057 = vmatprep.subr.mxu0 0.0
    %4058 = vmatpush1.msra.mxu0 0.0
    %4059 = vmatprep.subr.mxu0 0.0
    %4060 = vmatpush1.msra.mxu0 0.0
    %4061 = vmatprep.subr.mxu0 0.0
    %4062 = vmatpush1.msra.mxu0 0.0
    %4063 = vmatprep.subr.mxu0 0.0
    %4064 = vmatpush1.msra.mxu0 0.0
    %4065 = vmatprep.subr.mxu0 0.0
    %4066 = vmatpush1.msra.mxu0 0.0
    %4067 = vmatprep.subr.mxu0 0.0
    %4068 = vmatpush1.msra.mxu0 0.0
    %4069 = vmatprep.subr.mxu0 0.0
    %4070 = vmatpush1.msra.mxu0 0.0
    %4071 = vmatprep.subr.mxu0 0.0
    %4072 = vmatpush1.msra.mxu0 0.0
    %4073 = vmatprep.subr.mxu0 0.0
    %4074 = vmatpush1.msra.mxu0 0.0
    %4075 = vmatprep.subr.mxu0 0.0
    %4076 = vmatpush1.msra.mxu0 0.0
    %4077 = vmatprep.mubr.f32.mxu0 0.0
    %4078 = vmatmul.mubr.f32.gmra.mrb[0].mxu0 %v50
    %v4079 = vpop.f32.mrb[0].mxu0
    %v4080 = vadd.f32 0.0, %v4079
    %v4081 = vpop.f32.mrb[0].mxu0
    %v4082 = vadd.f32 0.0, %v4081
    %4083 = vmatprep.mubr.f32.mxu0 0.0
    %4084 = vmatmul.mubr.f32.gmra.mrb[0].mxu0 %v51
    %v4085 = vpop.f32.mrb[0].mxu0
    %v4086 = vadd.f32 0.0, %v4085
    %v4087 = vpop.f32.mrb[0].mxu0
    %v4088 = vadd.f32 0.0, %v4087
    %4089 = vdwg.mxu0
    %4090 = vmatprep.subr.mxu0 %v3888
    %4091 = vmatpush1.msra.mxu0 %v3887
    %4092 = vmatprep.subr.mxu0 %v3896
    %4093 = vmatpush1.msra.mxu0 %v3895
    %4094 = vmatprep.subr.mxu0 %v3904
    %4095 = vmatpush1.msra.mxu0 %v3903
    %4096 = vmatprep.subr.mxu0 %v3912
    %4097 = vmatpush1.msra.mxu0 %v3911
    %4098 = vmatprep.subr.mxu0 %v3920
    %4099 = vmatpush1.msra.mxu0 %v3919
    %4100 = vmatprep.subr.mxu0 %v3928
    %4101 = vmatpush1.msra.mxu0 %v3927
    %4102 = vmatprep.subr.mxu0 %v3936
    %4103 = vmatpush1.msra.mxu0 %v3935
    %4104 = vmatprep.subr.mxu0 %v3944
    %4105 = vmatpush1.msra.mxu0 %v3943
    %4106 = vmatprep.subr.mxu0 %v3952
    %4107 = vmatpush1.msra.mxu0 %v3951
    %4108 = vmatprep.subr.mxu0 %v3960
    %4109 = vmatpush1.msra.mxu0 %v3959
    %4110 = vmatprep.subr.mxu0 %v3968
    %4111 = vmatpush1.msra.mxu0 %v3967
    %4112 = vmatprep.subr.mxu0 %v3976
    %4113 = vmatpush1.msra.mxu0 %v3975
    %4114 = vmatprep.subr.mxu0 %v3984
    %4115 = vmatpush1.msra.mxu0 %v3983
    %4116 = vmatprep.subr.mxu0 %v3992
    %4117 = vmatpush1.msra.mxu0 %v3991
    %4118 = vmatprep.subr.mxu0 %v4000
    %4119 = vmatpush1.msra.mxu0 %v3999
    %4120 = vmatprep.subr.mxu0 %v4008
    %4121 = vmatpush1.msra.mxu0 %v4007
    %4122 = vmatprep.subr.mxu0 0.0
    %4123 = vmatpush1.msra.mxu0 0.0
    %4124 = vmatprep.subr.mxu0 0.0
    %4125 = vmatpush1.msra.mxu0 0.0
    %4126 = vmatprep.subr.mxu0 0.0
    %4127 = vmatpush1.msra.mxu0 0.0
    %4128 = vmatprep.subr.mxu0 0.0
    %4129 = vmatpush1.msra.mxu0 0.0
    %4130 = vmatprep.subr.mxu0 0.0
    %4131 = vmatpush1.msra.mxu0 0.0
    %4132 = vmatprep.subr.mxu0 0.0
    %4133 = vmatpush1.msra.mxu0 0.0
    %4134 = vmatprep.subr.mxu0 0.0
    %4135 = vmatpush1.msra.mxu0 0.0
    %4136 = vmatprep.subr.mxu0 0.0
    %4137 = vmatpush1.msra.mxu0 0.0
    %4138 = vmatprep.subr.mxu0 0.0
    %4139 = vmatpush1.msra.mxu0 0.0
    %4140 = vmatprep.subr.mxu0 0.0
    %4141 = vmatpush1.msra.mxu0 0.0
    %4142 = vmatprep.subr.mxu0 0.0
    %4143 = vmatpush1.msra.mxu0 0.0
    %4144 = vmatprep.subr.mxu0 0.0
    %4145 = vmatpush1.msra.mxu0 0.0
    %4146 = vmatprep.subr.mxu0 0.0
    %4147 = vmatpush1.msra.mxu0 0.0
    %4148 = vmatprep.subr.mxu0 0.0
    %4149 = vmatpush1.msra.mxu0 0.0
    %4150 = vmatprep.subr.mxu0 0.0
    %4151 = vmatpush1.msra.mxu0 0.0
    %4152 = vmatprep.subr.mxu0 0.0
    %4153 = vmatpush1.msra.mxu0 0.0
    %4154 = vmatprep.mubr.f32.mxu0 0.0
    %4155 = vmatmul.mubr.f32.gmra.mrb[0].mxu0 %v50
    %v4156 = vpop.f32.mrb[0].mxu0
    %v4157 = vadd.f32 0.0, %v4156
    %v4158 = vpop.f32.mrb[0].mxu0
    %v4159 = vadd.f32 0.0, %v4158
    %4160 = vmatprep.mubr.f32.mxu0 0.0
    %4161 = vmatmul.mubr.f32.gmra.mrb[0].mxu0 %v51
    %v4162 = vpop.f32.mrb[0].mxu0
    %v4163 = vadd.f32 0.0, %v4162
    %v4164 = vpop.f32.mrb[0].mxu0
    %v4165 = vadd.f32 0.0, %v4164
    %4166 = vdwg.mxu0
    %4167 = vmatprep.subr.mxu0 %v3890
    %4168 = vmatpush1.msra.mxu0 %v3889
    %4169 = vmatprep.subr.mxu0 %v3898
    %4170 = vmatpush1.msra.mxu0 %v3897
    %4171 = vmatprep.subr.mxu0 %v3906
    %4172 = vmatpush1.msra.mxu0 %v3905
    %4173 = vmatprep.subr.mxu0 %v3914
    %4174 = vmatpush1.msra.mxu0 %v3913
    %4175 = vmatprep.subr.mxu0 %v3922
    %4176 = vmatpush1.msra.mxu0 %v3921
    %4177 = vmatprep.subr.mxu0 %v3930
    %4178 = vmatpush1.msra.mxu0 %v3929
    %4179 = vmatprep.subr.mxu0 %v3938
    %4180 = vmatpush1.msra.mxu0 %v3937
    %4181 = vmatprep.subr.mxu0 %v3946
    %4182 = vmatpush1.msra.mxu0 %v3945
    %4183 = vmatprep.subr.mxu0 %v3954
    %4184 = vmatpush1.msra.mxu0 %v3953
    %4185 = vmatprep.subr.mxu0 %v3962
    %4186 = vmatpush1.msra.mxu0 %v3961
    %4187 = vmatprep.subr.mxu0 %v3970
    %4188 = vmatpush1.msra.mxu0 %v3969
    %4189 = vmatprep.subr.mxu0 %v3978
    %4190 = vmatpush1.msra.mxu0 %v3977
    %4191 = vmatprep.subr.mxu0 %v3986
    %4192 = vmatpush1.msra.mxu0 %v3985
    %4193 = vmatprep.subr.mxu0 %v3994
    %4194 = vmatpush1.msra.mxu0 %v3993
    %4195 = vmatprep.subr.mxu0 %v4002
    %4196 = vmatpush1.msra.mxu0 %v4001
    %4197 = vmatprep.subr.mxu0 %v4010
    %4198 = vmatpush1.msra.mxu0 %v4009
    %4199 = vmatprep.subr.mxu0 0.0
    %4200 = vmatpush1.msra.mxu0 0.0
    %4201 = vmatprep.subr.mxu0 0.0
    %4202 = vmatpush1.msra.mxu0 0.0
    %4203 = vmatprep.subr.mxu0 0.0
    %4204 = vmatpush1.msra.mxu0 0.0
    %4205 = vmatprep.subr.mxu0 0.0
    %4206 = vmatpush1.msra.mxu0 0.0
    %4207 = vmatprep.subr.mxu0 0.0
    %4208 = vmatpush1.msra.mxu0 0.0
    %4209 = vmatprep.subr.mxu0 0.0
    %4210 = vmatpush1.msra.mxu0 0.0
    %4211 = vmatprep.subr.mxu0 0.0
    %4212 = vmatpush1.msra.mxu0 0.0
    %4213 = vmatprep.subr.mxu0 0.0
    %4214 = vmatpush1.msra.mxu0 0.0
    %4215 = vmatprep.subr.mxu0 0.0
    %4216 = vmatpush1.msra.mxu0 0.0
    %4217 = vmatprep.subr.mxu0 0.0
    %4218 = vmatpush1.msra.mxu0 0.0
    %4219 = vmatprep.subr.mxu0 0.0
    %4220 = vmatpush1.msra.mxu0 0.0
    %4221 = vmatprep.subr.mxu0 0.0
    %4222 = vmatpush1.msra.mxu0 0.0
    %4223 = vmatprep.subr.mxu0 0.0
    %4224 = vmatpush1.msra.mxu0 0.0
    %4225 = vmatprep.subr.mxu0 0.0
    %4226 = vmatpush1.msra.mxu0 0.0
    %4227 = vmatprep.subr.mxu0 0.0
    %4228 = vmatpush1.msra.mxu0 0.0
    %4229 = vmatprep.subr.mxu0 0.0
    %4230 = vmatpush1.msra.mxu0 0.0
    %4231 = vmatprep.mubr.f32.mxu0 0.0
    %4232 = vmatmul.mubr.f32.gmra.mrb[0].mxu0 %v50
    %v4233 = vpop.f32.mrb[0].mxu0
    %v4234 = vadd.f32 0.0, %v4233
    %v4235 = vpop.f32.mrb[0].mxu0
    %v4236 = vadd.f32 0.0, %v4235
    %4237 = vmatprep.mubr.f32.mxu0 0.0
    %4238 = vmatmul.mubr.f32.gmra.mrb[0].mxu0 %v51
    %v4239 = vpop.f32.mrb[0].mxu0
    %v4240 = vadd.f32 0.0, %v4239
    %v4241 = vpop.f32.mrb[0].mxu0
    %v4242 = vadd.f32 0.0, %v4241
    %4243 = vdwg.mxu0
    %4244 = vmatprep.subr.mxu0 %v3892
    %4245 = vmatpush1.msra.mxu0 %v3891
    %4246 = vmatprep.subr.mxu0 %v3900
    %4247 = vmatpush1.msra.mxu0 %v3899
    %4248 = vmatprep.subr.mxu0 %v3908
    %4249 = vmatpush1.msra.mxu0 %v3907
    %4250 = vmatprep.subr.mxu0 %v3916
    %4251 = vmatpush1.msra.mxu0 %v3915
    %4252 = vmatprep.subr.mxu0 %v3924
    %4253 = vmatpush1.msra.mxu0 %v3923
    %4254 = vmatprep.subr.mxu0 %v3932
    %4255 = vmatpush1.msra.mxu0 %v3931
    %4256 = vmatprep.subr.mxu0 %v3940
    %4257 = vmatpush1.msra.mxu0 %v3939
    %4258 = vmatprep.subr.mxu0 %v3948
    %4259 = vmatpush1.msra.mxu0 %v3947
    %4260 = vmatprep.subr.mxu0 %v3956
    %4261 = vmatpush1.msra.mxu0 %v3955
    %4262 = vmatprep.subr.mxu0 %v3964
    %4263 = vmatpush1.msra.mxu0 %v3963
    %4264 = vmatprep.subr.mxu0 %v3972
    %4265 = vmatpush1.msra.mxu0 %v3971
    %4266 = vmatprep.subr.mxu0 %v3980
    %4267 = vmatpush1.msra.mxu0 %v3979
    %4268 = vmatprep.subr.mxu0 %v3988
    %4269 = vmatpush1.msra.mxu0 %v3987
    %4270 = vmatprep.subr.mxu0 %v3996
    %4271 = vmatpush1.msra.mxu0 %v3995
    %4272 = vmatprep.subr.mxu0 %v4004
    %4273 = vmatpush1.msra.mxu0 %v4003
    %4274 = vmatprep.subr.mxu0 %v4012
    %4275 = vmatpush1.msra.mxu0 %v4011
    %4276 = vmatprep.subr.mxu0 0.0
    %4277 = vmatpush1.msra.mxu0 0.0
    %4278 = vmatprep.subr.mxu0 0.0
    %4279 = vmatpush1.msra.mxu0 0.0
    %4280 = vmatprep.subr.mxu0 0.0
    %4281 = vmatpush1.msra.mxu0 0.0
    %4282 = vmatprep.subr.mxu0 0.0
    %4283 = vmatpush1.msra.mxu0 0.0
    %4284 = vmatprep.subr.mxu0 0.0
    %4285 = vmatpush1.msra.mxu0 0.0
    %4286 = vmatprep.subr.mxu0 0.0
    %4287 = vmatpush1.msra.mxu0 0.0
    %4288 = vmatprep.subr.mxu0 0.0
    %4289 = vmatpush1.msra.mxu0 0.0
    %4290 = vmatprep.subr.mxu0 0.0
    %4291 = vmatpush1.msra.mxu0 0.0
    %4292 = vmatprep.subr.mxu0 0.0
    %4293 = vmatpush1.msra.mxu0 0.0
    %4294 = vmatprep.subr.mxu0 0.0
    %4295 = vmatpush1.msra.mxu0 0.0
    %4296 = vmatprep.subr.mxu0 0.0
    %4297 = vmatpush1.msra.mxu0 0.0
    %4298 = vmatprep.subr.mxu0 0.0
    %4299 = vmatpush1.msra.mxu0 0.0
    %4300 = vmatprep.subr.mxu0 0.0
    %4301 = vmatpush1.msra.mxu0 0.0
    %4302 = vmatprep.subr.mxu0 0.0
    %4303 = vmatpush1.msra.mxu0 0.0
    %4304 = vmatprep.subr.mxu0 0.0
    %4305 = vmatpush1.msra.mxu0 0.0
    %4306 = vmatprep.subr.mxu0 0.0
    %4307 = vmatpush1.msra.mxu0 0.0
    %4308 = vmatprep.mubr.f32.mxu0 0.0
    %4309 = vmatmul.mubr.f32.gmra.mrb[0].mxu0 %v50
    %v4310 = vpop.f32.mrb[0].mxu0
    %v4311 = vadd.f32 0.0, %v4310
    %v4312 = vpop.f32.mrb[0].mxu0
    %v4313 = vadd.f32 0.0, %v4312
    %4314 = vmatprep.mubr.f32.mxu0 0.0
    %4315 = vmatmul.mubr.f32.gmra.mrb[0].mxu0 %v51
    %v4316 = vpop.f32.mrb[0].mxu0
    %v4317 = vadd.f32 0.0, %v4316
    %v4318 = vpop.f32.mrb[0].mxu0
    %v4319 = vadd.f32 0.0, %v4318
    %4320 = vdwg.mxu0
    %v4321 = vld [vmem:[%s3] sm:$0xff]
    %v4322 = vld [vmem:[%s3 + $0x8] sm:$0xff]
    %v4323 = vld [vmem:[%s8] sm:$0xff]
    %v4324 = vld [vmem:[%s8 + $0x8] sm:$0xff]
    %v4325 = vld [vmem:[%s8 + $0x10] sm:$0xff]
    %v4326 = vld [vmem:[%s8 + $0x18] sm:$0xff]
    %v4327 = vld [vmem:[%s8 + $0x20] sm:$0xff]
    %v4328 = vld [vmem:[%s8 + $0x28] sm:$0xff]
    %v4329 = vld [vmem:[%s8 + $0x30] sm:$0xff]
    %v4330 = vld [vmem:[%s8 + $0x38] sm:$0xff]
    %v4331 = vld [vmem:[%s8 + $0x40] sm:$0xff]
    %v4332 = vld [vmem:[%s8 + $0x48] sm:$0xff]
    %v4333 = vld [vmem:[%s8 + $0x50] sm:$0xff]
    %v4334 = vld [vmem:[%s8 + $0x58] sm:$0xff]
    %v4335 = vld [vmem:[%s8 + $0x60] sm:$0xff]
    %v4336 = vld [vmem:[%s8 + $0x68] sm:$0xff]
    %v4337 = vld [vmem:[%s8 + $0x70] sm:$0xff]
    %v4338 = vld [vmem:[%s8 + $0x78] sm:$0xff]
    %v4339 = vld [vmem:[%s8 + $0x80] sm:$0xff]
    %v4340 = vld [vmem:[%s8 + $0x88] sm:$0xff]
    %v4341 = vld [vmem:[%s8 + $0x90] sm:$0xff]
    %v4342 = vld [vmem:[%s8 + $0x98] sm:$0xff]
    %v4343 = vld [vmem:[%s8 + $0xa0] sm:$0xff]
    %v4344 = vld [vmem:[%s8 + $0xa8] sm:$0xff]
    %v4345 = vld [vmem:[%s8 + $0xb0] sm:$0xff]
    %v4346 = vld [vmem:[%s8 + $0xb8] sm:$0xff]
    %v4347 = vld [vmem:[%s8 + $0xc0] sm:$0xff]
    %v4348 = vld [vmem:[%s8 + $0xc8] sm:$0xff]
    %v4349 = vld [vmem:[%s8 + $0xd0] sm:$0xff]
    %v4350 = vld [vmem:[%s8 + $0xd8] sm:$0xff]
    %v4351 = vld [vmem:[%s8 + $0xe0] sm:$0xff]
    %v4352 = vld [vmem:[%s8 + $0xe8] sm:$0xff]
    %v4353 = vld [vmem:[%s8 + $0xf0] sm:$0xff]
    %v4354 = vld [vmem:[%s8 + $0xf8] sm:$0xff]
    %v4355 = vld [vmem:[%s8 + $0x100] sm:$0xff]
    %v4356 = vld [vmem:[%s8 + $0x108] sm:$0xff]
    %v4357 = vld [vmem:[%s8 + $0x110] sm:$0xff]
    %v4358 = vld [vmem:[%s8 + $0x118] sm:$0xff]
    %v4359 = vld [vmem:[%s8 + $0x120] sm:$0xff]
    %v4360 = vld [vmem:[%s8 + $0x128] sm:$0xff]
    %v4361 = vld [vmem:[%s8 + $0x130] sm:$0xff]
    %v4362 = vld [vmem:[%s8 + $0x138] sm:$0xff]
    %v4363 = vld [vmem:[%s8 + $0x140] sm:$0xff]
    %v4364 = vld [vmem:[%s8 + $0x148] sm:$0xff]
    %v4365 = vld [vmem:[%s8 + $0x150] sm:$0xff]
    %v4366 = vld [vmem:[%s8 + $0x158] sm:$0xff]
    %v4367 = vld [vmem:[%s8 + $0x160] sm:$0xff]
    %v4368 = vld [vmem:[%s8 + $0x168] sm:$0xff]
    %v4369 = vld [vmem:[%s8 + $0x170] sm:$0xff]
    %v4370 = vld [vmem:[%s8 + $0x178] sm:$0xff]
    %v4371 = vld [vmem:[%s8 + $0x180] sm:$0xff]
    %v4372 = vld [vmem:[%s8 + $0x188] sm:$0xff]
    %v4373 = vld [vmem:[%s8 + $0x190] sm:$0xff]
    %v4374 = vld [vmem:[%s8 + $0x198] sm:$0xff]
    %v4375 = vld [vmem:[%s8 + $0x1a0] sm:$0xff]
    %v4376 = vld [vmem:[%s8 + $0x1a8] sm:$0xff]
    %v4377 = vld [vmem:[%s8 + $0x1b0] sm:$0xff]
    %v4378 = vld [vmem:[%s8 + $0x1b8] sm:$0xff]
    %v4379 = vld [vmem:[%s8 + $0x1c0] sm:$0xff]
    %v4380 = vld [vmem:[%s8 + $0x1c8] sm:$0xff]
    %v4381 = vld [vmem:[%s8 + $0x1d0] sm:$0xff]
    %v4382 = vld [vmem:[%s8 + $0x1d8] sm:$0xff]
    %v4383 = vld [vmem:[%s8 + $0x1e0] sm:$0xff]
    %v4384 = vld [vmem:[%s8 + $0x1e8] sm:$0xff]
    %v4385 = vld [vmem:[%s8 + $0x1f0] sm:$0xff]
    %v4386 = vld [vmem:[%s8 + $0x1f8] sm:$0xff]
    %4388 = vrot.lane.b32.xlu0 %v3798, 64
    %v4389 = vpop.permute.xlu0 %4388
    %4391 = vrot.lane.b32.xlu0 %v3800, 64
    %v4392 = vpop.permute.xlu0 %4391
    %4394 = vrot.lane.b32.xlu0 %v3875, 64
    %v4395 = vpop.permute.xlu0 %4394
    %4397 = vrot.lane.b32.xlu0 %v3877, 64
    %v4398 = vpop.permute.xlu0 %4397
    %4400 = vrot.lane.b32.xlu0 %v3804, 64
    %v4401 = vpop.permute.xlu0 %4400
    %4403 = vrot.lane.b32.xlu0 %v3806, 64
    %v4404 = vpop.permute.xlu0 %4403
    %4406 = vrot.lane.b32.xlu0 %v3881, 64
    %v4407 = vpop.permute.xlu0 %4406
    %4409 = vrot.lane.b32.xlu0 %v3883, 64
    %v4410 = vpop.permute.xlu0 %4409
    %4412 = vrot.lane.b32.xlu0 %v4080, 64
    %v4413 = vpop.permute.xlu0 %4412
    %4415 = vrot.lane.b32.xlu0 %v4082, 64
    %v4416 = vpop.permute.xlu0 %4415
    %4418 = vrot.lane.b32.xlu0 %v4157, 64
    %v4419 = vpop.permute.xlu0 %4418
    %4421 = vrot.lane.b32.xlu0 %v4159, 64
    %v4422 = vpop.permute.xlu0 %4421
    %4424 = vrot.lane.b32.xlu0 %v4086, 64
    %v4425 = vpop.permute.xlu0 %4424
    %4427 = vrot.lane.b32.xlu0 %v4088, 64
    %v4428 = vpop.permute.xlu0 %4427
    %4430 = vrot.lane.b32.xlu0 %v4163, 64
    %v4431 = vpop.permute.xlu0 %4430
    %4433 = vrot.lane.b32.xlu0 %v4165, 64
    %v4434 = vpop.permute.xlu0 %4433
    %4436 = vrot.lane.b32.xlu0 %v4234, 64
    %v4437 = vpop.permute.xlu0 %4436
    %4440 = vrot.lane.b32.xlu0 %v4236, 64
    %v4441 = vpop.permute.xlu0 %4440
    %4444 = vrot.lane.b32.xlu0 %v4311, 64
    %v4445 = vpop.permute.xlu0 %4444
    %4448 = vrot.lane.b32.xlu0 %v4313, 64
    %v4449 = vpop.permute.xlu0 %4448
    %4452 = vrot.lane.b32.xlu0 %v4240, 64
    %v4453 = vpop.permute.xlu0 %4452
    %4456 = vrot.lane.b32.xlu0 %v4242, 64
    %v4457 = vpop.permute.xlu0 %4456
    %4460 = vrot.lane.b32.xlu0 %v4317, 64
    %v4461 = vpop.permute.xlu0 %4460
    %4464 = vrot.lane.b32.xlu0 %v4319, 64
    %v4465 = vpop.permute.xlu0 %4464
    %v4467 = vsel %vm852, %v3798, 0
    %v4469 = vsel %vm852, %v4080, 0
    %4471 = vmatprep.subr.mxu0 0.0
    %4472 = vmatpush1.xpose.msra.mxu0 %v4469
    %4473 = vmatprep.subr.mxu0 0.0
    %4474 = vmatpush1.xpose.msra.mxu0 0.0
    %4475 = vmatprep.subr.mxu0 0.0
    %4476 = vmatpush1.xpose.msra.mxu0 0.0
    %4477 = vmatprep.subr.mxu0 0.0
    %4478 = vmatpush1.xpose.msra.mxu0 0.0
    %4479 = vmatprep.subr.mxu0 0.0
    %4480 = vmatpush1.xpose.msra.mxu0 0.0
    %4481 = vmatprep.subr.mxu0 0.0
    %4482 = vmatpush1.xpose.msra.mxu0 0.0
    %4483 = vmatprep.subr.mxu0 0.0
    %4484 = vmatpush1.xpose.msra.mxu0 0.0
    %4485 = vmatprep.subr.mxu0 0.0
    %4486 = vmatpush1.xpose.msra.mxu0 0.0
    %4487 = vmatprep.subr.mxu0 0.0
    %4488 = vmatpush1.xpose.msra.mxu0 0.0
    %4489 = vmatprep.subr.mxu0 0.0
    %4490 = vmatpush1.xpose.msra.mxu0 0.0
    %4491 = vmatprep.subr.mxu0 0.0
    %4492 = vmatpush1.xpose.msra.mxu0 0.0
    %4493 = vmatprep.subr.mxu0 0.0
    %4494 = vmatpush1.xpose.msra.mxu0 0.0
    %4495 = vmatprep.subr.mxu0 0.0
    %4496 = vmatpush1.xpose.msra.mxu0 0.0
    %4497 = vmatprep.subr.mxu0 0.0
    %4498 = vmatpush1.xpose.msra.mxu0 0.0
    %4499 = vmatprep.subr.mxu0 0.0
    %4500 = vmatpush1.xpose.msra.mxu0 0.0
    %4501 = vmatprep.subr.mxu0 0.0
    %4502 = vmatpush1.xpose.msra.mxu0 0.0
    %4503 = vmatprep.subr.mxu0 0.0
    %4504 = vmatpush1.xpose.msra.mxu0 0.0
    %4505 = vmatprep.subr.mxu0 0.0
    %4506 = vmatpush1.xpose.msra.mxu0 0.0
    %4507 = vmatprep.subr.mxu0 0.0
    %4508 = vmatpush1.xpose.msra.mxu0 0.0
    %4509 = vmatprep.subr.mxu0 0.0
    %4510 = vmatpush1.xpose.msra.mxu0 0.0
    %4511 = vmatprep.subr.mxu0 0.0
    %4512 = vmatpush1.xpose.msra.mxu0 0.0
    %4513 = vmatprep.subr.mxu0 0.0
    %4514 = vmatpush1.xpose.msra.mxu0 0.0
    %4515 = vmatprep.subr.mxu0 0.0
    %4516 = vmatpush1.xpose.msra.mxu0 0.0
    %4517 = vmatprep.subr.mxu0 0.0
    %4518 = vmatpush1.xpose.msra.mxu0 0.0
    %4519 = vmatprep.subr.mxu0 0.0
    %4520 = vmatpush1.xpose.msra.mxu0 0.0
    %4521 = vmatprep.subr.mxu0 0.0
    %4522 = vmatpush1.xpose.msra.mxu0 0.0
    %4523 = vmatprep.subr.mxu0 0.0
    %4524 = vmatpush1.xpose.msra.mxu0 0.0
    %4525 = vmatprep.subr.mxu0 0.0
    %4526 = vmatpush1.xpose.msra.mxu0 0.0
    %4527 = vmatprep.subr.mxu0 0.0
    %4528 = vmatpush1.xpose.msra.mxu0 0.0
    %4529 = vmatprep.subr.mxu0 0.0
    %4530 = vmatpush1.xpose.msra.mxu0 0.0
    %4531 = vmatprep.subr.mxu0 0.0
    %4532 = vmatpush1.xpose.msra.mxu0 0.0
    %4533 = vmatprep.subr.mxu0 0.0
    %4534 = vmatpush1.xpose.msra.mxu0 0.0
    %4535 = vmatprep.mubr.f32.mxu0 0.0
    %4536 = vmatmul.mubr.f32.gmra.mrb[0].mxu0 %v4467
    %v4537 = vpop.f32.mrb[0].mxu0
    %v4538 = vadd.f32 0.0, %v4537
    %v4539 = vpop.f32.mrb[0].mxu0
    %4540 = vdwg.mxu0
    %v4541 = vsel %vm852, %v4389, 0
    %v4543 = vsel %vm852, %v4413, 0
    %4545 = vmatprep.subr.mxu0 0.0
    %4546 = vmatpush1.xpose.msra.mxu0 %v4543
    %4547 = vmatprep.subr.mxu0 0.0
    %4548 = vmatpush1.xpose.msra.mxu0 0.0
    %4549 = vmatprep.subr.mxu0 0.0
    %4550 = vmatpush1.xpose.msra.mxu0 0.0
    %4551 = vmatprep.subr.mxu0 0.0
    %4552 = vmatpush1.xpose.msra.mxu0 0.0
    %4553 = vmatprep.subr.mxu0 0.0
    %4554 = vmatpush1.xpose.msra.mxu0 0.0
    %4555 = vmatprep.subr.mxu0 0.0
    %4556 = vmatpush1.xpose.msra.mxu0 0.0
    %4557 = vmatprep.subr.mxu0 0.0
    %4558 = vmatpush1.xpose.msra.mxu0 0.0
    %4559 = vmatprep.subr.mxu0 0.0
    %4560 = vmatpush1.xpose.msra.mxu0 0.0
    %4561 = vmatprep.subr.mxu0 0.0
    %4562 = vmatpush1.xpose.msra.mxu0 0.0
    %4563 = vmatprep.subr.mxu0 0.0
    %4564 = vmatpush1.xpose.msra.mxu0 0.0
    %4565 = vmatprep.subr.mxu0 0.0
    %4566 = vmatpush1.xpose.msra.mxu0 0.0
    %4567 = vmatprep.subr.mxu0 0.0
    %4568 = vmatpush1.xpose.msra.mxu0 0.0
    %4569 = vmatprep.subr.mxu0 0.0
    %4570 = vmatpush1.xpose.msra.mxu0 0.0
    %4571 = vmatprep.subr.mxu0 0.0
    %4572 = vmatpush1.xpose.msra.mxu0 0.0
    %4573 = vmatprep.subr.mxu0 0.0
    %4574 = vmatpush1.xpose.msra.mxu0 0.0
    %4575 = vmatprep.subr.mxu0 0.0
    %4576 = vmatpush1.xpose.msra.mxu0 0.0
    %4577 = vmatprep.subr.mxu0 0.0
    %4578 = vmatpush1.xpose.msra.mxu0 0.0
    %4579 = vmatprep.subr.mxu0 0.0
    %4580 = vmatpush1.xpose.msra.mxu0 0.0
    %4581 = vmatprep.subr.mxu0 0.0
    %4582 = vmatpush1.xpose.msra.mxu0 0.0
    %4583 = vmatprep.subr.mxu0 0.0
    %4584 = vmatpush1.xpose.msra.mxu0 0.0
    %4585 = vmatprep.subr.mxu0 0.0
    %4586 = vmatpush1.xpose.msra.mxu0 0.0
    %4587 = vmatprep.subr.mxu0 0.0
    %4588 = vmatpush1.xpose.msra.mxu0 0.0
    %4589 = vmatprep.subr.mxu0 0.0
    %4590 = vmatpush1.xpose.msra.mxu0 0.0
    %4591 = vmatprep.subr.mxu0 0.0
    %4592 = vmatpush1.xpose.msra.mxu0 0.0
    %4593 = vmatprep.subr.mxu0 0.0
    %4594 = vmatpush1.xpose.msra.mxu0 0.0
    %4595 = vmatprep.subr.mxu0 0.0
    %4596 = vmatpush1.xpose.msra.mxu0 0.0
    %4597 = vmatprep.subr.mxu0 0.0
    %4598 = vmatpush1.xpose.msra.mxu0 0.0
    %4599 = vmatprep.subr.mxu0 0.0
    %4600 = vmatpush1.xpose.msra.mxu0 0.0
    %4601 = vmatprep.subr.mxu0 0.0
    %4602 = vmatpush1.xpose.msra.mxu0 0.0
    %4603 = vmatprep.subr.mxu0 0.0
    %4604 = vmatpush1.xpose.msra.mxu0 0.0
    %4605 = vmatprep.subr.mxu0 0.0
    %4606 = vmatpush1.xpose.msra.mxu0 0.0
    %4607 = vmatprep.subr.mxu0 0.0
    %4608 = vmatpush1.xpose.msra.mxu0 0.0
    %4609 = vmatprep.mubr.f32.mxu0 0.0
    %4610 = vmatmul.mubr.f32.gmra.mrb[0].mxu0 %v4541
    %v4611 = vpop.f32.mrb[0].mxu0
    %v4612 = vadd.f32 0.0, %v4611
    %v4613 = vpop.f32.mrb[0].mxu0
    %4614 = vdwg.mxu0
    %v4615 = vsel %vm852, %v3800, 0
    %v4617 = vsel %vm852, %v4082, 0
    %4619 = vmatprep.subr.mxu0 0.0
    %4620 = vmatpush1.xpose.msra.mxu0 %v4617
    %4621 = vmatprep.subr.mxu0 0.0
    %4622 = vmatpush1.xpose.msra.mxu0 0.0
    %4623 = vmatprep.subr.mxu0 0.0
    %4624 = vmatpush1.xpose.msra.mxu0 0.0
    %4625 = vmatprep.subr.mxu0 0.0
    %4626 = vmatpush1.xpose.msra.mxu0 0.0
    %4627 = vmatprep.subr.mxu0 0.0
    %4628 = vmatpush1.xpose.msra.mxu0 0.0
    %4629 = vmatprep.subr.mxu0 0.0
    %4630 = vmatpush1.xpose.msra.mxu0 0.0
    %4631 = vmatprep.subr.mxu0 0.0
    %4632 = vmatpush1.xpose.msra.mxu0 0.0
    %4633 = vmatprep.subr.mxu0 0.0
    %4634 = vmatpush1.xpose.msra.mxu0 0.0
    %4635 = vmatprep.subr.mxu0 0.0
    %4636 = vmatpush1.xpose.msra.mxu0 0.0
    %4637 = vmatprep.subr.mxu0 0.0
    %4638 = vmatpush1.xpose.msra.mxu0 0.0
    %4639 = vmatprep.subr.mxu0 0.0
    %4640 = vmatpush1.xpose.msra.mxu0 0.0
    %4641 = vmatprep.subr.mxu0 0.0
    %4642 = vmatpush1.xpose.msra.mxu0 0.0
    %4643 = vmatprep.subr.mxu0 0.0
    %4644 = vmatpush1.xpose.msra.mxu0 0.0
    %4645 = vmatprep.subr.mxu0 0.0
    %4646 = vmatpush1.xpose.msra.mxu0 0.0
    %4647 = vmatprep.subr.mxu0 0.0
    %4648 = vmatpush1.xpose.msra.mxu0 0.0
    %4649 = vmatprep.subr.mxu0 0.0
    %4650 = vmatpush1.xpose.msra.mxu0 0.0
    %4651 = vmatprep.subr.mxu0 0.0
    %4652 = vmatpush1.xpose.msra.mxu0 0.0
    %4653 = vmatprep.subr.mxu0 0.0
    %4654 = vmatpush1.xpose.msra.mxu0 0.0
    %4655 = vmatprep.subr.mxu0 0.0
    %4656 = vmatpush1.xpose.msra.mxu0 0.0
    %4657 = vmatprep.subr.mxu0 0.0
    %4658 = vmatpush1.xpose.msra.mxu0 0.0
    %4659 = vmatprep.subr.mxu0 0.0
    %4660 = vmatpush1.xpose.msra.mxu0 0.0
    %4661 = vmatprep.subr.mxu0 0.0
    %4662 = vmatpush1.xpose.msra.mxu0 0.0
    %4663 = vmatprep.subr.mxu0 0.0
    %4664 = vmatpush1.xpose.msra.mxu0 0.0
    %4665 = vmatprep.subr.mxu0 0.0
    %4666 = vmatpush1.xpose.msra.mxu0 0.0
    %4667 = vmatprep.subr.mxu0 0.0
    %4668 = vmatpush1.xpose.msra.mxu0 0.0
    %4669 = vmatprep.subr.mxu0 0.0
    %4670 = vmatpush1.xpose.msra.mxu0 0.0
    %4671 = vmatprep.subr.mxu0 0.0
    %4672 = vmatpush1.xpose.msra.mxu0 0.0
    %4673 = vmatprep.subr.mxu0 0.0
    %4674 = vmatpush1.xpose.msra.mxu0 0.0
    %4675 = vmatprep.subr.mxu0 0.0
    %4676 = vmatpush1.xpose.msra.mxu0 0.0
    %4677 = vmatprep.subr.mxu0 0.0
    %4678 = vmatpush1.xpose.msra.mxu0 0.0
    %4679 = vmatprep.subr.mxu0 0.0
    %4680 = vmatpush1.xpose.msra.mxu0 0.0
    %4681 = vmatprep.subr.mxu0 0.0
    %4682 = vmatpush1.xpose.msra.mxu0 0.0
    %4683 = vmatprep.mubr.f32.mxu0 0.0
    %4684 = vmatmul.mubr.f32.gmra.mrb[0].mxu0 %v4615
    %v4685 = vpop.f32.mrb[0].mxu0
    %v4686 = vadd.f32 0.0, %v4685
    %v4687 = vpop.f32.mrb[0].mxu0
    %4688 = vdwg.mxu0
    %v4689 = vsel %vm852, %v4392, 0
    %v4691 = vsel %vm852, %v4416, 0
    %4693 = vmatprep.subr.mxu0 0.0
    %4694 = vmatpush1.xpose.msra.mxu0 %v4691
    %4695 = vmatprep.subr.mxu0 0.0
    %4696 = vmatpush1.xpose.msra.mxu0 0.0
    %4697 = vmatprep.subr.mxu0 0.0
    %4698 = vmatpush1.xpose.msra.mxu0 0.0
    %4699 = vmatprep.subr.mxu0 0.0
    %4700 = vmatpush1.xpose.msra.mxu0 0.0
    %4701 = vmatprep.subr.mxu0 0.0
    %4702 = vmatpush1.xpose.msra.mxu0 0.0
    %4703 = vmatprep.subr.mxu0 0.0
    %4704 = vmatpush1.xpose.msra.mxu0 0.0
    %4705 = vmatprep.subr.mxu0 0.0
    %4706 = vmatpush1.xpose.msra.mxu0 0.0
    %4707 = vmatprep.subr.mxu0 0.0
    %4708 = vmatpush1.xpose.msra.mxu0 0.0
    %4709 = vmatprep.subr.mxu0 0.0
    %4710 = vmatpush1.xpose.msra.mxu0 0.0
    %4711 = vmatprep.subr.mxu0 0.0
    %4712 = vmatpush1.xpose.msra.mxu0 0.0
    %4713 = vmatprep.subr.mxu0 0.0
    %4714 = vmatpush1.xpose.msra.mxu0 0.0
    %4715 = vmatprep.subr.mxu0 0.0
    %4716 = vmatpush1.xpose.msra.mxu0 0.0
    %4717 = vmatprep.subr.mxu0 0.0
    %4718 = vmatpush1.xpose.msra.mxu0 0.0
    %4719 = vmatprep.subr.mxu0 0.0
    %4720 = vmatpush1.xpose.msra.mxu0 0.0
    %4721 = vmatprep.subr.mxu0 0.0
    %4722 = vmatpush1.xpose.msra.mxu0 0.0
    %4723 = vmatprep.subr.mxu0 0.0
    %4724 = vmatpush1.xpose.msra.mxu0 0.0
    %4725 = vmatprep.subr.mxu0 0.0
    %4726 = vmatpush1.xpose.msra.mxu0 0.0
    %4727 = vmatprep.subr.mxu0 0.0
    %4728 = vmatpush1.xpose.msra.mxu0 0.0
    %4729 = vmatprep.subr.mxu0 0.0
    %4730 = vmatpush1.xpose.msra.mxu0 0.0
    %4731 = vmatprep.subr.mxu0 0.0
    %4732 = vmatpush1.xpose.msra.mxu0 0.0
    %4733 = vmatprep.subr.mxu0 0.0
    %4734 = vmatpush1.xpose.msra.mxu0 0.0
    %4735 = vmatprep.subr.mxu0 0.0
    %4736 = vmatpush1.xpose.msra.mxu0 0.0
    %4737 = vmatprep.subr.mxu0 0.0
    %4738 = vmatpush1.xpose.msra.mxu0 0.0
    %4739 = vmatprep.subr.mxu0 0.0
    %4740 = vmatpush1.xpose.msra.mxu0 0.0
    %4741 = vmatprep.subr.mxu0 0.0
    %4742 = vmatpush1.xpose.msra.mxu0 0.0
    %4743 = vmatprep.subr.mxu0 0.0
    %4744 = vmatpush1.xpose.msra.mxu0 0.0
    %4745 = vmatprep.subr.mxu0 0.0
    %4746 = vmatpush1.xpose.msra.mxu0 0.0
    %4747 = vmatprep.subr.mxu0 0.0
    %4748 = vmatpush1.xpose.msra.mxu0 0.0
    %4749 = vmatprep.subr.mxu0 0.0
    %4750 = vmatpush1.xpose.msra.mxu0 0.0
    %4751 = vmatprep.subr.mxu0 0.0
    %4752 = vmatpush1.xpose.msra.mxu0 0.0
    %4753 = vmatprep.subr.mxu0 0.0
    %4754 = vmatpush1.xpose.msra.mxu0 0.0
    %4755 = vmatprep.subr.mxu0 0.0
    %4756 = vmatpush1.xpose.msra.mxu0 0.0
    %4757 = vmatprep.mubr.f32.mxu0 0.0
    %4758 = vmatmul.mubr.f32.gmra.mrb[0].mxu0 %v4689
    %v4759 = vpop.f32.mrb[0].mxu0
    %v4760 = vadd.f32 0.0, %v4759
    %v4761 = vpop.f32.mrb[0].mxu0
    %4762 = vdwg.mxu0
    %v4763 = vsel %vm852, %v3875, 0
    %v4765 = vsel %vm852, %v4157, 0
    %4767 = vmatprep.subr.mxu0 0.0
    %4768 = vmatpush1.xpose.msra.mxu0 %v4765
    %4769 = vmatprep.subr.mxu0 0.0
    %4770 = vmatpush1.xpose.msra.mxu0 0.0
    %4771 = vmatprep.subr.mxu0 0.0
    %4772 = vmatpush1.xpose.msra.mxu0 0.0
    %4773 = vmatprep.subr.mxu0 0.0
    %4774 = vmatpush1.xpose.msra.mxu0 0.0
    %4775 = vmatprep.subr.mxu0 0.0
    %4776 = vmatpush1.xpose.msra.mxu0 0.0
    %4777 = vmatprep.subr.mxu0 0.0
    %4778 = vmatpush1.xpose.msra.mxu0 0.0
    %4779 = vmatprep.subr.mxu0 0.0
    %4780 = vmatpush1.xpose.msra.mxu0 0.0
    %4781 = vmatprep.subr.mxu0 0.0
    %4782 = vmatpush1.xpose.msra.mxu0 0.0
    %4783 = vmatprep.subr.mxu0 0.0
    %4784 = vmatpush1.xpose.msra.mxu0 0.0
    %4785 = vmatprep.subr.mxu0 0.0
    %4786 = vmatpush1.xpose.msra.mxu0 0.0
    %4787 = vmatprep.subr.mxu0 0.0
    %4788 = vmatpush1.xpose.msra.mxu0 0.0
    %4789 = vmatprep.subr.mxu0 0.0
    %4790 = vmatpush1.xpose.msra.mxu0 0.0
    %4791 = vmatprep.subr.mxu0 0.0
    %4792 = vmatpush1.xpose.msra.mxu0 0.0
    %4793 = vmatprep.subr.mxu0 0.0
    %4794 = vmatpush1.xpose.msra.mxu0 0.0
    %4795 = vmatprep.subr.mxu0 0.0
    %4796 = vmatpush1.xpose.msra.mxu0 0.0
    %4797 = vmatprep.subr.mxu0 0.0
    %4798 = vmatpush1.xpose.msra.mxu0 0.0
    %4799 = vmatprep.subr.mxu0 0.0
    %4800 = vmatpush1.xpose.msra.mxu0 0.0
    %4801 = vmatprep.subr.mxu0 0.0
    %4802 = vmatpush1.xpose.msra.mxu0 0.0
    %4803 = vmatprep.subr.mxu0 0.0
    %4804 = vmatpush1.xpose.msra.mxu0 0.0
    %4805 = vmatprep.subr.mxu0 0.0
    %4806 = vmatpush1.xpose.msra.mxu0 0.0
    %4807 = vmatprep.subr.mxu0 0.0
    %4808 = vmatpush1.xpose.msra.mxu0 0.0
    %4809 = vmatprep.subr.mxu0 0.0
    %4810 = vmatpush1.xpose.msra.mxu0 0.0
    %4811 = vmatprep.subr.mxu0 0.0
    %4812 = vmatpush1.xpose.msra.mxu0 0.0
    %4813 = vmatprep.subr.mxu0 0.0
    %4814 = vmatpush1.xpose.msra.mxu0 0.0
    %4815 = vmatprep.subr.mxu0 0.0
    %4816 = vmatpush1.xpose.msra.mxu0 0.0
    %4817 = vmatprep.subr.mxu0 0.0
    %4818 = vmatpush1.xpose.msra.mxu0 0.0
    %4819 = vmatprep.subr.mxu0 0.0
    %4820 = vmatpush1.xpose.msra.mxu0 0.0
    %4821 = vmatprep.subr.mxu0 0.0
    %4822 = vmatpush1.xpose.msra.mxu0 0.0
    %4823 = vmatprep.subr.mxu0 0.0
    %4824 = vmatpush1.xpose.msra.mxu0 0.0
    %4825 = vmatprep.subr.mxu0 0.0
    %4826 = vmatpush1.xpose.msra.mxu0 0.0
    %4827 = vmatprep.subr.mxu0 0.0
    %4828 = vmatpush1.xpose.msra.mxu0 0.0
    %4829 = vmatprep.subr.mxu0 0.0
    %4830 = vmatpush1.xpose.msra.mxu0 0.0
    %4831 = vmatprep.mubr.f32.mxu0 0.0
    %4832 = vmatmul.mubr.f32.gmra.mrb[0].mxu0 %v4763
    %v4833 = vpop.f32.mrb[0].mxu0
    %v4834 = vadd.f32 0.0, %v4833
    %v4835 = vpop.f32.mrb[0].mxu0
    %4836 = vdwg.mxu0
    %v4837 = vsel %vm852, %v4395, 0
    %v4839 = vsel %vm852, %v4419, 0
    %4841 = vmatprep.subr.mxu0 0.0
    %4842 = vmatpush1.xpose.msra.mxu0 %v4839
    %4843 = vmatprep.subr.mxu0 0.0
    %4844 = vmatpush1.xpose.msra.mxu0 0.0
    %4845 = vmatprep.subr.mxu0 0.0
    %4846 = vmatpush1.xpose.msra.mxu0 0.0
    %4847 = vmatprep.subr.mxu0 0.0
    %4848 = vmatpush1.xpose.msra.mxu0 0.0
    %4849 = vmatprep.subr.mxu0 0.0
    %4850 = vmatpush1.xpose.msra.mxu0 0.0
    %4851 = vmatprep.subr.mxu0 0.0
    %4852 = vmatpush1.xpose.msra.mxu0 0.0
    %4853 = vmatprep.subr.mxu0 0.0
    %4854 = vmatpush1.xpose.msra.mxu0 0.0
    %4855 = vmatprep.subr.mxu0 0.0
    %4856 = vmatpush1.xpose.msra.mxu0 0.0
    %4857 = vmatprep.subr.mxu0 0.0
    %4858 = vmatpush1.xpose.msra.mxu0 0.0
    %4859 = vmatprep.subr.mxu0 0.0
    %4860 = vmatpush1.xpose.msra.mxu0 0.0
    %4861 = vmatprep.subr.mxu0 0.0
    %4862 = vmatpush1.xpose.msra.mxu0 0.0
    %4863 = vmatprep.subr.mxu0 0.0
    %4864 = vmatpush1.xpose.msra.mxu0 0.0
    %4865 = vmatprep.subr.mxu0 0.0
    %4866 = vmatpush1.xpose.msra.mxu0 0.0
    %4867 = vmatprep.subr.mxu0 0.0
    %4868 = vmatpush1.xpose.msra.mxu0 0.0
    %4869 = vmatprep.subr.mxu0 0.0
    %4870 = vmatpush1.xpose.msra.mxu0 0.0
    %4871 = vmatprep.subr.mxu0 0.0
    %4872 = vmatpush1.xpose.msra.mxu0 0.0
    %4873 = vmatprep.subr.mxu0 0.0
    %4874 = vmatpush1.xpose.msra.mxu0 0.0
    %4875 = vmatprep.subr.mxu0 0.0
    %4876 = vmatpush1.xpose.msra.mxu0 0.0
    %4877 = vmatprep.subr.mxu0 0.0
    %4878 = vmatpush1.xpose.msra.mxu0 0.0
    %4879 = vmatprep.subr.mxu0 0.0
    %4880 = vmatpush1.xpose.msra.mxu0 0.0
    %4881 = vmatprep.subr.mxu0 0.0
    %4882 = vmatpush1.xpose.msra.mxu0 0.0
    %4883 = vmatprep.subr.mxu0 0.0
    %4884 = vmatpush1.xpose.msra.mxu0 0.0
    %4885 = vmatprep.subr.mxu0 0.0
    %4886 = vmatpush1.xpose.msra.mxu0 0.0
    %4887 = vmatprep.subr.mxu0 0.0
    %4888 = vmatpush1.xpose.msra.mxu0 0.0
    %4889 = vmatprep.subr.mxu0 0.0
    %4890 = vmatpush1.xpose.msra.mxu0 0.0
    %4891 = vmatprep.subr.mxu0 0.0
    %4892 = vmatpush1.xpose.msra.mxu0 0.0
    %4893 = vmatprep.subr.mxu0 0.0
    %4894 = vmatpush1.xpose.msra.mxu0 0.0
    %4895 = vmatprep.subr.mxu0 0.0
    %4896 = vmatpush1.xpose.msra.mxu0 0.0
    %4897 = vmatprep.subr.mxu0 0.0
    %4898 = vmatpush1.xpose.msra.mxu0 0.0
    %4899 = vmatprep.subr.mxu0 0.0
    %4900 = vmatpush1.xpose.msra.mxu0 0.0
    %4901 = vmatprep.subr.mxu0 0.0
    %4902 = vmatpush1.xpose.msra.mxu0 0.0
    %4903 = vmatprep.subr.mxu0 0.0
    %4904 = vmatpush1.xpose.msra.mxu0 0.0
    %4905 = vmatprep.mubr.f32.mxu0 0.0
    %4906 = vmatmul.mubr.f32.gmra.mrb[0].mxu0 %v4837
    %v4907 = vpop.f32.mrb[0].mxu0
    %v4908 = vadd.f32 0.0, %v4907
    %v4909 = vpop.f32.mrb[0].mxu0
    %4910 = vdwg.mxu0
    %v4911 = vsel %vm852, %v3877, 0
    %v4913 = vsel %vm852, %v4159, 0
    %4915 = vmatprep.subr.mxu0 0.0
    %4916 = vmatpush1.xpose.msra.mxu0 %v4913
    %4917 = vmatprep.subr.mxu0 0.0
    %4918 = vmatpush1.xpose.msra.mxu0 0.0
    %4919 = vmatprep.subr.mxu0 0.0
    %4920 = vmatpush1.xpose.msra.mxu0 0.0
    %4921 = vmatprep.subr.mxu0 0.0
    %4922 = vmatpush1.xpose.msra.mxu0 0.0
    %4923 = vmatprep.subr.mxu0 0.0
    %4924 = vmatpush1.xpose.msra.mxu0 0.0
    %4925 = vmatprep.subr.mxu0 0.0
    %4926 = vmatpush1.xpose.msra.mxu0 0.0
    %4927 = vmatprep.subr.mxu0 0.0
    %4928 = vmatpush1.xpose.msra.mxu0 0.0
    %4929 = vmatprep.subr.mxu0 0.0
    %4930 = vmatpush1.xpose.msra.mxu0 0.0
    %4931 = vmatprep.subr.mxu0 0.0
    %4932 = vmatpush1.xpose.msra.mxu0 0.0
    %4933 = vmatprep.subr.mxu0 0.0
    %4934 = vmatpush1.xpose.msra.mxu0 0.0
    %4935 = vmatprep.subr.mxu0 0.0
    %4936 = vmatpush1.xpose.msra.mxu0 0.0
    %4937 = vmatprep.subr.mxu0 0.0
    %4938 = vmatpush1.xpose.msra.mxu0 0.0
    %4939 = vmatprep.subr.mxu0 0.0
    %4940 = vmatpush1.xpose.msra.mxu0 0.0
    %4941 = vmatprep.subr.mxu0 0.0
    %4942 = vmatpush1.xpose.msra.mxu0 0.0
    %4943 = vmatprep.subr.mxu0 0.0
    %4944 = vmatpush1.xpose.msra.mxu0 0.0
    %4945 = vmatprep.subr.mxu0 0.0
    %4946 = vmatpush1.xpose.msra.mxu0 0.0
    %4947 = vmatprep.subr.mxu0 0.0
    %4948 = vmatpush1.xpose.msra.mxu0 0.0
    %4949 = vmatprep.subr.mxu0 0.0
    %4950 = vmatpush1.xpose.msra.mxu0 0.0
    %4951 = vmatprep.subr.mxu0 0.0
    %4952 = vmatpush1.xpose.msra.mxu0 0.0
    %4953 = vmatprep.subr.mxu0 0.0
    %4954 = vmatpush1.xpose.msra.mxu0 0.0
    %4955 = vmatprep.subr.mxu0 0.0
    %4956 = vmatpush1.xpose.msra.mxu0 0.0
    %4957 = vmatprep.subr.mxu0 0.0
    %4958 = vmatpush1.xpose.msra.mxu0 0.0
    %4959 = vmatprep.subr.mxu0 0.0
    %4960 = vmatpush1.xpose.msra.mxu0 0.0
    %4961 = vmatprep.subr.mxu0 0.0
    %4962 = vmatpush1.xpose.msra.mxu0 0.0
    %4963 = vmatprep.subr.mxu0 0.0
    %4964 = vmatpush1.xpose.msra.mxu0 0.0
    %4965 = vmatprep.subr.mxu0 0.0
    %4966 = vmatpush1.xpose.msra.mxu0 0.0
    %4967 = vmatprep.subr.mxu0 0.0
    %4968 = vmatpush1.xpose.msra.mxu0 0.0
    %4969 = vmatprep.subr.mxu0 0.0
    %4970 = vmatpush1.xpose.msra.mxu0 0.0
    %4971 = vmatprep.subr.mxu0 0.0
    %4972 = vmatpush1.xpose.msra.mxu0 0.0
    %4973 = vmatprep.subr.mxu0 0.0
    %4974 = vmatpush1.xpose.msra.mxu0 0.0
    %4975 = vmatprep.subr.mxu0 0.0
    %4976 = vmatpush1.xpose.msra.mxu0 0.0
    %4977 = vmatprep.subr.mxu0 0.0
    %4978 = vmatpush1.xpose.msra.mxu0 0.0
    %4979 = vmatprep.mubr.f32.mxu0 0.0
    %4980 = vmatmul.mubr.f32.gmra.mrb[0].mxu0 %v4911
    %v4981 = vpop.f32.mrb[0].mxu0
    %v4982 = vadd.f32 0.0, %v4981
    %v4983 = vpop.f32.mrb[0].mxu0
    %4984 = vdwg.mxu0
    %v4985 = vsel %vm852, %v4398, 0
    %v4987 = vsel %vm852, %v4422, 0
    %4989 = vmatprep.subr.mxu0 0.0
    %4990 = vmatpush1.xpose.msra.mxu0 %v4987
    %4991 = vmatprep.subr.mxu0 0.0
    %4992 = vmatpush1.xpose.msra.mxu0 0.0
    %4993 = vmatprep.subr.mxu0 0.0
    %4994 = vmatpush1.xpose.msra.mxu0 0.0
    %4995 = vmatprep.subr.mxu0 0.0
    %4996 = vmatpush1.xpose.msra.mxu0 0.0
    %4997 = vmatprep.subr.mxu0 0.0
    %4998 = vmatpush1.xpose.msra.mxu0 0.0
    %4999 = vmatprep.subr.mxu0 0.0
    %5000 = vmatpush1.xpose.msra.mxu0 0.0
    %5001 = vmatprep.subr.mxu0 0.0
    %5002 = vmatpush1.xpose.msra.mxu0 0.0
    %5003 = vmatprep.subr.mxu0 0.0
    %5004 = vmatpush1.xpose.msra.mxu0 0.0
    %5005 = vmatprep.subr.mxu0 0.0
    %5006 = vmatpush1.xpose.msra.mxu0 0.0
    %5007 = vmatprep.subr.mxu0 0.0
    %5008 = vmatpush1.xpose.msra.mxu0 0.0
    %5009 = vmatprep.subr.mxu0 0.0
    %5010 = vmatpush1.xpose.msra.mxu0 0.0
    %5011 = vmatprep.subr.mxu0 0.0
    %5012 = vmatpush1.xpose.msra.mxu0 0.0
    %5013 = vmatprep.subr.mxu0 0.0
    %5014 = vmatpush1.xpose.msra.mxu0 0.0
    %5015 = vmatprep.subr.mxu0 0.0
    %5016 = vmatpush1.xpose.msra.mxu0 0.0
    %5017 = vmatprep.subr.mxu0 0.0
    %5018 = vmatpush1.xpose.msra.mxu0 0.0
    %5019 = vmatprep.subr.mxu0 0.0
    %5020 = vmatpush1.xpose.msra.mxu0 0.0
    %5021 = vmatprep.subr.mxu0 0.0
    %5022 = vmatpush1.xpose.msra.mxu0 0.0
    %5023 = vmatprep.subr.mxu0 0.0
    %5024 = vmatpush1.xpose.msra.mxu0 0.0
    %5025 = vmatprep.subr.mxu0 0.0
    %5026 = vmatpush1.xpose.msra.mxu0 0.0
    %5027 = vmatprep.subr.mxu0 0.0
    %5028 = vmatpush1.xpose.msra.mxu0 0.0
    %5029 = vmatprep.subr.mxu0 0.0
    %5030 = vmatpush1.xpose.msra.mxu0 0.0
    %5031 = vmatprep.subr.mxu0 0.0
    %5032 = vmatpush1.xpose.msra.mxu0 0.0
    %5033 = vmatprep.subr.mxu0 0.0
    %5034 = vmatpush1.xpose.msra.mxu0 0.0
    %5035 = vmatprep.subr.mxu0 0.0
    %5036 = vmatpush1.xpose.msra.mxu0 0.0
    %5037 = vmatprep.subr.mxu0 0.0
    %5038 = vmatpush1.xpose.msra.mxu0 0.0
    %5039 = vmatprep.subr.mxu0 0.0
    %5040 = vmatpush1.xpose.msra.mxu0 0.0
    %5041 = vmatprep.subr.mxu0 0.0
    %5042 = vmatpush1.xpose.msra.mxu0 0.0
    %5043 = vmatprep.subr.mxu0 0.0
    %5044 = vmatpush1.xpose.msra.mxu0 0.0
    %5045 = vmatprep.subr.mxu0 0.0
    %5046 = vmatpush1.xpose.msra.mxu0 0.0
    %5047 = vmatprep.subr.mxu0 0.0
    %5048 = vmatpush1.xpose.msra.mxu0 0.0
    %5049 = vmatprep.subr.mxu0 0.0
    %5050 = vmatpush1.xpose.msra.mxu0 0.0
    %5051 = vmatprep.subr.mxu0 0.0
    %5052 = vmatpush1.xpose.msra.mxu0 0.0
    %5053 = vmatprep.mubr.f32.mxu0 0.0
    %5054 = vmatmul.mubr.f32.gmra.mrb[0].mxu0 %v4985
    %v5055 = vpop.f32.mrb[0].mxu0
    %v5056 = vadd.f32 0.0, %v5055
    %v5057 = vpop.f32.mrb[0].mxu0
    %5058 = vdwg.mxu0
    %v5059 = vsel %vm852, %v3804, 0
    %v5061 = vsel %vm852, %v4086, 0
    %5063 = vmatprep.subr.mxu0 0.0
    %5064 = vmatpush1.xpose.msra.mxu0 %v5061
    %5065 = vmatprep.subr.mxu0 0.0
    %5066 = vmatpush1.xpose.msra.mxu0 0.0
    %5067 = vmatprep.subr.mxu0 0.0
    %5068 = vmatpush1.xpose.msra.mxu0 0.0
    %5069 = vmatprep.subr.mxu0 0.0
    %5070 = vmatpush1.xpose.msra.mxu0 0.0
    %5071 = vmatprep.subr.mxu0 0.0
    %5072 = vmatpush1.xpose.msra.mxu0 0.0
    %5073 = vmatprep.subr.mxu0 0.0
    %5074 = vmatpush1.xpose.msra.mxu0 0.0
    %5075 = vmatprep.subr.mxu0 0.0
    %5076 = vmatpush1.xpose.msra.mxu0 0.0
    %5077 = vmatprep.subr.mxu0 0.0
    %5078 = vmatpush1.xpose.msra.mxu0 0.0
    %5079 = vmatprep.subr.mxu0 0.0
    %5080 = vmatpush1.xpose.msra.mxu0 0.0
    %5081 = vmatprep.subr.mxu0 0.0
    %5082 = vmatpush1.xpose.msra.mxu0 0.0
    %5083 = vmatprep.subr.mxu0 0.0
    %5084 = vmatpush1.xpose.msra.mxu0 0.0
    %5085 = vmatprep.subr.mxu0 0.0
    %5086 = vmatpush1.xpose.msra.mxu0 0.0
    %5087 = vmatprep.subr.mxu0 0.0
    %5088 = vmatpush1.xpose.msra.mxu0 0.0
    %5089 = vmatprep.subr.mxu0 0.0
    %5090 = vmatpush1.xpose.msra.mxu0 0.0
    %5091 = vmatprep.subr.mxu0 0.0
    %5092 = vmatpush1.xpose.msra.mxu0 0.0
    %5093 = vmatprep.subr.mxu0 0.0
    %5094 = vmatpush1.xpose.msra.mxu0 0.0
    %5095 = vmatprep.subr.mxu0 0.0
    %5096 = vmatpush1.xpose.msra.mxu0 0.0
    %5097 = vmatprep.subr.mxu0 0.0
    %5098 = vmatpush1.xpose.msra.mxu0 0.0
    %5099 = vmatprep.subr.mxu0 0.0
    %5100 = vmatpush1.xpose.msra.mxu0 0.0
    %5101 = vmatprep.subr.mxu0 0.0
    %5102 = vmatpush1.xpose.msra.mxu0 0.0
    %5103 = vmatprep.subr.mxu0 0.0
    %5104 = vmatpush1.xpose.msra.mxu0 0.0
    %5105 = vmatprep.subr.mxu0 0.0
    %5106 = vmatpush1.xpose.msra.mxu0 0.0
    %5107 = vmatprep.subr.mxu0 0.0
    %5108 = vmatpush1.xpose.msra.mxu0 0.0
    %5109 = vmatprep.subr.mxu0 0.0
    %5110 = vmatpush1.xpose.msra.mxu0 0.0
    %5111 = vmatprep.subr.mxu0 0.0
    %5112 = vmatpush1.xpose.msra.mxu0 0.0
    %5113 = vmatprep.subr.mxu0 0.0
    %5114 = vmatpush1.xpose.msra.mxu0 0.0
    %5115 = vmatprep.subr.mxu0 0.0
    %5116 = vmatpush1.xpose.msra.mxu0 0.0
    %5117 = vmatprep.subr.mxu0 0.0
    %5118 = vmatpush1.xpose.msra.mxu0 0.0
    %5119 = vmatprep.subr.mxu0 0.0
    %5120 = vmatpush1.xpose.msra.mxu0 0.0
    %5121 = vmatprep.subr.mxu0 0.0
    %5122 = vmatpush1.xpose.msra.mxu0 0.0
    %5123 = vmatprep.subr.mxu0 0.0
    %5124 = vmatpush1.xpose.msra.mxu0 0.0
    %5125 = vmatprep.subr.mxu0 0.0
    %5126 = vmatpush1.xpose.msra.mxu0 0.0
    %5127 = vmatprep.mubr.f32.mxu0 0.0
    %5128 = vmatmul.mubr.f32.gmra.mrb[0].mxu0 %v5059
    %v5129 = vpop.f32.mrb[0].mxu0
    %v5130 = vadd.f32 0.0, %v5129
    %v5131 = vpop.f32.mrb[0].mxu0
    %5132 = vdwg.mxu0
    %v5133 = vsel %vm852, %v4401, 0
    %v5135 = vsel %vm852, %v4425, 0
    %5137 = vmatprep.subr.mxu0 0.0
    %5138 = vmatpush1.xpose.msra.mxu0 %v5135
    %5139 = vmatprep.subr.mxu0 0.0
    %5140 = vmatpush1.xpose.msra.mxu0 0.0
    %5141 = vmatprep.subr.mxu0 0.0
    %5142 = vmatpush1.xpose.msra.mxu0 0.0
    %5143 = vmatprep.subr.mxu0 0.0
    %5144 = vmatpush1.xpose.msra.mxu0 0.0
    %5145 = vmatprep.subr.mxu0 0.0
    %5146 = vmatpush1.xpose.msra.mxu0 0.0
    %5147 = vmatprep.subr.mxu0 0.0
    %5148 = vmatpush1.xpose.msra.mxu0 0.0
    %5149 = vmatprep.subr.mxu0 0.0
    %5150 = vmatpush1.xpose.msra.mxu0 0.0
    %5151 = vmatprep.subr.mxu0 0.0
    %5152 = vmatpush1.xpose.msra.mxu0 0.0
    %5153 = vmatprep.subr.mxu0 0.0
    %5154 = vmatpush1.xpose.msra.mxu0 0.0
    %5155 = vmatprep.subr.mxu0 0.0
    %5156 = vmatpush1.xpose.msra.mxu0 0.0
    %5157 = vmatprep.subr.mxu0 0.0
    %5158 = vmatpush1.xpose.msra.mxu0 0.0
    %5159 = vmatprep.subr.mxu0 0.0
    %5160 = vmatpush1.xpose.msra.mxu0 0.0
    %5161 = vmatprep.subr.mxu0 0.0
    %5162 = vmatpush1.xpose.msra.mxu0 0.0
    %5163 = vmatprep.subr.mxu0 0.0
    %5164 = vmatpush1.xpose.msra.mxu0 0.0
    %5165 = vmatprep.subr.mxu0 0.0
    %5166 = vmatpush1.xpose.msra.mxu0 0.0
    %5167 = vmatprep.subr.mxu0 0.0
    %5168 = vmatpush1.xpose.msra.mxu0 0.0
    %5169 = vmatprep.subr.mxu0 0.0
    %5170 = vmatpush1.xpose.msra.mxu0 0.0
    %5171 = vmatprep.subr.mxu0 0.0
    %5172 = vmatpush1.xpose.msra.mxu0 0.0
    %5173 = vmatprep.subr.mxu0 0.0
    %5174 = vmatpush1.xpose.msra.mxu0 0.0
    %5175 = vmatprep.subr.mxu0 0.0
    %5176 = vmatpush1.xpose.msra.mxu0 0.0
    %5177 = vmatprep.subr.mxu0 0.0
    %5178 = vmatpush1.xpose.msra.mxu0 0.0
    %5179 = vmatprep.subr.mxu0 0.0
    %5180 = vmatpush1.xpose.msra.mxu0 0.0
    %5181 = vmatprep.subr.mxu0 0.0
    %5182 = vmatpush1.xpose.msra.mxu0 0.0
    %5183 = vmatprep.subr.mxu0 0.0
    %5184 = vmatpush1.xpose.msra.mxu0 0.0
    %5185 = vmatprep.subr.mxu0 0.0
    %5186 = vmatpush1.xpose.msra.mxu0 0.0
    %5187 = vmatprep.subr.mxu0 0.0
    %5188 = vmatpush1.xpose.msra.mxu0 0.0
    %5189 = vmatprep.subr.mxu0 0.0
    %5190 = vmatpush1.xpose.msra.mxu0 0.0
    %5191 = vmatprep.subr.mxu0 0.0
    %5192 = vmatpush1.xpose.msra.mxu0 0.0
    %5193 = vmatprep.subr.mxu0 0.0
    %5194 = vmatpush1.xpose.msra.mxu0 0.0
    %5195 = vmatprep.subr.mxu0 0.0
    %5196 = vmatpush1.xpose.msra.mxu0 0.0
    %5197 = vmatprep.subr.mxu0 0.0
    %5198 = vmatpush1.xpose.msra.mxu0 0.0
    %5199 = vmatprep.subr.mxu0 0.0
    %5200 = vmatpush1.xpose.msra.mxu0 0.0
    %5201 = vmatprep.mubr.f32.mxu0 0.0
    %5202 = vmatmul.mubr.f32.gmra.mrb[0].mxu0 %v5133
    %v5203 = vpop.f32.mrb[0].mxu0
    %v5204 = vadd.f32 0.0, %v5203
    %v5205 = vpop.f32.mrb[0].mxu0
    %5206 = vdwg.mxu0
    %v5207 = vsel %vm852, %v3806, 0
    %v5209 = vsel %vm852, %v4088, 0
    %5211 = vmatprep.subr.mxu0 0.0
    %5212 = vmatpush1.xpose.msra.mxu0 %v5209
    %5213 = vmatprep.subr.mxu0 0.0
    %5214 = vmatpush1.xpose.msra.mxu0 0.0
    %5215 = vmatprep.subr.mxu0 0.0
    %5216 = vmatpush1.xpose.msra.mxu0 0.0
    %5217 = vmatprep.subr.mxu0 0.0
    %5218 = vmatpush1.xpose.msra.mxu0 0.0
    %5219 = vmatprep.subr.mxu0 0.0
    %5220 = vmatpush1.xpose.msra.mxu0 0.0
    %5221 = vmatprep.subr.mxu0 0.0
    %5222 = vmatpush1.xpose.msra.mxu0 0.0
    %5223 = vmatprep.subr.mxu0 0.0
    %5224 = vmatpush1.xpose.msra.mxu0 0.0
    %5225 = vmatprep.subr.mxu0 0.0
    %5226 = vmatpush1.xpose.msra.mxu0 0.0
    %5227 = vmatprep.subr.mxu0 0.0
    %5228 = vmatpush1.xpose.msra.mxu0 0.0
    %5229 = vmatprep.subr.mxu0 0.0
    %5230 = vmatpush1.xpose.msra.mxu0 0.0
    %5231 = vmatprep.subr.mxu0 0.0
    %5232 = vmatpush1.xpose.msra.mxu0 0.0
    %5233 = vmatprep.subr.mxu0 0.0
    %5234 = vmatpush1.xpose.msra.mxu0 0.0
    %5235 = vmatprep.subr.mxu0 0.0
    %5236 = vmatpush1.xpose.msra.mxu0 0.0
    %5237 = vmatprep.subr.mxu0 0.0
    %5238 = vmatpush1.xpose.msra.mxu0 0.0
    %5239 = vmatprep.subr.mxu0 0.0
    %5240 = vmatpush1.xpose.msra.mxu0 0.0
    %5241 = vmatprep.subr.mxu0 0.0
    %5242 = vmatpush1.xpose.msra.mxu0 0.0
    %5243 = vmatprep.subr.mxu0 0.0
    %5244 = vmatpush1.xpose.msra.mxu0 0.0
    %5245 = vmatprep.subr.mxu0 0.0
    %5246 = vmatpush1.xpose.msra.mxu0 0.0
    %5247 = vmatprep.subr.mxu0 0.0
    %5248 = vmatpush1.xpose.msra.mxu0 0.0
    %5249 = vmatprep.subr.mxu0 0.0
    %5250 = vmatpush1.xpose.msra.mxu0 0.0
    %5251 = vmatprep.subr.mxu0 0.0
    %5252 = vmatpush1.xpose.msra.mxu0 0.0
    %5253 = vmatprep.subr.mxu0 0.0
    %5254 = vmatpush1.xpose.msra.mxu0 0.0
    %5255 = vmatprep.subr.mxu0 0.0
    %5256 = vmatpush1.xpose.msra.mxu0 0.0
    %5257 = vmatprep.subr.mxu0 0.0
    %5258 = vmatpush1.xpose.msra.mxu0 0.0
    %5259 = vmatprep.subr.mxu0 0.0
    %5260 = vmatpush1.xpose.msra.mxu0 0.0
    %5261 = vmatprep.subr.mxu0 0.0
    %5262 = vmatpush1.xpose.msra.mxu0 0.0
    %5263 = vmatprep.subr.mxu0 0.0
    %5264 = vmatpush1.xpose.msra.mxu0 0.0
    %5265 = vmatprep.subr.mxu0 0.0
    %5266 = vmatpush1.xpose.msra.mxu0 0.0
    %5267 = vmatprep.subr.mxu0 0.0
    %5268 = vmatpush1.xpose.msra.mxu0 0.0
    %5269 = vmatprep.subr.mxu0 0.0
    %5270 = vmatpush1.xpose.msra.mxu0 0.0
    %5271 = vmatprep.subr.mxu0 0.0
    %5272 = vmatpush1.xpose.msra.mxu0 0.0
    %5273 = vmatprep.subr.mxu0 0.0
    %5274 = vmatpush1.xpose.msra.mxu0 0.0
    %5275 = vmatprep.mubr.f32.mxu0 0.0
    %5276 = vmatmul.mubr.f32.gmra.mrb[0].mxu0 %v5207
    %v5277 = vpop.f32.mrb[0].mxu0
    %v5278 = vadd.f32 0.0, %v5277
    %v5279 = vpop.f32.mrb[0].mxu0
    %5280 = vdwg.mxu0
    %v5281 = vsel %vm852, %v4404, 0
    %v5283 = vsel %vm852, %v4428, 0
    %5285 = vmatprep.subr.mxu0 0.0
    %5286 = vmatpush1.xpose.msra.mxu0 %v5283
    %5287 = vmatprep.subr.mxu0 0.0
    %5288 = vmatpush1.xpose.msra.mxu0 0.0
    %5289 = vmatprep.subr.mxu0 0.0
    %5290 = vmatpush1.xpose.msra.mxu0 0.0
    %5291 = vmatprep.subr.mxu0 0.0
    %5292 = vmatpush1.xpose.msra.mxu0 0.0
    %5293 = vmatprep.subr.mxu0 0.0
    %5294 = vmatpush1.xpose.msra.mxu0 0.0
    %5295 = vmatprep.subr.mxu0 0.0
    %5296 = vmatpush1.xpose.msra.mxu0 0.0
    %5297 = vmatprep.subr.mxu0 0.0
    %5298 = vmatpush1.xpose.msra.mxu0 0.0
    %5299 = vmatprep.subr.mxu0 0.0
    %5300 = vmatpush1.xpose.msra.mxu0 0.0
    %5301 = vmatprep.subr.mxu0 0.0
    %5302 = vmatpush1.xpose.msra.mxu0 0.0
    %5303 = vmatprep.subr.mxu0 0.0
    %5304 = vmatpush1.xpose.msra.mxu0 0.0
    %5305 = vmatprep.subr.mxu0 0.0
    %5306 = vmatpush1.xpose.msra.mxu0 0.0
    %5307 = vmatprep.subr.mxu0 0.0
    %5308 = vmatpush1.xpose.msra.mxu0 0.0
    %5309 = vmatprep.subr.mxu0 0.0
    %5310 = vmatpush1.xpose.msra.mxu0 0.0
    %5311 = vmatprep.subr.mxu0 0.0
    %5312 = vmatpush1.xpose.msra.mxu0 0.0
    %5313 = vmatprep.subr.mxu0 0.0
    %5314 = vmatpush1.xpose.msra.mxu0 0.0
    %5315 = vmatprep.subr.mxu0 0.0
    %5316 = vmatpush1.xpose.msra.mxu0 0.0
    %5317 = vmatprep.subr.mxu0 0.0
    %5318 = vmatpush1.xpose.msra.mxu0 0.0
    %5319 = vmatprep.subr.mxu0 0.0
    %5320 = vmatpush1.xpose.msra.mxu0 0.0
    %5321 = vmatprep.subr.mxu0 0.0
    %5322 = vmatpush1.xpose.msra.mxu0 0.0
    %5323 = vmatprep.subr.mxu0 0.0
    %5324 = vmatpush1.xpose.msra.mxu0 0.0
    %5325 = vmatprep.subr.mxu0 0.0
    %5326 = vmatpush1.xpose.msra.mxu0 0.0
    %5327 = vmatprep.subr.mxu0 0.0
    %5328 = vmatpush1.xpose.msra.mxu0 0.0
    %5329 = vmatprep.subr.mxu0 0.0
    %5330 = vmatpush1.xpose.msra.mxu0 0.0
    %5331 = vmatprep.subr.mxu0 0.0
    %5332 = vmatpush1.xpose.msra.mxu0 0.0
    %5333 = vmatprep.subr.mxu0 0.0
    %5334 = vmatpush1.xpose.msra.mxu0 0.0
    %5335 = vmatprep.subr.mxu0 0.0
    %5336 = vmatpush1.xpose.msra.mxu0 0.0
    %5337 = vmatprep.subr.mxu0 0.0
    %5338 = vmatpush1.xpose.msra.mxu0 0.0
    %5339 = vmatprep.subr.mxu0 0.0
    %5340 = vmatpush1.xpose.msra.mxu0 0.0
    %5341 = vmatprep.subr.mxu0 0.0
    %5342 = vmatpush1.xpose.msra.mxu0 0.0
    %5343 = vmatprep.subr.mxu0 0.0
    %5344 = vmatpush1.xpose.msra.mxu0 0.0
    %5345 = vmatprep.subr.mxu0 0.0
    %5346 = vmatpush1.xpose.msra.mxu0 0.0
    %5347 = vmatprep.subr.mxu0 0.0
    %5348 = vmatpush1.xpose.msra.mxu0 0.0
    %5349 = vmatprep.mubr.f32.mxu0 0.0
    %5350 = vmatmul.mubr.f32.gmra.mrb[0].mxu0 %v5281
    %v5351 = vpop.f32.mrb[0].mxu0
    %v5352 = vadd.f32 0.0, %v5351
    %v5353 = vpop.f32.mrb[0].mxu0
    %5354 = vdwg.mxu0
    %v5355 = vsel %vm852, %v3881, 0
    %v5357 = vsel %vm852, %v4163, 0
    %5359 = vmatprep.subr.mxu0 0.0
    %5360 = vmatpush1.xpose.msra.mxu0 %v5357
    %5361 = vmatprep.subr.mxu0 0.0
    %5362 = vmatpush1.xpose.msra.mxu0 0.0
    %5363 = vmatprep.subr.mxu0 0.0
    %5364 = vmatpush1.xpose.msra.mxu0 0.0
    %5365 = vmatprep.subr.mxu0 0.0
    %5366 = vmatpush1.xpose.msra.mxu0 0.0
    %5367 = vmatprep.subr.mxu0 0.0
    %5368 = vmatpush1.xpose.msra.mxu0 0.0
    %5369 = vmatprep.subr.mxu0 0.0
    %5370 = vmatpush1.xpose.msra.mxu0 0.0
    %5371 = vmatprep.subr.mxu0 0.0
    %5372 = vmatpush1.xpose.msra.mxu0 0.0
    %5373 = vmatprep.subr.mxu0 0.0
    %5374 = vmatpush1.xpose.msra.mxu0 0.0
    %5375 = vmatprep.subr.mxu0 0.0
    %5376 = vmatpush1.xpose.msra.mxu0 0.0
    %5377 = vmatprep.subr.mxu0 0.0
    %5378 = vmatpush1.xpose.msra.mxu0 0.0
    %5379 = vmatprep.subr.mxu0 0.0
    %5380 = vmatpush1.xpose.msra.mxu0 0.0
    %5381 = vmatprep.subr.mxu0 0.0
    %5382 = vmatpush1.xpose.msra.mxu0 0.0
    %5383 = vmatprep.subr.mxu0 0.0
    %5384 = vmatpush1.xpose.msra.mxu0 0.0
    %5385 = vmatprep.subr.mxu0 0.0
    %5386 = vmatpush1.xpose.msra.mxu0 0.0
    %5387 = vmatprep.subr.mxu0 0.0
    %5388 = vmatpush1.xpose.msra.mxu0 0.0
    %5389 = vmatprep.subr.mxu0 0.0
    %5390 = vmatpush1.xpose.msra.mxu0 0.0
    %5391 = vmatprep.subr.mxu0 0.0
    %5392 = vmatpush1.xpose.msra.mxu0 0.0
    %5393 = vmatprep.subr.mxu0 0.0
    %5394 = vmatpush1.xpose.msra.mxu0 0.0
    %5395 = vmatprep.subr.mxu0 0.0
    %5396 = vmatpush1.xpose.msra.mxu0 0.0
    %5397 = vmatprep.subr.mxu0 0.0
    %5398 = vmatpush1.xpose.msra.mxu0 0.0
    %5399 = vmatprep.subr.mxu0 0.0
    %5400 = vmatpush1.xpose.msra.mxu0 0.0
    %5401 = vmatprep.subr.mxu0 0.0
    %5402 = vmatpush1.xpose.msra.mxu0 0.0
    %5403 = vmatprep.subr.mxu0 0.0
    %5404 = vmatpush1.xpose.msra.mxu0 0.0
    %5405 = vmatprep.subr.mxu0 0.0
    %5406 = vmatpush1.xpose.msra.mxu0 0.0
    %5407 = vmatprep.subr.mxu0 0.0
    %5408 = vmatpush1.xpose.msra.mxu0 0.0
    %5409 = vmatprep.subr.mxu0 0.0
    %5410 = vmatpush1.xpose.msra.mxu0 0.0
    %5411 = vmatprep.subr.mxu0 0.0
    %5412 = vmatpush1.xpose.msra.mxu0 0.0
    %5413 = vmatprep.subr.mxu0 0.0
    %5414 = vmatpush1.xpose.msra.mxu0 0.0
    %5415 = vmatprep.subr.mxu0 0.0
    %5416 = vmatpush1.xpose.msra.mxu0 0.0
    %5417 = vmatprep.subr.mxu0 0.0
    %5418 = vmatpush1.xpose.msra.mxu0 0.0
    %5419 = vmatprep.subr.mxu0 0.0
    %5420 = vmatpush1.xpose.msra.mxu0 0.0
    %5421 = vmatprep.subr.mxu0 0.0
    %5422 = vmatpush1.xpose.msra.mxu0 0.0
    %5423 = vmatprep.mubr.f32.mxu0 0.0
    %5424 = vmatmul.mubr.f32.gmra.mrb[0].mxu0 %v5355
    %v5425 = vpop.f32.mrb[0].mxu0
    %v5426 = vadd.f32 0.0, %v5425
    %v5427 = vpop.f32.mrb[0].mxu0
    %5428 = vdwg.mxu0
    %v5429 = vsel %vm852, %v4407, 0
    %v5431 = vsel %vm852, %v4431, 0
    %5433 = vmatprep.subr.mxu0 0.0
    %5434 = vmatpush1.xpose.msra.mxu0 %v5431
    %5435 = vmatprep.subr.mxu0 0.0
    %5436 = vmatpush1.xpose.msra.mxu0 0.0
    %5437 = vmatprep.subr.mxu0 0.0
    %5438 = vmatpush1.xpose.msra.mxu0 0.0
    %5439 = vmatprep.subr.mxu0 0.0
    %5440 = vmatpush1.xpose.msra.mxu0 0.0
    %5441 = vmatprep.subr.mxu0 0.0
    %5442 = vmatpush1.xpose.msra.mxu0 0.0
    %5443 = vmatprep.subr.mxu0 0.0
    %5444 = vmatpush1.xpose.msra.mxu0 0.0
    %5445 = vmatprep.subr.mxu0 0.0
    %5446 = vmatpush1.xpose.msra.mxu0 0.0
    %5447 = vmatprep.subr.mxu0 0.0
    %5448 = vmatpush1.xpose.msra.mxu0 0.0
    %5449 = vmatprep.subr.mxu0 0.0
    %5450 = vmatpush1.xpose.msra.mxu0 0.0
    %5451 = vmatprep.subr.mxu0 0.0
    %5452 = vmatpush1.xpose.msra.mxu0 0.0
    %5453 = vmatprep.subr.mxu0 0.0
    %5454 = vmatpush1.xpose.msra.mxu0 0.0
    %5455 = vmatprep.subr.mxu0 0.0
    %5456 = vmatpush1.xpose.msra.mxu0 0.0
    %5457 = vmatprep.subr.mxu0 0.0
    %5458 = vmatpush1.xpose.msra.mxu0 0.0
    %5459 = vmatprep.subr.mxu0 0.0
    %5460 = vmatpush1.xpose.msra.mxu0 0.0
    %5461 = vmatprep.subr.mxu0 0.0
    %5462 = vmatpush1.xpose.msra.mxu0 0.0
    %5463 = vmatprep.subr.mxu0 0.0
    %5464 = vmatpush1.xpose.msra.mxu0 0.0
    %5465 = vmatprep.subr.mxu0 0.0
    %5466 = vmatpush1.xpose.msra.mxu0 0.0
    %5467 = vmatprep.subr.mxu0 0.0
    %5468 = vmatpush1.xpose.msra.mxu0 0.0
    %5469 = vmatprep.subr.mxu0 0.0
    %5470 = vmatpush1.xpose.msra.mxu0 0.0
    %5471 = vmatprep.subr.mxu0 0.0
    %5472 = vmatpush1.xpose.msra.mxu0 0.0
    %5473 = vmatprep.subr.mxu0 0.0
    %5474 = vmatpush1.xpose.msra.mxu0 0.0
    %5475 = vmatprep.subr.mxu0 0.0
    %5476 = vmatpush1.xpose.msra.mxu0 0.0
    %5477 = vmatprep.subr.mxu0 0.0
    %5478 = vmatpush1.xpose.msra.mxu0 0.0
    %5479 = vmatprep.subr.mxu0 0.0
    %5480 = vmatpush1.xpose.msra.mxu0 0.0
    %5481 = vmatprep.subr.mxu0 0.0
    %5482 = vmatpush1.xpose.msra.mxu0 0.0
    %5483 = vmatprep.subr.mxu0 0.0
    %5484 = vmatpush1.xpose.msra.mxu0 0.0
    %5485 = vmatprep.subr.mxu0 0.0
    %5486 = vmatpush1.xpose.msra.mxu0 0.0
    %5487 = vmatprep.subr.mxu0 0.0
    %5488 = vmatpush1.xpose.msra.mxu0 0.0
    %5489 = vmatprep.subr.mxu0 0.0
    %5490 = vmatpush1.xpose.msra.mxu0 0.0
    %5491 = vmatprep.subr.mxu0 0.0
    %5492 = vmatpush1.xpose.msra.mxu0 0.0
    %5493 = vmatprep.subr.mxu0 0.0
    %5494 = vmatpush1.xpose.msra.mxu0 0.0
    %5495 = vmatprep.subr.mxu0 0.0
    %5496 = vmatpush1.xpose.msra.mxu0 0.0
    %5497 = vmatprep.mubr.f32.mxu0 0.0
    %5498 = vmatmul.mubr.f32.gmra.mrb[0].mxu0 %v5429
    %v5499 = vpop.f32.mrb[0].mxu0
    %v5500 = vadd.f32 0.0, %v5499
    %v5501 = vpop.f32.mrb[0].mxu0
    %5502 = vdwg.mxu0
    %v5503 = vsel %vm852, %v3883, 0
    %v5505 = vsel %vm852, %v4165, 0
    %5507 = vmatprep.subr.mxu0 0.0
    %5508 = vmatpush1.xpose.msra.mxu0 %v5505
    %5509 = vmatprep.subr.mxu0 0.0
    %5510 = vmatpush1.xpose.msra.mxu0 0.0
    %5511 = vmatprep.subr.mxu0 0.0
    %5512 = vmatpush1.xpose.msra.mxu0 0.0
    %5513 = vmatprep.subr.mxu0 0.0
    %5514 = vmatpush1.xpose.msra.mxu0 0.0
    %5515 = vmatprep.subr.mxu0 0.0
    %5516 = vmatpush1.xpose.msra.mxu0 0.0
    %5517 = vmatprep.subr.mxu0 0.0
    %5518 = vmatpush1.xpose.msra.mxu0 0.0
    %5519 = vmatprep.subr.mxu0 0.0
    %5520 = vmatpush1.xpose.msra.mxu0 0.0
    %5521 = vmatprep.subr.mxu0 0.0
    %5522 = vmatpush1.xpose.msra.mxu0 0.0
    %5523 = vmatprep.subr.mxu0 0.0
    %5524 = vmatpush1.xpose.msra.mxu0 0.0
    %5525 = vmatprep.subr.mxu0 0.0
    %5526 = vmatpush1.xpose.msra.mxu0 0.0
    %5527 = vmatprep.subr.mxu0 0.0
    %5528 = vmatpush1.xpose.msra.mxu0 0.0
    %5529 = vmatprep.subr.mxu0 0.0
    %5530 = vmatpush1.xpose.msra.mxu0 0.0
    %5531 = vmatprep.subr.mxu0 0.0
    %5532 = vmatpush1.xpose.msra.mxu0 0.0
    %5533 = vmatprep.subr.mxu0 0.0
    %5534 = vmatpush1.xpose.msra.mxu0 0.0
    %5535 = vmatprep.subr.mxu0 0.0
    %5536 = vmatpush1.xpose.msra.mxu0 0.0
    %5537 = vmatprep.subr.mxu0 0.0
    %5538 = vmatpush1.xpose.msra.mxu0 0.0
    %5539 = vmatprep.subr.mxu0 0.0
    %5540 = vmatpush1.xpose.msra.mxu0 0.0
    %5541 = vmatprep.subr.mxu0 0.0
    %5542 = vmatpush1.xpose.msra.mxu0 0.0
    %5543 = vmatprep.subr.mxu0 0.0
    %5544 = vmatpush1.xpose.msra.mxu0 0.0
    %5545 = vmatprep.subr.mxu0 0.0
    %5546 = vmatpush1.xpose.msra.mxu0 0.0
    %5547 = vmatprep.subr.mxu0 0.0
    %5548 = vmatpush1.xpose.msra.mxu0 0.0
    %5549 = vmatprep.subr.mxu0 0.0
    %5550 = vmatpush1.xpose.msra.mxu0 0.0
    %5551 = vmatprep.subr.mxu0 0.0
    %5552 = vmatpush1.xpose.msra.mxu0 0.0
    %5553 = vmatprep.subr.mxu0 0.0
    %5554 = vmatpush1.xpose.msra.mxu0 0.0
    %5555 = vmatprep.subr.mxu0 0.0
    %5556 = vmatpush1.xpose.msra.mxu0 0.0
    %5557 = vmatprep.subr.mxu0 0.0
    %5558 = vmatpush1.xpose.msra.mxu0 0.0
    %5559 = vmatprep.subr.mxu0 0.0
    %5560 = vmatpush1.xpose.msra.mxu0 0.0
    %5561 = vmatprep.subr.mxu0 0.0
    %5562 = vmatpush1.xpose.msra.mxu0 0.0
    %5563 = vmatprep.subr.mxu0 0.0
    %5564 = vmatpush1.xpose.msra.mxu0 0.0
    %5565 = vmatprep.subr.mxu0 0.0
    %5566 = vmatpush1.xpose.msra.mxu0 0.0
    %5567 = vmatprep.subr.mxu0 0.0
    %5568 = vmatpush1.xpose.msra.mxu0 0.0
    %5569 = vmatprep.subr.mxu0 0.0
    %5570 = vmatpush1.xpose.msra.mxu0 0.0
    %5571 = vmatprep.mubr.f32.mxu0 0.0
    %5572 = vmatmul.mubr.f32.gmra.mrb[0].mxu0 %v5503
    %v5573 = vpop.f32.mrb[0].mxu0
    %v5574 = vadd.f32 0.0, %v5573
    %v5575 = vpop.f32.mrb[0].mxu0
    %5576 = vdwg.mxu0
    %v5577 = vsel %vm852, %v4410, 0
    %v5579 = vsel %vm852, %v4434, 0
    %5581 = vmatprep.subr.mxu0 0.0
    %5582 = vmatpush1.xpose.msra.mxu0 %v5579
    %5583 = vmatprep.subr.mxu0 0.0
    %5584 = vmatpush1.xpose.msra.mxu0 0.0
    %5585 = vmatprep.subr.mxu0 0.0
    %5586 = vmatpush1.xpose.msra.mxu0 0.0
    %5587 = vmatprep.subr.mxu0 0.0
    %5588 = vmatpush1.xpose.msra.mxu0 0.0
    %5589 = vmatprep.subr.mxu0 0.0
    %5590 = vmatpush1.xpose.msra.mxu0 0.0
    %5591 = vmatprep.subr.mxu0 0.0
    %5592 = vmatpush1.xpose.msra.mxu0 0.0
    %5593 = vmatprep.subr.mxu0 0.0
    %5594 = vmatpush1.xpose.msra.mxu0 0.0
    %5595 = vmatprep.subr.mxu0 0.0
    %5596 = vmatpush1.xpose.msra.mxu0 0.0
    %5597 = vmatprep.subr.mxu0 0.0
    %5598 = vmatpush1.xpose.msra.mxu0 0.0
    %5599 = vmatprep.subr.mxu0 0.0
    %5600 = vmatpush1.xpose.msra.mxu0 0.0
    %5601 = vmatprep.subr.mxu0 0.0
    %5602 = vmatpush1.xpose.msra.mxu0 0.0
    %5603 = vmatprep.subr.mxu0 0.0
    %5604 = vmatpush1.xpose.msra.mxu0 0.0
    %5605 = vmatprep.subr.mxu0 0.0
    %5606 = vmatpush1.xpose.msra.mxu0 0.0
    %5607 = vmatprep.subr.mxu0 0.0
    %5608 = vmatpush1.xpose.msra.mxu0 0.0
    %5609 = vmatprep.subr.mxu0 0.0
    %5610 = vmatpush1.xpose.msra.mxu0 0.0
    %5611 = vmatprep.subr.mxu0 0.0
    %5612 = vmatpush1.xpose.msra.mxu0 0.0
    %5613 = vmatprep.subr.mxu0 0.0
    %5614 = vmatpush1.xpose.msra.mxu0 0.0
    %5615 = vmatprep.subr.mxu0 0.0
    %5616 = vmatpush1.xpose.msra.mxu0 0.0
    %5617 = vmatprep.subr.mxu0 0.0
    %5618 = vmatpush1.xpose.msra.mxu0 0.0
    %5619 = vmatprep.subr.mxu0 0.0
    %5620 = vmatpush1.xpose.msra.mxu0 0.0
    %5621 = vmatprep.subr.mxu0 0.0
    %5622 = vmatpush1.xpose.msra.mxu0 0.0
    %5623 = vmatprep.subr.mxu0 0.0
    %5624 = vmatpush1.xpose.msra.mxu0 0.0
    %5625 = vmatprep.subr.mxu0 0.0
    %5626 = vmatpush1.xpose.msra.mxu0 0.0
    %5627 = vmatprep.subr.mxu0 0.0
    %5628 = vmatpush1.xpose.msra.mxu0 0.0
    %5629 = vmatprep.subr.mxu0 0.0
    %5630 = vmatpush1.xpose.msra.mxu0 0.0
    %5631 = vmatprep.subr.mxu0 0.0
    %5632 = vmatpush1.xpose.msra.mxu0 0.0
    %5633 = vmatprep.subr.mxu0 0.0
    %5634 = vmatpush1.xpose.msra.mxu0 0.0
    %5635 = vmatprep.subr.mxu0 0.0
    %5636 = vmatpush1.xpose.msra.mxu0 0.0
    %5637 = vmatprep.subr.mxu0 0.0
    %5638 = vmatpush1.xpose.msra.mxu0 0.0
    %5639 = vmatprep.subr.mxu0 0.0
    %5640 = vmatpush1.xpose.msra.mxu0 0.0
    %5641 = vmatprep.subr.mxu0 0.0
    %5642 = vmatpush1.xpose.msra.mxu0 0.0
    %5643 = vmatprep.subr.mxu0 0.0
    %5644 = vmatpush1.xpose.msra.mxu0 0.0
    %5645 = vmatprep.mubr.f32.mxu0 0.0
    %5646 = vmatmul.mubr.f32.gmra.mrb[0].mxu0 %v5577
    %v5647 = vpop.f32.mrb[0].mxu0
    %v5648 = vadd.f32 0.0, %v5647
    %v5649 = vpop.f32.mrb[0].mxu0
    %5650 = vdwg.mxu0
    %vm5651 = vcmp.gt.f32.partialorder %v4321, 0.5
    %vm5652 = vcmp.gt.f32.partialorder %v4322, 0.5
    %v5653 = vsel %vm5651, 1, 0
    %v5654 = vsel %vm5652, 1, 0
    %vm5655 = vcmp.eq.s32.totalorder %v5653, 1
    %vm5656 = vcmp.eq.s32.totalorder %v5654, 1
    %v5657 = vsel %vm5655, -10000.0, %v4538
    %v5658 = vsel %vm5655, -10000.0, %v4612
    %v5659 = vsel %vm5655, -10000.0, %v4686
    %v5660 = vsel %vm5655, -10000.0, %v4760
    %v5661 = vsel %vm5655, -10000.0, %v4834
    %v5662 = vsel %vm5655, -10000.0, %v4908
    %v5663 = vsel %vm5655, -10000.0, %v4982
    %v5664 = vsel %vm5655, -10000.0, %v5056
    %v5665 = vsel %vm5656, -10000.0, %v5130
    %v5666 = vsel %vm5656, -10000.0, %v5204
    %v5667 = vsel %vm5656, -10000.0, %v5278
    %v5668 = vsel %vm5656, -10000.0, %v5352
    %v5669 = vsel %vm5656, -10000.0, %v5426
    %v5670 = vsel %vm5656, -10000.0, %v5500
    %v5671 = vsel %vm5656, -10000.0, %v5574
    %v5672 = vsel %vm5656, -10000.0, %v5648
    %v5673 = vsel %vm2059, %v5657, -inf
    %5674 = vmax.xlane.f32.xlu0 %v5673
    %v5675 = vpop.xlane.xlu0 %5674
    %v5676 = vsel %vm2059, %v5658, -inf
    %5677 = vmax.xlane.f32.xlu0 %v5676
    %v5678 = vpop.xlane.xlu0 %5677
    %v5679 = vsel %vm2059, %v5659, -inf
    %5680 = vmax.xlane.f32.xlu0 %v5679
    %v5681 = vpop.xlane.xlu0 %5680
    %v5682 = vsel %vm2059, %v5660, -inf
    %5683 = vmax.xlane.f32.xlu0 %v5682
    %v5684 = vpop.xlane.xlu0 %5683
    %v5685 = vsel %vm2059, %v5661, -inf
    %5686 = vmax.xlane.f32.xlu0 %v5685
    %v5687 = vpop.xlane.xlu0 %5686
    %v5688 = vsel %vm2059, %v5662, -inf
    %5689 = vmax.xlane.f32.xlu0 %v5688
    %v5690 = vpop.xlane.xlu0 %5689
    %v5691 = vsel %vm2059, %v5663, -inf
    %5692 = vmax.xlane.f32.xlu0 %v5691
    %v5693 = vpop.xlane.xlu0 %5692
    %v5694 = vsel %vm2059, %v5664, -inf
    %5695 = vmax.xlane.f32.xlu0 %v5694
    %v5696 = vpop.xlane.xlu0 %5695
    %v5697 = vsel %vm2059, %v5665, -inf
    %5698 = vmax.xlane.f32.xlu0 %v5697
    %v5699 = vpop.xlane.xlu0 %5698
    %v5700 = vsel %vm2059, %v5666, -inf
    %5701 = vmax.xlane.f32.xlu0 %v5700
    %v5702 = vpop.xlane.xlu0 %5701
    %v5703 = vsel %vm2059, %v5667, -inf
    %5704 = vmax.xlane.f32.xlu0 %v5703
    %v5705 = vpop.xlane.xlu0 %5704
    %v5706 = vsel %vm2059, %v5668, -inf
    %5707 = vmax.xlane.f32.xlu0 %v5706
    %v5708 = vpop.xlane.xlu0 %5707
    %v5709 = vsel %vm2059, %v5669, -inf
    %5710 = vmax.xlane.f32.xlu0 %v5709
    %v5711 = vpop.xlane.xlu0 %5710
    %v5712 = vsel %vm2059, %v5670, -inf
    %5713 = vmax.xlane.f32.xlu0 %v5712
    %v5714 = vpop.xlane.xlu0 %5713
    %v5715 = vsel %vm2059, %v5671, -inf
    %5716 = vmax.xlane.f32.xlu0 %v5715
    %v5717 = vpop.xlane.xlu0 %5716
    %v5718 = vsel %vm2059, %v5672, -inf
    %5719 = vmax.xlane.f32.xlu0 %v5718
    %v5720 = vpop.xlane.xlu0 %5719
    %v5721 = vsub.f32 %v5657, %v5675
    %v5722 = vsub.f32 %v5658, %v5678
    %v5723 = vsub.f32 %v5659, %v5681
    %v5724 = vsub.f32 %v5660, %v5684
    %v5725 = vsub.f32 %v5661, %v5687
    %v5726 = vsub.f32 %v5662, %v5690
    %v5727 = vsub.f32 %v5663, %v5693
    %v5728 = vsub.f32 %v5664, %v5696
    %v5729 = vsub.f32 %v5665, %v5699
    %v5730 = vsub.f32 %v5666, %v5702
    %v5731 = vsub.f32 %v5667, %v5705
    %v5732 = vsub.f32 %v5668, %v5708
    %v5733 = vsub.f32 %v5669, %v5711
    %v5734 = vsub.f32 %v5670, %v5714
    %v5735 = vsub.f32 %v5671, %v5717
    %v5736 = vsub.f32 %v5672, %v5720
    %v5737 = vmul.f32 %v5721, 1.442695
    %v5738 = vpow.pop %v5737
    %v5739 = vmul.f32 %v5722, 1.442695
    %v5740 = vpow.pop %v5739
    %v5741 = vmul.f32 %v5723, 1.442695
    %v5742 = vpow.pop %v5741
    %v5743 = vmul.f32 %v5724, 1.442695
    %v5744 = vpow.pop %v5743
    %v5745 = vmul.f32 %v5725, 1.442695
    %v5746 = vpow.pop %v5745
    %v5747 = vmul.f32 %v5726, 1.442695
    %v5748 = vpow.pop %v5747
    %v5749 = vmul.f32 %v5727, 1.442695
    %v5750 = vpow.pop %v5749
    %v5751 = vmul.f32 %v5728, 1.442695
    %v5752 = vpow.pop %v5751
    %v5753 = vmul.f32 %v5729, 1.442695
    %v5754 = vpow.pop %v5753
    %v5755 = vmul.f32 %v5730, 1.442695
    %v5756 = vpow.pop %v5755
    %v5757 = vmul.f32 %v5731, 1.442695
    %v5758 = vpow.pop %v5757
    %v5759 = vmul.f32 %v5732, 1.442695
    %v5760 = vpow.pop %v5759
    %v5761 = vmul.f32 %v5733, 1.442695
    %v5762 = vpow.pop %v5761
    %v5763 = vmul.f32 %v5734, 1.442695
    %v5764 = vpow.pop %v5763
    %v5765 = vmul.f32 %v5735, 1.442695
    %v5766 = vpow.pop %v5765
    %v5767 = vmul.f32 %v5736, 1.442695
    %v5768 = vpow.pop %v5767
    %v5769 = vsel %vm2059, %v5738, 0.0
    %5770 = vadd.xlane.f32.xlu0 %v5769
    %v5771 = vpop.xlane.xlu0 %5770
    %v5772 = vsel %vm2059, %v5740, 0.0
    %5773 = vadd.xlane.f32.xlu0 %v5772
    %v5774 = vpop.xlane.xlu0 %5773
    %v5775 = vsel %vm2059, %v5742, 0.0
    %5776 = vadd.xlane.f32.xlu0 %v5775
    %v5777 = vpop.xlane.xlu0 %5776
    %v5778 = vsel %vm2059, %v5744, 0.0
    %5779 = vadd.xlane.f32.xlu0 %v5778
    %v5780 = vpop.xlane.xlu0 %5779
    %v5781 = vsel %vm2059, %v5746, 0.0
    %5782 = vadd.xlane.f32.xlu0 %v5781
    %v5783 = vpop.xlane.xlu0 %5782
    %v5784 = vsel %vm2059, %v5748, 0.0
    %5785 = vadd.xlane.f32.xlu0 %v5784
    %v5786 = vpop.xlane.xlu0 %5785
    %v5787 = vsel %vm2059, %v5750, 0.0
    %5788 = vadd.xlane.f32.xlu0 %v5787
    %v5789 = vpop.xlane.xlu0 %5788
    %v5790 = vsel %vm2059, %v5752, 0.0
    %5791 = vadd.xlane.f32.xlu0 %v5790
    %v5792 = vpop.xlane.xlu0 %5791
    %v5793 = vsel %vm2059, %v5754, 0.0
    %5794 = vadd.xlane.f32.xlu0 %v5793
    %v5795 = vpop.xlane.xlu0 %5794
    %v5796 = vsel %vm2059, %v5756, 0.0
    %5797 = vadd.xlane.f32.xlu0 %v5796
    %v5798 = vpop.xlane.xlu0 %5797
    %v5799 = vsel %vm2059, %v5758, 0.0
    %5800 = vadd.xlane.f32.xlu0 %v5799
    %v5801 = vpop.xlane.xlu0 %5800
    %v5802 = vsel %vm2059, %v5760, 0.0
    %5803 = vadd.xlane.f32.xlu0 %v5802
    %v5804 = vpop.xlane.xlu0 %5803
    %v5805 = vsel %vm2059, %v5762, 0.0
    %5806 = vadd.xlane.f32.xlu0 %v5805
    %v5807 = vpop.xlane.xlu0 %5806
    %v5808 = vsel %vm2059, %v5764, 0.0
    %5809 = vadd.xlane.f32.xlu0 %v5808
    %v5810 = vpop.xlane.xlu0 %5809
    %v5811 = vsel %vm2059, %v5766, 0.0
    %5812 = vadd.xlane.f32.xlu0 %v5811
    %v5813 = vpop.xlane.xlu0 %5812
    %v5814 = vsel %vm2059, %v5768, 0.0
    %5815 = vadd.xlane.f32.xlu0 %v5814
    %v5816 = vpop.xlane.xlu0 %5815
    %v5817 = vrcp.pop %v5771
    %v5818 = vmul.f32 %v5738, %v5817
    %v5819 = vrcp.pop %v5774
    %v5820 = vmul.f32 %v5740, %v5819
    %v5821 = vrcp.pop %v5777
    %v5822 = vmul.f32 %v5742, %v5821
    %v5823 = vrcp.pop %v5780
    %v5824 = vmul.f32 %v5744, %v5823
    %v5825 = vrcp.pop %v5783
    %v5826 = vmul.f32 %v5746, %v5825
    %v5827 = vrcp.pop %v5786
    %v5828 = vmul.f32 %v5748, %v5827
    %v5829 = vrcp.pop %v5789
    %v5830 = vmul.f32 %v5750, %v5829
    %v5831 = vrcp.pop %v5792
    %v5832 = vmul.f32 %v5752, %v5831
    %v5833 = vrcp.pop %v5795
    %v5834 = vmul.f32 %v5754, %v5833
    %v5835 = vrcp.pop %v5798
    %v5836 = vmul.f32 %v5756, %v5835
    %v5837 = vrcp.pop %v5801
    %v5838 = vmul.f32 %v5758, %v5837
    %v5839 = vrcp.pop %v5804
    %v5840 = vmul.f32 %v5760, %v5839
    %v5841 = vrcp.pop %v5807
    %v5842 = vmul.f32 %v5762, %v5841
    %v5843 = vrcp.pop %v5810
    %v5844 = vmul.f32 %v5764, %v5843
    %v5845 = vrcp.pop %v5813
    %v5846 = vmul.f32 %v5766, %v5845
    %v5847 = vrcp.pop %v5816
    %v5848 = vmul.f32 %v5768, %v5847
    %5849 = vst [vmem:[#allocation7] sm:$0xff] 0.0
    %5850 = vst [vmem:[#allocation7 + $0x8] sm:$0xff] 0.0
    %5851 = vst [vmem:[#allocation7 + $0x10] sm:$0xff] 0.0
    %5852 = vst [vmem:[#allocation7 + $0x18] sm:$0xff] 0.0
    %5853 = vst [vmem:[#allocation7 + $0x20] sm:$0xff] 0.0
    %5854 = vst [vmem:[#allocation7 + $0x28] sm:$0xff] 0.0
    %5855 = vst [vmem:[#allocation7 + $0x30] sm:$0xff] 0.0
    %5856 = vst [vmem:[#allocation7 + $0x38] sm:$0xff] 0.0
    %5857 = vst [vmem:[#allocation7 + $0x40] sm:$0xff] 0.0
    %5858 = vst [vmem:[#allocation7 + $0x48] sm:$0xff] 0.0
    %5859 = vst [vmem:[#allocation7 + $0x50] sm:$0xff] 0.0
    %5860 = vst [vmem:[#allocation7 + $0x58] sm:$0xff] 0.0
    %5861 = vst [vmem:[#allocation7 + $0x60] sm:$0xff] 0.0
    %5862 = vst [vmem:[#allocation7 + $0x68] sm:$0xff] 0.0
    %5863 = vst [vmem:[#allocation7 + $0x70] sm:$0xff] 0.0
    %5864 = vst [vmem:[#allocation7 + $0x78] sm:$0xff] 0.0
    %5865 = vst.msk [vmem:[#allocation7] sm:$0xff] %vm2059, %v5818
    %5866 = vst.msk [vmem:[#allocation7 + $0x8] sm:$0xff] %vm2059, %v5820
    %5867 = vst.msk [vmem:[#allocation7 + $0x10] sm:$0xff] %vm2059, %v5822
    %5868 = vst.msk [vmem:[#allocation7 + $0x18] sm:$0xff] %vm2059, %v5824
    %5869 = vst.msk [vmem:[#allocation7 + $0x20] sm:$0xff] %vm2059, %v5826
    %5870 = vst.msk [vmem:[#allocation7 + $0x28] sm:$0xff] %vm2059, %v5828
    %5871 = vst.msk [vmem:[#allocation7 + $0x30] sm:$0xff] %vm2059, %v5830
    %5872 = vst.msk [vmem:[#allocation7 + $0x38] sm:$0xff] %vm2059, %v5832
    %5873 = vst.msk [vmem:[#allocation7 + $0x40] sm:$0xff] %vm2059, %v5834
    %5874 = vst.msk [vmem:[#allocation7 + $0x48] sm:$0xff] %vm2059, %v5836
    %5875 = vst.msk [vmem:[#allocation7 + $0x50] sm:$0xff] %vm2059, %v5838
    %5876 = vst.msk [vmem:[#allocation7 + $0x58] sm:$0xff] %vm2059, %v5840
    %5877 = vst.msk [vmem:[#allocation7 + $0x60] sm:$0xff] %vm2059, %v5842
    %5878 = vst.msk [vmem:[#allocation7 + $0x68] sm:$0xff] %vm2059, %v5844
    %5879 = vst.msk [vmem:[#allocation7 + $0x70] sm:$0xff] %vm2059, %v5846
    %5880 = vst.msk [vmem:[#allocation7 + $0x78] sm:$0xff] %vm2059, %v5848
    %v5882 = vsel %vm2059, %v5818, 0
    %5884 = vmatprep.subr.mxu0 0.0
    %5885 = vmatpush1.msra.mxu0 %v4234
    %5886 = vmatprep.subr.mxu0 0.0
    %5887 = vmatpush1.msra.mxu0 0.0
    %5888 = vmatprep.subr.mxu0 0.0
    %5889 = vmatpush1.msra.mxu0 0.0
    %5890 = vmatprep.subr.mxu0 0.0
    %5891 = vmatpush1.msra.mxu0 0.0
    %5892 = vmatprep.subr.mxu0 0.0
    %5893 = vmatpush1.msra.mxu0 0.0
    %5894 = vmatprep.subr.mxu0 0.0
    %5895 = vmatpush1.msra.mxu0 0.0
    %5896 = vmatprep.subr.mxu0 0.0
    %5897 = vmatpush1.msra.mxu0 0.0
    %5898 = vmatprep.subr.mxu0 0.0
    %5899 = vmatpush1.msra.mxu0 0.0
    %5900 = vmatprep.subr.mxu0 0.0
    %5901 = vmatpush1.msra.mxu0 0.0
    %5902 = vmatprep.subr.mxu0 0.0
    %5903 = vmatpush1.msra.mxu0 0.0
    %5904 = vmatprep.subr.mxu0 0.0
    %5905 = vmatpush1.msra.mxu0 0.0
    %5906 = vmatprep.subr.mxu0 0.0
    %5907 = vmatpush1.msra.mxu0 0.0
    %5908 = vmatprep.subr.mxu0 0.0
    %5909 = vmatpush1.msra.mxu0 0.0
    %5910 = vmatprep.subr.mxu0 0.0
    %5911 = vmatpush1.msra.mxu0 0.0
    %5912 = vmatprep.subr.mxu0 0.0
    %5913 = vmatpush1.msra.mxu0 0.0
    %5914 = vmatprep.subr.mxu0 0.0
    %5915 = vmatpush1.msra.mxu0 0.0
    %5916 = vmatprep.subr.mxu0 0.0
    %5917 = vmatpush1.msra.mxu0 0.0
    %5918 = vmatprep.subr.mxu0 0.0
    %5919 = vmatpush1.msra.mxu0 0.0
    %5920 = vmatprep.subr.mxu0 0.0
    %5921 = vmatpush1.msra.mxu0 0.0
    %5922 = vmatprep.subr.mxu0 0.0
    %5923 = vmatpush1.msra.mxu0 0.0
    %5924 = vmatprep.subr.mxu0 0.0
    %5925 = vmatpush1.msra.mxu0 0.0
    %5926 = vmatprep.subr.mxu0 0.0
    %5927 = vmatpush1.msra.mxu0 0.0
    %5928 = vmatprep.subr.mxu0 0.0
    %5929 = vmatpush1.msra.mxu0 0.0
    %5930 = vmatprep.subr.mxu0 0.0
    %5931 = vmatpush1.msra.mxu0 0.0
    %5932 = vmatprep.subr.mxu0 0.0
    %5933 = vmatpush1.msra.mxu0 0.0
    %5934 = vmatprep.subr.mxu0 0.0
    %5935 = vmatpush1.msra.mxu0 0.0
    %5936 = vmatprep.subr.mxu0 0.0
    %5937 = vmatpush1.msra.mxu0 0.0
    %5938 = vmatprep.subr.mxu0 0.0
    %5939 = vmatpush1.msra.mxu0 0.0
    %5940 = vmatprep.subr.mxu0 0.0
    %5941 = vmatpush1.msra.mxu0 0.0
    %5942 = vmatprep.subr.mxu0 0.0
    %5943 = vmatpush1.msra.mxu0 0.0
    %5944 = vmatprep.subr.mxu0 0.0
    %5945 = vmatpush1.msra.mxu0 0.0
    %5946 = vmatprep.subr.mxu0 0.0
    %5947 = vmatpush1.msra.mxu0 0.0
    %5948 = vmatprep.mubr.f32.mxu0 0.0
    %5949 = vmatmul.mubr.f32.gmra.mrb[0].mxu0 %v5882
    %v5950 = vpop.f32.mrb[0].mxu0
    %v5951 = vadd.f32 0.0, %v5950
    %v5952 = vpop.f32.mrb[0].mxu0
    %5953 = vdwg.mxu0
    %v5955 = vsel %vm2059, %v5820, 0
    %5957 = vmatprep.subr.mxu0 0.0
    %5958 = vmatpush1.msra.mxu0 %v4437
    %5959 = vmatprep.subr.mxu0 0.0
    %5960 = vmatpush1.msra.mxu0 0.0
    %5961 = vmatprep.subr.mxu0 0.0
    %5962 = vmatpush1.msra.mxu0 0.0
    %5963 = vmatprep.subr.mxu0 0.0
    %5964 = vmatpush1.msra.mxu0 0.0
    %5965 = vmatprep.subr.mxu0 0.0
    %5966 = vmatpush1.msra.mxu0 0.0
    %5967 = vmatprep.subr.mxu0 0.0
    %5968 = vmatpush1.msra.mxu0 0.0
    %5969 = vmatprep.subr.mxu0 0.0
    %5970 = vmatpush1.msra.mxu0 0.0
    %5971 = vmatprep.subr.mxu0 0.0
    %5972 = vmatpush1.msra.mxu0 0.0
    %5973 = vmatprep.subr.mxu0 0.0
    %5974 = vmatpush1.msra.mxu0 0.0
    %5975 = vmatprep.subr.mxu0 0.0
    %5976 = vmatpush1.msra.mxu0 0.0
    %5977 = vmatprep.subr.mxu0 0.0
    %5978 = vmatpush1.msra.mxu0 0.0
    %5979 = vmatprep.subr.mxu0 0.0
    %5980 = vmatpush1.msra.mxu0 0.0
    %5981 = vmatprep.subr.mxu0 0.0
    %5982 = vmatpush1.msra.mxu0 0.0
    %5983 = vmatprep.subr.mxu0 0.0
    %5984 = vmatpush1.msra.mxu0 0.0
    %5985 = vmatprep.subr.mxu0 0.0
    %5986 = vmatpush1.msra.mxu0 0.0
    %5987 = vmatprep.subr.mxu0 0.0
    %5988 = vmatpush1.msra.mxu0 0.0
    %5989 = vmatprep.subr.mxu0 0.0
    %5990 = vmatpush1.msra.mxu0 0.0
    %5991 = vmatprep.subr.mxu0 0.0
    %5992 = vmatpush1.msra.mxu0 0.0
    %5993 = vmatprep.subr.mxu0 0.0
    %5994 = vmatpush1.msra.mxu0 0.0
    %5995 = vmatprep.subr.mxu0 0.0
    %5996 = vmatpush1.msra.mxu0 0.0
    %5997 = vmatprep.subr.mxu0 0.0
    %5998 = vmatpush1.msra.mxu0 0.0
    %5999 = vmatprep.subr.mxu0 0.0
    %6000 = vmatpush1.msra.mxu0 0.0
    %6001 = vmatprep.subr.mxu0 0.0
    %6002 = vmatpush1.msra.mxu0 0.0
    %6003 = vmatprep.subr.mxu0 0.0
    %6004 = vmatpush1.msra.mxu0 0.0
    %6005 = vmatprep.subr.mxu0 0.0
    %6006 = vmatpush1.msra.mxu0 0.0
    %6007 = vmatprep.subr.mxu0 0.0
    %6008 = vmatpush1.msra.mxu0 0.0
    %6009 = vmatprep.subr.mxu0 0.0
    %6010 = vmatpush1.msra.mxu0 0.0
    %6011 = vmatprep.subr.mxu0 0.0
    %6012 = vmatpush1.msra.mxu0 0.0
    %6013 = vmatprep.subr.mxu0 0.0
    %6014 = vmatpush1.msra.mxu0 0.0
    %6015 = vmatprep.subr.mxu0 0.0
    %6016 = vmatpush1.msra.mxu0 0.0
    %6017 = vmatprep.subr.mxu0 0.0
    %6018 = vmatpush1.msra.mxu0 0.0
    %6019 = vmatprep.subr.mxu0 0.0
    %6020 = vmatpush1.msra.mxu0 0.0
    %6021 = vmatprep.mubr.f32.mxu0 0.0
    %6022 = vmatmul.mubr.f32.gmra.mrb[0].mxu0 %v5955
    %v6023 = vpop.f32.mrb[0].mxu0
    %v6024 = vadd.f32 0.0, %v6023
    %v6025 = vpop.f32.mrb[0].mxu0
    %6026 = vdwg.mxu0
    %v6028 = vsel %vm2059, %v5822, 0
    %6030 = vmatprep.subr.mxu0 0.0
    %6031 = vmatpush1.msra.mxu0 %v4236
    %6032 = vmatprep.subr.mxu0 0.0
    %6033 = vmatpush1.msra.mxu0 0.0
    %6034 = vmatprep.subr.mxu0 0.0
    %6035 = vmatpush1.msra.mxu0 0.0
    %6036 = vmatprep.subr.mxu0 0.0
    %6037 = vmatpush1.msra.mxu0 0.0
    %6038 = vmatprep.subr.mxu0 0.0
    %6039 = vmatpush1.msra.mxu0 0.0
    %6040 = vmatprep.subr.mxu0 0.0
    %6041 = vmatpush1.msra.mxu0 0.0
    %6042 = vmatprep.subr.mxu0 0.0
    %6043 = vmatpush1.msra.mxu0 0.0
    %6044 = vmatprep.subr.mxu0 0.0
    %6045 = vmatpush1.msra.mxu0 0.0
    %6046 = vmatprep.subr.mxu0 0.0
    %6047 = vmatpush1.msra.mxu0 0.0
    %6048 = vmatprep.subr.mxu0 0.0
    %6049 = vmatpush1.msra.mxu0 0.0
    %6050 = vmatprep.subr.mxu0 0.0
    %6051 = vmatpush1.msra.mxu0 0.0
    %6052 = vmatprep.subr.mxu0 0.0
    %6053 = vmatpush1.msra.mxu0 0.0
    %6054 = vmatprep.subr.mxu0 0.0
    %6055 = vmatpush1.msra.mxu0 0.0
    %6056 = vmatprep.subr.mxu0 0.0
    %6057 = vmatpush1.msra.mxu0 0.0
    %6058 = vmatprep.subr.mxu0 0.0
    %6059 = vmatpush1.msra.mxu0 0.0
    %6060 = vmatprep.subr.mxu0 0.0
    %6061 = vmatpush1.msra.mxu0 0.0
    %6062 = vmatprep.subr.mxu0 0.0
    %6063 = vmatpush1.msra.mxu0 0.0
    %6064 = vmatprep.subr.mxu0 0.0
    %6065 = vmatpush1.msra.mxu0 0.0
    %6066 = vmatprep.subr.mxu0 0.0
    %6067 = vmatpush1.msra.mxu0 0.0
    %6068 = vmatprep.subr.mxu0 0.0
    %6069 = vmatpush1.msra.mxu0 0.0
    %6070 = vmatprep.subr.mxu0 0.0
    %6071 = vmatpush1.msra.mxu0 0.0
    %6072 = vmatprep.subr.mxu0 0.0
    %6073 = vmatpush1.msra.mxu0 0.0
    %6074 = vmatprep.subr.mxu0 0.0
    %6075 = vmatpush1.msra.mxu0 0.0
    %6076 = vmatprep.subr.mxu0 0.0
    %6077 = vmatpush1.msra.mxu0 0.0
    %6078 = vmatprep.subr.mxu0 0.0
    %6079 = vmatpush1.msra.mxu0 0.0
    %6080 = vmatprep.subr.mxu0 0.0
    %6081 = vmatpush1.msra.mxu0 0.0
    %6082 = vmatprep.subr.mxu0 0.0
    %6083 = vmatpush1.msra.mxu0 0.0
    %6084 = vmatprep.subr.mxu0 0.0
    %6085 = vmatpush1.msra.mxu0 0.0
    %6086 = vmatprep.subr.mxu0 0.0
    %6087 = vmatpush1.msra.mxu0 0.0
    %6088 = vmatprep.subr.mxu0 0.0
    %6089 = vmatpush1.msra.mxu0 0.0
    %6090 = vmatprep.subr.mxu0 0.0
    %6091 = vmatpush1.msra.mxu0 0.0
    %6092 = vmatprep.subr.mxu0 0.0
    %6093 = vmatpush1.msra.mxu0 0.0
    %6094 = vmatprep.mubr.f32.mxu0 0.0
    %6095 = vmatmul.mubr.f32.gmra.mrb[0].mxu0 %v6028
    %v6096 = vpop.f32.mrb[0].mxu0
    %v6097 = vadd.f32 0.0, %v6096
    %v6098 = vpop.f32.mrb[0].mxu0
    %6099 = vdwg.mxu0
    %v6101 = vsel %vm2059, %v5824, 0
    %6103 = vmatprep.subr.mxu0 0.0
    %6104 = vmatpush1.msra.mxu0 %v4441
    %6105 = vmatprep.subr.mxu0 0.0
    %6106 = vmatpush1.msra.mxu0 0.0
    %6107 = vmatprep.subr.mxu0 0.0
    %6108 = vmatpush1.msra.mxu0 0.0
    %6109 = vmatprep.subr.mxu0 0.0
    %6110 = vmatpush1.msra.mxu0 0.0
    %6111 = vmatprep.subr.mxu0 0.0
    %6112 = vmatpush1.msra.mxu0 0.0
    %6113 = vmatprep.subr.mxu0 0.0
    %6114 = vmatpush1.msra.mxu0 0.0
    %6115 = vmatprep.subr.mxu0 0.0
    %6116 = vmatpush1.msra.mxu0 0.0
    %6117 = vmatprep.subr.mxu0 0.0
    %6118 = vmatpush1.msra.mxu0 0.0
    %6119 = vmatprep.subr.mxu0 0.0
    %6120 = vmatpush1.msra.mxu0 0.0
    %6121 = vmatprep.subr.mxu0 0.0
    %6122 = vmatpush1.msra.mxu0 0.0
    %6123 = vmatprep.subr.mxu0 0.0
    %6124 = vmatpush1.msra.mxu0 0.0
    %6125 = vmatprep.subr.mxu0 0.0
    %6126 = vmatpush1.msra.mxu0 0.0
    %6127 = vmatprep.subr.mxu0 0.0
    %6128 = vmatpush1.msra.mxu0 0.0
    %6129 = vmatprep.subr.mxu0 0.0
    %6130 = vmatpush1.msra.mxu0 0.0
    %6131 = vmatprep.subr.mxu0 0.0
    %6132 = vmatpush1.msra.mxu0 0.0
    %6133 = vmatprep.subr.mxu0 0.0
    %6134 = vmatpush1.msra.mxu0 0.0
    %6135 = vmatprep.subr.mxu0 0.0
    %6136 = vmatpush1.msra.mxu0 0.0
    %6137 = vmatprep.subr.mxu0 0.0
    %6138 = vmatpush1.msra.mxu0 0.0
    %6139 = vmatprep.subr.mxu0 0.0
    %6140 = vmatpush1.msra.mxu0 0.0
    %6141 = vmatprep.subr.mxu0 0.0
    %6142 = vmatpush1.msra.mxu0 0.0
    %6143 = vmatprep.subr.mxu0 0.0
    %6144 = vmatpush1.msra.mxu0 0.0
    %6145 = vmatprep.subr.mxu0 0.0
    %6146 = vmatpush1.msra.mxu0 0.0
    %6147 = vmatprep.subr.mxu0 0.0
    %6148 = vmatpush1.msra.mxu0 0.0
    %6149 = vmatprep.subr.mxu0 0.0
    %6150 = vmatpush1.msra.mxu0 0.0
    %6151 = vmatprep.subr.mxu0 0.0
    %6152 = vmatpush1.msra.mxu0 0.0
    %6153 = vmatprep.subr.mxu0 0.0
    %6154 = vmatpush1.msra.mxu0 0.0
    %6155 = vmatprep.subr.mxu0 0.0
    %6156 = vmatpush1.msra.mxu0 0.0
    %6157 = vmatprep.subr.mxu0 0.0
    %6158 = vmatpush1.msra.mxu0 0.0
    %6159 = vmatprep.subr.mxu0 0.0
    %6160 = vmatpush1.msra.mxu0 0.0
    %6161 = vmatprep.subr.mxu0 0.0
    %6162 = vmatpush1.msra.mxu0 0.0
    %6163 = vmatprep.subr.mxu0 0.0
    %6164 = vmatpush1.msra.mxu0 0.0
    %6165 = vmatprep.subr.mxu0 0.0
    %6166 = vmatpush1.msra.mxu0 0.0
    %6167 = vmatprep.mubr.f32.mxu0 0.0
    %6168 = vmatmul.mubr.f32.gmra.mrb[0].mxu0 %v6101
    %v6169 = vpop.f32.mrb[0].mxu0
    %v6170 = vadd.f32 0.0, %v6169
    %v6171 = vpop.f32.mrb[0].mxu0
    %6172 = vdwg.mxu0
    %v6174 = vsel %vm2059, %v5826, 0
    %6176 = vmatprep.subr.mxu0 0.0
    %6177 = vmatpush1.msra.mxu0 %v4311
    %6178 = vmatprep.subr.mxu0 0.0
    %6179 = vmatpush1.msra.mxu0 0.0
    %6180 = vmatprep.subr.mxu0 0.0
    %6181 = vmatpush1.msra.mxu0 0.0
    %6182 = vmatprep.subr.mxu0 0.0
    %6183 = vmatpush1.msra.mxu0 0.0
    %6184 = vmatprep.subr.mxu0 0.0
    %6185 = vmatpush1.msra.mxu0 0.0
    %6186 = vmatprep.subr.mxu0 0.0
    %6187 = vmatpush1.msra.mxu0 0.0
    %6188 = vmatprep.subr.mxu0 0.0
    %6189 = vmatpush1.msra.mxu0 0.0
    %6190 = vmatprep.subr.mxu0 0.0
    %6191 = vmatpush1.msra.mxu0 0.0
    %6192 = vmatprep.subr.mxu0 0.0
    %6193 = vmatpush1.msra.mxu0 0.0
    %6194 = vmatprep.subr.mxu0 0.0
    %6195 = vmatpush1.msra.mxu0 0.0
    %6196 = vmatprep.subr.mxu0 0.0
    %6197 = vmatpush1.msra.mxu0 0.0
    %6198 = vmatprep.subr.mxu0 0.0
    %6199 = vmatpush1.msra.mxu0 0.0
    %6200 = vmatprep.subr.mxu0 0.0
    %6201 = vmatpush1.msra.mxu0 0.0
    %6202 = vmatprep.subr.mxu0 0.0
    %6203 = vmatpush1.msra.mxu0 0.0
    %6204 = vmatprep.subr.mxu0 0.0
    %6205 = vmatpush1.msra.mxu0 0.0
    %6206 = vmatprep.subr.mxu0 0.0
    %6207 = vmatpush1.msra.mxu0 0.0
    %6208 = vmatprep.subr.mxu0 0.0
    %6209 = vmatpush1.msra.mxu0 0.0
    %6210 = vmatprep.subr.mxu0 0.0
    %6211 = vmatpush1.msra.mxu0 0.0
    %6212 = vmatprep.subr.mxu0 0.0
    %6213 = vmatpush1.msra.mxu0 0.0
    %6214 = vmatprep.subr.mxu0 0.0
    %6215 = vmatpush1.msra.mxu0 0.0
    %6216 = vmatprep.subr.mxu0 0.0
    %6217 = vmatpush1.msra.mxu0 0.0
    %6218 = vmatprep.subr.mxu0 0.0
    %6219 = vmatpush1.msra.mxu0 0.0
    %6220 = vmatprep.subr.mxu0 0.0
    %6221 = vmatpush1.msra.mxu0 0.0
    %6222 = vmatprep.subr.mxu0 0.0
    %6223 = vmatpush1.msra.mxu0 0.0
    %6224 = vmatprep.subr.mxu0 0.0
    %6225 = vmatpush1.msra.mxu0 0.0
    %6226 = vmatprep.subr.mxu0 0.0
    %6227 = vmatpush1.msra.mxu0 0.0
    %6228 = vmatprep.subr.mxu0 0.0
    %6229 = vmatpush1.msra.mxu0 0.0
    %6230 = vmatprep.subr.mxu0 0.0
    %6231 = vmatpush1.msra.mxu0 0.0
    %6232 = vmatprep.subr.mxu0 0.0
    %6233 = vmatpush1.msra.mxu0 0.0
    %6234 = vmatprep.subr.mxu0 0.0
    %6235 = vmatpush1.msra.mxu0 0.0
    %6236 = vmatprep.subr.mxu0 0.0
    %6237 = vmatpush1.msra.mxu0 0.0
    %6238 = vmatprep.subr.mxu0 0.0
    %6239 = vmatpush1.msra.mxu0 0.0
    %6240 = vmatprep.mubr.f32.mxu0 0.0
    %6241 = vmatmul.mubr.f32.gmra.mrb[0].mxu0 %v6174
    %v6242 = vpop.f32.mrb[0].mxu0
    %v6243 = vadd.f32 0.0, %v6242
    %v6244 = vpop.f32.mrb[0].mxu0
    %6245 = vdwg.mxu0
    %v6247 = vsel %vm2059, %v5828, 0
    %6249 = vmatprep.subr.mxu0 0.0
    %6250 = vmatpush1.msra.mxu0 %v4445
    %6251 = vmatprep.subr.mxu0 0.0
    %6252 = vmatpush1.msra.mxu0 0.0
    %6253 = vmatprep.subr.mxu0 0.0
    %6254 = vmatpush1.msra.mxu0 0.0
    %6255 = vmatprep.subr.mxu0 0.0
    %6256 = vmatpush1.msra.mxu0 0.0
    %6257 = vmatprep.subr.mxu0 0.0
    %6258 = vmatpush1.msra.mxu0 0.0
    %6259 = vmatprep.subr.mxu0 0.0
    %6260 = vmatpush1.msra.mxu0 0.0
    %6261 = vmatprep.subr.mxu0 0.0
    %6262 = vmatpush1.msra.mxu0 0.0
    %6263 = vmatprep.subr.mxu0 0.0
    %6264 = vmatpush1.msra.mxu0 0.0
    %6265 = vmatprep.subr.mxu0 0.0
    %6266 = vmatpush1.msra.mxu0 0.0
    %6267 = vmatprep.subr.mxu0 0.0
    %6268 = vmatpush1.msra.mxu0 0.0
    %6269 = vmatprep.subr.mxu0 0.0
    %6270 = vmatpush1.msra.mxu0 0.0
    %6271 = vmatprep.subr.mxu0 0.0
    %6272 = vmatpush1.msra.mxu0 0.0
    %6273 = vmatprep.subr.mxu0 0.0
    %6274 = vmatpush1.msra.mxu0 0.0
    %6275 = vmatprep.subr.mxu0 0.0
    %6276 = vmatpush1.msra.mxu0 0.0
    %6277 = vmatprep.subr.mxu0 0.0
    %6278 = vmatpush1.msra.mxu0 0.0
    %6279 = vmatprep.subr.mxu0 0.0
    %6280 = vmatpush1.msra.mxu0 0.0
    %6281 = vmatprep.subr.mxu0 0.0
    %6282 = vmatpush1.msra.mxu0 0.0
    %6283 = vmatprep.subr.mxu0 0.0
    %6284 = vmatpush1.msra.mxu0 0.0
    %6285 = vmatprep.subr.mxu0 0.0
    %6286 = vmatpush1.msra.mxu0 0.0
    %6287 = vmatprep.subr.mxu0 0.0
    %6288 = vmatpush1.msra.mxu0 0.0
    %6289 = vmatprep.subr.mxu0 0.0
    %6290 = vmatpush1.msra.mxu0 0.0
    %6291 = vmatprep.subr.mxu0 0.0
    %6292 = vmatpush1.msra.mxu0 0.0
    %6293 = vmatprep.subr.mxu0 0.0
    %6294 = vmatpush1.msra.mxu0 0.0
    %6295 = vmatprep.subr.mxu0 0.0
    %6296 = vmatpush1.msra.mxu0 0.0
    %6297 = vmatprep.subr.mxu0 0.0
    %6298 = vmatpush1.msra.mxu0 0.0
    %6299 = vmatprep.subr.mxu0 0.0
    %6300 = vmatpush1.msra.mxu0 0.0
    %6301 = vmatprep.subr.mxu0 0.0
    %6302 = vmatpush1.msra.mxu0 0.0
    %6303 = vmatprep.subr.mxu0 0.0
    %6304 = vmatpush1.msra.mxu0 0.0
    %6305 = vmatprep.subr.mxu0 0.0
    %6306 = vmatpush1.msra.mxu0 0.0
    %6307 = vmatprep.subr.mxu0 0.0
    %6308 = vmatpush1.msra.mxu0 0.0
    %6309 = vmatprep.subr.mxu0 0.0
    %6310 = vmatpush1.msra.mxu0 0.0
    %6311 = vmatprep.subr.mxu0 0.0
    %6312 = vmatpush1.msra.mxu0 0.0
    %6313 = vmatprep.mubr.f32.mxu0 0.0
    %6314 = vmatmul.mubr.f32.gmra.mrb[0].mxu0 %v6247
    %v6315 = vpop.f32.mrb[0].mxu0
    %v6316 = vadd.f32 0.0, %v6315
    %v6317 = vpop.f32.mrb[0].mxu0
    %6318 = vdwg.mxu0
    %v6320 = vsel %vm2059, %v5830, 0
    %6322 = vmatprep.subr.mxu0 0.0
    %6323 = vmatpush1.msra.mxu0 %v4313
    %6324 = vmatprep.subr.mxu0 0.0
    %6325 = vmatpush1.msra.mxu0 0.0
    %6326 = vmatprep.subr.mxu0 0.0
    %6327 = vmatpush1.msra.mxu0 0.0
    %6328 = vmatprep.subr.mxu0 0.0
    %6329 = vmatpush1.msra.mxu0 0.0
    %6330 = vmatprep.subr.mxu0 0.0
    %6331 = vmatpush1.msra.mxu0 0.0
    %6332 = vmatprep.subr.mxu0 0.0
    %6333 = vmatpush1.msra.mxu0 0.0
    %6334 = vmatprep.subr.mxu0 0.0
    %6335 = vmatpush1.msra.mxu0 0.0
    %6336 = vmatprep.subr.mxu0 0.0
    %6337 = vmatpush1.msra.mxu0 0.0
    %6338 = vmatprep.subr.mxu0 0.0
    %6339 = vmatpush1.msra.mxu0 0.0
    %6340 = vmatprep.subr.mxu0 0.0
    %6341 = vmatpush1.msra.mxu0 0.0
    %6342 = vmatprep.subr.mxu0 0.0
    %6343 = vmatpush1.msra.mxu0 0.0
    %6344 = vmatprep.subr.mxu0 0.0
    %6345 = vmatpush1.msra.mxu0 0.0
    %6346 = vmatprep.subr.mxu0 0.0
    %6347 = vmatpush1.msra.mxu0 0.0
    %6348 = vmatprep.subr.mxu0 0.0
    %6349 = vmatpush1.msra.mxu0 0.0
    %6350 = vmatprep.subr.mxu0 0.0
    %6351 = vmatpush1.msra.mxu0 0.0
    %6352 = vmatprep.subr.mxu0 0.0
    %6353 = vmatpush1.msra.mxu0 0.0
    %6354 = vmatprep.subr.mxu0 0.0
    %6355 = vmatpush1.msra.mxu0 0.0
    %6356 = vmatprep.subr.mxu0 0.0
    %6357 = vmatpush1.msra.mxu0 0.0
    %6358 = vmatprep.subr.mxu0 0.0
    %6359 = vmatpush1.msra.mxu0 0.0
    %6360 = vmatprep.subr.mxu0 0.0
    %6361 = vmatpush1.msra.mxu0 0.0
    %6362 = vmatprep.subr.mxu0 0.0
    %6363 = vmatpush1.msra.mxu0 0.0
    %6364 = vmatprep.subr.mxu0 0.0
    %6365 = vmatpush1.msra.mxu0 0.0
    %6366 = vmatprep.subr.mxu0 0.0
    %6367 = vmatpush1.msra.mxu0 0.0
    %6368 = vmatprep.subr.mxu0 0.0
    %6369 = vmatpush1.msra.mxu0 0.0
    %6370 = vmatprep.subr.mxu0 0.0
    %6371 = vmatpush1.msra.mxu0 0.0
    %6372 = vmatprep.subr.mxu0 0.0
    %6373 = vmatpush1.msra.mxu0 0.0
    %6374 = vmatprep.subr.mxu0 0.0
    %6375 = vmatpush1.msra.mxu0 0.0
    %6376 = vmatprep.subr.mxu0 0.0
    %6377 = vmatpush1.msra.mxu0 0.0
    %6378 = vmatprep.subr.mxu0 0.0
    %6379 = vmatpush1.msra.mxu0 0.0
    %6380 = vmatprep.subr.mxu0 0.0
    %6381 = vmatpush1.msra.mxu0 0.0
    %6382 = vmatprep.subr.mxu0 0.0
    %6383 = vmatpush1.msra.mxu0 0.0
    %6384 = vmatprep.subr.mxu0 0.0
    %6385 = vmatpush1.msra.mxu0 0.0
    %6386 = vmatprep.mubr.f32.mxu0 0.0
    %6387 = vmatmul.mubr.f32.gmra.mrb[0].mxu0 %v6320
    %v6388 = vpop.f32.mrb[0].mxu0
    %v6389 = vadd.f32 0.0, %v6388
    %v6390 = vpop.f32.mrb[0].mxu0
    %6391 = vdwg.mxu0
    %v6393 = vsel %vm2059, %v5832, 0
    %6395 = vmatprep.subr.mxu0 0.0
    %6396 = vmatpush1.msra.mxu0 %v4449
    %6397 = vmatprep.subr.mxu0 0.0
    %6398 = vmatpush1.msra.mxu0 0.0
    %6399 = vmatprep.subr.mxu0 0.0
    %6400 = vmatpush1.msra.mxu0 0.0
    %6401 = vmatprep.subr.mxu0 0.0
    %6402 = vmatpush1.msra.mxu0 0.0
    %6403 = vmatprep.subr.mxu0 0.0
    %6404 = vmatpush1.msra.mxu0 0.0
    %6405 = vmatprep.subr.mxu0 0.0
    %6406 = vmatpush1.msra.mxu0 0.0
    %6407 = vmatprep.subr.mxu0 0.0
    %6408 = vmatpush1.msra.mxu0 0.0
    %6409 = vmatprep.subr.mxu0 0.0
    %6410 = vmatpush1.msra.mxu0 0.0
    %6411 = vmatprep.subr.mxu0 0.0
    %6412 = vmatpush1.msra.mxu0 0.0
    %6413 = vmatprep.subr.mxu0 0.0
    %6414 = vmatpush1.msra.mxu0 0.0
    %6415 = vmatprep.subr.mxu0 0.0
    %6416 = vmatpush1.msra.mxu0 0.0
    %6417 = vmatprep.subr.mxu0 0.0
    %6418 = vmatpush1.msra.mxu0 0.0
    %6419 = vmatprep.subr.mxu0 0.0
    %6420 = vmatpush1.msra.mxu0 0.0
    %6421 = vmatprep.subr.mxu0 0.0
    %6422 = vmatpush1.msra.mxu0 0.0
    %6423 = vmatprep.subr.mxu0 0.0
    %6424 = vmatpush1.msra.mxu0 0.0
    %6425 = vmatprep.subr.mxu0 0.0
    %6426 = vmatpush1.msra.mxu0 0.0
    %6427 = vmatprep.subr.mxu0 0.0
    %6428 = vmatpush1.msra.mxu0 0.0
    %6429 = vmatprep.subr.mxu0 0.0
    %6430 = vmatpush1.msra.mxu0 0.0
    %6431 = vmatprep.subr.mxu0 0.0
    %6432 = vmatpush1.msra.mxu0 0.0
    %6433 = vmatprep.subr.mxu0 0.0
    %6434 = vmatpush1.msra.mxu0 0.0
    %6435 = vmatprep.subr.mxu0 0.0
    %6436 = vmatpush1.msra.mxu0 0.0
    %6437 = vmatprep.subr.mxu0 0.0
    %6438 = vmatpush1.msra.mxu0 0.0
    %6439 = vmatprep.subr.mxu0 0.0
    %6440 = vmatpush1.msra.mxu0 0.0
    %6441 = vmatprep.subr.mxu0 0.0
    %6442 = vmatpush1.msra.mxu0 0.0
    %6443 = vmatprep.subr.mxu0 0.0
    %6444 = vmatpush1.msra.mxu0 0.0
    %6445 = vmatprep.subr.mxu0 0.0
    %6446 = vmatpush1.msra.mxu0 0.0
    %6447 = vmatprep.subr.mxu0 0.0
    %6448 = vmatpush1.msra.mxu0 0.0
    %6449 = vmatprep.subr.mxu0 0.0
    %6450 = vmatpush1.msra.mxu0 0.0
    %6451 = vmatprep.subr.mxu0 0.0
    %6452 = vmatpush1.msra.mxu0 0.0
    %6453 = vmatprep.subr.mxu0 0.0
    %6454 = vmatpush1.msra.mxu0 0.0
    %6455 = vmatprep.subr.mxu0 0.0
    %6456 = vmatpush1.msra.mxu0 0.0
    %6457 = vmatprep.subr.mxu0 0.0
    %6458 = vmatpush1.msra.mxu0 0.0
    %6459 = vmatprep.mubr.f32.mxu0 0.0
    %6460 = vmatmul.mubr.f32.gmra.mrb[0].mxu0 %v6393
    %v6461 = vpop.f32.mrb[0].mxu0
    %v6462 = vadd.f32 0.0, %v6461
    %v6463 = vpop.f32.mrb[0].mxu0
    %6464 = vdwg.mxu0
    %v6466 = vsel %vm2059, %v5834, 0
    %6468 = vmatprep.subr.mxu0 0.0
    %6469 = vmatpush1.msra.mxu0 %v4240
    %6470 = vmatprep.subr.mxu0 0.0
    %6471 = vmatpush1.msra.mxu0 0.0
    %6472 = vmatprep.subr.mxu0 0.0
    %6473 = vmatpush1.msra.mxu0 0.0
    %6474 = vmatprep.subr.mxu0 0.0
    %6475 = vmatpush1.msra.mxu0 0.0
    %6476 = vmatprep.subr.mxu0 0.0
    %6477 = vmatpush1.msra.mxu0 0.0
    %6478 = vmatprep.subr.mxu0 0.0
    %6479 = vmatpush1.msra.mxu0 0.0
    %6480 = vmatprep.subr.mxu0 0.0
    %6481 = vmatpush1.msra.mxu0 0.0
    %6482 = vmatprep.subr.mxu0 0.0
    %6483 = vmatpush1.msra.mxu0 0.0
    %6484 = vmatprep.subr.mxu0 0.0
    %6485 = vmatpush1.msra.mxu0 0.0
    %6486 = vmatprep.subr.mxu0 0.0
    %6487 = vmatpush1.msra.mxu0 0.0
    %6488 = vmatprep.subr.mxu0 0.0
    %6489 = vmatpush1.msra.mxu0 0.0
    %6490 = vmatprep.subr.mxu0 0.0
    %6491 = vmatpush1.msra.mxu0 0.0
    %6492 = vmatprep.subr.mxu0 0.0
    %6493 = vmatpush1.msra.mxu0 0.0
    %6494 = vmatprep.subr.mxu0 0.0
    %6495 = vmatpush1.msra.mxu0 0.0
    %6496 = vmatprep.subr.mxu0 0.0
    %6497 = vmatpush1.msra.mxu0 0.0
    %6498 = vmatprep.subr.mxu0 0.0
    %6499 = vmatpush1.msra.mxu0 0.0
    %6500 = vmatprep.subr.mxu0 0.0
    %6501 = vmatpush1.msra.mxu0 0.0
    %6502 = vmatprep.subr.mxu0 0.0
    %6503 = vmatpush1.msra.mxu0 0.0
    %6504 = vmatprep.subr.mxu0 0.0
    %6505 = vmatpush1.msra.mxu0 0.0
    %6506 = vmatprep.subr.mxu0 0.0
    %6507 = vmatpush1.msra.mxu0 0.0
    %6508 = vmatprep.subr.mxu0 0.0
    %6509 = vmatpush1.msra.mxu0 0.0
    %6510 = vmatprep.subr.mxu0 0.0
    %6511 = vmatpush1.msra.mxu0 0.0
    %6512 = vmatprep.subr.mxu0 0.0
    %6513 = vmatpush1.msra.mxu0 0.0
    %6514 = vmatprep.subr.mxu0 0.0
    %6515 = vmatpush1.msra.mxu0 0.0
    %6516 = vmatprep.subr.mxu0 0.0
    %6517 = vmatpush1.msra.mxu0 0.0
    %6518 = vmatprep.subr.mxu0 0.0
    %6519 = vmatpush1.msra.mxu0 0.0
    %6520 = vmatprep.subr.mxu0 0.0
    %6521 = vmatpush1.msra.mxu0 0.0
    %6522 = vmatprep.subr.mxu0 0.0
    %6523 = vmatpush1.msra.mxu0 0.0
    %6524 = vmatprep.subr.mxu0 0.0
    %6525 = vmatpush1.msra.mxu0 0.0
    %6526 = vmatprep.subr.mxu0 0.0
    %6527 = vmatpush1.msra.mxu0 0.0
    %6528 = vmatprep.subr.mxu0 0.0
    %6529 = vmatpush1.msra.mxu0 0.0
    %6530 = vmatprep.subr.mxu0 0.0
    %6531 = vmatpush1.msra.mxu0 0.0
    %6532 = vmatprep.mubr.f32.mxu0 0.0
    %6533 = vmatmul.mubr.f32.gmra.mrb[0].mxu0 %v6466
    %v6534 = vpop.f32.mrb[0].mxu0
    %v6535 = vadd.f32 0.0, %v6534
    %v6536 = vpop.f32.mrb[0].mxu0
    %6537 = vdwg.mxu0
    %v6539 = vsel %vm2059, %v5836, 0
    %6541 = vmatprep.subr.mxu0 0.0
    %6542 = vmatpush1.msra.mxu0 %v4453
    %6543 = vmatprep.subr.mxu0 0.0
    %6544 = vmatpush1.msra.mxu0 0.0
    %6545 = vmatprep.subr.mxu0 0.0
    %6546 = vmatpush1.msra.mxu0 0.0
    %6547 = vmatprep.subr.mxu0 0.0
    %6548 = vmatpush1.msra.mxu0 0.0
    %6549 = vmatprep.subr.mxu0 0.0
    %6550 = vmatpush1.msra.mxu0 0.0
    %6551 = vmatprep.subr.mxu0 0.0
    %6552 = vmatpush1.msra.mxu0 0.0
    %6553 = vmatprep.subr.mxu0 0.0
    %6554 = vmatpush1.msra.mxu0 0.0
    %6555 = vmatprep.subr.mxu0 0.0
    %6556 = vmatpush1.msra.mxu0 0.0
    %6557 = vmatprep.subr.mxu0 0.0
    %6558 = vmatpush1.msra.mxu0 0.0
    %6559 = vmatprep.subr.mxu0 0.0
    %6560 = vmatpush1.msra.mxu0 0.0
    %6561 = vmatprep.subr.mxu0 0.0
    %6562 = vmatpush1.msra.mxu0 0.0
    %6563 = vmatprep.subr.mxu0 0.0
    %6564 = vmatpush1.msra.mxu0 0.0
    %6565 = vmatprep.subr.mxu0 0.0
    %6566 = vmatpush1.msra.mxu0 0.0
    %6567 = vmatprep.subr.mxu0 0.0
    %6568 = vmatpush1.msra.mxu0 0.0
    %6569 = vmatprep.subr.mxu0 0.0
    %6570 = vmatpush1.msra.mxu0 0.0
    %6571 = vmatprep.subr.mxu0 0.0
    %6572 = vmatpush1.msra.mxu0 0.0
    %6573 = vmatprep.subr.mxu0 0.0
    %6574 = vmatpush1.msra.mxu0 0.0
    %6575 = vmatprep.subr.mxu0 0.0
    %6576 = vmatpush1.msra.mxu0 0.0
    %6577 = vmatprep.subr.mxu0 0.0
    %6578 = vmatpush1.msra.mxu0 0.0
    %6579 = vmatprep.subr.mxu0 0.0
    %6580 = vmatpush1.msra.mxu0 0.0
    %6581 = vmatprep.subr.mxu0 0.0
    %6582 = vmatpush1.msra.mxu0 0.0
    %6583 = vmatprep.subr.mxu0 0.0
    %6584 = vmatpush1.msra.mxu0 0.0
    %6585 = vmatprep.subr.mxu0 0.0
    %6586 = vmatpush1.msra.mxu0 0.0
    %6587 = vmatprep.subr.mxu0 0.0
    %6588 = vmatpush1.msra.mxu0 0.0
    %6589 = vmatprep.subr.mxu0 0.0
    %6590 = vmatpush1.msra.mxu0 0.0
    %6591 = vmatprep.subr.mxu0 0.0
    %6592 = vmatpush1.msra.mxu0 0.0
    %6593 = vmatprep.subr.mxu0 0.0
    %6594 = vmatpush1.msra.mxu0 0.0
    %6595 = vmatprep.subr.mxu0 0.0
    %6596 = vmatpush1.msra.mxu0 0.0
    %6597 = vmatprep.subr.mxu0 0.0
    %6598 = vmatpush1.msra.mxu0 0.0
    %6599 = vmatprep.subr.mxu0 0.0
    %6600 = vmatpush1.msra.mxu0 0.0
    %6601 = vmatprep.subr.mxu0 0.0
    %6602 = vmatpush1.msra.mxu0 0.0
    %6603 = vmatprep.subr.mxu0 0.0
    %6604 = vmatpush1.msra.mxu0 0.0
    %6605 = vmatprep.mubr.f32.mxu0 0.0
    %6606 = vmatmul.mubr.f32.gmra.mrb[0].mxu0 %v6539
    %v6607 = vpop.f32.mrb[0].mxu0
    %v6608 = vadd.f32 0.0, %v6607
    %v6609 = vpop.f32.mrb[0].mxu0
    %6610 = vdwg.mxu0
    %v6612 = vsel %vm2059, %v5838, 0
    %6614 = vmatprep.subr.mxu0 0.0
    %6615 = vmatpush1.msra.mxu0 %v4242
    %6616 = vmatprep.subr.mxu0 0.0
    %6617 = vmatpush1.msra.mxu0 0.0
    %6618 = vmatprep.subr.mxu0 0.0
    %6619 = vmatpush1.msra.mxu0 0.0
    %6620 = vmatprep.subr.mxu0 0.0
    %6621 = vmatpush1.msra.mxu0 0.0
    %6622 = vmatprep.subr.mxu0 0.0
    %6623 = vmatpush1.msra.mxu0 0.0
    %6624 = vmatprep.subr.mxu0 0.0
    %6625 = vmatpush1.msra.mxu0 0.0
    %6626 = vmatprep.subr.mxu0 0.0
    %6627 = vmatpush1.msra.mxu0 0.0
    %6628 = vmatprep.subr.mxu0 0.0
    %6629 = vmatpush1.msra.mxu0 0.0
    %6630 = vmatprep.subr.mxu0 0.0
    %6631 = vmatpush1.msra.mxu0 0.0
    %6632 = vmatprep.subr.mxu0 0.0
    %6633 = vmatpush1.msra.mxu0 0.0
    %6634 = vmatprep.subr.mxu0 0.0
    %6635 = vmatpush1.msra.mxu0 0.0
    %6636 = vmatprep.subr.mxu0 0.0
    %6637 = vmatpush1.msra.mxu0 0.0
    %6638 = vmatprep.subr.mxu0 0.0
    %6639 = vmatpush1.msra.mxu0 0.0
    %6640 = vmatprep.subr.mxu0 0.0
    %6641 = vmatpush1.msra.mxu0 0.0
    %6642 = vmatprep.subr.mxu0 0.0
    %6643 = vmatpush1.msra.mxu0 0.0
    %6644 = vmatprep.subr.mxu0 0.0
    %6645 = vmatpush1.msra.mxu0 0.0
    %6646 = vmatprep.subr.mxu0 0.0
    %6647 = vmatpush1.msra.mxu0 0.0
    %6648 = vmatprep.subr.mxu0 0.0
    %6649 = vmatpush1.msra.mxu0 0.0
    %6650 = vmatprep.subr.mxu0 0.0
    %6651 = vmatpush1.msra.mxu0 0.0
    %6652 = vmatprep.subr.mxu0 0.0
    %6653 = vmatpush1.msra.mxu0 0.0
    %6654 = vmatprep.subr.mxu0 0.0
    %6655 = vmatpush1.msra.mxu0 0.0
    %6656 = vmatprep.subr.mxu0 0.0
    %6657 = vmatpush1.msra.mxu0 0.0
    %6658 = vmatprep.subr.mxu0 0.0
    %6659 = vmatpush1.msra.mxu0 0.0
    %6660 = vmatprep.subr.mxu0 0.0
    %6661 = vmatpush1.msra.mxu0 0.0
    %6662 = vmatprep.subr.mxu0 0.0
    %6663 = vmatpush1.msra.mxu0 0.0
    %6664 = vmatprep.subr.mxu0 0.0
    %6665 = vmatpush1.msra.mxu0 0.0
    %6666 = vmatprep.subr.mxu0 0.0
    %6667 = vmatpush1.msra.mxu0 0.0
    %6668 = vmatprep.subr.mxu0 0.0
    %6669 = vmatpush1.msra.mxu0 0.0
    %6670 = vmatprep.subr.mxu0 0.0
    %6671 = vmatpush1.msra.mxu0 0.0
    %6672 = vmatprep.subr.mxu0 0.0
    %6673 = vmatpush1.msra.mxu0 0.0
    %6674 = vmatprep.subr.mxu0 0.0
    %6675 = vmatpush1.msra.mxu0 0.0
    %6676 = vmatprep.subr.mxu0 0.0
    %6677 = vmatpush1.msra.mxu0 0.0
    %6678 = vmatprep.mubr.f32.mxu0 0.0
    %6679 = vmatmul.mubr.f32.gmra.mrb[0].mxu0 %v6612
    %v6680 = vpop.f32.mrb[0].mxu0
    %v6681 = vadd.f32 0.0, %v6680
    %v6682 = vpop.f32.mrb[0].mxu0
    %6683 = vdwg.mxu0
    %v6685 = vsel %vm2059, %v5840, 0
    %6687 = vmatprep.subr.mxu0 0.0
    %6688 = vmatpush1.msra.mxu0 %v4457
    %6689 = vmatprep.subr.mxu0 0.0
    %6690 = vmatpush1.msra.mxu0 0.0
    %6691 = vmatprep.subr.mxu0 0.0
    %6692 = vmatpush1.msra.mxu0 0.0
    %6693 = vmatprep.subr.mxu0 0.0
    %6694 = vmatpush1.msra.mxu0 0.0
    %6695 = vmatprep.subr.mxu0 0.0
    %6696 = vmatpush1.msra.mxu0 0.0
    %6697 = vmatprep.subr.mxu0 0.0
    %6698 = vmatpush1.msra.mxu0 0.0
    %6699 = vmatprep.subr.mxu0 0.0
    %6700 = vmatpush1.msra.mxu0 0.0
    %6701 = vmatprep.subr.mxu0 0.0
    %6702 = vmatpush1.msra.mxu0 0.0
    %6703 = vmatprep.subr.mxu0 0.0
    %6704 = vmatpush1.msra.mxu0 0.0
    %6705 = vmatprep.subr.mxu0 0.0
    %6706 = vmatpush1.msra.mxu0 0.0
    %6707 = vmatprep.subr.mxu0 0.0
    %6708 = vmatpush1.msra.mxu0 0.0
    %6709 = vmatprep.subr.mxu0 0.0
    %6710 = vmatpush1.msra.mxu0 0.0
    %6711 = vmatprep.subr.mxu0 0.0
    %6712 = vmatpush1.msra.mxu0 0.0
    %6713 = vmatprep.subr.mxu0 0.0
    %6714 = vmatpush1.msra.mxu0 0.0
    %6715 = vmatprep.subr.mxu0 0.0
    %6716 = vmatpush1.msra.mxu0 0.0
    %6717 = vmatprep.subr.mxu0 0.0
    %6718 = vmatpush1.msra.mxu0 0.0
    %6719 = vmatprep.subr.mxu0 0.0
    %6720 = vmatpush1.msra.mxu0 0.0
    %6721 = vmatprep.subr.mxu0 0.0
    %6722 = vmatpush1.msra.mxu0 0.0
    %6723 = vmatprep.subr.mxu0 0.0
    %6724 = vmatpush1.msra.mxu0 0.0
    %6725 = vmatprep.subr.mxu0 0.0
    %6726 = vmatpush1.msra.mxu0 0.0
    %6727 = vmatprep.subr.mxu0 0.0
    %6728 = vmatpush1.msra.mxu0 0.0
    %6729 = vmatprep.subr.mxu0 0.0
    %6730 = vmatpush1.msra.mxu0 0.0
    %6731 = vmatprep.subr.mxu0 0.0
    %6732 = vmatpush1.msra.mxu0 0.0
    %6733 = vmatprep.subr.mxu0 0.0
    %6734 = vmatpush1.msra.mxu0 0.0
    %6735 = vmatprep.subr.mxu0 0.0
    %6736 = vmatpush1.msra.mxu0 0.0
    %6737 = vmatprep.subr.mxu0 0.0
    %6738 = vmatpush1.msra.mxu0 0.0
    %6739 = vmatprep.subr.mxu0 0.0
    %6740 = vmatpush1.msra.mxu0 0.0
    %6741 = vmatprep.subr.mxu0 0.0
    %6742 = vmatpush1.msra.mxu0 0.0
    %6743 = vmatprep.subr.mxu0 0.0
    %6744 = vmatpush1.msra.mxu0 0.0
    %6745 = vmatprep.subr.mxu0 0.0
    %6746 = vmatpush1.msra.mxu0 0.0
    %6747 = vmatprep.subr.mxu0 0.0
    %6748 = vmatpush1.msra.mxu0 0.0
    %6749 = vmatprep.subr.mxu0 0.0
    %6750 = vmatpush1.msra.mxu0 0.0
    %6751 = vmatprep.mubr.f32.mxu0 0.0
    %6752 = vmatmul.mubr.f32.gmra.mrb[0].mxu0 %v6685
    %v6753 = vpop.f32.mrb[0].mxu0
    %v6754 = vadd.f32 0.0, %v6753
    %v6755 = vpop.f32.mrb[0].mxu0
    %6756 = vdwg.mxu0
    %v6758 = vsel %vm2059, %v5842, 0
    %6760 = vmatprep.subr.mxu0 0.0
    %6761 = vmatpush1.msra.mxu0 %v4317
    %6762 = vmatprep.subr.mxu0 0.0
    %6763 = vmatpush1.msra.mxu0 0.0
    %6764 = vmatprep.subr.mxu0 0.0
    %6765 = vmatpush1.msra.mxu0 0.0
    %6766 = vmatprep.subr.mxu0 0.0
    %6767 = vmatpush1.msra.mxu0 0.0
    %6768 = vmatprep.subr.mxu0 0.0
    %6769 = vmatpush1.msra.mxu0 0.0
    %6770 = vmatprep.subr.mxu0 0.0
    %6771 = vmatpush1.msra.mxu0 0.0
    %6772 = vmatprep.subr.mxu0 0.0
    %6773 = vmatpush1.msra.mxu0 0.0
    %6774 = vmatprep.subr.mxu0 0.0
    %6775 = vmatpush1.msra.mxu0 0.0
    %6776 = vmatprep.subr.mxu0 0.0
    %6777 = vmatpush1.msra.mxu0 0.0
    %6778 = vmatprep.subr.mxu0 0.0
    %6779 = vmatpush1.msra.mxu0 0.0
    %6780 = vmatprep.subr.mxu0 0.0
    %6781 = vmatpush1.msra.mxu0 0.0
    %6782 = vmatprep.subr.mxu0 0.0
    %6783 = vmatpush1.msra.mxu0 0.0
    %6784 = vmatprep.subr.mxu0 0.0
    %6785 = vmatpush1.msra.mxu0 0.0
    %6786 = vmatprep.subr.mxu0 0.0
    %6787 = vmatpush1.msra.mxu0 0.0
    %6788 = vmatprep.subr.mxu0 0.0
    %6789 = vmatpush1.msra.mxu0 0.0
    %6790 = vmatprep.subr.mxu0 0.0
    %6791 = vmatpush1.msra.mxu0 0.0
    %6792 = vmatprep.subr.mxu0 0.0
    %6793 = vmatpush1.msra.mxu0 0.0
    %6794 = vmatprep.subr.mxu0 0.0
    %6795 = vmatpush1.msra.mxu0 0.0
    %6796 = vmatprep.subr.mxu0 0.0
    %6797 = vmatpush1.msra.mxu0 0.0
    %6798 = vmatprep.subr.mxu0 0.0
    %6799 = vmatpush1.msra.mxu0 0.0
    %6800 = vmatprep.subr.mxu0 0.0
    %6801 = vmatpush1.msra.mxu0 0.0
    %6802 = vmatprep.subr.mxu0 0.0
    %6803 = vmatpush1.msra.mxu0 0.0
    %6804 = vmatprep.subr.mxu0 0.0
    %6805 = vmatpush1.msra.mxu0 0.0
    %6806 = vmatprep.subr.mxu0 0.0
    %6807 = vmatpush1.msra.mxu0 0.0
    %6808 = vmatprep.subr.mxu0 0.0
    %6809 = vmatpush1.msra.mxu0 0.0
    %6810 = vmatprep.subr.mxu0 0.0
    %6811 = vmatpush1.msra.mxu0 0.0
    %6812 = vmatprep.subr.mxu0 0.0
    %6813 = vmatpush1.msra.mxu0 0.0
    %6814 = vmatprep.subr.mxu0 0.0
    %6815 = vmatpush1.msra.mxu0 0.0
    %6816 = vmatprep.subr.mxu0 0.0
    %6817 = vmatpush1.msra.mxu0 0.0
    %6818 = vmatprep.subr.mxu0 0.0
    %6819 = vmatpush1.msra.mxu0 0.0
    %6820 = vmatprep.subr.mxu0 0.0
    %6821 = vmatpush1.msra.mxu0 0.0
    %6822 = vmatprep.subr.mxu0 0.0
    %6823 = vmatpush1.msra.mxu0 0.0
    %6824 = vmatprep.mubr.f32.mxu0 0.0
    %6825 = vmatmul.mubr.f32.gmra.mrb[0].mxu0 %v6758
    %v6826 = vpop.f32.mrb[0].mxu0
    %v6827 = vadd.f32 0.0, %v6826
    %v6828 = vpop.f32.mrb[0].mxu0
    %6829 = vdwg.mxu0
    %v6831 = vsel %vm2059, %v5844, 0
    %6833 = vmatprep.subr.mxu0 0.0
    %6834 = vmatpush1.msra.mxu0 %v4461
    %6835 = vmatprep.subr.mxu0 0.0
    %6836 = vmatpush1.msra.mxu0 0.0
    %6837 = vmatprep.subr.mxu0 0.0
    %6838 = vmatpush1.msra.mxu0 0.0
    %6839 = vmatprep.subr.mxu0 0.0
    %6840 = vmatpush1.msra.mxu0 0.0
    %6841 = vmatprep.subr.mxu0 0.0
    %6842 = vmatpush1.msra.mxu0 0.0
    %6843 = vmatprep.subr.mxu0 0.0
    %6844 = vmatpush1.msra.mxu0 0.0
    %6845 = vmatprep.subr.mxu0 0.0
    %6846 = vmatpush1.msra.mxu0 0.0
    %6847 = vmatprep.subr.mxu0 0.0
    %6848 = vmatpush1.msra.mxu0 0.0
    %6849 = vmatprep.subr.mxu0 0.0
    %6850 = vmatpush1.msra.mxu0 0.0
    %6851 = vmatprep.subr.mxu0 0.0
    %6852 = vmatpush1.msra.mxu0 0.0
    %6853 = vmatprep.subr.mxu0 0.0
    %6854 = vmatpush1.msra.mxu0 0.0
    %6855 = vmatprep.subr.mxu0 0.0
    %6856 = vmatpush1.msra.mxu0 0.0
    %6857 = vmatprep.subr.mxu0 0.0
    %6858 = vmatpush1.msra.mxu0 0.0
    %6859 = vmatprep.subr.mxu0 0.0
    %6860 = vmatpush1.msra.mxu0 0.0
    %6861 = vmatprep.subr.mxu0 0.0
    %6862 = vmatpush1.msra.mxu0 0.0
    %6863 = vmatprep.subr.mxu0 0.0
    %6864 = vmatpush1.msra.mxu0 0.0
    %6865 = vmatprep.subr.mxu0 0.0
    %6866 = vmatpush1.msra.mxu0 0.0
    %6867 = vmatprep.subr.mxu0 0.0
    %6868 = vmatpush1.msra.mxu0 0.0
    %6869 = vmatprep.subr.mxu0 0.0
    %6870 = vmatpush1.msra.mxu0 0.0
    %6871 = vmatprep.subr.mxu0 0.0
    %6872 = vmatpush1.msra.mxu0 0.0
    %6873 = vmatprep.subr.mxu0 0.0
    %6874 = vmatpush1.msra.mxu0 0.0
    %6875 = vmatprep.subr.mxu0 0.0
    %6876 = vmatpush1.msra.mxu0 0.0
    %6877 = vmatprep.subr.mxu0 0.0
    %6878 = vmatpush1.msra.mxu0 0.0
    %6879 = vmatprep.subr.mxu0 0.0
    %6880 = vmatpush1.msra.mxu0 0.0
    %6881 = vmatprep.subr.mxu0 0.0
    %6882 = vmatpush1.msra.mxu0 0.0
    %6883 = vmatprep.subr.mxu0 0.0
    %6884 = vmatpush1.msra.mxu0 0.0
    %6885 = vmatprep.subr.mxu0 0.0
    %6886 = vmatpush1.msra.mxu0 0.0
    %6887 = vmatprep.subr.mxu0 0.0
    %6888 = vmatpush1.msra.mxu0 0.0
    %6889 = vmatprep.subr.mxu0 0.0
    %6890 = vmatpush1.msra.mxu0 0.0
    %6891 = vmatprep.subr.mxu0 0.0
    %6892 = vmatpush1.msra.mxu0 0.0
    %6893 = vmatprep.subr.mxu0 0.0
    %6894 = vmatpush1.msra.mxu0 0.0
    %6895 = vmatprep.subr.mxu0 0.0
    %6896 = vmatpush1.msra.mxu0 0.0
    %6897 = vmatprep.mubr.f32.mxu0 0.0
    %6898 = vmatmul.mubr.f32.gmra.mrb[0].mxu0 %v6831
    %v6899 = vpop.f32.mrb[0].mxu0
    %v6900 = vadd.f32 0.0, %v6899
    %v6901 = vpop.f32.mrb[0].mxu0
    %6902 = vdwg.mxu0
    %v6904 = vsel %vm2059, %v5846, 0
    %6906 = vmatprep.subr.mxu0 0.0
    %6907 = vmatpush1.msra.mxu0 %v4319
    %6908 = vmatprep.subr.mxu0 0.0
    %6909 = vmatpush1.msra.mxu0 0.0
    %6910 = vmatprep.subr.mxu0 0.0
    %6911 = vmatpush1.msra.mxu0 0.0
    %6912 = vmatprep.subr.mxu0 0.0
    %6913 = vmatpush1.msra.mxu0 0.0
    %6914 = vmatprep.subr.mxu0 0.0
    %6915 = vmatpush1.msra.mxu0 0.0
    %6916 = vmatprep.subr.mxu0 0.0
    %6917 = vmatpush1.msra.mxu0 0.0
    %6918 = vmatprep.subr.mxu0 0.0
    %6919 = vmatpush1.msra.mxu0 0.0
    %6920 = vmatprep.subr.mxu0 0.0
    %6921 = vmatpush1.msra.mxu0 0.0
    %6922 = vmatprep.subr.mxu0 0.0
    %6923 = vmatpush1.msra.mxu0 0.0
    %6924 = vmatprep.subr.mxu0 0.0
    %6925 = vmatpush1.msra.mxu0 0.0
    %6926 = vmatprep.subr.mxu0 0.0
    %6927 = vmatpush1.msra.mxu0 0.0
    %6928 = vmatprep.subr.mxu0 0.0
    %6929 = vmatpush1.msra.mxu0 0.0
    %6930 = vmatprep.subr.mxu0 0.0
    %6931 = vmatpush1.msra.mxu0 0.0
    %6932 = vmatprep.subr.mxu0 0.0
    %6933 = vmatpush1.msra.mxu0 0.0
    %6934 = vmatprep.subr.mxu0 0.0
    %6935 = vmatpush1.msra.mxu0 0.0
    %6936 = vmatprep.subr.mxu0 0.0
    %6937 = vmatpush1.msra.mxu0 0.0
    %6938 = vmatprep.subr.mxu0 0.0
    %6939 = vmatpush1.msra.mxu0 0.0
    %6940 = vmatprep.subr.mxu0 0.0
    %6941 = vmatpush1.msra.mxu0 0.0
    %6942 = vmatprep.subr.mxu0 0.0
    %6943 = vmatpush1.msra.mxu0 0.0
    %6944 = vmatprep.subr.mxu0 0.0
    %6945 = vmatpush1.msra.mxu0 0.0
    %6946 = vmatprep.subr.mxu0 0.0
    %6947 = vmatpush1.msra.mxu0 0.0
    %6948 = vmatprep.subr.mxu0 0.0
    %6949 = vmatpush1.msra.mxu0 0.0
    %6950 = vmatprep.subr.mxu0 0.0
    %6951 = vmatpush1.msra.mxu0 0.0
    %6952 = vmatprep.subr.mxu0 0.0
    %6953 = vmatpush1.msra.mxu0 0.0
    %6954 = vmatprep.subr.mxu0 0.0
    %6955 = vmatpush1.msra.mxu0 0.0
    %6956 = vmatprep.subr.mxu0 0.0
    %6957 = vmatpush1.msra.mxu0 0.0
    %6958 = vmatprep.subr.mxu0 0.0
    %6959 = vmatpush1.msra.mxu0 0.0
    %6960 = vmatprep.subr.mxu0 0.0
    %6961 = vmatpush1.msra.mxu0 0.0
    %6962 = vmatprep.subr.mxu0 0.0
    %6963 = vmatpush1.msra.mxu0 0.0
    %6964 = vmatprep.subr.mxu0 0.0
    %6965 = vmatpush1.msra.mxu0 0.0
    %6966 = vmatprep.subr.mxu0 0.0
    %6967 = vmatpush1.msra.mxu0 0.0
    %6968 = vmatprep.subr.mxu0 0.0
    %6969 = vmatpush1.msra.mxu0 0.0
    %6970 = vmatprep.mubr.f32.mxu0 0.0
    %6971 = vmatmul.mubr.f32.gmra.mrb[0].mxu0 %v6904
    %v6972 = vpop.f32.mrb[0].mxu0
    %v6973 = vadd.f32 0.0, %v6972
    %v6974 = vpop.f32.mrb[0].mxu0
    %6975 = vdwg.mxu0
    %v6977 = vsel %vm2059, %v5848, 0
    %6979 = vmatprep.subr.mxu0 0.0
    %6980 = vmatpush1.msra.mxu0 %v4465
    %6981 = vmatprep.subr.mxu0 0.0
    %6982 = vmatpush1.msra.mxu0 0.0
    %6983 = vmatprep.subr.mxu0 0.0
    %6984 = vmatpush1.msra.mxu0 0.0
    %6985 = vmatprep.subr.mxu0 0.0
    %6986 = vmatpush1.msra.mxu0 0.0
    %6987 = vmatprep.subr.mxu0 0.0
    %6988 = vmatpush1.msra.mxu0 0.0
    %6989 = vmatprep.subr.mxu0 0.0
    %6990 = vmatpush1.msra.mxu0 0.0
    %6991 = vmatprep.subr.mxu0 0.0
    %6992 = vmatpush1.msra.mxu0 0.0
    %6993 = vmatprep.subr.mxu0 0.0
    %6994 = vmatpush1.msra.mxu0 0.0
    %6995 = vmatprep.subr.mxu0 0.0
    %6996 = vmatpush1.msra.mxu0 0.0
    %6997 = vmatprep.subr.mxu0 0.0
    %6998 = vmatpush1.msra.mxu0 0.0
    %6999 = vmatprep.subr.mxu0 0.0
    %7000 = vmatpush1.msra.mxu0 0.0
    %7001 = vmatprep.subr.mxu0 0.0
    %7002 = vmatpush1.msra.mxu0 0.0
    %7003 = vmatprep.subr.mxu0 0.0
    %7004 = vmatpush1.msra.mxu0 0.0
    %7005 = vmatprep.subr.mxu0 0.0
    %7006 = vmatpush1.msra.mxu0 0.0
    %7007 = vmatprep.subr.mxu0 0.0
    %7008 = vmatpush1.msra.mxu0 0.0
    %7009 = vmatprep.subr.mxu0 0.0
    %7010 = vmatpush1.msra.mxu0 0.0
    %7011 = vmatprep.subr.mxu0 0.0
    %7012 = vmatpush1.msra.mxu0 0.0
    %7013 = vmatprep.subr.mxu0 0.0
    %7014 = vmatpush1.msra.mxu0 0.0
    %7015 = vmatprep.subr.mxu0 0.0
    %7016 = vmatpush1.msra.mxu0 0.0
    %7017 = vmatprep.subr.mxu0 0.0
    %7018 = vmatpush1.msra.mxu0 0.0
    %7019 = vmatprep.subr.mxu0 0.0
    %7020 = vmatpush1.msra.mxu0 0.0
    %7021 = vmatprep.subr.mxu0 0.0
    %7022 = vmatpush1.msra.mxu0 0.0
    %7023 = vmatprep.subr.mxu0 0.0
    %7024 = vmatpush1.msra.mxu0 0.0
    %7025 = vmatprep.subr.mxu0 0.0
    %7026 = vmatpush1.msra.mxu0 0.0
    %7027 = vmatprep.subr.mxu0 0.0
    %7028 = vmatpush1.msra.mxu0 0.0
    %7029 = vmatprep.subr.mxu0 0.0
    %7030 = vmatpush1.msra.mxu0 0.0
    %7031 = vmatprep.subr.mxu0 0.0
    %7032 = vmatpush1.msra.mxu0 0.0
    %7033 = vmatprep.subr.mxu0 0.0
    %7034 = vmatpush1.msra.mxu0 0.0
    %7035 = vmatprep.subr.mxu0 0.0
    %7036 = vmatpush1.msra.mxu0 0.0
    %7037 = vmatprep.subr.mxu0 0.0
    %7038 = vmatpush1.msra.mxu0 0.0
    %7039 = vmatprep.subr.mxu0 0.0
    %7040 = vmatpush1.msra.mxu0 0.0
    %7041 = vmatprep.subr.mxu0 0.0
    %7042 = vmatpush1.msra.mxu0 0.0
    %7043 = vmatprep.mubr.f32.mxu0 0.0
    %7044 = vmatmul.mubr.f32.gmra.mrb[0].mxu0 %v6977
    %v7045 = vpop.f32.mrb[0].mxu0
    %v7046 = vadd.f32 0.0, %v7045
    %v7047 = vpop.f32.mrb[0].mxu0
    %7048 = vdwg.mxu0
    %7049 = vst.msk [vmem:[#allocation2] sm:$0xff] %vm852, %v5951
    %7051 = vrot.lane.b32.xlu0 %v6024, 64
    %v7052 = vpop.permute.xlu0 %7051
    %7054 = vst.msk [vmem:[#allocation2] sm:$0xff] %vm3441, %v7052
    %7055 = vst.msk [vmem:[#allocation2 + $0x8] sm:$0xff] %vm852, %v6097
    %7057 = vrot.lane.b32.xlu0 %v6170, 64
    %v7058 = vpop.permute.xlu0 %7057
    %7060 = vst.msk [vmem:[#allocation2 + $0x8] sm:$0xff] %vm3441, %v7058
    %7061 = vst.msk [vmem:[#allocation2 + $0x10] sm:$0xff] %vm852, %v6243
    %7063 = vrot.lane.b32.xlu0 %v6316, 64
    %v7064 = vpop.permute.xlu0 %7063
    %7066 = vst.msk [vmem:[#allocation2 + $0x10] sm:$0xff] %vm3441, %v7064
    %7067 = vst.msk [vmem:[#allocation2 + $0x18] sm:$0xff] %vm852, %v6389
    %7069 = vrot.lane.b32.xlu0 %v6462, 64
    %v7070 = vpop.permute.xlu0 %7069
    %7072 = vst.msk [vmem:[#allocation2 + $0x18] sm:$0xff] %vm3441, %v7070
    %7073 = vst.msk [vmem:[#allocation2 + $0x20] sm:$0xff] %vm852, %v6535
    %7075 = vrot.lane.b32.xlu0 %v6608, 64
    %v7076 = vpop.permute.xlu0 %7075
    %7078 = vst.msk [vmem:[#allocation2 + $0x20] sm:$0xff] %vm3441, %v7076
    %7079 = vst.msk [vmem:[#allocation2 + $0x28] sm:$0xff] %vm852, %v6681
    %7081 = vrot.lane.b32.xlu0 %v6754, 64
    %v7082 = vpop.permute.xlu0 %7081
    %7084 = vst.msk [vmem:[#allocation2 + $0x28] sm:$0xff] %vm3441, %v7082
    %7085 = vst.msk [vmem:[#allocation2 + $0x30] sm:$0xff] %vm852, %v6827
    %7087 = vrot.lane.b32.xlu0 %v6900, 64
    %v7088 = vpop.permute.xlu0 %7087
    %7090 = vst.msk [vmem:[#allocation2 + $0x30] sm:$0xff] %vm3441, %v7088
    %7091 = vst.msk [vmem:[#allocation2 + $0x38] sm:$0xff] %vm852, %v6973
    %7093 = vrot.lane.b32.xlu0 %v7046, 64
    %v7094 = vpop.permute.xlu0 %7093
    %7096 = vst.msk [vmem:[#allocation2 + $0x38] sm:$0xff] %vm3441, %v7094
    %v7097 = vld [vmem:[#allocation2] sm:$0xff]
    %v7098 = vld [vmem:[#allocation2 + $0x8] sm:$0xff]
    %v7099 = vld [vmem:[#allocation2 + $0x10] sm:$0xff]
    %v7100 = vld [vmem:[#allocation2 + $0x18] sm:$0xff]
    %v7101 = vld [vmem:[#allocation2 + $0x20] sm:$0xff]
    %v7102 = vld [vmem:[#allocation2 + $0x28] sm:$0xff]
    %v7103 = vld [vmem:[#allocation2 + $0x30] sm:$0xff]
    %v7104 = vld [vmem:[#allocation2 + $0x38] sm:$0xff]
    %7105 = vmatprep.subr.mxu0 0.0
    %7106 = vmatpush1.msra.mxu0 %v4323
    %7107 = vmatprep.subr.mxu0 0.0
    %7108 = vmatpush1.msra.mxu0 %v4324
    %7109 = vmatprep.subr.mxu0 0.0
    %7110 = vmatpush1.msra.mxu0 %v4325
    %7111 = vmatprep.subr.mxu0 0.0
    %7112 = vmatpush1.msra.mxu0 %v4326
    %7113 = vmatprep.subr.mxu0 0.0
    %7114 = vmatpush1.msra.mxu0 %v4327
    %7115 = vmatprep.subr.mxu0 0.0
    %7116 = vmatpush1.msra.mxu0 %v4328
    %7117 = vmatprep.subr.mxu0 0.0
    %7118 = vmatpush1.msra.mxu0 %v4329
    %7119 = vmatprep.subr.mxu0 0.0
    %7120 = vmatpush1.msra.mxu0 %v4330
    %7121 = vmatprep.subr.mxu0 0.0
    %7122 = vmatpush1.msra.mxu0 %v4331
    %7123 = vmatprep.subr.mxu0 0.0
    %7124 = vmatpush1.msra.mxu0 %v4332
    %7125 = vmatprep.subr.mxu0 0.0
    %7126 = vmatpush1.msra.mxu0 %v4333
    %7127 = vmatprep.subr.mxu0 0.0
    %7128 = vmatpush1.msra.mxu0 %v4334
    %7129 = vmatprep.subr.mxu0 0.0
    %7130 = vmatpush1.msra.mxu0 %v4335
    %7131 = vmatprep.subr.mxu0 0.0
    %7132 = vmatpush1.msra.mxu0 %v4336
    %7133 = vmatprep.subr.mxu0 0.0
    %7134 = vmatpush1.msra.mxu0 %v4337
    %7135 = vmatprep.subr.mxu0 0.0
    %7136 = vmatpush1.msra.mxu0 %v4338
    %7137 = vmatprep.subr.mxu0 0.0
    %7138 = vmatpush1.msra.mxu0 %v4339
    %7139 = vmatprep.subr.mxu0 0.0
    %7140 = vmatpush1.msra.mxu0 %v4340
    %7141 = vmatprep.subr.mxu0 0.0
    %7142 = vmatpush1.msra.mxu0 %v4341
    %7143 = vmatprep.subr.mxu0 0.0
    %7144 = vmatpush1.msra.mxu0 %v4342
    %7145 = vmatprep.subr.mxu0 0.0
    %7146 = vmatpush1.msra.mxu0 %v4343
    %7147 = vmatprep.subr.mxu0 0.0
    %7148 = vmatpush1.msra.mxu0 %v4344
    %7149 = vmatprep.subr.mxu0 0.0
    %7150 = vmatpush1.msra.mxu0 %v4345
    %7151 = vmatprep.subr.mxu0 0.0
    %7152 = vmatpush1.msra.mxu0 %v4346
    %7153 = vmatprep.subr.mxu0 0.0
    %7154 = vmatpush1.msra.mxu0 %v4347
    %7155 = vmatprep.subr.mxu0 0.0
    %7156 = vmatpush1.msra.mxu0 %v4348
    %7157 = vmatprep.subr.mxu0 0.0
    %7158 = vmatpush1.msra.mxu0 %v4349
    %7159 = vmatprep.subr.mxu0 0.0
    %7160 = vmatpush1.msra.mxu0 %v4350
    %7161 = vmatprep.subr.mxu0 0.0
    %7162 = vmatpush1.msra.mxu0 %v4351
    %7163 = vmatprep.subr.mxu0 0.0
    %7164 = vmatpush1.msra.mxu0 %v4352
    %7165 = vmatprep.subr.mxu0 0.0
    %7166 = vmatpush1.msra.mxu0 %v4353
    %7167 = vmatprep.subr.mxu0 0.0
    %7168 = vmatpush1.msra.mxu0 %v4354
    %7169 = vmatprep.mubr.f32.mxu0 %v7098
    %7170 = vmatmul.mubr.f32.gmra.mrb[0].mxu0 %v7097
    %v7171 = vpop.f32.mrb[0].mxu0
    %v7172 = vadd.f32 %v3665, %v7171
    %v7173 = vpop.f32.mrb[0].mxu0
    %7174 = vmatprep.mubr.f32.mxu0 %v7102
    %7175 = vmatmul.mubr.f32.gmra.mrb[0].mxu0 %v7101
    %v7176 = vpop.f32.mrb[0].mxu0
    %v7177 = vadd.f32 %v3666, %v7176
    %v7178 = vpop.f32.mrb[0].mxu0
    %7179 = vdwg.mxu0
    %7180 = vmatprep.subr.mxu0 0.0
    %7181 = vmatpush1.msra.mxu0 %v4355
    %7182 = vmatprep.subr.mxu0 0.0
    %7183 = vmatpush1.msra.mxu0 %v4356
    %7184 = vmatprep.subr.mxu0 0.0
    %7185 = vmatpush1.msra.mxu0 %v4357
    %7186 = vmatprep.subr.mxu0 0.0
    %7187 = vmatpush1.msra.mxu0 %v4358
    %7188 = vmatprep.subr.mxu0 0.0
    %7189 = vmatpush1.msra.mxu0 %v4359
    %7190 = vmatprep.subr.mxu0 0.0
    %7191 = vmatpush1.msra.mxu0 %v4360
    %7192 = vmatprep.subr.mxu0 0.0
    %7193 = vmatpush1.msra.mxu0 %v4361
    %7194 = vmatprep.subr.mxu0 0.0
    %7195 = vmatpush1.msra.mxu0 %v4362
    %7196 = vmatprep.subr.mxu0 0.0
    %7197 = vmatpush1.msra.mxu0 %v4363
    %7198 = vmatprep.subr.mxu0 0.0
    %7199 = vmatpush1.msra.mxu0 %v4364
    %7200 = vmatprep.subr.mxu0 0.0
    %7201 = vmatpush1.msra.mxu0 %v4365
    %7202 = vmatprep.subr.mxu0 0.0
    %7203 = vmatpush1.msra.mxu0 %v4366
    %7204 = vmatprep.subr.mxu0 0.0
    %7205 = vmatpush1.msra.mxu0 %v4367
    %7206 = vmatprep.subr.mxu0 0.0
    %7207 = vmatpush1.msra.mxu0 %v4368
    %7208 = vmatprep.subr.mxu0 0.0
    %7209 = vmatpush1.msra.mxu0 %v4369
    %7210 = vmatprep.subr.mxu0 0.0
    %7211 = vmatpush1.msra.mxu0 %v4370
    %7212 = vmatprep.subr.mxu0 0.0
    %7213 = vmatpush1.msra.mxu0 %v4371
    %7214 = vmatprep.subr.mxu0 0.0
    %7215 = vmatpush1.msra.mxu0 %v4372
    %7216 = vmatprep.subr.mxu0 0.0
    %7217 = vmatpush1.msra.mxu0 %v4373
    %7218 = vmatprep.subr.mxu0 0.0
    %7219 = vmatpush1.msra.mxu0 %v4374
    %7220 = vmatprep.subr.mxu0 0.0
    %7221 = vmatpush1.msra.mxu0 %v4375
    %7222 = vmatprep.subr.mxu0 0.0
    %7223 = vmatpush1.msra.mxu0 %v4376
    %7224 = vmatprep.subr.mxu0 0.0
    %7225 = vmatpush1.msra.mxu0 %v4377
    %7226 = vmatprep.subr.mxu0 0.0
    %7227 = vmatpush1.msra.mxu0 %v4378
    %7228 = vmatprep.subr.mxu0 0.0
    %7229 = vmatpush1.msra.mxu0 %v4379
    %7230 = vmatprep.subr.mxu0 0.0
    %7231 = vmatpush1.msra.mxu0 %v4380
    %7232 = vmatprep.subr.mxu0 0.0
    %7233 = vmatpush1.msra.mxu0 %v4381
    %7234 = vmatprep.subr.mxu0 0.0
    %7235 = vmatpush1.msra.mxu0 %v4382
    %7236 = vmatprep.subr.mxu0 0.0
    %7237 = vmatpush1.msra.mxu0 %v4383
    %7238 = vmatprep.subr.mxu0 0.0
    %7239 = vmatpush1.msra.mxu0 %v4384
    %7240 = vmatprep.subr.mxu0 0.0
    %7241 = vmatpush1.msra.mxu0 %v4385
    %7242 = vmatprep.subr.mxu0 0.0
    %7243 = vmatpush1.msra.mxu0 %v4386
    %7244 = vmatprep.mubr.f32.mxu0 %v7100
    %7245 = vmatmul.mubr.f32.gmra.mrb[0].mxu0 %v7099
    %v7246 = vpop.f32.mrb[0].mxu0
    %v7247 = vadd.f32 %v7172, %v7246
    %v7248 = vpop.f32.mrb[0].mxu0
    %7249 = vmatprep.mubr.f32.mxu0 %v7104
    %7250 = vmatmul.mubr.f32.gmra.mrb[0].mxu0 %v7103
    %v7251 = vpop.f32.mrb[0].mxu0
    %v7252 = vadd.f32 %v7177, %v7251
    %v7253 = vpop.f32.mrb[0].mxu0
    %7254 = vdwg.mxu0
    %7255 = vadd.xlane.f32.xlu0 %v7247
    %v7256 = vpop.xlane.xlu0 %7255
    %7257 = vadd.xlane.f32.xlu0 %v7252
    %v7258 = vpop.xlane.xlu0 %7257
    %v7259 = vmul.f32 %v7256, 0.033333335
    %v7260 = vmul.f32 %v7258, 0.033333335
    %v7261 = vsub.f32 %v7247, %v7259
    %v7262 = vsub.f32 %v7252, %v7260
    %v7263 = vmul.f32 %v7261, %v47
    %v7264 = vmul.f32 %v7262, %v47
    %v7265 = vmul.f32 %v7263, %v7263
    %v7266 = vmul.f32 %v7264, %v7264
    %7267 = vadd.xlane.f32.xlu0 %v7265
    %v7268 = vpop.xlane.xlu0 %7267
    %7269 = vadd.xlane.f32.xlu0 %v7266
    %v7270 = vpop.xlane.xlu0 %7269
    %v7271 = vmul.f32 %v7268, 0.033333335
    %v7272 = vmul.f32 %v7270, 0.033333335
    %v7273 = vadd.f32 %v7271, 1e-05
    %v7274 = vadd.f32 %v7272, 1e-05
    %v7275 = vrsqrt.pop %v7273
    %v7276 = vrsqrt.pop %v7274
    %v7277 = vmul.f32 %v7263, %v7275
    %v7278 = vmul.f32 %v7264, %v7276
    %v7279 = vld [vmem:[%s9] sm:$0xff]
    %v7280 = vld [vmem:[%s9 + $0x8] sm:$0xff]
    %v7281 = vld [vmem:[%s9 + $0x10] sm:$0xff]
    %v7282 = vld [vmem:[%s9 + $0x18] sm:$0xff]
    %v7283 = vld [vmem:[%s9 + $0x20] sm:$0xff]
    %v7284 = vld [vmem:[%s9 + $0x28] sm:$0xff]
    %v7285 = vld [vmem:[%s9 + $0x30] sm:$0xff]
    %v7286 = vld [vmem:[%s9 + $0x38] sm:$0xff]
    %v7287 = vld [vmem:[%s9 + $0x40] sm:$0xff]
    %v7288 = vld [vmem:[%s9 + $0x48] sm:$0xff]
    %v7289 = vld [vmem:[%s9 + $0x50] sm:$0xff]
    %v7290 = vld [vmem:[%s9 + $0x58] sm:$0xff]
    %v7291 = vld [vmem:[%s9 + $0x60] sm:$0xff]
    %v7292 = vld [vmem:[%s9 + $0x68] sm:$0xff]
    %v7293 = vld [vmem:[%s9 + $0x70] sm:$0xff]
    %v7294 = vld [vmem:[%s9 + $0x78] sm:$0xff]
    %v7295 = vld [vmem:[%s9 + $0x80] sm:$0xff]
    %v7296 = vld [vmem:[%s9 + $0x88] sm:$0xff]
    %v7297 = vld [vmem:[%s9 + $0x90] sm:$0xff]
    %v7298 = vld [vmem:[%s9 + $0x98] sm:$0xff]
    %v7299 = vld [vmem:[%s9 + $0xa0] sm:$0xff]
    %v7300 = vld [vmem:[%s9 + $0xa8] sm:$0xff]
    %v7301 = vld [vmem:[%s9 + $0xb0] sm:$0xff]
    %v7302 = vld [vmem:[%s9 + $0xb8] sm:$0xff]
    %v7303 = vld [vmem:[%s9 + $0xc0] sm:$0xff]
    %v7304 = vld [vmem:[%s9 + $0xc8] sm:$0xff]
    %v7305 = vld [vmem:[%s9 + $0xd0] sm:$0xff]
    %v7306 = vld [vmem:[%s9 + $0xd8] sm:$0xff]
    %v7307 = vld [vmem:[%s9 + $0xe0] sm:$0xff]
    %v7308 = vld [vmem:[%s9 + $0xe8] sm:$0xff]
    %v7309 = vld [vmem:[%s9 + $0xf0] sm:$0xff]
    %v7310 = vld [vmem:[%s9 + $0xf8] sm:$0xff]
    %v7311 = vld [vmem:[%s9 + $0x100] sm:$0xff]
    %v7312 = vld [vmem:[%s9 + $0x108] sm:$0xff]
    %v7313 = vld [vmem:[%s9 + $0x110] sm:$0xff]
    %v7314 = vld [vmem:[%s9 + $0x118] sm:$0xff]
    %v7315 = vld [vmem:[%s9 + $0x120] sm:$0xff]
    %v7316 = vld [vmem:[%s9 + $0x128] sm:$0xff]
    %v7317 = vld [vmem:[%s9 + $0x130] sm:$0xff]
    %v7318 = vld [vmem:[%s9 + $0x138] sm:$0xff]
    %v7319 = vld [vmem:[%s9 + $0x140] sm:$0xff]
    %v7320 = vld [vmem:[%s9 + $0x148] sm:$0xff]
    %v7321 = vld [vmem:[%s9 + $0x150] sm:$0xff]
    %v7322 = vld [vmem:[%s9 + $0x158] sm:$0xff]
    %v7323 = vld [vmem:[%s9 + $0x160] sm:$0xff]
    %v7324 = vld [vmem:[%s9 + $0x168] sm:$0xff]
    %v7325 = vld [vmem:[%s9 + $0x170] sm:$0xff]
    %v7326 = vld [vmem:[%s9 + $0x178] sm:$0xff]
    %v7327 = vld [vmem:[%s9 + $0x180] sm:$0xff]
    %v7328 = vld [vmem:[%s9 + $0x188] sm:$0xff]
    %v7329 = vld [vmem:[%s9 + $0x190] sm:$0xff]
    %v7330 = vld [vmem:[%s9 + $0x198] sm:$0xff]
    %v7331 = vld [vmem:[%s9 + $0x1a0] sm:$0xff]
    %v7332 = vld [vmem:[%s9 + $0x1a8] sm:$0xff]
    %v7333 = vld [vmem:[%s9 + $0x1b0] sm:$0xff]
    %v7334 = vld [vmem:[%s9 + $0x1b8] sm:$0xff]
    %v7335 = vld [vmem:[%s9 + $0x1c0] sm:$0xff]
    %v7336 = vld [vmem:[%s9 + $0x1c8] sm:$0xff]
    %v7337 = vld [vmem:[%s9 + $0x1d0] sm:$0xff]
    %v7338 = vld [vmem:[%s9 + $0x1d8] sm:$0xff]
    %v7339 = vld [vmem:[%s9 + $0x1e0] sm:$0xff]
    %v7340 = vld [vmem:[%s9 + $0x1e8] sm:$0xff]
    %v7341 = vld [vmem:[%s9 + $0x1f0] sm:$0xff]
    %v7342 = vld [vmem:[%s9 + $0x1f8] sm:$0xff]
    %v7343 = vld [vmem:[%s9 + $0x200] sm:$0xff]
    %v7344 = vld [vmem:[%s9 + $0x208] sm:$0xff]
    %v7345 = vld [vmem:[%s9 + $0x210] sm:$0xff]
    %v7346 = vld [vmem:[%s9 + $0x218] sm:$0xff]
    %v7347 = vld [vmem:[%s9 + $0x220] sm:$0xff]
    %v7348 = vld [vmem:[%s9 + $0x228] sm:$0xff]
    %v7349 = vld [vmem:[%s9 + $0x230] sm:$0xff]
    %v7350 = vld [vmem:[%s9 + $0x238] sm:$0xff]
    %v7351 = vld [vmem:[%s9 + $0x240] sm:$0xff]
    %v7352 = vld [vmem:[%s9 + $0x248] sm:$0xff]
    %v7353 = vld [vmem:[%s9 + $0x250] sm:$0xff]
    %v7354 = vld [vmem:[%s9 + $0x258] sm:$0xff]
    %v7355 = vld [vmem:[%s9 + $0x260] sm:$0xff]
    %v7356 = vld [vmem:[%s9 + $0x268] sm:$0xff]
    %v7357 = vld [vmem:[%s9 + $0x270] sm:$0xff]
    %v7358 = vld [vmem:[%s9 + $0x278] sm:$0xff]
    %v7359 = vld [vmem:[%s9 + $0x280] sm:$0xff]
    %v7360 = vld [vmem:[%s9 + $0x288] sm:$0xff]
    %v7361 = vld [vmem:[%s9 + $0x290] sm:$0xff]
    %v7362 = vld [vmem:[%s9 + $0x298] sm:$0xff]
    %v7363 = vld [vmem:[%s9 + $0x2a0] sm:$0xff]
    %v7364 = vld [vmem:[%s9 + $0x2a8] sm:$0xff]
    %v7365 = vld [vmem:[%s9 + $0x2b0] sm:$0xff]
    %v7366 = vld [vmem:[%s9 + $0x2b8] sm:$0xff]
    %v7367 = vld [vmem:[%s9 + $0x2c0] sm:$0xff]
    %v7368 = vld [vmem:[%s9 + $0x2c8] sm:$0xff]
    %v7369 = vld [vmem:[%s9 + $0x2d0] sm:$0xff]
    %v7370 = vld [vmem:[%s9 + $0x2d8] sm:$0xff]
    %v7371 = vld [vmem:[%s9 + $0x2e0] sm:$0xff]
    %v7372 = vld [vmem:[%s9 + $0x2e8] sm:$0xff]
    %v7373 = vld [vmem:[%s9 + $0x2f0] sm:$0xff]
    %v7374 = vld [vmem:[%s9 + $0x2f8] sm:$0xff]
    %v7375 = vld [vmem:[%s9 + $0x300] sm:$0xff]
    %v7376 = vld [vmem:[%s9 + $0x308] sm:$0xff]
    %v7377 = vld [vmem:[%s9 + $0x310] sm:$0xff]
    %v7378 = vld [vmem:[%s9 + $0x318] sm:$0xff]
    %v7379 = vld [vmem:[%s9 + $0x320] sm:$0xff]
    %v7380 = vld [vmem:[%s9 + $0x328] sm:$0xff]
    %v7381 = vld [vmem:[%s9 + $0x330] sm:$0xff]
    %v7382 = vld [vmem:[%s9 + $0x338] sm:$0xff]
    %v7383 = vld [vmem:[%s9 + $0x340] sm:$0xff]
    %v7384 = vld [vmem:[%s9 + $0x348] sm:$0xff]
    %v7385 = vld [vmem:[%s9 + $0x350] sm:$0xff]
    %v7386 = vld [vmem:[%s9 + $0x358] sm:$0xff]
    %v7387 = vld [vmem:[%s9 + $0x360] sm:$0xff]
    %v7388 = vld [vmem:[%s9 + $0x368] sm:$0xff]
    %v7389 = vld [vmem:[%s9 + $0x370] sm:$0xff]
    %v7390 = vld [vmem:[%s9 + $0x378] sm:$0xff]
    %v7391 = vld [vmem:[%s9 + $0x380] sm:$0xff]
    %v7392 = vld [vmem:[%s9 + $0x388] sm:$0xff]
    %v7393 = vld [vmem:[%s9 + $0x390] sm:$0xff]
    %v7394 = vld [vmem:[%s9 + $0x398] sm:$0xff]
    %v7395 = vld [vmem:[%s9 + $0x3a0] sm:$0xff]
    %v7396 = vld [vmem:[%s9 + $0x3a8] sm:$0xff]
    %v7397 = vld [vmem:[%s9 + $0x3b0] sm:$0xff]
    %v7398 = vld [vmem:[%s9 + $0x3b8] sm:$0xff]
    %v7399 = vld [vmem:[%s9 + $0x3c0] sm:$0xff]
    %v7400 = vld [vmem:[%s9 + $0x3c8] sm:$0xff]
    %v7401 = vld [vmem:[%s9 + $0x3d0] sm:$0xff]
    %v7402 = vld [vmem:[%s9 + $0x3d8] sm:$0xff]
    %v7403 = vld [vmem:[%s9 + $0x3e0] sm:$0xff]
    %v7404 = vld [vmem:[%s9 + $0x3e8] sm:$0xff]
    %v7405 = vld [vmem:[%s9 + $0x3f0] sm:$0xff]
    %v7406 = vld [vmem:[%s9 + $0x3f8] sm:$0xff]
    %7407 = vmatprep.subr.mxu0 %v7280
    %7408 = vmatpush1.msra.mxu0 %v7279
    %7409 = vmatprep.subr.mxu0 %v7288
    %7410 = vmatpush1.msra.mxu0 %v7287
    %7411 = vmatprep.subr.mxu0 %v7296
    %7412 = vmatpush1.msra.mxu0 %v7295
    %7413 = vmatprep.subr.mxu0 %v7304
    %7414 = vmatpush1.msra.mxu0 %v7303
    %7415 = vmatprep.subr.mxu0 %v7312
    %7416 = vmatpush1.msra.mxu0 %v7311
    %7417 = vmatprep.subr.mxu0 %v7320
    %7418 = vmatpush1.msra.mxu0 %v7319
    %7419 = vmatprep.subr.mxu0 %v7328
    %7420 = vmatpush1.msra.mxu0 %v7327
    %7421 = vmatprep.subr.mxu0 %v7336
    %7422 = vmatpush1.msra.mxu0 %v7335
    %7423 = vmatprep.subr.mxu0 %v7344
    %7424 = vmatpush1.msra.mxu0 %v7343
    %7425 = vmatprep.subr.mxu0 %v7352
    %7426 = vmatpush1.msra.mxu0 %v7351
    %7427 = vmatprep.subr.mxu0 %v7360
    %7428 = vmatpush1.msra.mxu0 %v7359
    %7429 = vmatprep.subr.mxu0 %v7368
    %7430 = vmatpush1.msra.mxu0 %v7367
    %7431 = vmatprep.subr.mxu0 %v7376
    %7432 = vmatpush1.msra.mxu0 %v7375
    %7433 = vmatprep.subr.mxu0 %v7384
    %7434 = vmatpush1.msra.mxu0 %v7383
    %7435 = vmatprep.subr.mxu0 %v7392
    %7436 = vmatpush1.msra.mxu0 %v7391
    %7437 = vmatprep.subr.mxu0 %v7400
    %7438 = vmatpush1.msra.mxu0 %v7399
    %7439 = vmatprep.subr.mxu0 0.0
    %7440 = vmatpush1.msra.mxu0 0.0
    %7441 = vmatprep.subr.mxu0 0.0
    %7442 = vmatpush1.msra.mxu0 0.0
    %7443 = vmatprep.subr.mxu0 0.0
    %7444 = vmatpush1.msra.mxu0 0.0
    %7445 = vmatprep.subr.mxu0 0.0
    %7446 = vmatpush1.msra.mxu0 0.0
    %7447 = vmatprep.subr.mxu0 0.0
    %7448 = vmatpush1.msra.mxu0 0.0
    %7449 = vmatprep.subr.mxu0 0.0
    %7450 = vmatpush1.msra.mxu0 0.0
    %7451 = vmatprep.subr.mxu0 0.0
    %7452 = vmatpush1.msra.mxu0 0.0
    %7453 = vmatprep.subr.mxu0 0.0
    %7454 = vmatpush1.msra.mxu0 0.0
    %7455 = vmatprep.subr.mxu0 0.0
    %7456 = vmatpush1.msra.mxu0 0.0
    %7457 = vmatprep.subr.mxu0 0.0
    %7458 = vmatpush1.msra.mxu0 0.0
    %7459 = vmatprep.subr.mxu0 0.0
    %7460 = vmatpush1.msra.mxu0 0.0
    %7461 = vmatprep.subr.mxu0 0.0
    %7462 = vmatpush1.msra.mxu0 0.0
    %7463 = vmatprep.subr.mxu0 0.0
    %7464 = vmatpush1.msra.mxu0 0.0
    %7465 = vmatprep.subr.mxu0 0.0
    %7466 = vmatpush1.msra.mxu0 0.0
    %7467 = vmatprep.subr.mxu0 0.0
    %7468 = vmatpush1.msra.mxu0 0.0
    %7469 = vmatprep.subr.mxu0 0.0
    %7470 = vmatpush1.msra.mxu0 0.0
    %7471 = vmatprep.mubr.f32.mxu0 0.0
    %7472 = vmatmul.mubr.f32.gmra.mrb[0].mxu0 %v7277
    %v7473 = vpop.f32.mrb[0].mxu0
    %v7474 = vadd.f32 0.0, %v7473
    %v7475 = vpop.f32.mrb[0].mxu0
    %v7476 = vadd.f32 0.0, %v7475
    %7477 = vmatprep.mubr.f32.mxu0 0.0
    %7478 = vmatmul.mubr.f32.gmra.mrb[0].mxu0 %v7278
    %v7479 = vpop.f32.mrb[0].mxu0
    %v7480 = vadd.f32 0.0, %v7479
    %v7481 = vpop.f32.mrb[0].mxu0
    %v7482 = vadd.f32 0.0, %v7481
    %7483 = vdwg.mxu0
    %7484 = vmatprep.subr.mxu0 %v7282
    %7485 = vmatpush1.msra.mxu0 %v7281
    %7486 = vmatprep.subr.mxu0 %v7290
    %7487 = vmatpush1.msra.mxu0 %v7289
    %7488 = vmatprep.subr.mxu0 %v7298
    %7489 = vmatpush1.msra.mxu0 %v7297
    %7490 = vmatprep.subr.mxu0 %v7306
    %7491 = vmatpush1.msra.mxu0 %v7305
    %7492 = vmatprep.subr.mxu0 %v7314
    %7493 = vmatpush1.msra.mxu0 %v7313
    %7494 = vmatprep.subr.mxu0 %v7322
    %7495 = vmatpush1.msra.mxu0 %v7321
    %7496 = vmatprep.subr.mxu0 %v7330
    %7497 = vmatpush1.msra.mxu0 %v7329
    %7498 = vmatprep.subr.mxu0 %v7338
    %7499 = vmatpush1.msra.mxu0 %v7337
    %7500 = vmatprep.subr.mxu0 %v7346
    %7501 = vmatpush1.msra.mxu0 %v7345
    %7502 = vmatprep.subr.mxu0 %v7354
    %7503 = vmatpush1.msra.mxu0 %v7353
    %7504 = vmatprep.subr.mxu0 %v7362
    %7505 = vmatpush1.msra.mxu0 %v7361
    %7506 = vmatprep.subr.mxu0 %v7370
    %7507 = vmatpush1.msra.mxu0 %v7369
    %7508 = vmatprep.subr.mxu0 %v7378
    %7509 = vmatpush1.msra.mxu0 %v7377
    %7510 = vmatprep.subr.mxu0 %v7386
    %7511 = vmatpush1.msra.mxu0 %v7385
    %7512 = vmatprep.subr.mxu0 %v7394
    %7513 = vmatpush1.msra.mxu0 %v7393
    %7514 = vmatprep.subr.mxu0 %v7402
    %7515 = vmatpush1.msra.mxu0 %v7401
    %7516 = vmatprep.subr.mxu0 0.0
    %7517 = vmatpush1.msra.mxu0 0.0
    %7518 = vmatprep.subr.mxu0 0.0
    %7519 = vmatpush1.msra.mxu0 0.0
    %7520 = vmatprep.subr.mxu0 0.0
    %7521 = vmatpush1.msra.mxu0 0.0
    %7522 = vmatprep.subr.mxu0 0.0
    %7523 = vmatpush1.msra.mxu0 0.0
    %7524 = vmatprep.subr.mxu0 0.0
    %7525 = vmatpush1.msra.mxu0 0.0
    %7526 = vmatprep.subr.mxu0 0.0
    %7527 = vmatpush1.msra.mxu0 0.0
    %7528 = vmatprep.subr.mxu0 0.0
    %7529 = vmatpush1.msra.mxu0 0.0
    %7530 = vmatprep.subr.mxu0 0.0
    %7531 = vmatpush1.msra.mxu0 0.0
    %7532 = vmatprep.subr.mxu0 0.0
    %7533 = vmatpush1.msra.mxu0 0.0
    %7534 = vmatprep.subr.mxu0 0.0
    %7535 = vmatpush1.msra.mxu0 0.0
    %7536 = vmatprep.subr.mxu0 0.0
    %7537 = vmatpush1.msra.mxu0 0.0
    %7538 = vmatprep.subr.mxu0 0.0
    %7539 = vmatpush1.msra.mxu0 0.0
    %7540 = vmatprep.subr.mxu0 0.0
    %7541 = vmatpush1.msra.mxu0 0.0
    %7542 = vmatprep.subr.mxu0 0.0
    %7543 = vmatpush1.msra.mxu0 0.0
    %7544 = vmatprep.subr.mxu0 0.0
    %7545 = vmatpush1.msra.mxu0 0.0
    %7546 = vmatprep.subr.mxu0 0.0
    %7547 = vmatpush1.msra.mxu0 0.0
    %7548 = vmatprep.mubr.f32.mxu0 0.0
    %7549 = vmatmul.mubr.f32.gmra.mrb[0].mxu0 %v7277
    %v7550 = vpop.f32.mrb[0].mxu0
    %v7551 = vadd.f32 0.0, %v7550
    %v7552 = vpop.f32.mrb[0].mxu0
    %v7553 = vadd.f32 0.0, %v7552
    %7554 = vmatprep.mubr.f32.mxu0 0.0
    %7555 = vmatmul.mubr.f32.gmra.mrb[0].mxu0 %v7278
    %v7556 = vpop.f32.mrb[0].mxu0
    %v7557 = vadd.f32 0.0, %v7556
    %v7558 = vpop.f32.mrb[0].mxu0
    %v7559 = vadd.f32 0.0, %v7558
    %7560 = vdwg.mxu0
    %7561 = vmatprep.subr.mxu0 %v7284
    %7562 = vmatpush1.msra.mxu0 %v7283
    %7563 = vmatprep.subr.mxu0 %v7292
    %7564 = vmatpush1.msra.mxu0 %v7291
    %7565 = vmatprep.subr.mxu0 %v7300
    %7566 = vmatpush1.msra.mxu0 %v7299
    %7567 = vmatprep.subr.mxu0 %v7308
    %7568 = vmatpush1.msra.mxu0 %v7307
    %7569 = vmatprep.subr.mxu0 %v7316
    %7570 = vmatpush1.msra.mxu0 %v7315
    %7571 = vmatprep.subr.mxu0 %v7324
    %7572 = vmatpush1.msra.mxu0 %v7323
    %7573 = vmatprep.subr.mxu0 %v7332
    %7574 = vmatpush1.msra.mxu0 %v7331
    %7575 = vmatprep.subr.mxu0 %v7340
    %7576 = vmatpush1.msra.mxu0 %v7339
    %7577 = vmatprep.subr.mxu0 %v7348
    %7578 = vmatpush1.msra.mxu0 %v7347
    %7579 = vmatprep.subr.mxu0 %v7356
    %7580 = vmatpush1.msra.mxu0 %v7355
    %7581 = vmatprep.subr.mxu0 %v7364
    %7582 = vmatpush1.msra.mxu0 %v7363
    %7583 = vmatprep.subr.mxu0 %v7372
    %7584 = vmatpush1.msra.mxu0 %v7371
    %7585 = vmatprep.subr.mxu0 %v7380
    %7586 = vmatpush1.msra.mxu0 %v7379
    %7587 = vmatprep.subr.mxu0 %v7388
    %7588 = vmatpush1.msra.mxu0 %v7387
    %7589 = vmatprep.subr.mxu0 %v7396
    %7590 = vmatpush1.msra.mxu0 %v7395
    %7591 = vmatprep.subr.mxu0 %v7404
    %7592 = vmatpush1.msra.mxu0 %v7403
    %7593 = vmatprep.subr.mxu0 0.0
    %7594 = vmatpush1.msra.mxu0 0.0
    %7595 = vmatprep.subr.mxu0 0.0
    %7596 = vmatpush1.msra.mxu0 0.0
    %7597 = vmatprep.subr.mxu0 0.0
    %7598 = vmatpush1.msra.mxu0 0.0
    %7599 = vmatprep.subr.mxu0 0.0
    %7600 = vmatpush1.msra.mxu0 0.0
    %7601 = vmatprep.subr.mxu0 0.0
    %7602 = vmatpush1.msra.mxu0 0.0
    %7603 = vmatprep.subr.mxu0 0.0
    %7604 = vmatpush1.msra.mxu0 0.0
    %7605 = vmatprep.subr.mxu0 0.0
    %7606 = vmatpush1.msra.mxu0 0.0
    %7607 = vmatprep.subr.mxu0 0.0
    %7608 = vmatpush1.msra.mxu0 0.0
    %7609 = vmatprep.subr.mxu0 0.0
    %7610 = vmatpush1.msra.mxu0 0.0
    %7611 = vmatprep.subr.mxu0 0.0
    %7612 = vmatpush1.msra.mxu0 0.0
    %7613 = vmatprep.subr.mxu0 0.0
    %7614 = vmatpush1.msra.mxu0 0.0
    %7615 = vmatprep.subr.mxu0 0.0
    %7616 = vmatpush1.msra.mxu0 0.0
    %7617 = vmatprep.subr.mxu0 0.0
    %7618 = vmatpush1.msra.mxu0 0.0
    %7619 = vmatprep.subr.mxu0 0.0
    %7620 = vmatpush1.msra.mxu0 0.0
    %7621 = vmatprep.subr.mxu0 0.0
    %7622 = vmatpush1.msra.mxu0 0.0
    %7623 = vmatprep.subr.mxu0 0.0
    %7624 = vmatpush1.msra.mxu0 0.0
    %7625 = vmatprep.mubr.f32.mxu0 0.0
    %7626 = vmatmul.mubr.f32.gmra.mrb[0].mxu0 %v7277
    %v7627 = vpop.f32.mrb[0].mxu0
    %v7628 = vadd.f32 0.0, %v7627
    %v7629 = vpop.f32.mrb[0].mxu0
    %v7630 = vadd.f32 0.0, %v7629
    %7631 = vmatprep.mubr.f32.mxu0 0.0
    %7632 = vmatmul.mubr.f32.gmra.mrb[0].mxu0 %v7278
    %v7633 = vpop.f32.mrb[0].mxu0
    %v7634 = vadd.f32 0.0, %v7633
    %v7635 = vpop.f32.mrb[0].mxu0
    %v7636 = vadd.f32 0.0, %v7635
    %7637 = vdwg.mxu0
    %7638 = vmatprep.subr.mxu0 %v7286
    %7639 = vmatpush1.msra.mxu0 %v7285
    %7640 = vmatprep.subr.mxu0 %v7294
    %7641 = vmatpush1.msra.mxu0 %v7293
    %7642 = vmatprep.subr.mxu0 %v7302
    %7643 = vmatpush1.msra.mxu0 %v7301
    %7644 = vmatprep.subr.mxu0 %v7310
    %7645 = vmatpush1.msra.mxu0 %v7309
    %7646 = vmatprep.subr.mxu0 %v7318
    %7647 = vmatpush1.msra.mxu0 %v7317
    %7648 = vmatprep.subr.mxu0 %v7326
    %7649 = vmatpush1.msra.mxu0 %v7325
    %7650 = vmatprep.subr.mxu0 %v7334
    %7651 = vmatpush1.msra.mxu0 %v7333
    %7652 = vmatprep.subr.mxu0 %v7342
    %7653 = vmatpush1.msra.mxu0 %v7341
    %7654 = vmatprep.subr.mxu0 %v7350
    %7655 = vmatpush1.msra.mxu0 %v7349
    %7656 = vmatprep.subr.mxu0 %v7358
    %7657 = vmatpush1.msra.mxu0 %v7357
    %7658 = vmatprep.subr.mxu0 %v7366
    %7659 = vmatpush1.msra.mxu0 %v7365
    %7660 = vmatprep.subr.mxu0 %v7374
    %7661 = vmatpush1.msra.mxu0 %v7373
    %7662 = vmatprep.subr.mxu0 %v7382
    %7663 = vmatpush1.msra.mxu0 %v7381
    %7664 = vmatprep.subr.mxu0 %v7390
    %7665 = vmatpush1.msra.mxu0 %v7389
    %7666 = vmatprep.subr.mxu0 %v7398
    %7667 = vmatpush1.msra.mxu0 %v7397
    %7668 = vmatprep.subr.mxu0 %v7406
    %7669 = vmatpush1.msra.mxu0 %v7405
    %7670 = vmatprep.subr.mxu0 0.0
    %7671 = vmatpush1.msra.mxu0 0.0
    %7672 = vmatprep.subr.mxu0 0.0
    %7673 = vmatpush1.msra.mxu0 0.0
    %7674 = vmatprep.subr.mxu0 0.0
    %7675 = vmatpush1.msra.mxu0 0.0
    %7676 = vmatprep.subr.mxu0 0.0
    %7677 = vmatpush1.msra.mxu0 0.0
    %7678 = vmatprep.subr.mxu0 0.0
    %7679 = vmatpush1.msra.mxu0 0.0
    %7680 = vmatprep.subr.mxu0 0.0
    %7681 = vmatpush1.msra.mxu0 0.0
    %7682 = vmatprep.subr.mxu0 0.0
    %7683 = vmatpush1.msra.mxu0 0.0
    %7684 = vmatprep.subr.mxu0 0.0
    %7685 = vmatpush1.msra.mxu0 0.0
    %7686 = vmatprep.subr.mxu0 0.0
    %7687 = vmatpush1.msra.mxu0 0.0
    %7688 = vmatprep.subr.mxu0 0.0
    %7689 = vmatpush1.msra.mxu0 0.0
    %7690 = vmatprep.subr.mxu0 0.0
    %7691 = vmatpush1.msra.mxu0 0.0
    %7692 = vmatprep.subr.mxu0 0.0
    %7693 = vmatpush1.msra.mxu0 0.0
    %7694 = vmatprep.subr.mxu0 0.0
    %7695 = vmatpush1.msra.mxu0 0.0
    %7696 = vmatprep.subr.mxu0 0.0
    %7697 = vmatpush1.msra.mxu0 0.0
    %7698 = vmatprep.subr.mxu0 0.0
    %7699 = vmatpush1.msra.mxu0 0.0
    %7700 = vmatprep.subr.mxu0 0.0
    %7701 = vmatpush1.msra.mxu0 0.0
    %7702 = vmatprep.mubr.f32.mxu0 0.0
    %7703 = vmatmul.mubr.f32.gmra.mrb[0].mxu0 %v7277
    %v7704 = vpop.f32.mrb[0].mxu0
    %v7705 = vadd.f32 0.0, %v7704
    %v7706 = vpop.f32.mrb[0].mxu0
    %v7707 = vadd.f32 0.0, %v7706
    %7708 = vmatprep.mubr.f32.mxu0 0.0
    %7709 = vmatmul.mubr.f32.gmra.mrb[0].mxu0 %v7278
    %v7710 = vpop.f32.mrb[0].mxu0
    %v7711 = vadd.f32 0.0, %v7710
    %v7712 = vpop.f32.mrb[0].mxu0
    %v7713 = vadd.f32 0.0, %v7712
    %7714 = vdwg.mxu0
    %v7715 = vmax.f32 %v7474, 0.0
    %v7716 = vmax.f32 %v7476, 0.0
    %v7717 = vmax.f32 %v7551, 0.0
    %v7718 = vmax.f32 %v7553, 0.0
    %v7719 = vmax.f32 %v7628, 0.0
    %v7720 = vmax.f32 %v7630, 0.0
    %v7721 = vmax.f32 %v7705, 0.0
    %v7722 = vmax.f32 %v7707, 0.0
    %v7723 = vmax.f32 %v7480, 0.0
    %v7724 = vmax.f32 %v7482, 0.0
    %v7725 = vmax.f32 %v7557, 0.0
    %v7726 = vmax.f32 %v7559, 0.0
    %v7727 = vmax.f32 %v7634, 0.0
    %v7728 = vmax.f32 %v7636, 0.0
    %v7729 = vmax.f32 %v7711, 0.0
    %v7730 = vmax.f32 %v7713, 0.0
    %v7731 = vld [vmem:[%s10] sm:$0xff]
    %v7732 = vld [vmem:[%s10 + $0x8] sm:$0xff]
    %v7733 = vld [vmem:[%s10 + $0x10] sm:$0xff]
    %v7734 = vld [vmem:[%s10 + $0x18] sm:$0xff]
    %v7735 = vld [vmem:[%s10 + $0x20] sm:$0xff]
    %v7736 = vld [vmem:[%s10 + $0x28] sm:$0xff]
    %v7737 = vld [vmem:[%s10 + $0x30] sm:$0xff]
    %v7738 = vld [vmem:[%s10 + $0x38] sm:$0xff]
    %v7739 = vld [vmem:[%s10 + $0x40] sm:$0xff]
    %v7740 = vld [vmem:[%s10 + $0x48] sm:$0xff]
    %v7741 = vld [vmem:[%s10 + $0x50] sm:$0xff]
    %v7742 = vld [vmem:[%s10 + $0x58] sm:$0xff]
    %v7743 = vld [vmem:[%s10 + $0x60] sm:$0xff]
    %v7744 = vld [vmem:[%s10 + $0x68] sm:$0xff]
    %v7745 = vld [vmem:[%s10 + $0x70] sm:$0xff]
    %v7746 = vld [vmem:[%s10 + $0x78] sm:$0xff]
    %v7747 = vld [vmem:[%s10 + $0x80] sm:$0xff]
    %v7748 = vld [vmem:[%s10 + $0x88] sm:$0xff]
    %v7749 = vld [vmem:[%s10 + $0x90] sm:$0xff]
    %v7750 = vld [vmem:[%s10 + $0x98] sm:$0xff]
    %v7751 = vld [vmem:[%s10 + $0xa0] sm:$0xff]
    %v7752 = vld [vmem:[%s10 + $0xa8] sm:$0xff]
    %v7753 = vld [vmem:[%s10 + $0xb0] sm:$0xff]
    %v7754 = vld [vmem:[%s10 + $0xb8] sm:$0xff]
    %v7755 = vld [vmem:[%s10 + $0xc0] sm:$0xff]
    %v7756 = vld [vmem:[%s10 + $0xc8] sm:$0xff]
    %v7757 = vld [vmem:[%s10 + $0xd0] sm:$0xff]
    %v7758 = vld [vmem:[%s10 + $0xd8] sm:$0xff]
    %v7759 = vld [vmem:[%s10 + $0xe0] sm:$0xff]
    %v7760 = vld [vmem:[%s10 + $0xe8] sm:$0xff]
    %v7761 = vld [vmem:[%s10 + $0xf0] sm:$0xff]
    %v7762 = vld [vmem:[%s10 + $0xf8] sm:$0xff]
    %v7763 = vld [vmem:[%s10 + $0x100] sm:$0xff]
    %v7764 = vld [vmem:[%s10 + $0x108] sm:$0xff]
    %v7765 = vld [vmem:[%s10 + $0x110] sm:$0xff]
    %v7766 = vld [vmem:[%s10 + $0x118] sm:$0xff]
    %v7767 = vld [vmem:[%s10 + $0x120] sm:$0xff]
    %v7768 = vld [vmem:[%s10 + $0x128] sm:$0xff]
    %v7769 = vld [vmem:[%s10 + $0x130] sm:$0xff]
    %v7770 = vld [vmem:[%s10 + $0x138] sm:$0xff]
    %v7771 = vld [vmem:[%s10 + $0x140] sm:$0xff]
    %v7772 = vld [vmem:[%s10 + $0x148] sm:$0xff]
    %v7773 = vld [vmem:[%s10 + $0x150] sm:$0xff]
    %v7774 = vld [vmem:[%s10 + $0x158] sm:$0xff]
    %v7775 = vld [vmem:[%s10 + $0x160] sm:$0xff]
    %v7776 = vld [vmem:[%s10 + $0x168] sm:$0xff]
    %v7777 = vld [vmem:[%s10 + $0x170] sm:$0xff]
    %v7778 = vld [vmem:[%s10 + $0x178] sm:$0xff]
    %v7779 = vld [vmem:[%s10 + $0x180] sm:$0xff]
    %v7780 = vld [vmem:[%s10 + $0x188] sm:$0xff]
    %v7781 = vld [vmem:[%s10 + $0x190] sm:$0xff]
    %v7782 = vld [vmem:[%s10 + $0x198] sm:$0xff]
    %v7783 = vld [vmem:[%s10 + $0x1a0] sm:$0xff]
    %v7784 = vld [vmem:[%s10 + $0x1a8] sm:$0xff]
    %v7785 = vld [vmem:[%s10 + $0x1b0] sm:$0xff]
    %v7786 = vld [vmem:[%s10 + $0x1b8] sm:$0xff]
    %v7787 = vld [vmem:[%s10 + $0x1c0] sm:$0xff]
    %v7788 = vld [vmem:[%s10 + $0x1c8] sm:$0xff]
    %v7789 = vld [vmem:[%s10 + $0x1d0] sm:$0xff]
    %v7790 = vld [vmem:[%s10 + $0x1d8] sm:$0xff]
    %v7791 = vld [vmem:[%s10 + $0x1e0] sm:$0xff]
    %v7792 = vld [vmem:[%s10 + $0x1e8] sm:$0xff]
    %v7793 = vld [vmem:[%s10 + $0x1f0] sm:$0xff]
    %v7794 = vld [vmem:[%s10 + $0x1f8] sm:$0xff]
    %v7795 = vld [vmem:[%s10 + $0x200] sm:$0xff]
    %v7796 = vld [vmem:[%s10 + $0x208] sm:$0xff]
    %v7797 = vld [vmem:[%s10 + $0x210] sm:$0xff]
    %v7798 = vld [vmem:[%s10 + $0x218] sm:$0xff]
    %v7799 = vld [vmem:[%s10 + $0x220] sm:$0xff]
    %v7800 = vld [vmem:[%s10 + $0x228] sm:$0xff]
    %v7801 = vld [vmem:[%s10 + $0x230] sm:$0xff]
    %v7802 = vld [vmem:[%s10 + $0x238] sm:$0xff]
    %v7803 = vld [vmem:[%s10 + $0x240] sm:$0xff]
    %v7804 = vld [vmem:[%s10 + $0x248] sm:$0xff]
    %v7805 = vld [vmem:[%s10 + $0x250] sm:$0xff]
    %v7806 = vld [vmem:[%s10 + $0x258] sm:$0xff]
    %v7807 = vld [vmem:[%s10 + $0x260] sm:$0xff]
    %v7808 = vld [vmem:[%s10 + $0x268] sm:$0xff]
    %v7809 = vld [vmem:[%s10 + $0x270] sm:$0xff]
    %v7810 = vld [vmem:[%s10 + $0x278] sm:$0xff]
    %v7811 = vld [vmem:[%s10 + $0x280] sm:$0xff]
    %v7812 = vld [vmem:[%s10 + $0x288] sm:$0xff]
    %v7813 = vld [vmem:[%s10 + $0x290] sm:$0xff]
    %v7814 = vld [vmem:[%s10 + $0x298] sm:$0xff]
    %v7815 = vld [vmem:[%s10 + $0x2a0] sm:$0xff]
    %v7816 = vld [vmem:[%s10 + $0x2a8] sm:$0xff]
    %v7817 = vld [vmem:[%s10 + $0x2b0] sm:$0xff]
    %v7818 = vld [vmem:[%s10 + $0x2b8] sm:$0xff]
    %v7819 = vld [vmem:[%s10 + $0x2c0] sm:$0xff]
    %v7820 = vld [vmem:[%s10 + $0x2c8] sm:$0xff]
    %v7821 = vld [vmem:[%s10 + $0x2d0] sm:$0xff]
    %v7822 = vld [vmem:[%s10 + $0x2d8] sm:$0xff]
    %v7823 = vld [vmem:[%s10 + $0x2e0] sm:$0xff]
    %v7824 = vld [vmem:[%s10 + $0x2e8] sm:$0xff]
    %v7825 = vld [vmem:[%s10 + $0x2f0] sm:$0xff]
    %v7826 = vld [vmem:[%s10 + $0x2f8] sm:$0xff]
    %v7827 = vld [vmem:[%s10 + $0x300] sm:$0xff]
    %v7828 = vld [vmem:[%s10 + $0x308] sm:$0xff]
    %v7829 = vld [vmem:[%s10 + $0x310] sm:$0xff]
    %v7830 = vld [vmem:[%s10 + $0x318] sm:$0xff]
    %v7831 = vld [vmem:[%s10 + $0x320] sm:$0xff]
    %v7832 = vld [vmem:[%s10 + $0x328] sm:$0xff]
    %v7833 = vld [vmem:[%s10 + $0x330] sm:$0xff]
    %v7834 = vld [vmem:[%s10 + $0x338] sm:$0xff]
    %v7835 = vld [vmem:[%s10 + $0x340] sm:$0xff]
    %v7836 = vld [vmem:[%s10 + $0x348] sm:$0xff]
    %v7837 = vld [vmem:[%s10 + $0x350] sm:$0xff]
    %v7838 = vld [vmem:[%s10 + $0x358] sm:$0xff]
    %v7839 = vld [vmem:[%s10 + $0x360] sm:$0xff]
    %v7840 = vld [vmem:[%s10 + $0x368] sm:$0xff]
    %v7841 = vld [vmem:[%s10 + $0x370] sm:$0xff]
    %v7842 = vld [vmem:[%s10 + $0x378] sm:$0xff]
    %v7843 = vld [vmem:[%s10 + $0x380] sm:$0xff]
    %v7844 = vld [vmem:[%s10 + $0x388] sm:$0xff]
    %v7845 = vld [vmem:[%s10 + $0x390] sm:$0xff]
    %v7846 = vld [vmem:[%s10 + $0x398] sm:$0xff]
    %v7847 = vld [vmem:[%s10 + $0x3a0] sm:$0xff]
    %v7848 = vld [vmem:[%s10 + $0x3a8] sm:$0xff]
    %v7849 = vld [vmem:[%s10 + $0x3b0] sm:$0xff]
    %v7850 = vld [vmem:[%s10 + $0x3b8] sm:$0xff]
    %v7851 = vld [vmem:[%s10 + $0x3c0] sm:$0xff]
    %v7852 = vld [vmem:[%s10 + $0x3c8] sm:$0xff]
    %v7853 = vld [vmem:[%s10 + $0x3d0] sm:$0xff]
    %v7854 = vld [vmem:[%s10 + $0x3d8] sm:$0xff]
    %v7855 = vld [vmem:[%s10 + $0x3e0] sm:$0xff]
    %v7856 = vld [vmem:[%s10 + $0x3e8] sm:$0xff]
    %v7857 = vld [vmem:[%s10 + $0x3f0] sm:$0xff]
    %v7858 = vld [vmem:[%s10 + $0x3f8] sm:$0xff]
    %7859 = vmatprep.subr.mxu0 0.0
    %7860 = vmatpush1.msra.mxu0 %v7731
    %7861 = vmatprep.subr.mxu0 0.0
    %7862 = vmatpush1.msra.mxu0 %v7732
    %7863 = vmatprep.subr.mxu0 0.0
    %7864 = vmatpush1.msra.mxu0 %v7733
    %7865 = vmatprep.subr.mxu0 0.0
    %7866 = vmatpush1.msra.mxu0 %v7734
    %7867 = vmatprep.subr.mxu0 0.0
    %7868 = vmatpush1.msra.mxu0 %v7735
    %7869 = vmatprep.subr.mxu0 0.0
    %7870 = vmatpush1.msra.mxu0 %v7736
    %7871 = vmatprep.subr.mxu0 0.0
    %7872 = vmatpush1.msra.mxu0 %v7737
    %7873 = vmatprep.subr.mxu0 0.0
    %7874 = vmatpush1.msra.mxu0 %v7738
    %7875 = vmatprep.subr.mxu0 0.0
    %7876 = vmatpush1.msra.mxu0 %v7739
    %7877 = vmatprep.subr.mxu0 0.0
    %7878 = vmatpush1.msra.mxu0 %v7740
    %7879 = vmatprep.subr.mxu0 0.0
    %7880 = vmatpush1.msra.mxu0 %v7741
    %7881 = vmatprep.subr.mxu0 0.0
    %7882 = vmatpush1.msra.mxu0 %v7742
    %7883 = vmatprep.subr.mxu0 0.0
    %7884 = vmatpush1.msra.mxu0 %v7743
    %7885 = vmatprep.subr.mxu0 0.0
    %7886 = vmatpush1.msra.mxu0 %v7744
    %7887 = vmatprep.subr.mxu0 0.0
    %7888 = vmatpush1.msra.mxu0 %v7745
    %7889 = vmatprep.subr.mxu0 0.0
    %7890 = vmatpush1.msra.mxu0 %v7746
    %7891 = vmatprep.subr.mxu0 0.0
    %7892 = vmatpush1.msra.mxu0 %v7747
    %7893 = vmatprep.subr.mxu0 0.0
    %7894 = vmatpush1.msra.mxu0 %v7748
    %7895 = vmatprep.subr.mxu0 0.0
    %7896 = vmatpush1.msra.mxu0 %v7749
    %7897 = vmatprep.subr.mxu0 0.0
    %7898 = vmatpush1.msra.mxu0 %v7750
    %7899 = vmatprep.subr.mxu0 0.0
    %7900 = vmatpush1.msra.mxu0 %v7751
    %7901 = vmatprep.subr.mxu0 0.0
    %7902 = vmatpush1.msra.mxu0 %v7752
    %7903 = vmatprep.subr.mxu0 0.0
    %7904 = vmatpush1.msra.mxu0 %v7753
    %7905 = vmatprep.subr.mxu0 0.0
    %7906 = vmatpush1.msra.mxu0 %v7754
    %7907 = vmatprep.subr.mxu0 0.0
    %7908 = vmatpush1.msra.mxu0 %v7755
    %7909 = vmatprep.subr.mxu0 0.0
    %7910 = vmatpush1.msra.mxu0 %v7756
    %7911 = vmatprep.subr.mxu0 0.0
    %7912 = vmatpush1.msra.mxu0 %v7757
    %7913 = vmatprep.subr.mxu0 0.0
    %7914 = vmatpush1.msra.mxu0 %v7758
    %7915 = vmatprep.subr.mxu0 0.0
    %7916 = vmatpush1.msra.mxu0 %v7759
    %7917 = vmatprep.subr.mxu0 0.0
    %7918 = vmatpush1.msra.mxu0 %v7760
    %7919 = vmatprep.subr.mxu0 0.0
    %7920 = vmatpush1.msra.mxu0 %v7761
    %7921 = vmatprep.subr.mxu0 0.0
    %7922 = vmatpush1.msra.mxu0 %v7762
    %7923 = vmatprep.mubr.f32.mxu0 %v7716
    %7924 = vmatmul.mubr.f32.gmra.mrb[0].mxu0 %v7715
    %v7925 = vpop.f32.mrb[0].mxu0
    %v7926 = vadd.f32 %v7277, %v7925
    %v7927 = vpop.f32.mrb[0].mxu0
    %7928 = vmatprep.mubr.f32.mxu0 %v7724
    %7929 = vmatmul.mubr.f32.gmra.mrb[0].mxu0 %v7723
    %v7930 = vpop.f32.mrb[0].mxu0
    %v7931 = vadd.f32 %v7278, %v7930
    %v7932 = vpop.f32.mrb[0].mxu0
    %7933 = vdwg.mxu0
    %7934 = vmatprep.subr.mxu0 0.0
    %7935 = vmatpush1.msra.mxu0 %v7763
    %7936 = vmatprep.subr.mxu0 0.0
    %7937 = vmatpush1.msra.mxu0 %v7764
    %7938 = vmatprep.subr.mxu0 0.0
    %7939 = vmatpush1.msra.mxu0 %v7765
    %7940 = vmatprep.subr.mxu0 0.0
    %7941 = vmatpush1.msra.mxu0 %v7766
    %7942 = vmatprep.subr.mxu0 0.0
    %7943 = vmatpush1.msra.mxu0 %v7767
    %7944 = vmatprep.subr.mxu0 0.0
    %7945 = vmatpush1.msra.mxu0 %v7768
    %7946 = vmatprep.subr.mxu0 0.0
    %7947 = vmatpush1.msra.mxu0 %v7769
    %7948 = vmatprep.subr.mxu0 0.0
    %7949 = vmatpush1.msra.mxu0 %v7770
    %7950 = vmatprep.subr.mxu0 0.0
    %7951 = vmatpush1.msra.mxu0 %v7771
    %7952 = vmatprep.subr.mxu0 0.0
    %7953 = vmatpush1.msra.mxu0 %v7772
    %7954 = vmatprep.subr.mxu0 0.0
    %7955 = vmatpush1.msra.mxu0 %v7773
    %7956 = vmatprep.subr.mxu0 0.0
    %7957 = vmatpush1.msra.mxu0 %v7774
    %7958 = vmatprep.subr.mxu0 0.0
    %7959 = vmatpush1.msra.mxu0 %v7775
    %7960 = vmatprep.subr.mxu0 0.0
    %7961 = vmatpush1.msra.mxu0 %v7776
    %7962 = vmatprep.subr.mxu0 0.0
    %7963 = vmatpush1.msra.mxu0 %v7777
    %7964 = vmatprep.subr.mxu0 0.0
    %7965 = vmatpush1.msra.mxu0 %v7778
    %7966 = vmatprep.subr.mxu0 0.0
    %7967 = vmatpush1.msra.mxu0 %v7779
    %7968 = vmatprep.subr.mxu0 0.0
    %7969 = vmatpush1.msra.mxu0 %v7780
    %7970 = vmatprep.subr.mxu0 0.0
    %7971 = vmatpush1.msra.mxu0 %v7781
    %7972 = vmatprep.subr.mxu0 0.0
    %7973 = vmatpush1.msra.mxu0 %v7782
    %7974 = vmatprep.subr.mxu0 0.0
    %7975 = vmatpush1.msra.mxu0 %v7783
    %7976 = vmatprep.subr.mxu0 0.0
    %7977 = vmatpush1.msra.mxu0 %v7784
    %7978 = vmatprep.subr.mxu0 0.0
    %7979 = vmatpush1.msra.mxu0 %v7785
    %7980 = vmatprep.subr.mxu0 0.0
    %7981 = vmatpush1.msra.mxu0 %v7786
    %7982 = vmatprep.subr.mxu0 0.0
    %7983 = vmatpush1.msra.mxu0 %v7787
    %7984 = vmatprep.subr.mxu0 0.0
    %7985 = vmatpush1.msra.mxu0 %v7788
    %7986 = vmatprep.subr.mxu0 0.0
    %7987 = vmatpush1.msra.mxu0 %v7789
    %7988 = vmatprep.subr.mxu0 0.0
    %7989 = vmatpush1.msra.mxu0 %v7790
    %7990 = vmatprep.subr.mxu0 0.0
    %7991 = vmatpush1.msra.mxu0 %v7791
    %7992 = vmatprep.subr.mxu0 0.0
    %7993 = vmatpush1.msra.mxu0 %v7792
    %7994 = vmatprep.subr.mxu0 0.0
    %7995 = vmatpush1.msra.mxu0 %v7793
    %7996 = vmatprep.subr.mxu0 0.0
    %7997 = vmatpush1.msra.mxu0 %v7794
    %7998 = vmatprep.mubr.f32.mxu0 %v7718
    %7999 = vmatmul.mubr.f32.gmra.mrb[0].mxu0 %v7717
    %v8000 = vpop.f32.mrb[0].mxu0
    %v8001 = vadd.f32 %v7926, %v8000
    %v8002 = vpop.f32.mrb[0].mxu0
    %8003 = vmatprep.mubr.f32.mxu0 %v7726
    %8004 = vmatmul.mubr.f32.gmra.mrb[0].mxu0 %v7725
    %v8005 = vpop.f32.mrb[0].mxu0
    %v8006 = vadd.f32 %v7931, %v8005
    %v8007 = vpop.f32.mrb[0].mxu0
    %8008 = vdwg.mxu0
    %8009 = vmatprep.subr.mxu0 0.0
    %8010 = vmatpush1.msra.mxu0 %v7795
    %8011 = vmatprep.subr.mxu0 0.0
    %8012 = vmatpush1.msra.mxu0 %v7796
    %8013 = vmatprep.subr.mxu0 0.0
    %8014 = vmatpush1.msra.mxu0 %v7797
    %8015 = vmatprep.subr.mxu0 0.0
    %8016 = vmatpush1.msra.mxu0 %v7798
    %8017 = vmatprep.subr.mxu0 0.0
    %8018 = vmatpush1.msra.mxu0 %v7799
    %8019 = vmatprep.subr.mxu0 0.0
    %8020 = vmatpush1.msra.mxu0 %v7800
    %8021 = vmatprep.subr.mxu0 0.0
    %8022 = vmatpush1.msra.mxu0 %v7801
    %8023 = vmatprep.subr.mxu0 0.0
    %8024 = vmatpush1.msra.mxu0 %v7802
    %8025 = vmatprep.subr.mxu0 0.0
    %8026 = vmatpush1.msra.mxu0 %v7803
    %8027 = vmatprep.subr.mxu0 0.0
    %8028 = vmatpush1.msra.mxu0 %v7804
    %8029 = vmatprep.subr.mxu0 0.0
    %8030 = vmatpush1.msra.mxu0 %v7805
    %8031 = vmatprep.subr.mxu0 0.0
    %8032 = vmatpush1.msra.mxu0 %v7806
    %8033 = vmatprep.subr.mxu0 0.0
    %8034 = vmatpush1.msra.mxu0 %v7807
    %8035 = vmatprep.subr.mxu0 0.0
    %8036 = vmatpush1.msra.mxu0 %v7808
    %8037 = vmatprep.subr.mxu0 0.0
    %8038 = vmatpush1.msra.mxu0 %v7809
    %8039 = vmatprep.subr.mxu0 0.0
    %8040 = vmatpush1.msra.mxu0 %v7810
    %8041 = vmatprep.subr.mxu0 0.0
    %8042 = vmatpush1.msra.mxu0 %v7811
    %8043 = vmatprep.subr.mxu0 0.0
    %8044 = vmatpush1.msra.mxu0 %v7812
    %8045 = vmatprep.subr.mxu0 0.0
    %8046 = vmatpush1.msra.mxu0 %v7813
    %8047 = vmatprep.subr.mxu0 0.0
    %8048 = vmatpush1.msra.mxu0 %v7814
    %8049 = vmatprep.subr.mxu0 0.0
    %8050 = vmatpush1.msra.mxu0 %v7815
    %8051 = vmatprep.subr.mxu0 0.0
    %8052 = vmatpush1.msra.mxu0 %v7816
    %8053 = vmatprep.subr.mxu0 0.0
    %8054 = vmatpush1.msra.mxu0 %v7817
    %8055 = vmatprep.subr.mxu0 0.0
    %8056 = vmatpush1.msra.mxu0 %v7818
    %8057 = vmatprep.subr.mxu0 0.0
    %8058 = vmatpush1.msra.mxu0 %v7819
    %8059 = vmatprep.subr.mxu0 0.0
    %8060 = vmatpush1.msra.mxu0 %v7820
    %8061 = vmatprep.subr.mxu0 0.0
    %8062 = vmatpush1.msra.mxu0 %v7821
    %8063 = vmatprep.subr.mxu0 0.0
    %8064 = vmatpush1.msra.mxu0 %v7822
    %8065 = vmatprep.subr.mxu0 0.0
    %8066 = vmatpush1.msra.mxu0 %v7823
    %8067 = vmatprep.subr.mxu0 0.0
    %8068 = vmatpush1.msra.mxu0 %v7824
    %8069 = vmatprep.subr.mxu0 0.0
    %8070 = vmatpush1.msra.mxu0 %v7825
    %8071 = vmatprep.subr.mxu0 0.0
    %8072 = vmatpush1.msra.mxu0 %v7826
    %8073 = vmatprep.mubr.f32.mxu0 %v7720
    %8074 = vmatmul.mubr.f32.gmra.mrb[0].mxu0 %v7719
    %v8075 = vpop.f32.mrb[0].mxu0
    %v8076 = vadd.f32 %v8001, %v8075
    %v8077 = vpop.f32.mrb[0].mxu0
    %8078 = vmatprep.mubr.f32.mxu0 %v7728
    %8079 = vmatmul.mubr.f32.gmra.mrb[0].mxu0 %v7727
    %v8080 = vpop.f32.mrb[0].mxu0
    %v8081 = vadd.f32 %v8006, %v8080
    %v8082 = vpop.f32.mrb[0].mxu0
    %8083 = vdwg.mxu0
    %8084 = vmatprep.subr.mxu0 0.0
    %8085 = vmatpush1.msra.mxu0 %v7827
    %8086 = vmatprep.subr.mxu0 0.0
    %8087 = vmatpush1.msra.mxu0 %v7828
    %8088 = vmatprep.subr.mxu0 0.0
    %8089 = vmatpush1.msra.mxu0 %v7829
    %8090 = vmatprep.subr.mxu0 0.0
    %8091 = vmatpush1.msra.mxu0 %v7830
    %8092 = vmatprep.subr.mxu0 0.0
    %8093 = vmatpush1.msra.mxu0 %v7831
    %8094 = vmatprep.subr.mxu0 0.0
    %8095 = vmatpush1.msra.mxu0 %v7832
    %8096 = vmatprep.subr.mxu0 0.0
    %8097 = vmatpush1.msra.mxu0 %v7833
    %8098 = vmatprep.subr.mxu0 0.0
    %8099 = vmatpush1.msra.mxu0 %v7834
    %8100 = vmatprep.subr.mxu0 0.0
    %8101 = vmatpush1.msra.mxu0 %v7835
    %8102 = vmatprep.subr.mxu0 0.0
    %8103 = vmatpush1.msra.mxu0 %v7836
    %8104 = vmatprep.subr.mxu0 0.0
    %8105 = vmatpush1.msra.mxu0 %v7837
    %8106 = vmatprep.subr.mxu0 0.0
    %8107 = vmatpush1.msra.mxu0 %v7838
    %8108 = vmatprep.subr.mxu0 0.0
    %8109 = vmatpush1.msra.mxu0 %v7839
    %8110 = vmatprep.subr.mxu0 0.0
    %8111 = vmatpush1.msra.mxu0 %v7840
    %8112 = vmatprep.subr.mxu0 0.0
    %8113 = vmatpush1.msra.mxu0 %v7841
    %8114 = vmatprep.subr.mxu0 0.0
    %8115 = vmatpush1.msra.mxu0 %v7842
    %8116 = vmatprep.subr.mxu0 0.0
    %8117 = vmatpush1.msra.mxu0 %v7843
    %8118 = vmatprep.subr.mxu0 0.0
    %8119 = vmatpush1.msra.mxu0 %v7844
    %8120 = vmatprep.subr.mxu0 0.0
    %8121 = vmatpush1.msra.mxu0 %v7845
    %8122 = vmatprep.subr.mxu0 0.0
    %8123 = vmatpush1.msra.mxu0 %v7846
    %8124 = vmatprep.subr.mxu0 0.0
    %8125 = vmatpush1.msra.mxu0 %v7847
    %8126 = vmatprep.subr.mxu0 0.0
    %8127 = vmatpush1.msra.mxu0 %v7848
    %8128 = vmatprep.subr.mxu0 0.0
    %8129 = vmatpush1.msra.mxu0 %v7849
    %8130 = vmatprep.subr.mxu0 0.0
    %8131 = vmatpush1.msra.mxu0 %v7850
    %8132 = vmatprep.subr.mxu0 0.0
    %8133 = vmatpush1.msra.mxu0 %v7851
    %8134 = vmatprep.subr.mxu0 0.0
    %8135 = vmatpush1.msra.mxu0 %v7852
    %8136 = vmatprep.subr.mxu0 0.0
    %8137 = vmatpush1.msra.mxu0 %v7853
    %8138 = vmatprep.subr.mxu0 0.0
    %8139 = vmatpush1.msra.mxu0 %v7854
    %8140 = vmatprep.subr.mxu0 0.0
    %8141 = vmatpush1.msra.mxu0 %v7855
    %8142 = vmatprep.subr.mxu0 0.0
    %8143 = vmatpush1.msra.mxu0 %v7856
    %8144 = vmatprep.subr.mxu0 0.0
    %8145 = vmatpush1.msra.mxu0 %v7857
    %8146 = vmatprep.subr.mxu0 0.0
    %8147 = vmatpush1.msra.mxu0 %v7858
    %8148 = vmatprep.mubr.f32.mxu0 %v7722
    %8149 = vmatmul.mubr.f32.gmra.mrb[0].mxu0 %v7721
    %v8150 = vpop.f32.mrb[0].mxu0
    %v8151 = vadd.f32 %v8076, %v8150
    %v8152 = vpop.f32.mrb[0].mxu0
    %8153 = vmatprep.mubr.f32.mxu0 %v7730
    %8154 = vmatmul.mubr.f32.gmra.mrb[0].mxu0 %v7729
    %v8155 = vpop.f32.mrb[0].mxu0
    %v8156 = vadd.f32 %v8081, %v8155
    %v8157 = vpop.f32.mrb[0].mxu0
    %8158 = vdwg.mxu0
    %8159 = vadd.xlane.f32.xlu0 %v8151
    %v8160 = vpop.xlane.xlu0 %8159
    %8161 = vadd.xlane.f32.xlu0 %v8156
    %v8162 = vpop.xlane.xlu0 %8161
    %v8163 = vmul.f32 %v8160, 0.033333335
    %v8164 = vmul.f32 %v8162, 0.033333335
    %v8165 = vsub.f32 %v8151, %v8163
    %v8166 = vsub.f32 %v8156, %v8164
    %v8167 = vmul.f32 %v8165, %v47
    %v8168 = vmul.f32 %v8166, %v47
    %v8169 = vmul.f32 %v8167, %v8167
    %v8170 = vmul.f32 %v8168, %v8168
    %8171 = vadd.xlane.f32.xlu0 %v8169
    %v8172 = vpop.xlane.xlu0 %8171
    %8173 = vadd.xlane.f32.xlu0 %v8170
    %v8174 = vpop.xlane.xlu0 %8173
    %v8175 = vmul.f32 %v8172, 0.033333335
    %v8176 = vmul.f32 %v8174, 0.033333335
    %v8177 = vadd.f32 %v8175, 1e-05
    %v8178 = vadd.f32 %v8176, 1e-05
    %v8179 = vrsqrt.pop %v8177
    %v8180 = vrsqrt.pop %v8178
    %v8181 = vmul.f32 %v8167, %v8179
    %v8182 = vmul.f32 %v8168, %v8180
    %8183 = vst [vmem:[#allocation3] sm:$0xff] %v8181
    %8184 = vst [vmem:[#allocation3 + $0x8] sm:$0xff] %v8182
    // Predicated region
    $region46: #{decoder_layer.1} parent=1 // pred_check
      _
    $region47: #{decoder_layer.1} parent=1 // pred_check_branch
      %8186 = sbr.rel (0) target = $region49
    $region48: #{decoder_layer.1} parent=1 // pred_region
      %s8188 = ssub.s32 256, 256
      %8189 = vsyncadd [#allocation4], %s8188
      %s8190 = sshll.u32 [#allocation3], 4
      %s8191 = int_to_ptr.vmem [resolvable:$true] %s8190
      %8196 = dma.vmem_to_hbm [thread:$0]  %s8191, 256, %s11, [#allocation4], 128, 128, 8
    $region49: #{decoder_layer.1} parent=1 // pred_fallthru
      _
    // Predicated region
    $region50: #{decoder_layer.1} parent=1 // pred_check
      _
    $region51: #{decoder_layer.1} parent=1 // pred_check_branch
      %8198 = sbr.rel (0) target = $region53
    $region52: #{decoder_layer.1} parent=1 // pred_region
      %s8200 = ssub.s32 2048, 2048
      %8201 = vsyncadd [#allocation6], %s8200
      %s8202 = sshll.u32 [#allocation5], 4
      %s8203 = int_to_ptr.vmem [resolvable:$true] %s8202
      %8208 = dma.vmem_to_hbm [thread:$0]  %s8203, 2048, %s12, [#allocation6], 128, 128, 8
    $region53: #{decoder_layer.1} parent=1 // pred_fallthru
      _
    // Predicated region
    $region54: #{decoder_layer.1} parent=1 // pred_check
      _
    $region55: #{decoder_layer.1} parent=1 // pred_check_branch
      %8210 = sbr.rel (0) target = $region57
    $region56: #{decoder_layer.1} parent=1 // pred_region
      %s8212 = ssub.s32 2048, 2048
      %8213 = vsyncadd [#allocation6], %s8212
      %s8214 = sshll.u32 [#allocation7], 4
      %s8215 = int_to_ptr.vmem [resolvable:$true] %s8214
      %8220 = dma.vmem_to_hbm [thread:$0]  %s8215, 2048, %s13, [#allocation6], 128, 128, 8
    $region57: #{decoder_layer.1} parent=1 // pred_fallthru
      _
    // Predicated region
    $region58: #{decoder_layer.1} parent=1 // pred_check
      _
    $region59: #{decoder_layer.1} parent=1 // pred_check_branch
      %8222 = sbr.rel (0) target = $region61
    $region60: #{decoder_layer.1} parent=1 // pred_region
      %8223 = dma.done [#allocation4], 256
    $region61: #{decoder_layer.1} parent=1 // pred_fallthru
      _
    // Predicated region
    $region62: #{decoder_layer.1} parent=1 // pred_check
      _
    $region63: #{decoder_layer.1} parent=1 // pred_check_branch
      %8225 = sbr.rel (0) target = $region65
    $region64: #{decoder_layer.1} parent=1 // pred_region
      %8226 = dma.done [#allocation6], 2048
    $region65: #{decoder_layer.1} parent=1 // pred_fallthru
      _
    // Predicated region
    $region66: #{decoder_layer.1} parent=1 // pred_check
      _
    $region67: #{decoder_layer.1} parent=1 // pred_check_branch
      %8228 = sbr.rel (0) target = $region69
    $region68: #{decoder_layer.1} parent=1 // pred_region
      %8229 = dma.done [#allocation6], 2048
    $region69: #{decoder_layer.1} parent=1 // pred_fallthru
      _
    %8230 = vsyncpa [#allocation4], 1
    %8231 = vsyncpa [#allocation6], 1

</llo_original>
